<compile_context>
chip_gen: v5e
topology: v5e:2x2
jax: 0.10.0
libtpu: 0.0.40
codegen_flags: <defaults>
</compile_context>

<pallas_src>
import functools

import jax
import jax.numpy as jnp
from jax.experimental import pallas as pl
from jax.experimental.pallas import tpu as pltpu

LATENT = 32
IMAGE_SHAPE = (16, 16)      # small test shape (module default is (256, 256))
PRIOR = 1.0

_GUARD = 8                  # guard rows so halo reads of the flattened layout stay in-bounds
_FC1_TK_MAX = 8192          # max K-tile for the enc_fc1 reduction (review: 2048-8192)
_VMEM_LIMIT = 48 * 1024 * 1024   # < v7x physical 64 MiB; >= defaults on v5e/v6e


def _mosaic_params(*semantics):
    return pltpu.CompilerParams(dimension_semantics=semantics,
                                vmem_limit_bytes=_VMEM_LIMIT)


def _round_up(x, m):
    return ((x + m - 1) // m) * m


def _fc1_tile(k):
    return min(_FC1_TK_MAX, _round_up(k, 512))


def _dec_row_tile(h):
    for t in (32, 16, 8, 4, 2, 1):
        if h % t == 0 and h // t >= 2:
            return t
    return h


# ----------------------------------------------------------------------------
# Encoder conv (3x3, stride 2, valid, ReLU) -- one fused kernel per layer.
# ----------------------------------------------------------------------------
def _enc_conv_kernel(phases_ref, w_ref, b_ref, o_ref, *, wh, m_out):
    """Stride-2 3x3 VALID conv + bias + ReLU for a single batch element.

    The wrapper pre-splits the input into its 4 polyphase planes (even/odd rows x even/odd
    cols), each flattened to (plane_rows * wh, Cin).  Tap (di, dj) of the stride-2 conv is a
    contiguous row-slice of plane (di%2, dj%2); all 9 taps are concatenated along K into one
    (m_out, 9*Cin) patch block and fed to a single accumulating MXU dot.  Output rows are
    stored at full plane width `wh`; columns >= ow are don't-care and sliced off outside.
    """
    taps = []
    for t in range(9):
        di, dj = divmod(t, 3)
        p = (di % 2) * 2 + (dj % 2)
        off = (di // 2) * wh + (dj // 2)
        taps.append(phases_ref[0, p, pl.ds(off, m_out), :])          # (m_out, Cin) bf16
    patch = jnp.concatenate(taps, axis=-1)                           # (m_out, 9*Cin)
    acc = jnp.dot(patch, w_ref[...], preferred_element_type=jnp.float32)
    o_ref[0] = jnp.maximum(acc + b_ref[...], 0.0).astype(o_ref.dtype)


def enc_conv(x_nhwc, w, b):
    """3x3 / stride 2 / valid conv + ReLU.  x: (B,H,W,Cin) bf16, w: (9*Cin, Cout) bf16."""
    B, H, W, cin = x_nhwc.shape
    cout = w.shape[1]
    oh, ow = (H - 3) // 2 + 1, (W - 3) // 2 + 1
    hh, wh = (H + 1) // 2, (W + 1) // 2

    # Polyphase split (pure data movement, 1x the activation, done by XLA).
    xp = jnp.pad(x_nhwc, ((0, 0), (0, 2 * hh - H), (0, 2 * wh - W), (0, 0)))
    phases = jnp.stack([xp[:, a::2, c::2, :] for a in (0, 1) for c in (0, 1)], axis=1)
    phases = jnp.pad(phases, ((0, 0), (0, 0), (0, 2), (0, 0), (0, 0)))   # halo guard rows
    mp = (hh + 2) * wh
    phases = phases.reshape(B, 4, mp, cin).astype(jnp.bfloat16)
    m_out = oh * wh

    out = pl.pallas_call(
        functools.partial(_enc_conv_kernel, wh=wh, m_out=m_out),
        out_shape=jax.ShapeDtypeStruct((B, m_out, cout), jnp.bfloat16),
        grid_spec=pltpu.PrefetchScalarGridSpec(
            num_scalar_prefetch=0,
            grid=(B,),
            in_specs=[
                pl.BlockSpec((1, 4, mp, cin), lambda i: (i, 0, 0, 0)),
                pl.BlockSpec(w.shape, lambda i: (0, 0)),
                pl.BlockSpec((1, cout), lambda i: (0, 0)),
            ],
            out_specs=pl.BlockSpec((1, m_out, cout), lambda i: (i, 0, 0)),
        ),
        compiler_params=_mosaic_params("parallel"),
    )(phases, w, b)
    # (B, oh*wh, Cout) -> (B, oh, ow, Cout): drop the don't-care columns.
    return out.reshape(B, oh, wh, cout)[:, :, :ow, :]


# ----------------------------------------------------------------------------
# Encoder head: K-tiled fc1 + fused fc2 + softplus + reparam sample + KL +
# decoder layer-1 z-projection (zc = z @ sum_t W1z).
# ----------------------------------------------------------------------------
def _enc_head_kernel(flat_ref, w1_ref, b1_ref, w2_ref, b2_ref, w1zs_ref, eps_ref,
                     z_ref, zc_ref, kl_ref, acc_ref, *, prior):
    k = pl.program_id(0)

    @pl.when(k == 0)
    def _():
        acc_ref[...] = jnp.zeros_like(acc_ref)

    acc_ref[...] += jnp.dot(flat_ref[...], w1_ref[...],
                            preferred_element_type=jnp.float32)

    @pl.when(k == pl.num_programs(0) - 1)
    def _():
        h = jnp.maximum(acc_ref[...] + b1_ref[...], 0.0)
        stats = jnp.dot(h.astype(jnp.bfloat16), w2_ref[...],
                        preferred_element_type=jnp.float32) + b2_ref[...]
        mean = stats[:, :LATENT]
        sigma = jnp.logaddexp(stats[:, LATENT:], 0.0) + 1e-10       # softplus (matches ref eps)
        z = mean + sigma * eps_ref[...]
        z_ref[...] = z
        zc_ref[...] = jnp.dot(z.astype(jnp.bfloat16), w1zs_ref[...],
                              preferred_element_type=jnp.float32)
        p = jnp.float32(prior)
        kl = (jnp.log(p) - jnp.log(sigma)
              + (sigma * sigma + mean * mean) / (2.0 * p * p) - 0.5)
        kl_ref[...] = jnp.sum(kl, axis=1, keepdims=True)


def encoder_head(flat, w1, b1, w2, b2, w1z_sum, eps, prior=PRIOR):
    B, K = flat.shape
    Kp, hidden = w1.shape
    tk = _fc1_tile(K)
    assert Kp == _round_up(K, tk), (Kp, K, tk)
    nk = Kp // tk
    flat_p = jnp.pad(flat.astype(jnp.bfloat16), ((0, 0), (0, Kp - K)))

    z, zc, kl = pl.pallas_call(
        functools.partial(_enc_head_kernel, prior=prior),
        out_shape=(jax.ShapeDtypeStruct((B, LATENT), jnp.float32),
                   jax.ShapeDtypeStruct((B, LATENT), jnp.float32),
                   jax.ShapeDtypeStruct((B, 1), jnp.float32)),
        grid_spec=pltpu.PrefetchScalarGridSpec(
            num_scalar_prefetch=0,
            grid=(nk,),
            in_specs=[
                pl.BlockSpec((B, tk), lambda k: (0, k)),
                pl.BlockSpec((tk, hidden), lambda k: (k, 0)),
                pl.BlockSpec((1, hidden), lambda k: (0, 0)),
                pl.BlockSpec((hidden, 2 * LATENT), lambda k: (0, 0)),
                pl.BlockSpec((1, 2 * LATENT), lambda k: (0, 0)),
                pl.BlockSpec((LATENT, LATENT), lambda k: (0, 0)),
                pl.BlockSpec((B, LATENT), lambda k: (0, 0)),
            ],
            out_specs=(pl.BlockSpec((B, LATENT), lambda k: (0, 0)),
                       pl.BlockSpec((B, LATENT), lambda k: (0, 0)),
                       pl.BlockSpec((B, 1), lambda k: (0, 0))),
            scratch_shapes=[pltpu.VMEM((B, hidden), jnp.float32)],
        ),
        compiler_params=_mosaic_params("arbitrary"),
    )(flat_p, w1, b1, w2, b2, w1z_sum, eps.astype(jnp.float32))
    return z, zc, kl[:, 0]


# ----------------------------------------------------------------------------
# Decoder: spatial broadcast + 4x (3x3 conv, ReLU) + 1x1 conv; layer 1 folded,
# row-tiled over output rows (grid (B, H/Tr) with a 6-row halo).
# ----------------------------------------------------------------------------
def _decoder_kernel(zc_ref, cpre_ref,
                    w2_ref, b2_ref, w3_ref, b3_ref, w4_ref, b4_ref,
                    w5_ref, b5_ref, o_ref, h1_ref, h2_ref, h3_ref, *, wp, tr):
    """One output-row tile of the spatial-broadcast decoder for one batch element.

    cpre_ref holds the precomputed layer-1 (coord-conv + bias) pre-activation for this
    tile's (Tr+6)-row halo window, flattened to ((Tr+6)*wp + guard, 32).  Layer 1 is then
    just ReLU(cpre + zc).  Each subsequent 3x3 VALID conv builds a (m, 288) patch block
    from 9 contiguous row-slices of the previous layer's flattened scratch and issues one
    MXU dot.  Columns beyond each layer's valid width hold garbage never read by a valid
    output; the wrapper slices them off.
    """
    bidx = pl.program_id(0)
    zc = zc_ref[pl.ds(bidx, 1), :]                                   # (1, 32) f32

    # Layer 1 (folded): broadcast z contribution + precomputed coord/bias map.
    h1_ref[...] = jnp.maximum(cpre_ref[0].astype(jnp.float32) + zc,
                              0.0).astype(h1_ref.dtype)

    def conv3x3(src_ref, w_ref, b_ref, out_rows):
        m = out_rows * wp
        patch = jnp.concatenate(
            [src_ref[pl.ds(di * wp + dj, m), :] for di in range(3) for dj in range(3)],
            axis=-1)                                                 # (m, 288) bf16
        y = jnp.dot(patch, w_ref[...], preferred_element_type=jnp.float32)
        return jnp.maximum(y + b_ref[...], 0.0)                      # (m, 32) f32

    def store(dst_ref, val):
        m = val.shape[0]
        dst_ref[pl.ds(0, m), :] = val.astype(dst_ref.dtype)
        dst_ref[pl.ds(m, _GUARD), :] = jnp.zeros((_GUARD, val.shape[1]), dst_ref.dtype)

    store(h2_ref, conv3x3(h1_ref, w2_ref, b2_ref, tr + 4))
    store(h3_ref, conv3x3(h2_ref, w3_ref, b3_ref, tr + 2))
    h4 = conv3x3(h3_ref, w4_ref, b4_ref, tr)                         # (tr*wp, 32) f32
    y5 = jnp.dot(h4.astype(jnp.bfloat16), w5_ref[...],
                 preferred_element_type=jnp.float32) + b5_ref[...]   # (tr*wp, 4) f32
    # Store channel-major so the (long) spatial axis is the lane dimension.
    o_ref[0, 0] = y5.T.astype(o_ref.dtype)                           # (4, tr*wp)


def decoder(zc, prep, image_shape):
    B = zc.shape[0]
    H, W = image_shape
    wp = W + 8
    tr = _dec_row_tile(H)
    nt = H // tr
    n1g = (tr + 6) * wp + _GUARD
    mt = tr * wp
    cpre = prep["dec_coordpre"]                                      # (nt, n1g, 32) bf16
    assert cpre.shape == (nt, n1g, LATENT), cpre.shape

    out = pl.pallas_call(
        functools.partial(_decoder_kernel, wp=wp, tr=tr),
        out_shape=jax.ShapeDtypeStruct((B, nt, 4, mt), jnp.float32),
        grid_spec=pltpu.PrefetchScalarGridSpec(
            num_scalar_prefetch=0,
            grid=(B, nt),
            in_specs=[
                pl.BlockSpec((B, LATENT), lambda b, r: (0, 0)),
                pl.BlockSpec((1, n1g, LATENT), lambda b, r: (r, 0, 0)),
                pl.BlockSpec((9 * 32, 32), lambda b, r: (0, 0)),
                pl.BlockSpec((1, 32), lambda b, r: (0, 0)),
                pl.BlockSpec((9 * 32, 32), lambda b, r: (0, 0)),
                pl.BlockSpec((1, 32), lambda b, r: (0, 0)),
                pl.BlockSpec((9 * 32, 32), lambda b, r: (0, 0)),
                pl.BlockSpec((1, 32), lambda b, r: (0, 0)),
                pl.BlockSpec((32, 4), lambda b, r: (0, 0)),
                pl.BlockSpec((1, 4), lambda b, r: (0, 0)),
            ],
            out_specs=pl.BlockSpec((1, 1, 4, mt), lambda b, r: (b, r, 0, 0)),
            scratch_shapes=[
                pltpu.VMEM((n1g, 32), jnp.bfloat16),
                pltpu.VMEM(((tr + 4) * wp + _GUARD, 32), jnp.bfloat16),
                pltpu.VMEM(((tr + 2) * wp + _GUARD, 32), jnp.bfloat16),
            ],
        ),
        compiler_params=_mosaic_params("parallel", "parallel"),
    )(zc.astype(jnp.float32), cpre,
      prep["dec_c2_w"], prep["dec_c2_b"],
      prep["dec_c3_w"], prep["dec_c3_b"],
      prep["dec_c4_w"], prep["dec_c4_b"],
      prep["dec_c5_w"], prep["dec_c5_b"])

    # (B, nt, 4, tr*wp) -> (B, 4, H, W): stitch tiles, drop don't-care columns.
    out = out.reshape(B, nt, 4, tr, wp)
    out = jnp.transpose(out, (0, 2, 1, 3, 4)).reshape(B, 4, H, wp)
    return out[..., :W]


# ----------------------------------------------------------------------------
# Parameters (deterministic synthetic init; conv weights stored GEMM-ready as
# (kh*kw*Cin, Cout) with tap-major / channel-innermost ordering).
# NOTE: real PyTorch conv weights (out,in,kh,kw) must be permuted to (kh,kw,in,out)
# before reshaping to this layout; dec_c1_w's input-channel order per tap must be
# [z(32), coord_y, coord_x].
# ----------------------------------------------------------------------------
def init_params(key, image_shape):
    H, W = image_shape

    def conv_out(s):
        return (s - 3) // 2 + 1

    fh, fw = H, W
    for _ in range(3):
        fh, fw = conv_out(fh), conv_out(fw)

    shapes = {
        "enc_c1_w": (3 * 3 * 4, 32),   "enc_c1_b": (32,),
        "enc_c2_w": (3 * 3 * 32, 32),  "enc_c2_b": (32,),
        "enc_c3_w": (3 * 3 * 32, 64),  "enc_c3_b": (64,),
        "enc_fc1_w": (64 * fh * fw, 256), "enc_fc1_b": (256,),
        "enc_fc2_w": (256, 2 * LATENT),   "enc_fc2_b": (2 * LATENT,),
        "dec_c1_w": (3 * 3 * (LATENT + 2), 32), "dec_c1_b": (32,),
        "dec_c2_w": (3 * 3 * 32, 32), "dec_c2_b": (32,),
        "dec_c3_w": (3 * 3 * 32, 32), "dec_c3_b": (32,),
        "dec_c4_w": (3 * 3 * 32, 32), "dec_c4_b": (32,),
        "dec_c5_w": (32, 4),          "dec_c5_b": (4,),
    }
    params = {}
    keys = jax.random.split(key, len(shapes))
    for k, (name, shp) in zip(keys, sorted(shapes.items())):
        if name.endswith("_b"):
            params[name] = jnp.zeros(shp, jnp.float32)
        else:
            params[name] = 0.05 * jax.random.normal(k, shp, jnp.float32)
    return params


# ----------------------------------------------------------------------------
# One-time weight preparation (outside the jitted forward): bf16 casts, fc1 K-pad,
# decoder layer-1 fold (z projection + precomputed coord/bias map, pre-tiled with halos).
# ----------------------------------------------------------------------------
def prepare_params(params, image_shape):
    H, W = image_shape
    prep = {}

    for i in (1, 2, 3):
        prep[f"enc_c{i}_w"] = params[f"enc_c{i}_w"].astype(jnp.bfloat16)
        prep[f"enc_c{i}_b"] = params[f"enc_c{i}_b"].reshape(1, -1).astype(jnp.float32)

    K, hidden = params["enc_fc1_w"].shape
    tk = _fc1_tile(K)
    kp = _round_up(K, tk)
    prep["enc_fc1_w"] = jnp.pad(params["enc_fc1_w"],
                                ((0, kp - K), (0, 0))).astype(jnp.bfloat16)
    prep["enc_fc1_b"] = params["enc_fc1_b"].reshape(1, hidden).astype(jnp.float32)
    prep["enc_fc2_w"] = params["enc_fc2_w"].astype(jnp.bfloat16)
    prep["enc_fc2_b"] = params["enc_fc2_b"].reshape(1, -1).astype(jnp.float32)

    # Decoder layer-1 fold.
    w1 = params["dec_c1_w"].reshape(9, LATENT + 2, 32).astype(jnp.float32)
    prep["dec_w1z_sum"] = jnp.sum(w1[:, :LATENT, :], axis=0).astype(jnp.bfloat16)

    wp = W + 8
    ys = jnp.linspace(-1.0, 1.0, H + 8)
    xs = jnp.linspace(-1.0, 1.0, W + 8)
    yy, xx = jnp.meshgrid(ys, xs, indexing="ij")
    coord = jnp.stack([yy, xx], axis=-1).astype(jnp.float32)          # (H+8, W+8, 2)
    acc = jnp.broadcast_to(params["dec_c1_b"].reshape(1, 1, 32).astype(jnp.float32),
                           (H + 6, W + 6, 32))
    for t in range(9):
        di, dj = divmod(t, 3)
        acc = acc + jnp.einsum("ijc,cn->ijn",
                               coord[di:di + H + 6, dj:dj + W + 6, :],
                               w1[t, LATENT:, :])
    accp = jnp.pad(acc, ((0, 0), (0, wp - (W + 6)), (0, 0)))          # (H+6, wp, 32)
    tr = _dec_row_tile(H)
    nt = H // tr
    tiles = []
    for t in range(nt):
        sl = accp[t * tr: t * tr + tr + 6].reshape((tr + 6) * wp, 32)
        tiles.append(jnp.pad(sl, ((0, _GUARD), (0, 0))))
    prep["dec_coordpre"] = jnp.stack(tiles, axis=0).astype(jnp.bfloat16)

    for i in (2, 3, 4):
        prep[f"dec_c{i}_w"] = params[f"dec_c{i}_w"].astype(jnp.bfloat16)
        prep[f"dec_c{i}_b"] = params[f"dec_c{i}_b"].reshape(1, -1).astype(jnp.float32)
    prep["dec_c5_w"] = params["dec_c5_w"].astype(jnp.bfloat16)
    prep["dec_c5_b"] = params["dec_c5_b"].reshape(1, -1).astype(jnp.float32)
    return prep


# ----------------------------------------------------------------------------
# Forward pass (mirrors the spatial-MONet background VAE forward).
# ----------------------------------------------------------------------------
def vae_background_forward(prep, x, scope, eps, image_shape=IMAGE_SHAPE):
    B = x.shape[0]

    # encoder_input = cat([x, scope], dim=1)  (NCHW) -> NHWC, cast once to bf16
    enc_in = jnp.concatenate([x, scope], axis=1)
    h = jnp.transpose(enc_in, (0, 2, 3, 1)).astype(jnp.bfloat16)     # (B,H,W,4)

    h = enc_conv(h, prep["enc_c1_w"], prep["enc_c1_b"])
    h = enc_conv(h, prep["enc_c2_w"], prep["enc_c2_b"])
    h = enc_conv(h, prep["enc_c3_w"], prep["enc_c3_b"])

    # flatten in NCHW order to match PyTorch's x.view(B, -1)
    flat = jnp.transpose(h, (0, 3, 1, 2)).reshape(B, -1)
    z, zc, kl_z = encoder_head(flat, prep["enc_fc1_w"], prep["enc_fc1_b"],
                               prep["enc_fc2_w"], prep["enc_fc2_b"],
                               prep["dec_w1z_sum"], eps)
    del z  # z only feeds the decoder through zc (layer-1 fold); KL uses mean/sigma in-kernel

    decoded = decoder(zc, prep, image_shape)                         # (B,4,H,W) NCHW
    return decoded, kl_z


# TODO(synk): init_bias() (dataset-dependent decoder bias init) and the full MaskedAIR
# orchestration (UNet mask net, affine-grid spatial transformer, per-slot loop) are not
# part of this VAE forward and are omitted here.

if __name__ == "__main__":
    key = jax.random.PRNGKey(0)
    k_param, k_x, k_scope, k_eps = jax.random.split(key, 4)

    B, H, W = 2, IMAGE_SHAPE[0], IMAGE_SHAPE[1]
    x = jax.random.normal(k_x, (B, 3, H, W), jnp.float32)
    scope = jax.nn.sigmoid(jax.random.normal(k_scope, (B, 1, H, W), jnp.float32))
    eps = jax.random.normal(k_eps, (B, LATENT), jnp.float32)         # reparameterization noise

    params = init_params(k_param, IMAGE_SHAPE)
    prep = prepare_params(params, IMAGE_SHAPE)                       # once, outside the jit

    fwd = jax.jit(functools.partial(vae_background_forward, image_shape=IMAGE_SHAPE))
    decoded, kl_z = fwd(prep, x, scope, eps)
    jax.block_until_ready((decoded, kl_z))

    assert decoded.shape == (B, 4, H, W), decoded.shape
    assert kl_z.shape == (B,), kl_z.shape
    assert bool(jnp.all(jnp.isfinite(decoded))) and bool(jnp.all(jnp.isfinite(kl_z)))
    print("KERNEL_OK")
</pallas_src>

<mosaic_0001>
module attributes {stable_mosaic.version = 11 : i64} {
  func.func @_enc_conv_kernel(%arg0: i32, %arg1: memref<1x4x80x4xbf16, #tpu.memory_space<vmem>>, %arg2: memref<36x32xbf16, #tpu.memory_space<vmem>>, %arg3: memref<1x32xf32, #tpu.memory_space<vmem>>, %arg4: memref<1x56x32xbf16, #tpu.memory_space<vmem>>) attributes {dimension_semantics = [#tpu.dimension_semantics<parallel>], iteration_bounds = array<i64: 2>, scalar_prefetch = 0 : i64, scratch_operands = 0 : i64, tpu.core_type = #tpu.core_type<tc>, window_params = [{transform_indices = @transform_0, window_bounds = array<i64: 1, 4, 80, 4>}, {pipeline_mode = #tpu.pipeline_mode<synchronous>, transform_indices = @transform_1, window_bounds = array<i64: 36, 32>}, {pipeline_mode = #tpu.pipeline_mode<synchronous>, transform_indices = @transform_2, window_bounds = array<i64: 1, 32>}, {transform_indices = @transform_3, window_bounds = array<i64: 1, 56, 32>}]} {
    %c0 = arith.constant 0 : index
    %c0_0 = arith.constant 0 : index
    %c0_1 = arith.constant 0 : index
    %c0_2 = arith.constant 0 : index
    %0 = vector.load %arg1[%c0, %c0_0, %c0_1, %c0_2] : memref<1x4x80x4xbf16, #tpu.memory_space<vmem>>, vector<1x1x56x4xbf16>
    %1 = vector.shape_cast %0 : vector<1x1x56x4xbf16> to vector<56x4xbf16>
    %c0_3 = arith.constant 0 : index
    %c1 = arith.constant 1 : index
    %c0_4 = arith.constant 0 : index
    %c0_5 = arith.constant 0 : index
    %2 = vector.load %arg1[%c0_3, %c1, %c0_4, %c0_5] : memref<1x4x80x4xbf16, #tpu.memory_space<vmem>>, vector<1x1x56x4xbf16>
    %3 = vector.shape_cast %2 : vector<1x1x56x4xbf16> to vector<56x4xbf16>
    %c0_6 = arith.constant 0 : index
    %c0_7 = arith.constant 0 : index
    %c1_8 = arith.constant 1 : index
    %c0_9 = arith.constant 0 : index
    %4 = vector.load %arg1[%c0_6, %c0_7, %c1_8, %c0_9] : memref<1x4x80x4xbf16, #tpu.memory_space<vmem>>, vector<1x1x56x4xbf16>
    %5 = vector.shape_cast %4 : vector<1x1x56x4xbf16> to vector<56x4xbf16>
    %c0_10 = arith.constant 0 : index
    %c2 = arith.constant 2 : index
    %c0_11 = arith.constant 0 : index
    %c0_12 = arith.constant 0 : index
    %6 = vector.load %arg1[%c0_10, %c2, %c0_11, %c0_12] : memref<1x4x80x4xbf16, #tpu.memory_space<vmem>>, vector<1x1x56x4xbf16>
    %7 = vector.shape_cast %6 : vector<1x1x56x4xbf16> to vector<56x4xbf16>
    %c0_13 = arith.constant 0 : index
    %c3 = arith.constant 3 : index
    %c0_14 = arith.constant 0 : index
    %c0_15 = arith.constant 0 : index
    %8 = vector.load %arg1[%c0_13, %c3, %c0_14, %c0_15] : memref<1x4x80x4xbf16, #tpu.memory_space<vmem>>, vector<1x1x56x4xbf16>
    %9 = vector.shape_cast %8 : vector<1x1x56x4xbf16> to vector<56x4xbf16>
    %c0_16 = arith.constant 0 : index
    %c2_17 = arith.constant 2 : index
    %c1_18 = arith.constant 1 : index
    %c0_19 = arith.constant 0 : index
    %10 = vector.load %arg1[%c0_16, %c2_17, %c1_18, %c0_19] : memref<1x4x80x4xbf16, #tpu.memory_space<vmem>>, vector<1x1x56x4xbf16>
    %11 = vector.shape_cast %10 : vector<1x1x56x4xbf16> to vector<56x4xbf16>
    %c0_20 = arith.constant 0 : index
    %c0_21 = arith.constant 0 : index
    %c8 = arith.constant 8 : index
    %c0_22 = arith.constant 0 : index
    %12 = vector.load %arg1[%c0_20, %c0_21, %c8, %c0_22] : memref<1x4x80x4xbf16, #tpu.memory_space<vmem>>, vector<1x1x56x4xbf16>
    %13 = vector.shape_cast %12 : vector<1x1x56x4xbf16> to vector<56x4xbf16>
    %c0_23 = arith.constant 0 : index
    %c1_24 = arith.constant 1 : index
    %c8_25 = arith.constant 8 : index
    %c0_26 = arith.constant 0 : index
    %14 = vector.load %arg1[%c0_23, %c1_24, %c8_25, %c0_26] : memref<1x4x80x4xbf16, #tpu.memory_space<vmem>>, vector<1x1x56x4xbf16>
    %15 = vector.shape_cast %14 : vector<1x1x56x4xbf16> to vector<56x4xbf16>
    %c0_27 = arith.constant 0 : index
    %c0_28 = arith.constant 0 : index
    %c9 = arith.constant 9 : index
    %c0_29 = arith.constant 0 : index
    %16 = vector.load %arg1[%c0_27, %c0_28, %c9, %c0_29] : memref<1x4x80x4xbf16, #tpu.memory_space<vmem>>, vector<1x1x56x4xbf16>
    %17 = vector.shape_cast %16 : vector<1x1x56x4xbf16> to vector<56x4xbf16>
    %18 = tpu.concatenate %1, %3, %5, %7, %9, %11, %13, %15, %17 in 1 : vector<56x4xbf16>, vector<56x4xbf16>, vector<56x4xbf16>, vector<56x4xbf16>, vector<56x4xbf16>, vector<56x4xbf16>, vector<56x4xbf16>, vector<56x4xbf16>, vector<56x4xbf16> -> vector<56x36xbf16>
    %c0_30 = arith.constant 0 : index
    %c0_31 = arith.constant 0 : index
    %19 = vector.load %arg2[%c0_30, %c0_31] : memref<36x32xbf16, #tpu.memory_space<vmem>>, vector<36x32xbf16>
    %cst = arith.constant dense<0.000000e+00> : vector<56x32xf32>
    %20 = tpu.matmul %18, %19, %cst {dimension_numbers = #tpu.dot_dimension_numbers<[1], [0], [0], [1], [0, 0, 1, 1], [], []>} : vector<56x36xbf16>, vector<36x32xbf16>, vector<56x32xf32> -> vector<56x32xf32>
    %c0_32 = arith.constant 0 : index
    %c0_33 = arith.constant 0 : index
    %21 = vector.load %arg3[%c0_32, %c0_33] : memref<1x32xf32, #tpu.memory_space<vmem>>, vector<1x32xf32>
    %22 = vector.broadcast %21 : vector<1x32xf32> to vector<56x32xf32>
    %23 = arith.addf %20, %22 : vector<56x32xf32>
    %cst_34 = arith.constant 0.000000e+00 : f32
    %24 = vector.broadcast %cst_34 : f32 to vector<56x32xf32>
    %25 = arith.maximumf %23, %24 : vector<56x32xf32>
    %26 = arith.truncf %25 : vector<56x32xf32> to vector<56x32xbf16>
    %c0_35 = arith.constant 0 : index
    %c0_36 = arith.constant 0 : index
    %c0_37 = arith.constant 0 : index
    %27 = vector.load %arg4[%c0_35, %c0_36, %c0_37] : memref<1x56x32xbf16, #tpu.memory_space<vmem>>, vector<1x56x32xbf16>
    %28 = vector.shape_cast %27 : vector<1x56x32xbf16> to vector<56x32xbf16>
    %29 = vector.shape_cast %26 : vector<56x32xbf16> to vector<1x56x32xbf16>
    tpu.vector_store %arg4[%c0_35, %c0_36, %c0_37], %29 {strides = array<i32>} : memref<1x56x32xbf16, #tpu.memory_space<vmem>>, vector<1x56x32xbf16>,
    return
  }
  func.func @transform_0(%arg0: i32) -> (i32, i32, i32, i32) {
    %c0_i32 = arith.constant 0 : i32
    %c0_i32_0 = arith.constant 0 : i32
    %c0_i32_1 = arith.constant 0 : i32
    %c0_i32_2 = arith.constant 0 : i32
    return %arg0, %c0_i32, %c0_i32_0, %c0_i32_1 : i32, i32, i32, i32
  }
  func.func @transform_1(%arg0: i32) -> (i32, i32) {
    %c0_i32 = arith.constant 0 : i32
    %c0_i32_0 = arith.constant 0 : i32
    %c0_i32_1 = arith.constant 0 : i32
    return %c0_i32, %c0_i32_0 : i32, i32
  }
  func.func @transform_2(%arg0: i32) -> (i32, i32) {
    %c0_i32 = arith.constant 0 : i32
    %c0_i32_0 = arith.constant 0 : i32
    %c0_i32_1 = arith.constant 0 : i32
    return %c0_i32, %c0_i32_0 : i32, i32
  }
  func.func @transform_3(%arg0: i32) -> (i32, i32, i32) {
    %c0_i32 = arith.constant 0 : i32
    %c0_i32_0 = arith.constant 0 : i32
    %c0_i32_1 = arith.constant 0 : i32
    return %arg0, %c0_i32, %c0_i32_0 : i32, i32, i32
  }
}

module attributes {stable_mosaic.version = 11 : i64} {
  func.func @_enc_conv_kernel(%arg0: i32, %arg1: memref<1x4x24x32xbf16, #tpu.memory_space<vmem>>, %arg2: memref<288x32xbf16, #tpu.memory_space<vmem>>, %arg3: memref<1x32xf32, #tpu.memory_space<vmem>>, %arg4: memref<1x12x32xbf16, #tpu.memory_space<vmem>>) attributes {dimension_semantics = [#tpu.dimension_semantics<parallel>], iteration_bounds = array<i64: 2>, scalar_prefetch = 0 : i64, scratch_operands = 0 : i64, tpu.core_type = #tpu.core_type<tc>, window_params = [{transform_indices = @transform_0, window_bounds = array<i64: 1, 4, 24, 32>}, {pipeline_mode = #tpu.pipeline_mode<synchronous>, transform_indices = @transform_1, window_bounds = array<i64: 288, 32>}, {pipeline_mode = #tpu.pipeline_mode<synchronous>, transform_indices = @transform_2, window_bounds = array<i64: 1, 32>}, {transform_indices = @transform_3, window_bounds = array<i64: 1, 12, 32>}]} {
    %c0 = arith.constant 0 : index
    %c0_0 = arith.constant 0 : index
    %c0_1 = arith.constant 0 : index
    %c0_2 = arith.constant 0 : index
    %0 = vector.load %arg1[%c0, %c0_0, %c0_1, %c0_2] : memref<1x4x24x32xbf16, #tpu.memory_space<vmem>>, vector<1x1x12x32xbf16>
    %1 = vector.shape_cast %0 : vector<1x1x12x32xbf16> to vector<12x32xbf16>
    %c0_3 = arith.constant 0 : index
    %c1 = arith.constant 1 : index
    %c0_4 = arith.constant 0 : index
    %c0_5 = arith.constant 0 : index
    %2 = vector.load %arg1[%c0_3, %c1, %c0_4, %c0_5] : memref<1x4x24x32xbf16, #tpu.memory_space<vmem>>, vector<1x1x12x32xbf16>
    %3 = vector.shape_cast %2 : vector<1x1x12x32xbf16> to vector<12x32xbf16>
    %c0_6 = arith.constant 0 : index
    %c0_7 = arith.constant 0 : index
    %c1_8 = arith.constant 1 : index
    %c0_9 = arith.constant 0 : index
    %4 = vector.load %arg1[%c0_6, %c0_7, %c1_8, %c0_9] : memref<1x4x24x32xbf16, #tpu.memory_space<vmem>>, vector<1x1x12x32xbf16>
    %5 = vector.shape_cast %4 : vector<1x1x12x32xbf16> to vector<12x32xbf16>
    %c0_10 = arith.constant 0 : index
    %c2 = arith.constant 2 : index
    %c0_11 = arith.constant 0 : index
    %c0_12 = arith.constant 0 : index
    %6 = vector.load %arg1[%c0_10, %c2, %c0_11, %c0_12] : memref<1x4x24x32xbf16, #tpu.memory_space<vmem>>, vector<1x1x12x32xbf16>
    %7 = vector.shape_cast %6 : vector<1x1x12x32xbf16> to vector<12x32xbf16>
    %c0_13 = arith.constant 0 : index
    %c3 = arith.constant 3 : index
    %c0_14 = arith.constant 0 : index
    %c0_15 = arith.constant 0 : index
    %8 = vector.load %arg1[%c0_13, %c3, %c0_14, %c0_15] : memref<1x4x24x32xbf16, #tpu.memory_space<vmem>>, vector<1x1x12x32xbf16>
    %9 = vector.shape_cast %8 : vector<1x1x12x32xbf16> to vector<12x32xbf16>
    %c0_16 = arith.constant 0 : index
    %c2_17 = arith.constant 2 : index
    %c1_18 = arith.constant 1 : index
    %c0_19 = arith.constant 0 : index
    %10 = vector.load %arg1[%c0_16, %c2_17, %c1_18, %c0_19] : memref<1x4x24x32xbf16, #tpu.memory_space<vmem>>, vector<1x1x12x32xbf16>
    %11 = vector.shape_cast %10 : vector<1x1x12x32xbf16> to vector<12x32xbf16>
    %c0_20 = arith.constant 0 : index
    %c0_21 = arith.constant 0 : index
    %c4 = arith.constant 4 : index
    %c0_22 = arith.constant 0 : index
    %12 = vector.load %arg1[%c0_20, %c0_21, %c4, %c0_22] : memref<1x4x24x32xbf16, #tpu.memory_space<vmem>>, vector<1x1x12x32xbf16>
    %13 = vector.shape_cast %12 : vector<1x1x12x32xbf16> to vector<12x32xbf16>
    %c0_23 = arith.constant 0 : index
    %c1_24 = arith.constant 1 : index
    %c4_25 = arith.constant 4 : index
    %c0_26 = arith.constant 0 : index
    %14 = vector.load %arg1[%c0_23, %c1_24, %c4_25, %c0_26] : memref<1x4x24x32xbf16, #tpu.memory_space<vmem>>, vector<1x1x12x32xbf16>
    %15 = vector.shape_cast %14 : vector<1x1x12x32xbf16> to vector<12x32xbf16>
    %c0_27 = arith.constant 0 : index
    %c0_28 = arith.constant 0 : index
    %c5 = arith.constant 5 : index
    %c0_29 = arith.constant 0 : index
    %16 = vector.load %arg1[%c0_27, %c0_28, %c5, %c0_29] : memref<1x4x24x32xbf16, #tpu.memory_space<vmem>>, vector<1x1x12x32xbf16>
    %17 = vector.shape_cast %16 : vector<1x1x12x32xbf16> to vector<12x32xbf16>
    %18 = tpu.concatenate %1, %3, %5, %7, %9, %11, %13, %15, %17 in 1 : vector<12x32xbf16>, vector<12x32xbf16>, vector<12x32xbf16>, vector<12x32xbf16>, vector<12x32xbf16>, vector<12x32xbf16>, vector<12x32xbf16>, vector<12x32xbf16>, vector<12x32xbf16> -> vector<12x288xbf16>
    %c0_30 = arith.constant 0 : index
    %c0_31 = arith.constant 0 : index
    %19 = vector.load %arg2[%c0_30, %c0_31] : memref<288x32xbf16, #tpu.memory_space<vmem>>, vector<288x32xbf16>
    %cst = arith.constant dense<0.000000e+00> : vector<12x32xf32>
    %20 = tpu.matmul %18, %19, %cst {dimension_numbers = #tpu.dot_dimension_numbers<[1], [0], [0], [1], [0, 0, 1, 1], [], []>} : vector<12x288xbf16>, vector<288x32xbf16>, vector<12x32xf32> -> vector<12x32xf32>
    %c0_32 = arith.constant 0 : index
    %c0_33 = arith.constant 0 : index
    %21 = vector.load %arg3[%c0_32, %c0_33] : memref<1x32xf32, #tpu.memory_space<vmem>>, vector<1x32xf32>
    %22 = vector.broadcast %21 : vector<1x32xf32> to vector<12x32xf32>
    %23 = arith.addf %20, %22 : vector<12x32xf32>
    %cst_34 = arith.constant 0.000000e+00 : f32
    %24 = vector.broadcast %cst_34 : f32 to vector<12x32xf32>
    %25 = arith.maximumf %23, %24 : vector<12x32xf32>
    %26 = arith.truncf %25 : vector<12x32xf32> to vector<12x32xbf16>
    %c0_35 = arith.constant 0 : index
    %c0_36 = arith.constant 0 : index
    %c0_37 = arith.constant 0 : index
    %27 = vector.load %arg4[%c0_35, %c0_36, %c0_37] : memref<1x12x32xbf16, #tpu.memory_space<vmem>>, vector<1x12x32xbf16>
    %28 = vector.shape_cast %27 : vector<1x12x32xbf16> to vector<12x32xbf16>
    %29 = vector.shape_cast %26 : vector<12x32xbf16> to vector<1x12x32xbf16>
    tpu.vector_store %arg4[%c0_35, %c0_36, %c0_37], %29 {strides = array<i32>} : memref<1x12x32xbf16, #tpu.memory_space<vmem>>, vector<1x12x32xbf16>,
    return
  }
  func.func @transform_0(%arg0: i32) -> (i32, i32, i32, i32) {
    %c0_i32 = arith.constant 0 : i32
    %c0_i32_0 = arith.constant 0 : i32
    %c0_i32_1 = arith.constant 0 : i32
    %c0_i32_2 = arith.constant 0 : i32
    return %arg0, %c0_i32, %c0_i32_0, %c0_i32_1 : i32, i32, i32, i32
  }
  func.func @transform_1(%arg0: i32) -> (i32, i32) {
    %c0_i32 = arith.constant 0 : i32
    %c0_i32_0 = arith.constant 0 : i32
    %c0_i32_1 = arith.constant 0 : i32
    return %c0_i32, %c0_i32_0 : i32, i32
  }
  func.func @transform_2(%arg0: i32) -> (i32, i32) {
    %c0_i32 = arith.constant 0 : i32
    %c0_i32_0 = arith.constant 0 : i32
    %c0_i32_1 = arith.constant 0 : i32
    return %c0_i32, %c0_i32_0 : i32, i32
  }
  func.func @transform_3(%arg0: i32) -> (i32, i32, i32) {
    %c0_i32 = arith.constant 0 : i32
    %c0_i32_0 = arith.constant 0 : i32
    %c0_i32_1 = arith.constant 0 : i32
    return %arg0, %c0_i32, %c0_i32_0 : i32, i32, i32
  }
}

module attributes {stable_mosaic.version = 11 : i64} {
  func.func @_enc_conv_kernel(%arg0: i32, %arg1: memref<1x4x8x32xbf16, #tpu.memory_space<vmem>>, %arg2: memref<288x64xbf16, #tpu.memory_space<vmem>>, %arg3: memref<1x64xf32, #tpu.memory_space<vmem>>, %arg4: memref<1x2x64xbf16, #tpu.memory_space<vmem>>) attributes {dimension_semantics = [#tpu.dimension_semantics<parallel>], iteration_bounds = array<i64: 2>, scalar_prefetch = 0 : i64, scratch_operands = 0 : i64, tpu.core_type = #tpu.core_type<tc>, window_params = [{transform_indices = @transform_0, window_bounds = array<i64: 1, 4, 8, 32>}, {pipeline_mode = #tpu.pipeline_mode<synchronous>, transform_indices = @transform_1, window_bounds = array<i64: 288, 64>}, {pipeline_mode = #tpu.pipeline_mode<synchronous>, transform_indices = @transform_2, window_bounds = array<i64: 1, 64>}, {transform_indices = @transform_3, window_bounds = array<i64: 1, 2, 64>}]} {
    %c0 = arith.constant 0 : index
    %c0_0 = arith.constant 0 : index
    %c0_1 = arith.constant 0 : index
    %c0_2 = arith.constant 0 : index
    %0 = vector.load %arg1[%c0, %c0_0, %c0_1, %c0_2] : memref<1x4x8x32xbf16, #tpu.memory_space<vmem>>, vector<1x1x2x32xbf16>
    %1 = vector.shape_cast %0 : vector<1x1x2x32xbf16> to vector<2x32xbf16>
    %c0_3 = arith.constant 0 : index
    %c1 = arith.constant 1 : index
    %c0_4 = arith.constant 0 : index
    %c0_5 = arith.constant 0 : index
    %2 = vector.load %arg1[%c0_3, %c1, %c0_4, %c0_5] : memref<1x4x8x32xbf16, #tpu.memory_space<vmem>>, vector<1x1x2x32xbf16>
    %3 = vector.shape_cast %2 : vector<1x1x2x32xbf16> to vector<2x32xbf16>
    %c0_6 = arith.constant 0 : index
    %c0_7 = arith.constant 0 : index
    %c1_8 = arith.constant 1 : index
    %c0_9 = arith.constant 0 : index
    %4 = vector.load %arg1[%c0_6, %c0_7, %c1_8, %c0_9] : memref<1x4x8x32xbf16, #tpu.memory_space<vmem>>, vector<1x1x2x32xbf16>
    %5 = vector.shape_cast %4 : vector<1x1x2x32xbf16> to vector<2x32xbf16>
    %c0_10 = arith.constant 0 : index
    %c2 = arith.constant 2 : index
    %c0_11 = arith.constant 0 : index
    %c0_12 = arith.constant 0 : index
    %6 = vector.load %arg1[%c0_10, %c2, %c0_11, %c0_12] : memref<1x4x8x32xbf16, #tpu.memory_space<vmem>>, vector<1x1x2x32xbf16>
    %7 = vector.shape_cast %6 : vector<1x1x2x32xbf16> to vector<2x32xbf16>
    %c0_13 = arith.constant 0 : index
    %c3 = arith.constant 3 : index
    %c0_14 = arith.constant 0 : index
    %c0_15 = arith.constant 0 : index
    %8 = vector.load %arg1[%c0_13, %c3, %c0_14, %c0_15] : memref<1x4x8x32xbf16, #tpu.memory_space<vmem>>, vector<1x1x2x32xbf16>
    %9 = vector.shape_cast %8 : vector<1x1x2x32xbf16> to vector<2x32xbf16>
    %c0_16 = arith.constant 0 : index
    %c2_17 = arith.constant 2 : index
    %c1_18 = arith.constant 1 : index
    %c0_19 = arith.constant 0 : index
    %10 = vector.load %arg1[%c0_16, %c2_17, %c1_18, %c0_19] : memref<1x4x8x32xbf16, #tpu.memory_space<vmem>>, vector<1x1x2x32xbf16>
    %11 = vector.shape_cast %10 : vector<1x1x2x32xbf16> to vector<2x32xbf16>
    %c0_20 = arith.constant 0 : index
    %c0_21 = arith.constant 0 : index
    %c2_22 = arith.constant 2 : index
    %c0_23 = arith.constant 0 : index
    %12 = vector.load %arg1[%c0_20, %c0_21, %c2_22, %c0_23] : memref<1x4x8x32xbf16, #tpu.memory_space<vmem>>, vector<1x1x2x32xbf16>
    %13 = vector.shape_cast %12 : vector<1x1x2x32xbf16> to vector<2x32xbf16>
    %c0_24 = arith.constant 0 : index
    %c1_25 = arith.constant 1 : index
    %c2_26 = arith.constant 2 : index
    %c0_27 = arith.constant 0 : index
    %14 = vector.load %arg1[%c0_24, %c1_25, %c2_26, %c0_27] : memref<1x4x8x32xbf16, #tpu.memory_space<vmem>>, vector<1x1x2x32xbf16>
    %15 = vector.shape_cast %14 : vector<1x1x2x32xbf16> to vector<2x32xbf16>
    %c0_28 = arith.constant 0 : index
    %c0_29 = arith.constant 0 : index
    %c3_30 = arith.constant 3 : index
    %c0_31 = arith.constant 0 : index
    %16 = vector.load %arg1[%c0_28, %c0_29, %c3_30, %c0_31] : memref<1x4x8x32xbf16, #tpu.memory_space<vmem>>, vector<1x1x2x32xbf16>
    %17 = vector.shape_cast %16 : vector<1x1x2x32xbf16> to vector<2x32xbf16>
    %18 = tpu.concatenate %1, %3, %5, %7, %9, %11, %13, %15, %17 in 1 : vector<2x32xbf16>, vector<2x32xbf16>, vector<2x32xbf16>, vector<2x32xbf16>, vector<2x32xbf16>, vector<2x32xbf16>, vector<2x32xbf16>, vector<2x32xbf16>, vector<2x32xbf16> -> vector<2x288xbf16>
    %c0_32 = arith.constant 0 : index
    %c0_33 = arith.constant 0 : index
    %19 = vector.load %arg2[%c0_32, %c0_33] : memref<288x64xbf16, #tpu.memory_space<vmem>>, vector<288x64xbf16>
    %cst = arith.constant dense<0.000000e+00> : vector<2x64xf32>
    %20 = tpu.matmul %18, %19, %cst {dimension_numbers = #tpu.dot_dimension_numbers<[1], [0], [0], [1], [0, 0, 1, 1], [], []>} : vector<2x288xbf16>, vector<288x64xbf16>, vector<2x64xf32> -> vector<2x64xf32>
    %c0_34 = arith.constant 0 : index
    %c0_35 = arith.constant 0 : index
    %21 = vector.load %arg3[%c0_34, %c0_35] : memref<1x64xf32, #tpu.memory_space<vmem>>, vector<1x64xf32>
    %22 = vector.broadcast %21 : vector<1x64xf32> to vector<2x64xf32>
    %23 = arith.addf %20, %22 : vector<2x64xf32>
    %cst_36 = arith.constant 0.000000e+00 : f32
    %24 = vector.broadcast %cst_36 : f32 to vector<2x64xf32>
    %25 = arith.maximumf %23, %24 : vector<2x64xf32>
    %26 = arith.truncf %25 : vector<2x64xf32> to vector<2x64xbf16>
    %c0_37 = arith.constant 0 : index
    %c0_38 = arith.constant 0 : index
    %c0_39 = arith.constant 0 : index
    %27 = vector.load %arg4[%c0_37, %c0_38, %c0_39] : memref<1x2x64xbf16, #tpu.memory_space<vmem>>, vector<1x2x64xbf16>
    %28 = vector.shape_cast %27 : vector<1x2x64xbf16> to vector<2x64xbf16>
    %29 = vector.shape_cast %26 : vector<2x64xbf16> to vector<1x2x64xbf16>
    tpu.vector_store %arg4[%c0_37, %c0_38, %c0_39], %29 {strides = array<i32>} : memref<1x2x64xbf16, #tpu.memory_space<vmem>>, vector<1x2x64xbf16>,
    return
  }
  func.func @transform_0(%arg0: i32) -> (i32, i32, i32, i32) {
    %c0_i32 = arith.constant 0 : i32
    %c0_i32_0 = arith.constant 0 : i32
    %c0_i32_1 = arith.constant 0 : i32
    %c0_i32_2 = arith.constant 0 : i32
    return %arg0, %c0_i32, %c0_i32_0, %c0_i32_1 : i32, i32, i32, i32
  }
  func.func @transform_1(%arg0: i32) -> (i32, i32) {
    %c0_i32 = arith.constant 0 : i32
    %c0_i32_0 = arith.constant 0 : i32
    %c0_i32_1 = arith.constant 0 : i32
    return %c0_i32, %c0_i32_0 : i32, i32
  }
  func.func @transform_2(%arg0: i32) -> (i32, i32) {
    %c0_i32 = arith.constant 0 : i32
    %c0_i32_0 = arith.constant 0 : i32
    %c0_i32_1 = arith.constant 0 : i32
    return %c0_i32, %c0_i32_0 : i32, i32
  }
  func.func @transform_3(%arg0: i32) -> (i32, i32, i32) {
    %c0_i32 = arith.constant 0 : i32
    %c0_i32_0 = arith.constant 0 : i32
    %c0_i32_1 = arith.constant 0 : i32
    return %arg0, %c0_i32, %c0_i32_0 : i32, i32, i32
  }
}

module attributes {stable_mosaic.version = 11 : i64} {
  func.func @_enc_head_kernel(%arg0: i32, %arg1: memref<2x512xbf16, #tpu.memory_space<vmem>>, %arg2: memref<512x256xbf16, #tpu.memory_space<vmem>>, %arg3: memref<1x256xf32, #tpu.memory_space<vmem>>, %arg4: memref<256x64xbf16, #tpu.memory_space<vmem>>, %arg5: memref<1x64xf32, #tpu.memory_space<vmem>>, %arg6: memref<32x32xbf16, #tpu.memory_space<vmem>>, %arg7: memref<2x32xf32, #tpu.memory_space<vmem>>, %arg8: memref<2x32xf32, #tpu.memory_space<vmem>>, %arg9: memref<2x32xf32, #tpu.memory_space<vmem>>, %arg10: memref<2x1xf32, #tpu.memory_space<vmem>>, %arg11: memref<2x256xf32, #tpu.memory_space<vmem>>) attributes {dimension_semantics = [#tpu.dimension_semantics<arbitrary>], iteration_bounds = array<i64: 1>, scalar_prefetch = 0 : i64, scratch_operands = 1 : i64, tpu.core_type = #tpu.core_type<tc>, window_params = [{transform_indices = @transform_0, window_bounds = array<i64: 2, 512>}, {transform_indices = @transform_1, window_bounds = array<i64: 512, 256>}, {pipeline_mode = #tpu.pipeline_mode<synchronous>, transform_indices = @transform_2, window_bounds = array<i64: 1, 256>}, {pipeline_mode = #tpu.pipeline_mode<synchronous>, transform_indices = @transform_3, window_bounds = array<i64: 256, 64>}, {pipeline_mode = #tpu.pipeline_mode<synchronous>, transform_indices = @transform_4, window_bounds = array<i64: 1, 64>}, {pipeline_mode = #tpu.pipeline_mode<synchronous>, transform_indices = @transform_5, window_bounds = array<i64: 32, 32>}, {pipeline_mode = #tpu.pipeline_mode<synchronous>, transform_indices = @transform_6, window_bounds = array<i64: 2, 32>}, {pipeline_mode = #tpu.pipeline_mode<synchronous>, transform_indices = @transform_7, window_bounds = array<i64: 2, 32>}, {pipeline_mode = #tpu.pipeline_mode<synchronous>, transform_indices = @transform_8, window_bounds = array<i64: 2, 32>}, {pipeline_mode = #tpu.pipeline_mode<synchronous>, transform_indices = @transform_9, window_bounds = array<i64: 2, 1>}]} {
    %c0_i32 = arith.constant 0 : i32
    %0 = arith.cmpi eq, %arg0, %c0_i32 : i32
    %1 = arith.extui %0 : i1 to i32
    %c0_i32_0 = arith.constant 0 : i32
    %2 = arith.cmpi ne, %1, %c0_i32_0 : i32
    scf.if %2 {
      %cst_10 = arith.constant 0.000000e+00 : f32
      %12 = vector.broadcast %cst_10 : f32 to vector<2x256xf32>
      %c0_11 = arith.constant 0 : index
      %c0_12 = arith.constant 0 : index
      %13 = vector.load %arg11[%c0_11, %c0_12] : memref<2x256xf32, #tpu.memory_space<vmem>>, vector<2x256xf32>
      tpu.vector_store %arg11[%c0_11, %c0_12], %12 {strides = array<i32>} : memref<2x256xf32, #tpu.memory_space<vmem>>, vector<2x256xf32>,
    } else {
    }
    %c0 = arith.constant 0 : index
    %c0_1 = arith.constant 0 : index
    %3 = vector.load %arg11[%c0, %c0_1] : memref<2x256xf32, #tpu.memory_space<vmem>>, vector<2x256xf32>
    %c0_2 = arith.constant 0 : index
    %c0_3 = arith.constant 0 : index
    %4 = vector.load %arg1[%c0_2, %c0_3] : memref<2x512xbf16, #tpu.memory_space<vmem>>, vector<2x512xbf16>
    %c0_4 = arith.constant 0 : index
    %c0_5 = arith.constant 0 : index
    %5 = vector.load %arg2[%c0_4, %c0_5] : memref<512x256xbf16, #tpu.memory_space<vmem>>, vector<512x256xbf16>
    %cst = arith.constant dense<0.000000e+00> : vector<2x256xf32>
    %6 = tpu.matmul %4, %5, %cst {dimension_numbers = #tpu.dot_dimension_numbers<[1], [0], [0], [1], [0, 0, 1, 1], [], []>} : vector<2x512xbf16>, vector<512x256xbf16>, vector<2x256xf32> -> vector<2x256xf32>
    %7 = arith.addf %3, %6 : vector<2x256xf32>
    %c0_6 = arith.constant 0 : index
    %c0_7 = arith.constant 0 : index
    %8 = vector.load %arg11[%c0_6, %c0_7] : memref<2x256xf32, #tpu.memory_space<vmem>>, vector<2x256xf32>
    tpu.vector_store %arg11[%c0_6, %c0_7], %7 {strides = array<i32>} : memref<2x256xf32, #tpu.memory_space<vmem>>, vector<2x256xf32>,
    %c0_i32_8 = arith.constant 0 : i32
    %9 = arith.cmpi eq, %arg0, %c0_i32_8 : i32
    %10 = arith.extui %9 : i1 to i32
    %c0_i32_9 = arith.constant 0 : i32
    %11 = arith.cmpi ne, %10, %c0_i32_9 : i32
    scf.if %11 {
      %c0_10 = arith.constant 0 : index
      %c0_11 = arith.constant 0 : index
      %12 = vector.load %arg11[%c0_10, %c0_11] : memref<2x256xf32, #tpu.memory_space<vmem>>, vector<2x256xf32>
      %c0_12 = arith.constant 0 : index
      %c0_13 = arith.constant 0 : index
      %13 = vector.load %arg3[%c0_12, %c0_13] : memref<1x256xf32, #tpu.memory_space<vmem>>, vector<1x256xf32>
      %14 = vector.broadcast %13 : vector<1x256xf32> to vector<2x256xf32>
      %15 = arith.addf %12, %14 : vector<2x256xf32>
      %cst_14 = arith.constant 0.000000e+00 : f32
      %16 = vector.broadcast %cst_14 : f32 to vector<2x256xf32>
      %17 = arith.maximumf %15, %16 : vector<2x256xf32>
      %18 = arith.truncf %17 : vector<2x256xf32> to vector<2x256xbf16>
      %c0_15 = arith.constant 0 : index
      %c0_16 = arith.constant 0 : index
      %19 = vector.load %arg4[%c0_15, %c0_16] : memref<256x64xbf16, #tpu.memory_space<vmem>>, vector<256x64xbf16>
      %cst_17 = arith.constant dense<0.000000e+00> : vector<2x64xf32>
      %20 = tpu.matmul %18, %19, %cst_17 {dimension_numbers = #tpu.dot_dimension_numbers<[1], [0], [0], [1], [0, 0, 1, 1], [], []>} : vector<2x256xbf16>, vector<256x64xbf16>, vector<2x64xf32> -> vector<2x64xf32>
      %c0_18 = arith.constant 0 : index
      %c0_19 = arith.constant 0 : index
      %21 = vector.load %arg5[%c0_18, %c0_19] : memref<1x64xf32, #tpu.memory_space<vmem>>, vector<1x64xf32>
      %22 = vector.broadcast %21 : vector<1x64xf32> to vector<2x64xf32>
      %23 = arith.addf %20, %22 : vector<2x64xf32>
      %24 = vector.extract_strided_slice %23 {offsets = [0, 0], sizes = [2, 32], strides = [1, 1]} : vector<2x64xf32> to vector<2x32xf32>
      %25 = vector.extract_strided_slice %23 {offsets = [0, 32], sizes = [2, 32], strides = [1, 1]} : vector<2x64xf32> to vector<2x32xf32>
      %cst_20 = arith.constant 0.000000e+00 : f32
      %26 = vector.broadcast %cst_20 : f32 to vector<2x32xf32>
      %27 = arith.maximumf %25, %26 : vector<2x32xf32>
      %28 = vector.broadcast %cst_20 : f32 to vector<2x32xf32>
      %29 = arith.subf %25, %28 : vector<2x32xf32>
      %30 = arith.cmpf one, %29, %29 : vector<2x32xf32>
      %31 = vector.broadcast %cst_20 : f32 to vector<2x32xf32>
      %32 = arith.addf %25, %31 : vector<2x32xf32>
      %33 = math.absf %29 : vector<2x32xf32>
      %cst_21 = arith.constant 0.000000e+00 : f32
      %34 = vector.broadcast %cst_21 : f32 to vector<2x32xf32>
      %35 = arith.subf %34, %33 : vector<2x32xf32>
      %36 = math.exp %35 : vector<2x32xf32>
      %37 = math.log1p %36 : vector<2x32xf32>
      %38 = arith.addf %27, %37 : vector<2x32xf32>
      %39 = arith.select %30, %32, %38 : vector<2x32xi1>, vector<2x32xf32>
      %cst_22 = arith.constant 1.000000e-10 : f32
      %40 = vector.broadcast %cst_22 : f32 to vector<2x32xf32>
      %41 = arith.addf %39, %40 : vector<2x32xf32>
      %c0_23 = arith.constant 0 : index
      %c0_24 = arith.constant 0 : index
      %42 = vector.load %arg7[%c0_23, %c0_24] : memref<2x32xf32, #tpu.memory_space<vmem>>, vector<2x32xf32>
      %43 = arith.mulf %41, %42 : vector<2x32xf32>
      %44 = arith.addf %24, %43 : vector<2x32xf32>
      %c0_25 = arith.constant 0 : index
      %c0_26 = arith.constant 0 : index
      %45 = vector.load %arg8[%c0_25, %c0_26] : memref<2x32xf32, #tpu.memory_space<vmem>>, vector<2x32xf32>
      tpu.vector_store %arg8[%c0_25, %c0_26], %44 {strides = array<i32>} : memref<2x32xf32, #tpu.memory_space<vmem>>, vector<2x32xf32>,
      %46 = arith.truncf %44 : vector<2x32xf32> to vector<2x32xbf16>
      %c0_27 = arith.constant 0 : index
      %c0_28 = arith.constant 0 : index
      %47 = vector.load %arg6[%c0_27, %c0_28] : memref<32x32xbf16, #tpu.memory_space<vmem>>, vector<32x32xbf16>
      %cst_29 = arith.constant dense<0.000000e+00> : vector<2x32xf32>
      %48 = tpu.matmul %46, %47, %cst_29 {dimension_numbers = #tpu.dot_dimension_numbers<[1], [0], [0], [1], [0, 0, 1, 1], [], []>} : vector<2x32xbf16>, vector<32x32xbf16>, vector<2x32xf32> -> vector<2x32xf32>
      %c0_30 = arith.constant 0 : index
      %c0_31 = arith.constant 0 : index
      %49 = vector.load %arg9[%c0_30, %c0_31] : memref<2x32xf32, #tpu.memory_space<vmem>>, vector<2x32xf32>
      tpu.vector_store %arg9[%c0_30, %c0_31], %48 {strides = array<i32>} : memref<2x32xf32, #tpu.memory_space<vmem>>, vector<2x32xf32>,
      %cst_32 = arith.constant 1.000000e+00 : f32
      %50 = math.log %cst_32 : f32
      %51 = math.log %41 : vector<2x32xf32>
      %52 = vector.broadcast %50 : f32 to vector<2x32xf32>
      %53 = arith.subf %52, %51 : vector<2x32xf32>
      %54 = arith.mulf %41, %41 : vector<2x32xf32>
      %55 = arith.mulf %24, %24 : vector<2x32xf32>
      %56 = arith.addf %54, %55 : vector<2x32xf32>
      %cst_33 = arith.constant 2.000000e+00 : f32
      %cst_34 = arith.constant 1.000000e+00 : f32
      %57 = arith.mulf %cst_33, %cst_34 : f32
      %cst_35 = arith.constant 1.000000e+00 : f32
      %58 = arith.mulf %57, %cst_35 : f32
      %59 = vector.broadcast %58 : f32 to vector<2x32xf32>
      %60 = arith.divf %56, %59 : vector<2x32xf32>
      %61 = arith.addf %53, %60 : vector<2x32xf32>
      %cst_36 = arith.constant 5.000000e-01 : f32
      %62 = vector.broadcast %cst_36 : f32 to vector<2x32xf32>
      %63 = arith.subf %61, %62 : vector<2x32xf32>
      %cst_37 = arith.constant dense<0.000000e+00> : vector<2xf32>
      %64 = vector.multi_reduction <add>, %63, %cst_37 [1] : vector<2x32xf32> to vector<2xf32>
      %65 = vector.shape_cast %64 : vector<2xf32> to vector<2x1xf32>
      %c0_38 = arith.constant 0 : index
      %c0_39 = arith.constant 0 : index
      %66 = vector.load %arg10[%c0_38, %c0_39] : memref<2x1xf32, #tpu.memory_space<vmem>>, vector<2x1xf32>
      tpu.vector_store %arg10[%c0_38, %c0_39], %65 {strides = array<i32>} : memref<2x1xf32, #tpu.memory_space<vmem>>, vector<2x1xf32>,
    } else {
    }
    return
  }
  func.func @transform_0(%arg0: i32) -> (i32, i32) {
    %c0_i32 = arith.constant 0 : i32
    %c0_i32_0 = arith.constant 0 : i32
    return %c0_i32, %arg0 : i32, i32
  }
  func.func @transform_1(%arg0: i32) -> (i32, i32) {
    %c0_i32 = arith.constant 0 : i32
    %c0_i32_0 = arith.constant 0 : i32
    return %arg0, %c0_i32 : i32, i32
  }
  func.func @transform_2(%arg0: i32) -> (i32, i32) {
    %c0_i32 = arith.constant 0 : i32
    %c0_i32_0 = arith.constant 0 : i32
    %c0_i32_1 = arith.constant 0 : i32
    return %c0_i32, %c0_i32_0 : i32, i32
  }
  func.func @transform_3(%arg0: i32) -> (i32, i32) {
    %c0_i32 = arith.constant 0 : i32
    %c0_i32_0 = arith.constant 0 : i32
    %c0_i32_1 = arith.constant 0 : i32
    return %c0_i32, %c0_i32_0 : i32, i32
  }
  func.func @transform_4(%arg0: i32) -> (i32, i32) {
    %c0_i32 = arith.constant 0 : i32
    %c0_i32_0 = arith.constant 0 : i32
    %c0_i32_1 = arith.constant 0 : i32
    return %c0_i32, %c0_i32_0 : i32, i32
  }
  func.func @transform_5(%arg0: i32) -> (i32, i32) {
    %c0_i32 = arith.constant 0 : i32
    %c0_i32_0 = arith.constant 0 : i32
    %c0_i32_1 = arith.constant 0 : i32
    return %c0_i32, %c0_i32_0 : i32, i32
  }
  func.func @transform_6(%arg0: i32) -> (i32, i32) {
    %c0_i32 = arith.constant 0 : i32
    %c0_i32_0 = arith.constant 0 : i32
    %c0_i32_1 = arith.constant 0 : i32
    return %c0_i32, %c0_i32_0 : i32, i32
  }
  func.func @transform_7(%arg0: i32) -> (i32, i32) {
    %c0_i32 = arith.constant 0 : i32
    %c0_i32_0 = arith.constant 0 : i32
    %c0_i32_1 = arith.constant 0 : i32
    return %c0_i32, %c0_i32_0 : i32, i32
  }
  func.func @transform_8(%arg0: i32) -> (i32, i32) {
    %c0_i32 = arith.constant 0 : i32
    %c0_i32_0 = arith.constant 0 : i32
    %c0_i32_1 = arith.constant 0 : i32
    return %c0_i32, %c0_i32_0 : i32, i32
  }
  func.func @transform_9(%arg0: i32) -> (i32, i32) {
    %c0_i32 = arith.constant 0 : i32
    %c0_i32_0 = arith.constant 0 : i32
    %c0_i32_1 = arith.constant 0 : i32
    return %c0_i32, %c0_i32_0 : i32, i32
  }
}

module attributes {stable_mosaic.version = 11 : i64} {
  func.func @_decoder_kernel(%arg0: i32, %arg1: i32, %arg2: memref<2x32xf32, #tpu.memory_space<vmem>>, %arg3: memref<1x344x32xbf16, #tpu.memory_space<vmem>>, %arg4: memref<288x32xbf16, #tpu.memory_space<vmem>>, %arg5: memref<1x32xf32, #tpu.memory_space<vmem>>, %arg6: memref<288x32xbf16, #tpu.memory_space<vmem>>, %arg7: memref<1x32xf32, #tpu.memory_space<vmem>>, %arg8: memref<288x32xbf16, #tpu.memory_space<vmem>>, %arg9: memref<1x32xf32, #tpu.memory_space<vmem>>, %arg10: memref<32x4xbf16, #tpu.memory_space<vmem>>, %arg11: memref<1x4xf32, #tpu.memory_space<vmem>>, %arg12: memref<1x1x4x192xf32, #tpu.memory_space<vmem>>, %arg13: memref<344x32xbf16, #tpu.memory_space<vmem>>, %arg14: memref<296x32xbf16, #tpu.memory_space<vmem>>, %arg15: memref<248x32xbf16, #tpu.memory_space<vmem>>) attributes {dimension_semantics = [#tpu.dimension_semantics<parallel>, #tpu.dimension_semantics<parallel>], iteration_bounds = array<i64: 2, 2>, scalar_prefetch = 0 : i64, scratch_operands = 3 : i64, tpu.core_type = #tpu.core_type<tc>, window_params = [{pipeline_mode = #tpu.pipeline_mode<synchronous>, transform_indices = @transform_0, window_bounds = array<i64: 2, 32>}, {transform_indices = @transform_1, window_bounds = array<i64: 1, 344, 32>}, {pipeline_mode = #tpu.pipeline_mode<synchronous>, transform_indices = @transform_2, window_bounds = array<i64: 288, 32>}, {pipeline_mode = #tpu.pipeline_mode<synchronous>, transform_indices = @transform_3, window_bounds = array<i64: 1, 32>}, {pipeline_mode = #tpu.pipeline_mode<synchronous>, transform_indices = @transform_4, window_bounds = array<i64: 288, 32>}, {pipeline_mode = #tpu.pipeline_mode<synchronous>, transform_indices = @transform_5, window_bounds = array<i64: 1, 32>}, {pipeline_mode = #tpu.pipeline_mode<synchronous>, transform_indices = @transform_6, window_bounds = array<i64: 288, 32>}, {pipeline_mode = #tpu.pipeline_mode<synchronous>, transform_indices = @transform_7, window_bounds = array<i64: 1, 32>}, {pipeline_mode = #tpu.pipeline_mode<synchronous>, transform_indices = @transform_8, window_bounds = array<i64: 32, 4>}, {pipeline_mode = #tpu.pipeline_mode<synchronous>, transform_indices = @transform_9, window_bounds = array<i64: 1, 4>}, {transform_indices = @transform_10, window_bounds = array<i64: 1, 1, 4, 192>}]} {
    %0 = arith.index_cast %arg0 : i32 to index
    %c0 = arith.constant 0 : index
    %1 = vector.load %arg2[%0, %c0] : memref<2x32xf32, #tpu.memory_space<vmem>>, vector<1x32xf32>
    %c0_0 = arith.constant 0 : index
    %c0_1 = arith.constant 0 : index
    %c0_2 = arith.constant 0 : index
    %2 = vector.load %arg3[%c0_0, %c0_1, %c0_2] : memref<1x344x32xbf16, #tpu.memory_space<vmem>>, vector<1x344x32xbf16>
    %3 = vector.shape_cast %2 : vector<1x344x32xbf16> to vector<344x32xbf16>
    %4 = arith.extf %3 : vector<344x32xbf16> to vector<344x32xf32>
    %5 = vector.broadcast %1 : vector<1x32xf32> to vector<344x32xf32>
    %6 = arith.addf %4, %5 : vector<344x32xf32>
    %cst = arith.constant 0.000000e+00 : f32
    %7 = vector.broadcast %cst : f32 to vector<344x32xf32>
    %8 = arith.maximumf %6, %7 : vector<344x32xf32>
    %9 = arith.truncf %8 : vector<344x32xf32> to vector<344x32xbf16>
    %c0_3 = arith.constant 0 : index
    %c0_4 = arith.constant 0 : index
    %10 = vector.load %arg13[%c0_3, %c0_4] : memref<344x32xbf16, #tpu.memory_space<vmem>>, vector<344x32xbf16>
    tpu.vector_store %arg13[%c0_3, %c0_4], %9 {strides = array<i32>} : memref<344x32xbf16, #tpu.memory_space<vmem>>, vector<344x32xbf16>,
    %c0_5 = arith.constant 0 : index
    %c0_6 = arith.constant 0 : index
    %11 = vector.load %arg13[%c0_5, %c0_6] : memref<344x32xbf16, #tpu.memory_space<vmem>>, vector<288x32xbf16>
    %c1 = arith.constant 1 : index
    %c0_7 = arith.constant 0 : index
    %12 = vector.load %arg13[%c1, %c0_7] : memref<344x32xbf16, #tpu.memory_space<vmem>>, vector<288x32xbf16>
    %c2 = arith.constant 2 : index
    %c0_8 = arith.constant 0 : index
    %13 = vector.load %arg13[%c2, %c0_8] : memref<344x32xbf16, #tpu.memory_space<vmem>>, vector<288x32xbf16>
    %c24 = arith.constant 24 : index
    %c0_9 = arith.constant 0 : index
    %14 = vector.load %arg13[%c24, %c0_9] : memref<344x32xbf16, #tpu.memory_space<vmem>>, vector<288x32xbf16>
    %c25 = arith.constant 25 : index
    %c0_10 = arith.constant 0 : index
    %15 = vector.load %arg13[%c25, %c0_10] : memref<344x32xbf16, #tpu.memory_space<vmem>>, vector<288x32xbf16>
    %c26 = arith.constant 26 : index
    %c0_11 = arith.constant 0 : index
    %16 = vector.load %arg13[%c26, %c0_11] : memref<344x32xbf16, #tpu.memory_space<vmem>>, vector<288x32xbf16>
    %c48 = arith.constant 48 : index
    %c0_12 = arith.constant 0 : index
    %17 = vector.load %arg13[%c48, %c0_12] : memref<344x32xbf16, #tpu.memory_space<vmem>>, vector<288x32xbf16>
    %c49 = arith.constant 49 : index
    %c0_13 = arith.constant 0 : index
    %18 = vector.load %arg13[%c49, %c0_13] : memref<344x32xbf16, #tpu.memory_space<vmem>>, vector<288x32xbf16>
    %c50 = arith.constant 50 : index
    %c0_14 = arith.constant 0 : index
    %19 = vector.load %arg13[%c50, %c0_14] : memref<344x32xbf16, #tpu.memory_space<vmem>>, vector<288x32xbf16>
    %20 = tpu.concatenate %11, %12, %13, %14, %15, %16, %17, %18, %19 in 1 : vector<288x32xbf16>, vector<288x32xbf16>, vector<288x32xbf16>, vector<288x32xbf16>, vector<288x32xbf16>, vector<288x32xbf16>, vector<288x32xbf16>, vector<288x32xbf16>, vector<288x32xbf16> -> vector<288x288xbf16>
    %c0_15 = arith.constant 0 : index
    %c0_16 = arith.constant 0 : index
    %21 = vector.load %arg4[%c0_15, %c0_16] : memref<288x32xbf16, #tpu.memory_space<vmem>>, vector<288x32xbf16>
    %cst_17 = arith.constant dense<0.000000e+00> : vector<288x32xf32>
    %22 = tpu.matmul %20, %21, %cst_17 {dimension_numbers = #tpu.dot_dimension_numbers<[1], [0], [0], [1], [0, 0, 1, 1], [], []>} : vector<288x288xbf16>, vector<288x32xbf16>, vector<288x32xf32> -> vector<288x32xf32>
    %c0_18 = arith.constant 0 : index
    %c0_19 = arith.constant 0 : index
    %23 = vector.load %arg5[%c0_18, %c0_19] : memref<1x32xf32, #tpu.memory_space<vmem>>, vector<1x32xf32>
    %24 = vector.broadcast %23 : vector<1x32xf32> to vector<288x32xf32>
    %25 = arith.addf %22, %24 : vector<288x32xf32>
    %cst_20 = arith.constant 0.000000e+00 : f32
    %26 = vector.broadcast %cst_20 : f32 to vector<288x32xf32>
    %27 = arith.maximumf %25, %26 : vector<288x32xf32>
    %28 = arith.truncf %27 : vector<288x32xf32> to vector<288x32xbf16>
    %c0_21 = arith.constant 0 : index
    %c0_22 = arith.constant 0 : index
    %29 = vector.load %arg14[%c0_21, %c0_22] : memref<296x32xbf16, #tpu.memory_space<vmem>>, vector<288x32xbf16>
    tpu.vector_store %arg14[%c0_21, %c0_22], %28 {strides = array<i32>} : memref<296x32xbf16, #tpu.memory_space<vmem>>, vector<288x32xbf16>,
    %cst_23 = arith.constant 0.000000e+00 : bf16
    %30 = vector.broadcast %cst_23 : bf16 to vector<8x32xbf16>
    %c288 = arith.constant 288 : index
    %c0_24 = arith.constant 0 : index
    %31 = vector.load %arg14[%c288, %c0_24] : memref<296x32xbf16, #tpu.memory_space<vmem>>, vector<8x32xbf16>
    tpu.vector_store %arg14[%c288, %c0_24], %30 {strides = array<i32>} : memref<296x32xbf16, #tpu.memory_space<vmem>>, vector<8x32xbf16>,
    %c0_25 = arith.constant 0 : index
    %c0_26 = arith.constant 0 : index
    %32 = vector.load %arg14[%c0_25, %c0_26] : memref<296x32xbf16, #tpu.memory_space<vmem>>, vector<240x32xbf16>
    %c1_27 = arith.constant 1 : index
    %c0_28 = arith.constant 0 : index
    %33 = vector.load %arg14[%c1_27, %c0_28] : memref<296x32xbf16, #tpu.memory_space<vmem>>, vector<240x32xbf16>
    %c2_29 = arith.constant 2 : index
    %c0_30 = arith.constant 0 : index
    %34 = vector.load %arg14[%c2_29, %c0_30] : memref<296x32xbf16, #tpu.memory_space<vmem>>, vector<240x32xbf16>
    %c24_31 = arith.constant 24 : index
    %c0_32 = arith.constant 0 : index
    %35 = vector.load %arg14[%c24_31, %c0_32] : memref<296x32xbf16, #tpu.memory_space<vmem>>, vector<240x32xbf16>
    %c25_33 = arith.constant 25 : index
    %c0_34 = arith.constant 0 : index
    %36 = vector.load %arg14[%c25_33, %c0_34] : memref<296x32xbf16, #tpu.memory_space<vmem>>, vector<240x32xbf16>
    %c26_35 = arith.constant 26 : index
    %c0_36 = arith.constant 0 : index
    %37 = vector.load %arg14[%c26_35, %c0_36] : memref<296x32xbf16, #tpu.memory_space<vmem>>, vector<240x32xbf16>
    %c48_37 = arith.constant 48 : index
    %c0_38 = arith.constant 0 : index
    %38 = vector.load %arg14[%c48_37, %c0_38] : memref<296x32xbf16, #tpu.memory_space<vmem>>, vector<240x32xbf16>
    %c49_39 = arith.constant 49 : index
    %c0_40 = arith.constant 0 : index
    %39 = vector.load %arg14[%c49_39, %c0_40] : memref<296x32xbf16, #tpu.memory_space<vmem>>, vector<240x32xbf16>
    %c50_41 = arith.constant 50 : index
    %c0_42 = arith.constant 0 : index
    %40 = vector.load %arg14[%c50_41, %c0_42] : memref<296x32xbf16, #tpu.memory_space<vmem>>, vector<240x32xbf16>
    %41 = tpu.concatenate %32, %33, %34, %35, %36, %37, %38, %39, %40 in 1 : vector<240x32xbf16>, vector<240x32xbf16>, vector<240x32xbf16>, vector<240x32xbf16>, vector<240x32xbf16>, vector<240x32xbf16>, vector<240x32xbf16>, vector<240x32xbf16>, vector<240x32xbf16> -> vector<240x288xbf16>
    %c0_43 = arith.constant 0 : index
    %c0_44 = arith.constant 0 : index
    %42 = vector.load %arg6[%c0_43, %c0_44] : memref<288x32xbf16, #tpu.memory_space<vmem>>, vector<288x32xbf16>
    %cst_45 = arith.constant dense<0.000000e+00> : vector<240x32xf32>
    %43 = tpu.matmul %41, %42, %cst_45 {dimension_numbers = #tpu.dot_dimension_numbers<[1], [0], [0], [1], [0, 0, 1, 1], [], []>} : vector<240x288xbf16>, vector<288x32xbf16>, vector<240x32xf32> -> vector<240x32xf32>
    %c0_46 = arith.constant 0 : index
    %c0_47 = arith.constant 0 : index
    %44 = vector.load %arg7[%c0_46, %c0_47] : memref<1x32xf32, #tpu.memory_space<vmem>>, vector<1x32xf32>
    %45 = vector.broadcast %44 : vector<1x32xf32> to vector<240x32xf32>
    %46 = arith.addf %43, %45 : vector<240x32xf32>
    %cst_48 = arith.constant 0.000000e+00 : f32
    %47 = vector.broadcast %cst_48 : f32 to vector<240x32xf32>
    %48 = arith.maximumf %46, %47 : vector<240x32xf32>
    %49 = arith.truncf %48 : vector<240x32xf32> to vector<240x32xbf16>
    %c0_49 = arith.constant 0 : index
    %c0_50 = arith.constant 0 : index
    %50 = vector.load %arg15[%c0_49, %c0_50] : memref<248x32xbf16, #tpu.memory_space<vmem>>, vector<240x32xbf16>
    tpu.vector_store %arg15[%c0_49, %c0_50], %49 {strides = array<i32>} : memref<248x32xbf16, #tpu.memory_space<vmem>>, vector<240x32xbf16>,
    %cst_51 = arith.constant 0.000000e+00 : bf16
    %51 = vector.broadcast %cst_51 : bf16 to vector<8x32xbf16>
    %c240 = arith.constant 240 : index
    %c0_52 = arith.constant 0 : index
    %52 = vector.load %arg15[%c240, %c0_52] : memref<248x32xbf16, #tpu.memory_space<vmem>>, vector<8x32xbf16>
    tpu.vector_store %arg15[%c240, %c0_52], %51 {strides = array<i32>} : memref<248x32xbf16, #tpu.memory_space<vmem>>, vector<8x32xbf16>,
    %c0_53 = arith.constant 0 : index
    %c0_54 = arith.constant 0 : index
    %53 = vector.load %arg15[%c0_53, %c0_54] : memref<248x32xbf16, #tpu.memory_space<vmem>>, vector<192x32xbf16>
    %c1_55 = arith.constant 1 : index
    %c0_56 = arith.constant 0 : index
    %54 = vector.load %arg15[%c1_55, %c0_56] : memref<248x32xbf16, #tpu.memory_space<vmem>>, vector<192x32xbf16>
    %c2_57 = arith.constant 2 : index
    %c0_58 = arith.constant 0 : index
    %55 = vector.load %arg15[%c2_57, %c0_58] : memref<248x32xbf16, #tpu.memory_space<vmem>>, vector<192x32xbf16>
    %c24_59 = arith.constant 24 : index
    %c0_60 = arith.constant 0 : index
    %56 = vector.load %arg15[%c24_59, %c0_60] : memref<248x32xbf16, #tpu.memory_space<vmem>>, vector<192x32xbf16>
    %c25_61 = arith.constant 25 : index
    %c0_62 = arith.constant 0 : index
    %57 = vector.load %arg15[%c25_61, %c0_62] : memref<248x32xbf16, #tpu.memory_space<vmem>>, vector<192x32xbf16>
    %c26_63 = arith.constant 26 : index
    %c0_64 = arith.constant 0 : index
    %58 = vector.load %arg15[%c26_63, %c0_64] : memref<248x32xbf16, #tpu.memory_space<vmem>>, vector<192x32xbf16>
    %c48_65 = arith.constant 48 : index
    %c0_66 = arith.constant 0 : index
    %59 = vector.load %arg15[%c48_65, %c0_66] : memref<248x32xbf16, #tpu.memory_space<vmem>>, vector<192x32xbf16>
    %c49_67 = arith.constant 49 : index
    %c0_68 = arith.constant 0 : index
    %60 = vector.load %arg15[%c49_67, %c0_68] : memref<248x32xbf16, #tpu.memory_space<vmem>>, vector<192x32xbf16>
    %c50_69 = arith.constant 50 : index
    %c0_70 = arith.constant 0 : index
    %61 = vector.load %arg15[%c50_69, %c0_70] : memref<248x32xbf16, #tpu.memory_space<vmem>>, vector<192x32xbf16>
    %62 = tpu.concatenate %53, %54, %55, %56, %57, %58, %59, %60, %61 in 1 : vector<192x32xbf16>, vector<192x32xbf16>, vector<192x32xbf16>, vector<192x32xbf16>, vector<192x32xbf16>, vector<192x32xbf16>, vector<192x32xbf16>, vector<192x32xbf16>, vector<192x32xbf16> -> vector<192x288xbf16>
    %c0_71 = arith.constant 0 : index
    %c0_72 = arith.constant 0 : index
    %63 = vector.load %arg8[%c0_71, %c0_72] : memref<288x32xbf16, #tpu.memory_space<vmem>>, vector<288x32xbf16>
    %cst_73 = arith.constant dense<0.000000e+00> : vector<192x32xf32>
    %64 = tpu.matmul %62, %63, %cst_73 {dimension_numbers = #tpu.dot_dimension_numbers<[1], [0], [0], [1], [0, 0, 1, 1], [], []>} : vector<192x288xbf16>, vector<288x32xbf16>, vector<192x32xf32> -> vector<192x32xf32>
    %c0_74 = arith.constant 0 : index
    %c0_75 = arith.constant 0 : index
    %65 = vector.load %arg9[%c0_74, %c0_75] : memref<1x32xf32, #tpu.memory_space<vmem>>, vector<1x32xf32>
    %66 = vector.broadcast %65 : vector<1x32xf32> to vector<192x32xf32>
    %67 = arith.addf %64, %66 : vector<192x32xf32>
    %cst_76 = arith.constant 0.000000e+00 : f32
    %68 = vector.broadcast %cst_76 : f32 to vector<192x32xf32>
    %69 = arith.maximumf %67, %68 : vector<192x32xf32>
    %70 = arith.truncf %69 : vector<192x32xf32> to vector<192x32xbf16>
    %c0_77 = arith.constant 0 : index
    %c0_78 = arith.constant 0 : index
    %71 = vector.load %arg10[%c0_77, %c0_78] : memref<32x4xbf16, #tpu.memory_space<vmem>>, vector<32x4xbf16>
    %cst_79 = arith.constant dense<0.000000e+00> : vector<192x4xf32>
    %72 = tpu.matmul %70, %71, %cst_79 {dimension_numbers = #tpu.dot_dimension_numbers<[1], [0], [0], [1], [0, 0, 1, 1], [], []>} : vector<192x32xbf16>, vector<32x4xbf16>, vector<192x4xf32> -> vector<192x4xf32>
    %c0_80 = arith.constant 0 : index
    %c0_81 = arith.constant 0 : index
    %73 = vector.load %arg11[%c0_80, %c0_81] : memref<1x4xf32, #tpu.memory_space<vmem>>, vector<1x4xf32>
    %74 = vector.broadcast %73 : vector<1x4xf32> to vector<192x4xf32>
    %75 = arith.addf %72, %74 : vector<192x4xf32>
    %76 = tpu.transpose %75, [1, 0] : vector<192x4xf32> -> vector<4x192xf32>
    %c0_82 = arith.constant 0 : index
    %c0_83 = arith.constant 0 : index
    %c0_84 = arith.constant 0 : index
    %c0_85 = arith.constant 0 : index
    %77 = vector.load %arg12[%c0_82, %c0_83, %c0_84, %c0_85] : memref<1x1x4x192xf32, #tpu.memory_space<vmem>>, vector<1x1x4x192xf32>
    %78 = vector.shape_cast %77 : vector<1x1x4x192xf32> to vector<4x192xf32>
    %79 = vector.shape_cast %76 : vector<4x192xf32> to vector<1x1x4x192xf32>
    tpu.vector_store %arg12[%c0_82, %c0_83, %c0_84, %c0_85], %79 {strides = array<i32>} : memref<1x1x4x192xf32, #tpu.memory_space<vmem>>, vector<1x1x4x192xf32>,
    return
  }
  func.func @transform_0(%arg0: i32, %arg1: i32) -> (i32, i32) {
    %c0_i32 = arith.constant 0 : i32
    %c0_i32_0 = arith.constant 0 : i32
    %c0_i32_1 = arith.constant 0 : i32
    return %c0_i32, %c0_i32_0 : i32, i32
  }
  func.func @transform_1(%arg0: i32, %arg1: i32) -> (i32, i32, i32) {
    %c0_i32 = arith.constant 0 : i32
    %c0_i32_0 = arith.constant 0 : i32
    %c0_i32_1 = arith.constant 0 : i32
    return %arg1, %c0_i32, %c0_i32_0 : i32, i32, i32
  }
  func.func @transform_2(%arg0: i32, %arg1: i32) -> (i32, i32) {
    %c0_i32 = arith.constant 0 : i32
    %c0_i32_0 = arith.constant 0 : i32
    %c0_i32_1 = arith.constant 0 : i32
    return %c0_i32, %c0_i32_0 : i32, i32
  }
  func.func @transform_3(%arg0: i32, %arg1: i32) -> (i32, i32) {
    %c0_i32 = arith.constant 0 : i32
    %c0_i32_0 = arith.constant 0 : i32
    %c0_i32_1 = arith.constant 0 : i32
    return %c0_i32, %c0_i32_0 : i32, i32
  }
  func.func @transform_4(%arg0: i32, %arg1: i32) -> (i32, i32) {
    %c0_i32 = arith.constant 0 : i32
    %c0_i32_0 = arith.constant 0 : i32
    %c0_i32_1 = arith.constant 0 : i32
    return %c0_i32, %c0_i32_0 : i32, i32
  }
  func.func @transform_5(%arg0: i32, %arg1: i32) -> (i32, i32) {
    %c0_i32 = arith.constant 0 : i32
    %c0_i32_0 = arith.constant 0 : i32
    %c0_i32_1 = arith.constant 0 : i32
    return %c0_i32, %c0_i32_0 : i32, i32
  }
  func.func @transform_6(%arg0: i32, %arg1: i32) -> (i32, i32) {
    %c0_i32 = arith.constant 0 : i32
    %c0_i32_0 = arith.constant 0 : i32
    %c0_i32_1 = arith.constant 0 : i32
    return %c0_i32, %c0_i32_0 : i32, i32
  }
  func.func @transform_7(%arg0: i32, %arg1: i32) -> (i32, i32) {
    %c0_i32 = arith.constant 0 : i32
    %c0_i32_0 = arith.constant 0 : i32
    %c0_i32_1 = arith.constant 0 : i32
    return %c0_i32, %c0_i32_0 : i32, i32
  }
  func.func @transform_8(%arg0: i32, %arg1: i32) -> (i32, i32) {
    %c0_i32 = arith.constant 0 : i32
    %c0_i32_0 = arith.constant 0 : i32
    %c0_i32_1 = arith.constant 0 : i32
    return %c0_i32, %c0_i32_0 : i32, i32
  }
  func.func @transform_9(%arg0: i32, %arg1: i32) -> (i32, i32) {
    %c0_i32 = arith.constant 0 : i32
    %c0_i32_0 = arith.constant 0 : i32
    %c0_i32_1 = arith.constant 0 : i32
    return %c0_i32, %c0_i32_0 : i32, i32
  }
  func.func @transform_10(%arg0: i32, %arg1: i32) -> (i32, i32, i32, i32) {
    %c0_i32 = arith.constant 0 : i32
    %c0_i32_0 = arith.constant 0 : i32
    %c0_i32_1 = arith.constant 0 : i32
    return %arg0, %arg1, %c0_i32, %c0_i32_0 : i32, i32, i32, i32
  }
}

</mosaic_0001>

<llo_original>
// kernel: vae_background_forward.5
$region0: #{vae_background_forward.5}
  #allocation0 [shape = 'u32[]', space=smem, size = 0x4, offset = 0x4, fixed_abs, tag = 'smem constant byte address 0x4 - core index']
  #allocation1 [shape = 'u32[72,128]{1,0:T(1,128)}', space=vmem, size = 0x9000, scoped, tag = 'internal scratch']
  %s0 = inlined_call_operand.vmem [shape: bf16[2,4,80,4], index: 0, kind: input, shape index: {}]
  %s1 = inlined_call_operand.vmem [shape: bf16[36,32], index: 1, kind: input, shape index: {}]
  %s2 = inlined_call_operand.vmem [shape: f32[1,32], index: 2, kind: input, shape index: {}]
  %s3 = inlined_call_operand.vmem [shape: bf16[2,56,32], index: 3, kind: output, shape index: {}]
  %s4 = sld [smem:[#allocation0]]
  $region45: #{vae_background_forward.5} parent=0
    _
  %s6 = ssub.s32 1, %s4
  %s7 = scalar_select 0, %s6, %s4
  loop: start=0, step=1, limit=4
  $region2: #{vae_background_forward.5} parent=0 // loop_pre_header
    _
  $region3: #{vae_background_forward.5} parent=0 // loop_header
    %s9 = sphi 0, %s13
    %p10 = scmp.ge.s32.totalorder %s9, 4
    %s19 = sphi 0, %s21
    %s22 = sphi 0, %s19
    %s23 = sphi 0, %s22
    %s39 = sphi 0, %s23
    %s43 = sphi 0, %s43
    %s45 = sphi 0, %s43
    %s46 = sphi 0, %s45
    %s60 = sphi 0, %s46
    %s64 = sphi 0, %s64
    %s66 = sphi 0, %s64
    %s67 = sphi 0, %s66
    %s81 = sphi 0, %s67
    %s87 = sphi 0, %s89
    %s90 = sphi 0, %s87
    %s91 = sphi 0, %s90
    %s107 = sphi 0, %s91
  $region4: #{vae_background_forward.5} parent=0 // loop_header_branch
    %12 = sbr.rel (%p10) target = $region8
  $region5: #{vae_background_forward.5} parent=0 // loop_body
    %s14 = ssub.s32 %s9, 1
    %s15 = ssub.s32 %s9, 2
    %s16 = sadd.s32 %s9, 1
    %s17 = ssub.s32 %s9, %s16
    %p18 = scmp.eq.s32.totalorder %s17, 0
    %s20 = sadd.s32 %s19, 1
    %s21 = scalar_select %p18, %s19, %s20
    %p24 = pneg %p18
    %p25 = scmp.eq.s32.totalorder %s9, 1
    %p26 = por %p24, %p25
    %p27 = scmp.ne.s32.totalorder %s19, %s22
    %p28 = scmp.eq.s32.totalorder %s9, 0
    %p29 = por %p27, %p28
    %p30 = scmp.ne.s32.totalorder %s19, %s22
    %p31 = scmp.eq.s32.totalorder %s14, 1
    %p32 = por %p30, %p31
    %p33 = scmp.ne.s32.totalorder %s22, %s23
    %p34 = scmp.eq.s32.totalorder %s14, 0
    %p35 = por %p33, %p34
    %p36 = scmp.ne.s32.totalorder %s22, %s23
    %p37 = scmp.eq.s32.totalorder %s15, 1
    %p38 = por %p36, %p37
    %p40 = scmp.ne.s32.totalorder %s23, %s39
    %p41 = scmp.eq.s32.totalorder %s15, 0
    %p42 = por %p40, %p41
    %s44 = sadd.s32 %s43, 1
    %p47 = scmp.eq.s32.totalorder %s9, 1
    %p48 = scmp.ne.s32.totalorder %s43, %s45
    %p49 = scmp.eq.s32.totalorder %s9, 0
    %p50 = por %p48, %p49
    %p51 = scmp.ne.s32.totalorder %s43, %s45
    %p52 = scmp.eq.s32.totalorder %s14, 1
    %p53 = por %p51, %p52
    %p54 = scmp.ne.s32.totalorder %s45, %s46
    %p55 = scmp.eq.s32.totalorder %s14, 0
    %p56 = por %p54, %p55
    %p57 = scmp.ne.s32.totalorder %s45, %s46
    %p58 = scmp.eq.s32.totalorder %s15, 1
    %p59 = por %p57, %p58
    %p61 = scmp.ne.s32.totalorder %s46, %s60
    %p62 = scmp.eq.s32.totalorder %s15, 0
    %p63 = por %p61, %p62
    %s65 = sadd.s32 %s64, 1
    %p68 = scmp.eq.s32.totalorder %s9, 1
    %p69 = scmp.ne.s32.totalorder %s64, %s66
    %p70 = scmp.eq.s32.totalorder %s9, 0
    %p71 = por %p69, %p70
    %p72 = scmp.ne.s32.totalorder %s64, %s66
    %p73 = scmp.eq.s32.totalorder %s14, 1
    %p74 = por %p72, %p73
    %p75 = scmp.ne.s32.totalorder %s66, %s67
    %p76 = scmp.eq.s32.totalorder %s14, 0
    %p77 = por %p75, %p76
    %p78 = scmp.ne.s32.totalorder %s66, %s67
    %p79 = scmp.eq.s32.totalorder %s15, 1
    %p80 = por %p78, %p79
    %p82 = scmp.ne.s32.totalorder %s67, %s81
    %p83 = scmp.eq.s32.totalorder %s15, 0
    %p84 = por %p82, %p83
    %s85 = ssub.s32 %s9, %s16
    %p86 = scmp.eq.s32.totalorder %s85, 0
    %s88 = sadd.s32 %s87, 1
    %s89 = scalar_select %p86, %s87, %s88
    %p92 = pneg %p86
    %p93 = scmp.eq.s32.totalorder %s9, 1
    %p94 = por %p92, %p93
    %p95 = scmp.ne.s32.totalorder %s87, %s90
    %p96 = scmp.eq.s32.totalorder %s9, 0
    %p97 = por %p95, %p96
    %p98 = scmp.ne.s32.totalorder %s87, %s90
    %p99 = scmp.eq.s32.totalorder %s14, 1
    %p100 = por %p98, %p99
    %p101 = scmp.ne.s32.totalorder %s90, %s91
    %p102 = scmp.eq.s32.totalorder %s14, 0
    %p103 = por %p101, %p102
    %p104 = scmp.ne.s32.totalorder %s90, %s91
    %p105 = scmp.eq.s32.totalorder %s15, 1
    %p106 = por %p104, %p105
    %p108 = scmp.ne.s32.totalorder %s91, %s107
    %p109 = scmp.eq.s32.totalorder %s15, 0
    %p110 = por %p108, %p109
    %p111 = scmp.le.s32.totalorder 1, %s9
    %p112 = scmp.lt.s32.totalorder %s9, 3
    %p113 = pnand %p111, %p112
    %p114 = pneg %p113
    // Predicated region
    $region9: #{vae_background_forward.5} parent=5 // pred_check
      _
    $region10: #{vae_background_forward.5} parent=5 // pred_check_branch
      %116 = sbr.rel (%p113) target = $region12
    $region11: #{vae_background_forward.5} parent=5 // pred_region
      %s117 = ssub.s32 %s9, 1
      // Predicated region
      $region13: #{vae_background_forward.5} parent=11 // pred_check
        %p118 = pneg %p56
      $region14: #{vae_background_forward.5} parent=11 // pred_check_branch
        %120 = sbr.rel (%p118) target = $region16
      $region15: #{vae_background_forward.5} parent=11 // pred_region
        _
      $region16: #{vae_background_forward.5} parent=11 // pred_fallthru
        _
      // Predicated region
      $region17: #{vae_background_forward.5} parent=11 // pred_check
        %p121 = pneg %p77
      $region18: #{vae_background_forward.5} parent=11 // pred_check_branch
        %123 = sbr.rel (%p121) target = $region20
      $region19: #{vae_background_forward.5} parent=11 // pred_region
        _
      $region20: #{vae_background_forward.5} parent=11 // pred_fallthru
        _
    $region12: #{vae_background_forward.5} parent=5 // pred_fallthru
      _
    %p124 = scmp.lt.s32.totalorder %s9, 2
    // Predicated region
    $region21: #{vae_background_forward.5} parent=5 // pred_check
      %p125 = pneg %p124
    $region22: #{vae_background_forward.5} parent=5 // pred_check_branch
      %127 = sbr.rel (%p125) target = $region24
    $region23: #{vae_background_forward.5} parent=5 // pred_region
      // Predicated region
      $region25: #{vae_background_forward.5} parent=23 // pred_check
        %p128 = pneg %p29
      $region26: #{vae_background_forward.5} parent=23 // pred_check_branch
        %130 = sbr.rel (%p128) target = $region28
      $region27: #{vae_background_forward.5} parent=23 // pred_region
        %p131 = scmp.lt.s32.totalorder %s9, 1
        %s132 = scalar_select %p131, %s9, 1
        %s133 = smul.addr %s132, 40
        %s134 = smul.addr %s133, 4
        %s135 = scalar_lea.vmem %s0, %s134
      $region28: #{vae_background_forward.5} parent=23 // pred_fallthru
        _
    $region24: #{vae_background_forward.5} parent=5 // pred_fallthru
      _
    %p136 = scmp.le.s32.totalorder 1, %s9
    %p137 = scmp.lt.s32.totalorder %s9, 3
    %p138 = pnand %p136, %p137
    %p139 = pneg %p138
    // Predicated region
    $region29: #{vae_background_forward.5} parent=5 // pred_check
      _
    $region30: #{vae_background_forward.5} parent=5 // pred_check_branch
      %141 = sbr.rel (%p138) target = $region32
    $region31: #{vae_background_forward.5} parent=5 // pred_region
      %s142 = ssub.s32 %s9, 1
      %p143 = scmp.lt.s32.totalorder %s14, 1
      %s144 = scalar_select %p143, %s14, 1
      %s145 = smul.addr %s144, 40
      %s146 = smul.addr %s145, 4
      %s147 = scalar_lea.vmem %s0, %s146
      %p148 = pneg %p35
      %p149 = pneg %p32
      %p150 = pneg %p56
      %p151 = pneg %p53
      %p152 = pneg %p77
      %p153 = pneg %p74
      %p154 = pneg %p103
      %p155 = pneg %p100
      %p156 = scmp.lt.s32.totalorder %s14, 1
      %s157 = scalar_select %p156, %s14, 1
      %s158 = smul.addr %s157, 7
      %s159 = smul.addr %s158, 4
      %s160 = scalar_lea.vmem %s3, %s159
      %p161 = scmp.lt.s32.totalorder %s14, 1
      %s162 = scalar_select %p161, %s14, 1
      %s163 = smul.addr %s162, 40
      %s164 = smul.addr %s163, 4
      %s165 = scalar_lea.vmem %s0, %s164
      %p166 = scmp.lt.s32.totalorder %s14, 1
      %s167 = scalar_select %p166, %s14, 1
      %s168 = smul.addr %s167, 7
      %s169 = smul.addr %s168, 4
      %s170 = scalar_lea.vmem %s3, %s169
      %v172 = vld [vmem:[%s165] sm:$0xf]
      %v173 = vld [vmem:[%s165 + $0x4] sm:$0xf]
      %v174 = vld [vmem:[%s165 + $0x8] sm:$0xf]
      %v175 = vld [vmem:[%s165 + $0xc] sm:$0xf]
      %v176 = vld [vmem:[%s165 + $0x10] sm:$0xf]
      %v177 = vld [vmem:[%s165 + $0x14] sm:$0xf]
      %v178 = vld [vmem:[%s165 + $0x18] sm:$0xf]
      %s179 = scalar_lea.vmem %s165, 40
      %v180 = vld [vmem:[%s179] sm:$0xf]
      %v181 = vld [vmem:[%s179 + $0x4] sm:$0xf]
      %v182 = vld [vmem:[%s179 + $0x8] sm:$0xf]
      %v183 = vld [vmem:[%s179 + $0xc] sm:$0xf]
      %v184 = vld [vmem:[%s179 + $0x10] sm:$0xf]
      %v185 = vld [vmem:[%s179 + $0x14] sm:$0xf]
      %v186 = vld [vmem:[%s179 + $0x18] sm:$0xf]
      %v187 = vld [vmem:[%s165 + $0x1c] sm:$0x1]
      %s188 = scalar_lea.vmem %s165, 80
      %v189 = vld [vmem:[%s188] sm:$0xf]
      %v190 = vld [vmem:[%s188 + $0x4] sm:$0xf]
      %v191 = vld [vmem:[%s188 + $0x8] sm:$0xf]
      %v192 = vld [vmem:[%s188 + $0xc] sm:$0xf]
      %v193 = vld [vmem:[%s188 + $0x10] sm:$0xf]
      %v194 = vld [vmem:[%s188 + $0x14] sm:$0xf]
      %v195 = vld [vmem:[%s188 + $0x18] sm:$0xf]
      %s196 = scalar_lea.vmem %s165, 120
      %v197 = vld [vmem:[%s196] sm:$0xf]
      %v198 = vld [vmem:[%s196 + $0x4] sm:$0xf]
      %v199 = vld [vmem:[%s196 + $0x8] sm:$0xf]
      %v200 = vld [vmem:[%s196 + $0xc] sm:$0xf]
      %v201 = vld [vmem:[%s196 + $0x10] sm:$0xf]
      %v202 = vld [vmem:[%s196 + $0x14] sm:$0xf]
      %v203 = vld [vmem:[%s196 + $0x18] sm:$0xf]
      %v204 = vld [vmem:[%s188 + $0x1c] sm:$0x1]
      %v205 = vld [vmem:[%s165 + $0x1c] sm:$0xf]
      %v206 = vld [vmem:[%s179 + $0x1c] sm:$0xf]
      %v207 = vld [vmem:[%s165 + $0x20] sm:$0x1]
      %v215 = vunpack.c.l.b16 %v172
      %v216 = vunpack.c.l.b16 %v173
      %v217 = vunpack.c.l.b16 %v174
      %v218 = vunpack.c.l.b16 %v175
      %v219 = vunpack.c.l.b16 %v176
      %v220 = vunpack.c.l.b16 %v177
      %v221 = vunpack.c.l.b16 %v178
      %v222 = vpack.c.b16 %v216, %v215
      %v223 = vpack.c.b16 %v218, %v217
      %v224 = vpack.c.b16 %v220, %v219
      %v225 = vpack.c.b16 %v221, %v221
      %v233 = vunpack.c.l.b16 %v180
      %v234 = vunpack.c.l.b16 %v181
      %v235 = vunpack.c.l.b16 %v182
      %v236 = vunpack.c.l.b16 %v183
      %v237 = vunpack.c.l.b16 %v184
      %v238 = vunpack.c.l.b16 %v185
      %v239 = vunpack.c.l.b16 %v186
      %v240 = vpack.c.b16 %v234, %v233
      %v241 = vpack.c.b16 %v236, %v235
      %v242 = vpack.c.b16 %v238, %v237
      %v243 = vpack.c.b16 %v239, %v239
      %244 = vrot.lane.b32.xlu0 %v240, 4
      %v245 = vpop.permute.xlu0 %244
      %246 = vrot.lane.b32.xlu0 %v241, 4
      %v247 = vpop.permute.xlu0 %246
      %248 = vrot.lane.b32.xlu0 %v242, 4
      %v249 = vpop.permute.xlu0 %248
      %250 = vrot.lane.b32.xlu0 %v243, 4
      %v251 = vpop.permute.xlu0 %250
      %v253 = vunpack.c.l.b16 %v187
      %v254 = vpack.c.b16 %v253, %v221
      %vm255 = vsmask.f32 7424
      %v257 = vshrl.u32 %v222, 16
      %v259 = vshll.u32 %v222, 16
      %v261 = vrot.slane %v259, 1
      %v262 = vor.u32 %v257, %v261
      %v264 = vshll.u32 %v223, 16
      %v266 = vrot.slane %v264, 1
      %v267 = vsel %vm255, %v262, %v266
      %v268 = vshrl.u32 %v223, 16
      %v270 = vor.u32 %v268, %v266
      %v272 = vshll.u32 %v224, 16
      %v274 = vrot.slane %v272, 1
      %v275 = vsel %vm255, %v270, %v274
      %v276 = vshrl.u32 %v224, 16
      %v278 = vor.u32 %v276, %v274
      %v280 = vshll.u32 %v254, 16
      %v282 = vrot.slane %v280, 1
      %v283 = vsel %vm255, %v278, %v282
      %v284 = vshrl.u32 %v254, 16
      %v286 = vor.u32 %v284, %v282
      %287 = vrot.lane.b32.xlu0 %v267, 8
      %v288 = vpop.permute.xlu0 %287
      %289 = vrot.lane.b32.xlu0 %v275, 8
      %v290 = vpop.permute.xlu0 %289
      %291 = vrot.lane.b32.xlu0 %v283, 8
      %v292 = vpop.permute.xlu0 %291
      %293 = vrot.lane.b32.xlu0 %v286, 8
      %v294 = vpop.permute.xlu0 %293
      %v302 = vunpack.c.l.b16 %v189
      %v303 = vunpack.c.l.b16 %v190
      %v304 = vunpack.c.l.b16 %v191
      %v305 = vunpack.c.l.b16 %v192
      %v306 = vunpack.c.l.b16 %v193
      %v307 = vunpack.c.l.b16 %v194
      %v308 = vunpack.c.l.b16 %v195
      %v309 = vpack.c.b16 %v303, %v302
      %v310 = vpack.c.b16 %v305, %v304
      %v311 = vpack.c.b16 %v307, %v306
      %v312 = vpack.c.b16 %v308, %v308
      %313 = vrot.lane.b32.xlu0 %v309, 12
      %v314 = vpop.permute.xlu0 %313
      %315 = vrot.lane.b32.xlu0 %v310, 12
      %v316 = vpop.permute.xlu0 %315
      %317 = vrot.lane.b32.xlu0 %v311, 12
      %v318 = vpop.permute.xlu0 %317
      %319 = vrot.lane.b32.xlu0 %v312, 12
      %v320 = vpop.permute.xlu0 %319
      %v328 = vunpack.c.l.b16 %v197
      %v329 = vunpack.c.l.b16 %v198
      %v330 = vunpack.c.l.b16 %v199
      %v331 = vunpack.c.l.b16 %v200
      %v332 = vunpack.c.l.b16 %v201
      %v333 = vunpack.c.l.b16 %v202
      %v334 = vunpack.c.l.b16 %v203
      %v335 = vpack.c.b16 %v329, %v328
      %v336 = vpack.c.b16 %v331, %v330
      %v337 = vpack.c.b16 %v333, %v332
      %v338 = vpack.c.b16 %v334, %v334
      %339 = vrot.lane.b32.xlu0 %v335, 16
      %v340 = vpop.permute.xlu0 %339
      %341 = vrot.lane.b32.xlu0 %v336, 16
      %v342 = vpop.permute.xlu0 %341
      %343 = vrot.lane.b32.xlu0 %v337, 16
      %v344 = vpop.permute.xlu0 %343
      %345 = vrot.lane.b32.xlu0 %v338, 16
      %v346 = vpop.permute.xlu0 %345
      %v348 = vunpack.c.l.b16 %v204
      %v349 = vpack.c.b16 %v348, %v308
      %v351 = vshrl.u32 %v309, 16
      %v353 = vshll.u32 %v309, 16
      %v355 = vrot.slane %v353, 1
      %v356 = vor.u32 %v351, %v355
      %v358 = vshll.u32 %v310, 16
      %v360 = vrot.slane %v358, 1
      %v361 = vsel %vm255, %v356, %v360
      %v362 = vshrl.u32 %v310, 16
      %v364 = vor.u32 %v362, %v360
      %v366 = vshll.u32 %v311, 16
      %v368 = vrot.slane %v366, 1
      %v369 = vsel %vm255, %v364, %v368
      %v370 = vshrl.u32 %v311, 16
      %v372 = vor.u32 %v370, %v368
      %v374 = vshll.u32 %v349, 16
      %v376 = vrot.slane %v374, 1
      %v377 = vsel %vm255, %v372, %v376
      %v378 = vshrl.u32 %v349, 16
      %v380 = vor.u32 %v378, %v376
      %381 = vrot.lane.b32.xlu0 %v361, 20
      %v382 = vpop.permute.xlu0 %381
      %383 = vrot.lane.b32.xlu0 %v369, 20
      %v384 = vpop.permute.xlu0 %383
      %385 = vrot.lane.b32.xlu0 %v377, 20
      %v386 = vpop.permute.xlu0 %385
      %387 = vrot.lane.b32.xlu0 %v380, 20
      %v388 = vpop.permute.xlu0 %387
      %v390 = vunpack.c.l.b16 %v205
      %v391 = vpack.c.b16 %v217, %v216
      %v392 = vpack.c.b16 %v219, %v218
      %v393 = vpack.c.b16 %v221, %v220
      %v394 = vpack.c.b16 %v390, %v390
      %395 = vrot.lane.b32.xlu0 %v391, 24
      %v396 = vpop.permute.xlu0 %395
      %397 = vrot.lane.b32.xlu0 %v392, 24
      %v398 = vpop.permute.xlu0 %397
      %399 = vrot.lane.b32.xlu0 %v393, 24
      %v400 = vpop.permute.xlu0 %399
      %401 = vrot.lane.b32.xlu0 %v394, 24
      %v402 = vpop.permute.xlu0 %401
      %v404 = vunpack.c.l.b16 %v206
      %v405 = vpack.c.b16 %v235, %v234
      %v406 = vpack.c.b16 %v237, %v236
      %v407 = vpack.c.b16 %v239, %v238
      %v408 = vpack.c.b16 %v404, %v404
      %409 = vrot.lane.b32.xlu0 %v405, 28
      %v410 = vpop.permute.xlu0 %409
      %411 = vrot.lane.b32.xlu0 %v406, 28
      %v412 = vpop.permute.xlu0 %411
      %413 = vrot.lane.b32.xlu0 %v407, 28
      %v414 = vpop.permute.xlu0 %413
      %415 = vrot.lane.b32.xlu0 %v408, 28
      %v416 = vpop.permute.xlu0 %415
      %v418 = vunpack.c.l.b16 %v207
      %v419 = vpack.c.b16 %v418, %v390
      %v421 = vshrl.u32 %v391, 16
      %v423 = vshll.u32 %v391, 16
      %v425 = vrot.slane %v423, 1
      %v426 = vor.u32 %v421, %v425
      %v428 = vshll.u32 %v392, 16
      %v430 = vrot.slane %v428, 1
      %v431 = vsel %vm255, %v426, %v430
      %v432 = vshrl.u32 %v392, 16
      %v434 = vor.u32 %v432, %v430
      %v436 = vshll.u32 %v393, 16
      %v438 = vrot.slane %v436, 1
      %v439 = vsel %vm255, %v434, %v438
      %v440 = vshrl.u32 %v393, 16
      %v442 = vor.u32 %v440, %v438
      %v444 = vshll.u32 %v419, 16
      %v446 = vrot.slane %v444, 1
      %v447 = vsel %vm255, %v442, %v446
      %v448 = vshrl.u32 %v419, 16
      %v450 = vor.u32 %v448, %v446
      %451 = vrot.lane.b32.xlu0 %v431, 32
      %v452 = vpop.permute.xlu0 %451
      %453 = vrot.lane.b32.xlu0 %v439, 32
      %v454 = vpop.permute.xlu0 %453
      %455 = vrot.lane.b32.xlu0 %v447, 32
      %v456 = vpop.permute.xlu0 %455
      %457 = vrot.lane.b32.xlu0 %v450, 32
      %v458 = vpop.permute.xlu0 %457
      %vm459 = vcmask 31744
      %v461 = vsel %vm459, %v222, %v245
      %v463 = vsel %vm459, %v223, %v247
      %v465 = vsel %vm459, %v224, %v249
      %v468 = vsel %vm459, %v225, %v251
      %vm469 = vcmask 64512
      %v471 = vsel %vm469, %v461, %v288
      %v473 = vsel %vm469, %v463, %v290
      %v475 = vsel %vm469, %v465, %v292
      %v477 = vsel %vm469, %v468, %v294
      %vm478 = vcmask 97280
      %v480 = vsel %vm478, %v471, %v314
      %v482 = vsel %vm478, %v473, %v316
      %v484 = vsel %vm478, %v475, %v318
      %v486 = vsel %vm478, %v477, %v320
      %vm487 = vcmask 130048
      %v489 = vsel %vm487, %v480, %v340
      %v491 = vsel %vm487, %v482, %v342
      %v493 = vsel %vm487, %v484, %v344
      %v495 = vsel %vm487, %v486, %v346
      %vm496 = vcmask 162816
      %v498 = vsel %vm496, %v489, %v382
      %v500 = vsel %vm496, %v491, %v384
      %v502 = vsel %vm496, %v493, %v386
      %v504 = vsel %vm496, %v495, %v388
      %vm505 = vcmask 195584
      %v507 = vsel %vm505, %v498, %v396
      %v509 = vsel %vm505, %v500, %v398
      %v511 = vsel %vm505, %v502, %v400
      %v513 = vsel %vm505, %v504, %v402
      %vm514 = vcmask 228352
      %v516 = vsel %vm514, %v507, %v410
      %v518 = vsel %vm514, %v509, %v412
      %v520 = vsel %vm514, %v511, %v414
      %v522 = vsel %vm514, %v513, %v416
      %vm523 = vcmask 261120
      %v525 = vsel %vm523, %v516, %v452
      %v527 = vsel %vm523, %v518, %v454
      %v529 = vsel %vm523, %v520, %v456
      %v531 = vsel %vm523, %v522, %v458
      %v532 = vld [vmem:[%s1] sm:$0xf]
      %v533 = vld [vmem:[%s1 + $0x4] sm:$0xf]
      %v534 = vld [vmem:[%s1 + $0x8] sm:$0xf]
      %v535 = vld [vmem:[%s1 + $0xc] sm:$0xf]
      %v536 = vld [vmem:[%s1 + $0x10] sm:$0x3]
      %v537 = vld [vmem:[%s2] sm:$0x1]
      %v539 = vperm.slane %v537, 0
      %v546 = vunpack.c.l.b16 %v532
      %v547 = vunpack.c.l.b16 %v533
      %v548 = vunpack.c.l.b16 %v534
      %v549 = vunpack.c.l.b16 %v535
      %v550 = vunpack.c.l.b16 %v536
      %v551 = vpack.c.b16 %v547, %v546
      %v552 = vpack.c.b16 %v549, %v548
      %v553 = vpack.c.b16 %v550, %v550
      %vm556 = vcmask 293888
      %v557 = vsel %vm556, %v525, 0
      %v559 = vsel %vm556, %v527, 0
      %v561 = vsel %vm556, %v529, 0
      %v563 = vsel %vm556, %v531, 0
      %vm565 = vcmask 1041408
      %v567 = vsel %vm565, %v553, 0
      %569 = vmatpush.bf16.msra.mxu0 0
      %570 = vmatpush.bf16.msra.mxu0 0
      %571 = vmatpush.bf16.msra.mxu0 0
      %572 = vmatpush.bf16.msra.mxu0 0
      %573 = vmatpush.bf16.msra.mxu0 0
      %574 = vmatpush.bf16.msra.mxu0 %v567
      %575 = vmatpush.bf16.msra.mxu0 %v552
      %576 = vmatpush.bf16.msra.mxu0 %v551
      %577 = vmatmul.bf16.gmra.mxu0 %v557
      %v578 = vpop.f32.mrf.mxu0
      %v579 = vadd.f32 %v539, %v578
      %v580 = vpop.f32.mrf.mxu0
      %v581 = vadd.f32 %v539, %v580
      %582 = vmatmul.bf16.gmra.mxu0 %v559
      %v583 = vpop.f32.mrf.mxu0
      %v584 = vadd.f32 %v539, %v583
      %v585 = vpop.f32.mrf.mxu0
      %v586 = vadd.f32 %v539, %v585
      %587 = vmatmul.bf16.gmra.mxu0 %v561
      %v588 = vpop.f32.mrf.mxu0
      %v589 = vadd.f32 %v539, %v588
      %v590 = vpop.f32.mrf.mxu0
      %v591 = vadd.f32 %v539, %v590
      %592 = vmatmul.bf16.gmra.mxu0 %v563
      %v593 = vpop.f32.mrf.mxu0
      %v594 = vadd.f32 %v539, %v593
      %v595 = vpop.f32.mrf.mxu0
      %596 = vdwg.mxu0
      %v597 = vmax.f32 %v579, 0.0
      %v598 = vmax.f32 %v581, 0.0
      %v599 = vmax.f32 %v584, 0.0
      %v600 = vmax.f32 %v586, 0.0
      %v601 = vmax.f32 %v589, 0.0
      %v602 = vmax.f32 %v591, 0.0
      %v603 = vmax.f32 %v594, 0.0
      %v604 = vpack.c.bf16 %v597, %v597
      %v605 = vpack.c.bf16 %v598, %v598
      %v606 = vpack.c.bf16 %v599, %v599
      %v607 = vpack.c.bf16 %v600, %v600
      %v608 = vpack.c.bf16 %v601, %v601
      %v609 = vpack.c.bf16 %v602, %v602
      %v610 = vpack.c.bf16 %v603, %v603
      %vm611 = vcmask 257024
      %612 = vst.msk [vmem:[%s170] sm:$0xf] %vm611, %v604
      %613 = vst.msk [vmem:[%s170 + $0x4] sm:$0xf] %vm611, %v605
      %614 = vst.msk [vmem:[%s170 + $0x8] sm:$0xf] %vm611, %v606
      %615 = vst.msk [vmem:[%s170 + $0xc] sm:$0xf] %vm611, %v607
      %616 = vst.msk [vmem:[%s170 + $0x10] sm:$0xf] %vm611, %v608
      %617 = vst.msk [vmem:[%s170 + $0x14] sm:$0xf] %vm611, %v609
      %618 = vst.msk [vmem:[%s170 + $0x18] sm:$0xf] %vm611, %v610
      %p619 = scmp.lt.s32.totalorder %s14, 1
      %s620 = scalar_select %p619, %s14, 1
      %s621 = smul.addr %s620, 7
      %s622 = smul.addr %s621, 4
      %s623 = scalar_lea.vmem %s3, %s622
      // Predicated region
      $region33: #{vae_background_forward.5} parent=31 // pred_check
        %p624 = pneg %p100
      $region34: #{vae_background_forward.5} parent=31 // pred_check_branch
        %626 = sbr.rel (%p624) target = $region36
      $region35: #{vae_background_forward.5} parent=31 // pred_region
        _
      $region36: #{vae_background_forward.5} parent=31 // pred_fallthru
        _
    $region32: #{vae_background_forward.5} parent=5 // pred_fallthru
      _
    %p627 = scmp.le.s32.totalorder 2, %s9
    // Predicated region
    $region37: #{vae_background_forward.5} parent=5 // pred_check
      %p628 = pneg %p627
    $region38: #{vae_background_forward.5} parent=5 // pred_check_branch
      %630 = sbr.rel (%p628) target = $region40
    $region39: #{vae_background_forward.5} parent=5 // pred_region
      %s631 = ssub.s32 %s9, 2
      // Predicated region
      $region41: #{vae_background_forward.5} parent=39 // pred_check
        %p632 = pneg %p106
      $region42: #{vae_background_forward.5} parent=39 // pred_check_branch
        %634 = sbr.rel (%p632) target = $region44
      $region43: #{vae_background_forward.5} parent=39 // pred_region
        %p635 = scmp.lt.s32.totalorder %s15, 1
        %s636 = scalar_select %p635, %s15, 1
        %s637 = smul.addr %s636, 7
        %s638 = smul.addr %s637, 4
        %s639 = scalar_lea.vmem %s3, %s638
      $region44: #{vae_background_forward.5} parent=39 // pred_fallthru
        _
    $region40: #{vae_background_forward.5} parent=5 // pred_fallthru
      _
  $region6: #{vae_background_forward.5} parent=0 // loop_footer
    %s13 = sadd.s32 1, %s9
  $region7: #{vae_background_forward.5} parent=0 // loop_footer_branch
    %8 = sbr.rel target = $region3
  $region8: #{vae_background_forward.5} parent=0 // loop_exit
    _

// kernel: vae_background_forward.6
$region0: #{vae_background_forward.6}
  #allocation0 [shape = 'u32[]', space=smem, size = 0x4, offset = 0x4, fixed_abs, tag = 'smem constant byte address 0x4 - core index']
  #allocation1 [shape = 'u32[72,128]{1,0:T(1,128)}', space=vmem, size = 0x9000, scoped, tag = 'internal scratch']
  %s0 = inlined_call_operand.vmem [shape: bf16[2,4,24,32], index: 0, kind: input, shape index: {}]
  %s1 = inlined_call_operand.vmem [shape: bf16[288,32], index: 1, kind: input, shape index: {}]
  %s2 = inlined_call_operand.vmem [shape: f32[1,32], index: 2, kind: input, shape index: {}]
  %s3 = inlined_call_operand.vmem [shape: bf16[2,12,32], index: 3, kind: output, shape index: {}]
  %s4 = sld [smem:[#allocation0]]
  $region45: #{vae_background_forward.6} parent=0
    _
  %s6 = ssub.s32 1, %s4
  %s7 = scalar_select 0, %s6, %s4
  loop: start=0, step=1, limit=4
  $region2: #{vae_background_forward.6} parent=0 // loop_pre_header
    _
  $region3: #{vae_background_forward.6} parent=0 // loop_header
    %s9 = sphi 0, %s13
    %p10 = scmp.ge.s32.totalorder %s9, 4
    %s19 = sphi 0, %s21
    %s22 = sphi 0, %s19
    %s23 = sphi 0, %s22
    %s39 = sphi 0, %s23
    %s43 = sphi 0, %s43
    %s45 = sphi 0, %s43
    %s46 = sphi 0, %s45
    %s60 = sphi 0, %s46
    %s64 = sphi 0, %s64
    %s66 = sphi 0, %s64
    %s67 = sphi 0, %s66
    %s81 = sphi 0, %s67
    %s87 = sphi 0, %s89
    %s90 = sphi 0, %s87
    %s91 = sphi 0, %s90
    %s107 = sphi 0, %s91
  $region4: #{vae_background_forward.6} parent=0 // loop_header_branch
    %12 = sbr.rel (%p10) target = $region8
  $region5: #{vae_background_forward.6} parent=0 // loop_body
    %s14 = ssub.s32 %s9, 1
    %s15 = ssub.s32 %s9, 2
    %s16 = sadd.s32 %s9, 1
    %s17 = ssub.s32 %s9, %s16
    %p18 = scmp.eq.s32.totalorder %s17, 0
    %s20 = sadd.s32 %s19, 1
    %s21 = scalar_select %p18, %s19, %s20
    %p24 = pneg %p18
    %p25 = scmp.eq.s32.totalorder %s9, 1
    %p26 = por %p24, %p25
    %p27 = scmp.ne.s32.totalorder %s19, %s22
    %p28 = scmp.eq.s32.totalorder %s9, 0
    %p29 = por %p27, %p28
    %p30 = scmp.ne.s32.totalorder %s19, %s22
    %p31 = scmp.eq.s32.totalorder %s14, 1
    %p32 = por %p30, %p31
    %p33 = scmp.ne.s32.totalorder %s22, %s23
    %p34 = scmp.eq.s32.totalorder %s14, 0
    %p35 = por %p33, %p34
    %p36 = scmp.ne.s32.totalorder %s22, %s23
    %p37 = scmp.eq.s32.totalorder %s15, 1
    %p38 = por %p36, %p37
    %p40 = scmp.ne.s32.totalorder %s23, %s39
    %p41 = scmp.eq.s32.totalorder %s15, 0
    %p42 = por %p40, %p41
    %s44 = sadd.s32 %s43, 1
    %p47 = scmp.eq.s32.totalorder %s9, 1
    %p48 = scmp.ne.s32.totalorder %s43, %s45
    %p49 = scmp.eq.s32.totalorder %s9, 0
    %p50 = por %p48, %p49
    %p51 = scmp.ne.s32.totalorder %s43, %s45
    %p52 = scmp.eq.s32.totalorder %s14, 1
    %p53 = por %p51, %p52
    %p54 = scmp.ne.s32.totalorder %s45, %s46
    %p55 = scmp.eq.s32.totalorder %s14, 0
    %p56 = por %p54, %p55
    %p57 = scmp.ne.s32.totalorder %s45, %s46
    %p58 = scmp.eq.s32.totalorder %s15, 1
    %p59 = por %p57, %p58
    %p61 = scmp.ne.s32.totalorder %s46, %s60
    %p62 = scmp.eq.s32.totalorder %s15, 0
    %p63 = por %p61, %p62
    %s65 = sadd.s32 %s64, 1
    %p68 = scmp.eq.s32.totalorder %s9, 1
    %p69 = scmp.ne.s32.totalorder %s64, %s66
    %p70 = scmp.eq.s32.totalorder %s9, 0
    %p71 = por %p69, %p70
    %p72 = scmp.ne.s32.totalorder %s64, %s66
    %p73 = scmp.eq.s32.totalorder %s14, 1
    %p74 = por %p72, %p73
    %p75 = scmp.ne.s32.totalorder %s66, %s67
    %p76 = scmp.eq.s32.totalorder %s14, 0
    %p77 = por %p75, %p76
    %p78 = scmp.ne.s32.totalorder %s66, %s67
    %p79 = scmp.eq.s32.totalorder %s15, 1
    %p80 = por %p78, %p79
    %p82 = scmp.ne.s32.totalorder %s67, %s81
    %p83 = scmp.eq.s32.totalorder %s15, 0
    %p84 = por %p82, %p83
    %s85 = ssub.s32 %s9, %s16
    %p86 = scmp.eq.s32.totalorder %s85, 0
    %s88 = sadd.s32 %s87, 1
    %s89 = scalar_select %p86, %s87, %s88
    %p92 = pneg %p86
    %p93 = scmp.eq.s32.totalorder %s9, 1
    %p94 = por %p92, %p93
    %p95 = scmp.ne.s32.totalorder %s87, %s90
    %p96 = scmp.eq.s32.totalorder %s9, 0
    %p97 = por %p95, %p96
    %p98 = scmp.ne.s32.totalorder %s87, %s90
    %p99 = scmp.eq.s32.totalorder %s14, 1
    %p100 = por %p98, %p99
    %p101 = scmp.ne.s32.totalorder %s90, %s91
    %p102 = scmp.eq.s32.totalorder %s14, 0
    %p103 = por %p101, %p102
    %p104 = scmp.ne.s32.totalorder %s90, %s91
    %p105 = scmp.eq.s32.totalorder %s15, 1
    %p106 = por %p104, %p105
    %p108 = scmp.ne.s32.totalorder %s91, %s107
    %p109 = scmp.eq.s32.totalorder %s15, 0
    %p110 = por %p108, %p109
    %p111 = scmp.le.s32.totalorder 1, %s9
    %p112 = scmp.lt.s32.totalorder %s9, 3
    %p113 = pnand %p111, %p112
    %p114 = pneg %p113
    // Predicated region
    $region9: #{vae_background_forward.6} parent=5 // pred_check
      _
    $region10: #{vae_background_forward.6} parent=5 // pred_check_branch
      %116 = sbr.rel (%p113) target = $region12
    $region11: #{vae_background_forward.6} parent=5 // pred_region
      %s117 = ssub.s32 %s9, 1
      // Predicated region
      $region13: #{vae_background_forward.6} parent=11 // pred_check
        %p118 = pneg %p56
      $region14: #{vae_background_forward.6} parent=11 // pred_check_branch
        %120 = sbr.rel (%p118) target = $region16
      $region15: #{vae_background_forward.6} parent=11 // pred_region
        _
      $region16: #{vae_background_forward.6} parent=11 // pred_fallthru
        _
      // Predicated region
      $region17: #{vae_background_forward.6} parent=11 // pred_check
        %p121 = pneg %p77
      $region18: #{vae_background_forward.6} parent=11 // pred_check_branch
        %123 = sbr.rel (%p121) target = $region20
      $region19: #{vae_background_forward.6} parent=11 // pred_region
        _
      $region20: #{vae_background_forward.6} parent=11 // pred_fallthru
        _
    $region12: #{vae_background_forward.6} parent=5 // pred_fallthru
      _
    %p124 = scmp.lt.s32.totalorder %s9, 2
    // Predicated region
    $region21: #{vae_background_forward.6} parent=5 // pred_check
      %p125 = pneg %p124
    $region22: #{vae_background_forward.6} parent=5 // pred_check_branch
      %127 = sbr.rel (%p125) target = $region24
    $region23: #{vae_background_forward.6} parent=5 // pred_region
      // Predicated region
      $region25: #{vae_background_forward.6} parent=23 // pred_check
        %p128 = pneg %p29
      $region26: #{vae_background_forward.6} parent=23 // pred_check_branch
        %130 = sbr.rel (%p128) target = $region28
      $region27: #{vae_background_forward.6} parent=23 // pred_region
        %p131 = scmp.lt.s32.totalorder %s9, 1
        %s132 = scalar_select %p131, %s9, 1
        %s133 = smul.addr %s132, 12
        %s134 = smul.addr %s133, 4
        %s135 = scalar_lea.vmem %s0, %s134
      $region28: #{vae_background_forward.6} parent=23 // pred_fallthru
        _
    $region24: #{vae_background_forward.6} parent=5 // pred_fallthru
      _
    %p136 = scmp.le.s32.totalorder 1, %s9
    %p137 = scmp.lt.s32.totalorder %s9, 3
    %p138 = pnand %p136, %p137
    %p139 = pneg %p138
    // Predicated region
    $region29: #{vae_background_forward.6} parent=5 // pred_check
      _
    $region30: #{vae_background_forward.6} parent=5 // pred_check_branch
      %141 = sbr.rel (%p138) target = $region32
    $region31: #{vae_background_forward.6} parent=5 // pred_region
      %s142 = ssub.s32 %s9, 1
      %p143 = scmp.lt.s32.totalorder %s14, 1
      %s144 = scalar_select %p143, %s14, 1
      %s145 = smul.addr %s144, 12
      %s146 = smul.addr %s145, 4
      %s147 = scalar_lea.vmem %s0, %s146
      %p148 = pneg %p35
      %p149 = pneg %p32
      %p150 = pneg %p56
      %p151 = pneg %p53
      %p152 = pneg %p77
      %p153 = pneg %p74
      %p154 = pneg %p103
      %p155 = pneg %p100
      %p156 = scmp.lt.s32.totalorder %s14, 1
      %s157 = scalar_select %p156, %s14, 1
      %s158 = smul.addr %s157, 2
      %s159 = smul.addr %s158, 4
      %s160 = scalar_lea.vmem %s3, %s159
      %p161 = scmp.lt.s32.totalorder %s14, 1
      %s162 = scalar_select %p161, %s14, 1
      %s163 = smul.addr %s162, 12
      %s164 = smul.addr %s163, 4
      %s165 = scalar_lea.vmem %s0, %s164
      %p166 = scmp.lt.s32.totalorder %s14, 1
      %s167 = scalar_select %p166, %s14, 1
      %s168 = smul.addr %s167, 2
      %s169 = smul.addr %s168, 4
      %s170 = scalar_lea.vmem %s3, %s169
      %v172 = vld [vmem:[%s165] sm:$0xf]
      %v173 = vld [vmem:[%s165 + $0x4] sm:$0x3]
      %s174 = scalar_lea.vmem %s165, 12
      %v175 = vld [vmem:[%s174] sm:$0xf]
      %v176 = vld [vmem:[%s174 + $0x4] sm:$0x3]
      %v177 = vld [vmem:[%s165 + $0x4] sm:$0x7]
      %s178 = scalar_lea.vmem %s165, 24
      %v179 = vld [vmem:[%s178] sm:$0xf]
      %v180 = vld [vmem:[%s178 + $0x4] sm:$0x3]
      %s181 = scalar_lea.vmem %s165, 36
      %v182 = vld [vmem:[%s181] sm:$0xf]
      %v183 = vld [vmem:[%s181 + $0x4] sm:$0x3]
      %v184 = vld [vmem:[%s178 + $0x4] sm:$0x7]
      %v185 = vld [vmem:[%s165] sm:$0xc]
      %v186 = vld [vmem:[%s165 + $0x4] sm:$0xf]
      %v187 = vld [vmem:[%s174] sm:$0xc]
      %v188 = vld [vmem:[%s174 + $0x4] sm:$0xf]
      %v189 = vld [vmem:[%s165 + $0x8] sm:$0x1]
      %v192 = vunpack.c.l.b16 %v172
      %v193 = vunpack.c.l.b16 %v173
      %v194 = vpack.c.b16 %v193, %v192
      %v197 = vunpack.c.l.b16 %v175
      %v198 = vunpack.c.l.b16 %v176
      %v199 = vpack.c.b16 %v198, %v197
      %200 = vrot.lane.b32.xlu0 %v199, 32
      %v201 = vpop.permute.xlu0 %200
      %v203 = vunpack.c.l.b16 %v177
      %v204 = vpack.c.b16 %v203, %v192
      %v206 = vshrl.u32 %v204, 16
      %v208 = vshll.u32 %v204, 16
      %v210 = vrot.slane %v208, 1
      %v211 = vor.u32 %v206, %v210
      %212 = vrot.lane.b32.xlu0 %v211, 64
      %v213 = vpop.permute.xlu0 %212
      %v216 = vunpack.c.l.b16 %v179
      %v217 = vunpack.c.l.b16 %v180
      %v218 = vpack.c.b16 %v217, %v216
      %219 = vrot.lane.b32.xlu0 %v218, 96
      %v220 = vpop.permute.xlu0 %219
      %v223 = vunpack.c.l.b16 %v182
      %v224 = vunpack.c.l.b16 %v183
      %v225 = vpack.c.b16 %v224, %v223
      %v227 = vunpack.c.l.b16 %v184
      %v228 = vpack.c.b16 %v227, %v216
      %v230 = vshrl.u32 %v228, 16
      %v232 = vshll.u32 %v228, 16
      %v234 = vrot.slane %v232, 1
      %v235 = vor.u32 %v230, %v234
      %236 = vrot.lane.b32.xlu0 %v235, 32
      %v237 = vpop.permute.xlu0 %236
      %v240 = vunpack.c.l.b16 %v185
      %v241 = vunpack.c.l.b16 %v186
      %v242 = vpack.c.b16 %v241, %v240
      %v243 = vrot.slane %v242, 2
      %244 = vrot.lane.b32.xlu0 %v243, 64
      %v245 = vpop.permute.xlu0 %244
      %v248 = vunpack.c.l.b16 %v187
      %v249 = vunpack.c.l.b16 %v188
      %v250 = vpack.c.b16 %v249, %v248
      %v251 = vrot.slane %v250, 2
      %252 = vrot.lane.b32.xlu0 %v251, 96
      %v253 = vpop.permute.xlu0 %252
      %v255 = vunpack.c.l.b16 %v189
      %v256 = vpack.c.b16 %v255, %v255
      %vm257 = vsmask.f32 5376
      %v259 = vshrl.u32 %v242, 16
      %v261 = vrot.slane %v259, 2
      %v262 = vshll.u32 %v242, 16
      %v264 = vrot.slane %v262, 3
      %v265 = vor.u32 %v261, %v264
      %v267 = vshll.u32 %v256, 16
      %v269 = vrot.slane %v267, 3
      %v270 = vsel %vm257, %v265, %v269
      %vm271 = vcmask 261120
      %v274 = vsel %vm271, %v194, %v201
      %vm275 = vcmask 523264
      %v277 = vsel %vm275, %v274, %v213
      %vm278 = vcmask 785408
      %v280 = vsel %vm278, %v277, %v220
      %v284 = vsel %vm271, %v225, %v237
      %v286 = vsel %vm275, %v284, %v245
      %v288 = vsel %vm278, %v286, %v253
      %v290 = vld [vmem:[%s1] sm:$0xf]
      %v291 = vld [vmem:[%s1 + $0x4] sm:$0xf]
      %v292 = vld [vmem:[%s1 + $0x8] sm:$0xf]
      %v293 = vld [vmem:[%s1 + $0xc] sm:$0xf]
      %v294 = vld [vmem:[%s1 + $0x10] sm:$0xf]
      %v295 = vld [vmem:[%s1 + $0x14] sm:$0xf]
      %v296 = vld [vmem:[%s1 + $0x18] sm:$0xf]
      %v297 = vld [vmem:[%s1 + $0x1c] sm:$0xf]
      %v298 = vld [vmem:[%s1 + $0x20] sm:$0xf]
      %v299 = vld [vmem:[%s1 + $0x24] sm:$0xf]
      %v300 = vld [vmem:[%s1 + $0x28] sm:$0xf]
      %v301 = vld [vmem:[%s1 + $0x2c] sm:$0xf]
      %v302 = vld [vmem:[%s1 + $0x30] sm:$0xf]
      %v303 = vld [vmem:[%s1 + $0x34] sm:$0xf]
      %v304 = vld [vmem:[%s1 + $0x38] sm:$0xf]
      %v305 = vld [vmem:[%s1 + $0x3c] sm:$0xf]
      %v306 = vld [vmem:[%s1 + $0x40] sm:$0xf]
      %v307 = vld [vmem:[%s1 + $0x44] sm:$0xf]
      %v308 = vld [vmem:[%s1 + $0x48] sm:$0xf]
      %v309 = vld [vmem:[%s1 + $0x4c] sm:$0xf]
      %v310 = vld [vmem:[%s1 + $0x50] sm:$0xf]
      %v311 = vld [vmem:[%s1 + $0x54] sm:$0xf]
      %v312 = vld [vmem:[%s1 + $0x58] sm:$0xf]
      %v313 = vld [vmem:[%s1 + $0x5c] sm:$0xf]
      %v314 = vld [vmem:[%s1 + $0x60] sm:$0xf]
      %v315 = vld [vmem:[%s1 + $0x64] sm:$0xf]
      %v316 = vld [vmem:[%s1 + $0x68] sm:$0xf]
      %v317 = vld [vmem:[%s1 + $0x6c] sm:$0xf]
      %v318 = vld [vmem:[%s1 + $0x70] sm:$0xf]
      %v319 = vld [vmem:[%s1 + $0x74] sm:$0xf]
      %v320 = vld [vmem:[%s1 + $0x78] sm:$0xf]
      %v321 = vld [vmem:[%s1 + $0x7c] sm:$0xf]
      %v322 = vld [vmem:[%s1 + $0x80] sm:$0xf]
      %v323 = vld [vmem:[%s1 + $0x84] sm:$0xf]
      %v324 = vld [vmem:[%s1 + $0x88] sm:$0xf]
      %v325 = vld [vmem:[%s1 + $0x8c] sm:$0xf]
      %v326 = vld [vmem:[%s2] sm:$0x1]
      %v328 = vperm.slane %v326, 0
      %v366 = vunpack.c.l.b16 %v290
      %v367 = vunpack.c.l.b16 %v291
      %v368 = vunpack.c.l.b16 %v292
      %v369 = vunpack.c.l.b16 %v293
      %v370 = vunpack.c.l.b16 %v294
      %v371 = vunpack.c.l.b16 %v295
      %v372 = vunpack.c.l.b16 %v296
      %v373 = vunpack.c.l.b16 %v297
      %v374 = vunpack.c.l.b16 %v298
      %v375 = vunpack.c.l.b16 %v299
      %v376 = vunpack.c.l.b16 %v300
      %v377 = vunpack.c.l.b16 %v301
      %v378 = vunpack.c.l.b16 %v302
      %v379 = vunpack.c.l.b16 %v303
      %v380 = vunpack.c.l.b16 %v304
      %v381 = vunpack.c.l.b16 %v305
      %v382 = vunpack.c.l.b16 %v306
      %v383 = vunpack.c.l.b16 %v307
      %v384 = vunpack.c.l.b16 %v308
      %v385 = vunpack.c.l.b16 %v309
      %v386 = vunpack.c.l.b16 %v310
      %v387 = vunpack.c.l.b16 %v311
      %v388 = vunpack.c.l.b16 %v312
      %v389 = vunpack.c.l.b16 %v313
      %v390 = vunpack.c.l.b16 %v314
      %v391 = vunpack.c.l.b16 %v315
      %v392 = vunpack.c.l.b16 %v316
      %v393 = vunpack.c.l.b16 %v317
      %v394 = vunpack.c.l.b16 %v318
      %v395 = vunpack.c.l.b16 %v319
      %v396 = vunpack.c.l.b16 %v320
      %v397 = vunpack.c.l.b16 %v321
      %v398 = vunpack.c.l.b16 %v322
      %v399 = vunpack.c.l.b16 %v323
      %v400 = vunpack.c.l.b16 %v324
      %v401 = vunpack.c.l.b16 %v325
      %v402 = vpack.c.b16 %v367, %v366
      %v403 = vpack.c.b16 %v369, %v368
      %v404 = vpack.c.b16 %v371, %v370
      %v405 = vpack.c.b16 %v373, %v372
      %v406 = vpack.c.b16 %v375, %v374
      %v407 = vpack.c.b16 %v377, %v376
      %v408 = vpack.c.b16 %v379, %v378
      %v409 = vpack.c.b16 %v381, %v380
      %v410 = vpack.c.b16 %v383, %v382
      %v411 = vpack.c.b16 %v385, %v384
      %v412 = vpack.c.b16 %v387, %v386
      %v413 = vpack.c.b16 %v389, %v388
      %v414 = vpack.c.b16 %v391, %v390
      %v415 = vpack.c.b16 %v393, %v392
      %v416 = vpack.c.b16 %v395, %v394
      %v417 = vpack.c.b16 %v397, %v396
      %v418 = vpack.c.b16 %v399, %v398
      %v419 = vpack.c.b16 %v401, %v400
      %v439 = vsel %vm271, %v270, 0
      %441 = vmatpush.bf16.msra.mxu0 %v409
      %442 = vmatpush.bf16.msra.mxu0 %v408
      %443 = vmatpush.bf16.msra.mxu0 %v407
      %444 = vmatpush.bf16.msra.mxu0 %v406
      %445 = vmatpush.bf16.msra.mxu0 %v405
      %446 = vmatpush.bf16.msra.mxu0 %v404
      %447 = vmatpush.bf16.msra.mxu0 %v403
      %448 = vmatpush.bf16.msra.mxu0 %v402
      %449 = vmatmul.bf16.gmra.mxu0 %v280
      %v450 = vpop.f32.mrf.mxu0
      %v451 = vadd.f32 %v328, %v450
      %v452 = vpop.f32.mrf.mxu0
      %v453 = vadd.f32 %v328, %v452
      %454 = vdwg.mxu0
      %455 = vmatpush.bf16.msra.mxu0 %v417
      %456 = vmatpush.bf16.msra.mxu0 %v416
      %457 = vmatpush.bf16.msra.mxu0 %v415
      %458 = vmatpush.bf16.msra.mxu0 %v414
      %459 = vmatpush.bf16.msra.mxu0 %v413
      %460 = vmatpush.bf16.msra.mxu0 %v412
      %461 = vmatpush.bf16.msra.mxu0 %v411
      %462 = vmatpush.bf16.msra.mxu0 %v410
      %463 = vmatmul.bf16.gmra.mxu0 %v288
      %v464 = vpop.f32.mrf.mxu0
      %v465 = vadd.f32 %v451, %v464
      %v466 = vpop.f32.mrf.mxu0
      %v467 = vadd.f32 %v453, %v466
      %468 = vdwg.mxu0
      %469 = vmatpush.bf16.msra.mxu0 0
      %470 = vmatpush.bf16.msra.mxu0 0
      %471 = vmatpush.bf16.msra.mxu0 0
      %472 = vmatpush.bf16.msra.mxu0 0
      %473 = vmatpush.bf16.msra.mxu0 0
      %474 = vmatpush.bf16.msra.mxu0 0
      %475 = vmatpush.bf16.msra.mxu0 %v419
      %476 = vmatpush.bf16.msra.mxu0 %v418
      %477 = vmatmul.bf16.gmra.mxu0 %v439
      %v478 = vpop.f32.mrf.mxu0
      %v479 = vadd.f32 %v465, %v478
      %v480 = vpop.f32.mrf.mxu0
      %v481 = vadd.f32 %v467, %v480
      %482 = vdwg.mxu0
      %v483 = vmax.f32 %v479, 0.0
      %v484 = vmax.f32 %v481, 0.0
      %v485 = vpack.c.bf16 %v483, %v483
      %v486 = vpack.c.bf16 %v484, %v484
      %vm487 = vcmask 257024
      %488 = vst.msk [vmem:[%s170] sm:$0xf] %vm487, %v485
      %vm489 = vcmask 254976
      %490 = vst.msk [vmem:[%s170 + $0x4] sm:$0x3] %vm489, %v486
      %p491 = scmp.lt.s32.totalorder %s14, 1
      %s492 = scalar_select %p491, %s14, 1
      %s493 = smul.addr %s492, 2
      %s494 = smul.addr %s493, 4
      %s495 = scalar_lea.vmem %s3, %s494
      // Predicated region
      $region33: #{vae_background_forward.6} parent=31 // pred_check
        %p496 = pneg %p100
      $region34: #{vae_background_forward.6} parent=31 // pred_check_branch
        %498 = sbr.rel (%p496) target = $region36
      $region35: #{vae_background_forward.6} parent=31 // pred_region
        _
      $region36: #{vae_background_forward.6} parent=31 // pred_fallthru
        _
    $region32: #{vae_background_forward.6} parent=5 // pred_fallthru
      _
    %p499 = scmp.le.s32.totalorder 2, %s9
    // Predicated region
    $region37: #{vae_background_forward.6} parent=5 // pred_check
      %p500 = pneg %p499
    $region38: #{vae_background_forward.6} parent=5 // pred_check_branch
      %502 = sbr.rel (%p500) target = $region40
    $region39: #{vae_background_forward.6} parent=5 // pred_region
      %s503 = ssub.s32 %s9, 2
      // Predicated region
      $region41: #{vae_background_forward.6} parent=39 // pred_check
        %p504 = pneg %p106
      $region42: #{vae_background_forward.6} parent=39 // pred_check_branch
        %506 = sbr.rel (%p504) target = $region44
      $region43: #{vae_background_forward.6} parent=39 // pred_region
        %p507 = scmp.lt.s32.totalorder %s15, 1
        %s508 = scalar_select %p507, %s15, 1
        %s509 = smul.addr %s508, 2
        %s510 = smul.addr %s509, 4
        %s511 = scalar_lea.vmem %s3, %s510
      $region44: #{vae_background_forward.6} parent=39 // pred_fallthru
        _
    $region40: #{vae_background_forward.6} parent=5 // pred_fallthru
      _
  $region6: #{vae_background_forward.6} parent=0 // loop_footer
    %s13 = sadd.s32 1, %s9
  $region7: #{vae_background_forward.6} parent=0 // loop_footer_branch
    %8 = sbr.rel target = $region3
  $region8: #{vae_background_forward.6} parent=0 // loop_exit
    _

// kernel: vae_background_forward.7
$region0: #{vae_background_forward.7}
  #allocation0 [shape = 'u32[]', space=smem, size = 0x4, offset = 0x4, fixed_abs, tag = 'smem constant byte address 0x4 - core index']
  #allocation1 [shape = 'u32[72,128]{1,0:T(1,128)}', space=vmem, size = 0x9000, scoped, tag = 'internal scratch']
  %s0 = inlined_call_operand.vmem [shape: bf16[2,4,8,32], index: 0, kind: input, shape index: {}]
  %s1 = inlined_call_operand.vmem [shape: bf16[288,64], index: 1, kind: input, shape index: {}]
  %s2 = inlined_call_operand.vmem [shape: f32[1,64], index: 2, kind: input, shape index: {}]
  %s3 = inlined_call_operand.vmem [shape: bf16[2,2,64], index: 3, kind: output, shape index: {}]
  %s4 = sld [smem:[#allocation0]]
  $region45: #{vae_background_forward.7} parent=0
    _
  %s6 = ssub.s32 1, %s4
  %s7 = scalar_select 0, %s6, %s4
  loop: start=0, step=1, limit=4
  $region2: #{vae_background_forward.7} parent=0 // loop_pre_header
    _
  $region3: #{vae_background_forward.7} parent=0 // loop_header
    %s9 = sphi 0, %s13
    %p10 = scmp.ge.s32.totalorder %s9, 4
    %s19 = sphi 0, %s21
    %s22 = sphi 0, %s19
    %s23 = sphi 0, %s22
    %s39 = sphi 0, %s23
    %s43 = sphi 0, %s43
    %s45 = sphi 0, %s43
    %s46 = sphi 0, %s45
    %s60 = sphi 0, %s46
    %s64 = sphi 0, %s64
    %s66 = sphi 0, %s64
    %s67 = sphi 0, %s66
    %s81 = sphi 0, %s67
    %s87 = sphi 0, %s89
    %s90 = sphi 0, %s87
    %s91 = sphi 0, %s90
    %s107 = sphi 0, %s91
  $region4: #{vae_background_forward.7} parent=0 // loop_header_branch
    %12 = sbr.rel (%p10) target = $region8
  $region5: #{vae_background_forward.7} parent=0 // loop_body
    %s14 = ssub.s32 %s9, 1
    %s15 = ssub.s32 %s9, 2
    %s16 = sadd.s32 %s9, 1
    %s17 = ssub.s32 %s9, %s16
    %p18 = scmp.eq.s32.totalorder %s17, 0
    %s20 = sadd.s32 %s19, 1
    %s21 = scalar_select %p18, %s19, %s20
    %p24 = pneg %p18
    %p25 = scmp.eq.s32.totalorder %s9, 1
    %p26 = por %p24, %p25
    %p27 = scmp.ne.s32.totalorder %s19, %s22
    %p28 = scmp.eq.s32.totalorder %s9, 0
    %p29 = por %p27, %p28
    %p30 = scmp.ne.s32.totalorder %s19, %s22
    %p31 = scmp.eq.s32.totalorder %s14, 1
    %p32 = por %p30, %p31
    %p33 = scmp.ne.s32.totalorder %s22, %s23
    %p34 = scmp.eq.s32.totalorder %s14, 0
    %p35 = por %p33, %p34
    %p36 = scmp.ne.s32.totalorder %s22, %s23
    %p37 = scmp.eq.s32.totalorder %s15, 1
    %p38 = por %p36, %p37
    %p40 = scmp.ne.s32.totalorder %s23, %s39
    %p41 = scmp.eq.s32.totalorder %s15, 0
    %p42 = por %p40, %p41
    %s44 = sadd.s32 %s43, 1
    %p47 = scmp.eq.s32.totalorder %s9, 1
    %p48 = scmp.ne.s32.totalorder %s43, %s45
    %p49 = scmp.eq.s32.totalorder %s9, 0
    %p50 = por %p48, %p49
    %p51 = scmp.ne.s32.totalorder %s43, %s45
    %p52 = scmp.eq.s32.totalorder %s14, 1
    %p53 = por %p51, %p52
    %p54 = scmp.ne.s32.totalorder %s45, %s46
    %p55 = scmp.eq.s32.totalorder %s14, 0
    %p56 = por %p54, %p55
    %p57 = scmp.ne.s32.totalorder %s45, %s46
    %p58 = scmp.eq.s32.totalorder %s15, 1
    %p59 = por %p57, %p58
    %p61 = scmp.ne.s32.totalorder %s46, %s60
    %p62 = scmp.eq.s32.totalorder %s15, 0
    %p63 = por %p61, %p62
    %s65 = sadd.s32 %s64, 1
    %p68 = scmp.eq.s32.totalorder %s9, 1
    %p69 = scmp.ne.s32.totalorder %s64, %s66
    %p70 = scmp.eq.s32.totalorder %s9, 0
    %p71 = por %p69, %p70
    %p72 = scmp.ne.s32.totalorder %s64, %s66
    %p73 = scmp.eq.s32.totalorder %s14, 1
    %p74 = por %p72, %p73
    %p75 = scmp.ne.s32.totalorder %s66, %s67
    %p76 = scmp.eq.s32.totalorder %s14, 0
    %p77 = por %p75, %p76
    %p78 = scmp.ne.s32.totalorder %s66, %s67
    %p79 = scmp.eq.s32.totalorder %s15, 1
    %p80 = por %p78, %p79
    %p82 = scmp.ne.s32.totalorder %s67, %s81
    %p83 = scmp.eq.s32.totalorder %s15, 0
    %p84 = por %p82, %p83
    %s85 = ssub.s32 %s9, %s16
    %p86 = scmp.eq.s32.totalorder %s85, 0
    %s88 = sadd.s32 %s87, 1
    %s89 = scalar_select %p86, %s87, %s88
    %p92 = pneg %p86
    %p93 = scmp.eq.s32.totalorder %s9, 1
    %p94 = por %p92, %p93
    %p95 = scmp.ne.s32.totalorder %s87, %s90
    %p96 = scmp.eq.s32.totalorder %s9, 0
    %p97 = por %p95, %p96
    %p98 = scmp.ne.s32.totalorder %s87, %s90
    %p99 = scmp.eq.s32.totalorder %s14, 1
    %p100 = por %p98, %p99
    %p101 = scmp.ne.s32.totalorder %s90, %s91
    %p102 = scmp.eq.s32.totalorder %s14, 0
    %p103 = por %p101, %p102
    %p104 = scmp.ne.s32.totalorder %s90, %s91
    %p105 = scmp.eq.s32.totalorder %s15, 1
    %p106 = por %p104, %p105
    %p108 = scmp.ne.s32.totalorder %s91, %s107
    %p109 = scmp.eq.s32.totalorder %s15, 0
    %p110 = por %p108, %p109
    %p111 = scmp.le.s32.totalorder 1, %s9
    %p112 = scmp.lt.s32.totalorder %s9, 3
    %p113 = pnand %p111, %p112
    %p114 = pneg %p113
    // Predicated region
    $region9: #{vae_background_forward.7} parent=5 // pred_check
      _
    $region10: #{vae_background_forward.7} parent=5 // pred_check_branch
      %116 = sbr.rel (%p113) target = $region12
    $region11: #{vae_background_forward.7} parent=5 // pred_region
      %s117 = ssub.s32 %s9, 1
      // Predicated region
      $region13: #{vae_background_forward.7} parent=11 // pred_check
        %p118 = pneg %p56
      $region14: #{vae_background_forward.7} parent=11 // pred_check_branch
        %120 = sbr.rel (%p118) target = $region16
      $region15: #{vae_background_forward.7} parent=11 // pred_region
        _
      $region16: #{vae_background_forward.7} parent=11 // pred_fallthru
        _
      // Predicated region
      $region17: #{vae_background_forward.7} parent=11 // pred_check
        %p121 = pneg %p77
      $region18: #{vae_background_forward.7} parent=11 // pred_check_branch
        %123 = sbr.rel (%p121) target = $region20
      $region19: #{vae_background_forward.7} parent=11 // pred_region
        _
      $region20: #{vae_background_forward.7} parent=11 // pred_fallthru
        _
    $region12: #{vae_background_forward.7} parent=5 // pred_fallthru
      _
    %p124 = scmp.lt.s32.totalorder %s9, 2
    // Predicated region
    $region21: #{vae_background_forward.7} parent=5 // pred_check
      %p125 = pneg %p124
    $region22: #{vae_background_forward.7} parent=5 // pred_check_branch
      %127 = sbr.rel (%p125) target = $region24
    $region23: #{vae_background_forward.7} parent=5 // pred_region
      // Predicated region
      $region25: #{vae_background_forward.7} parent=23 // pred_check
        %p128 = pneg %p29
      $region26: #{vae_background_forward.7} parent=23 // pred_check_branch
        %130 = sbr.rel (%p128) target = $region28
      $region27: #{vae_background_forward.7} parent=23 // pred_region
        %p131 = scmp.lt.s32.totalorder %s9, 1
        %s132 = scalar_select %p131, %s9, 1
        %s133 = smul.addr %s132, 4
        %s134 = smul.addr %s133, 4
        %s135 = scalar_lea.vmem %s0, %s134
      $region28: #{vae_background_forward.7} parent=23 // pred_fallthru
        _
    $region24: #{vae_background_forward.7} parent=5 // pred_fallthru
      _
    %p136 = scmp.le.s32.totalorder 1, %s9
    %p137 = scmp.lt.s32.totalorder %s9, 3
    %p138 = pnand %p136, %p137
    %p139 = pneg %p138
    // Predicated region
    $region29: #{vae_background_forward.7} parent=5 // pred_check
      _
    $region30: #{vae_background_forward.7} parent=5 // pred_check_branch
      %141 = sbr.rel (%p138) target = $region32
    $region31: #{vae_background_forward.7} parent=5 // pred_region
      %s142 = ssub.s32 %s9, 1
      %p143 = scmp.lt.s32.totalorder %s14, 1
      %s144 = scalar_select %p143, %s14, 1
      %s145 = smul.addr %s144, 4
      %s146 = smul.addr %s145, 4
      %s147 = scalar_lea.vmem %s0, %s146
      %p148 = pneg %p35
      %p149 = pneg %p32
      %p150 = pneg %p56
      %p151 = pneg %p53
      %p152 = pneg %p77
      %p153 = pneg %p74
      %p154 = pneg %p103
      %p155 = pneg %p100
      %p156 = scmp.lt.s32.totalorder %s14, 1
      %s157 = scalar_select %p156, %s14, 1
      %s158 = scalar_lea.vmem %s3, %s157
      %p159 = scmp.lt.s32.totalorder %s14, 1
      %s160 = scalar_select %p159, %s14, 1
      %s161 = smul.addr %s160, 4
      %s162 = smul.addr %s161, 4
      %s163 = scalar_lea.vmem %s0, %s162
      %p164 = scmp.lt.s32.totalorder %s14, 1
      %s165 = scalar_select %p164, %s14, 1
      %s166 = scalar_lea.vmem %s3, %s165
      %v168 = vld [vmem:[%s163] sm:$0x1]
      %s169 = scalar_lea.vmem %s163, 4
      %v170 = vld [vmem:[%s169] sm:$0x1]
      %v171 = vld [vmem:[%s163] sm:$0x3]
      %s172 = scalar_lea.vmem %s163, 8
      %v173 = vld [vmem:[%s172] sm:$0x1]
      %s174 = scalar_lea.vmem %s163, 12
      %v175 = vld [vmem:[%s174] sm:$0x1]
      %v176 = vld [vmem:[%s172] sm:$0x3]
      %v177 = vld [vmem:[%s163] sm:$0x2]
      %v178 = vld [vmem:[%s169] sm:$0x2]
      %v179 = vld [vmem:[%s163] sm:$0x6]
      %v181 = vunpack.c.l.b16 %v170
      %v182 = vpack.c.b16 %v181, %v181
      %183 = vrot.lane.b32.xlu0 %v182, 32
      %v184 = vpop.permute.xlu0 %183
      %v186 = vunpack.c.l.b16 %v171
      %v187 = vpack.c.b16 %v186, %v186
      %v189 = vshrl.u32 %v187, 16
      %v191 = vshll.u32 %v187, 16
      %v193 = vrot.slane %v191, 1
      %v194 = vor.u32 %v189, %v193
      %195 = vrot.lane.b32.xlu0 %v194, 64
      %v196 = vpop.permute.xlu0 %195
      %v198 = vunpack.c.l.b16 %v173
      %v199 = vpack.c.b16 %v198, %v198
      %200 = vrot.lane.b32.xlu0 %v199, 96
      %v201 = vpop.permute.xlu0 %200
      %v203 = vunpack.c.l.b16 %v176
      %v204 = vpack.c.b16 %v203, %v203
      %v206 = vshrl.u32 %v204, 16
      %v208 = vshll.u32 %v204, 16
      %v210 = vrot.slane %v208, 1
      %v211 = vor.u32 %v206, %v210
      %212 = vrot.lane.b32.xlu0 %v211, 32
      %v213 = vpop.permute.xlu0 %212
      %v215 = vunpack.c.l.b16 %v177
      %v216 = vpack.c.b16 %v215, %v215
      %v217 = vrot.slane %v216, 1
      %218 = vrot.lane.b32.xlu0 %v217, 64
      %v219 = vpop.permute.xlu0 %218
      %v221 = vunpack.c.l.b16 %v178
      %v222 = vpack.c.b16 %v221, %v221
      %v223 = vrot.slane %v222, 1
      %224 = vrot.lane.b32.xlu0 %v223, 96
      %v225 = vpop.permute.xlu0 %224
      %v227 = vunpack.c.l.b16 %v179
      %v228 = vpack.c.b16 %v227, %v227
      %v230 = vshrl.u32 %v228, 16
      %v232 = vrot.slane %v230, 1
      %v233 = vshll.u32 %v228, 16
      %v235 = vrot.slane %v233, 2
      %v236 = vor.u32 %v232, %v235
      %vm237 = vcmask 261120
      %v240 = vsel %vm237, %v168, %v184
      %vm241 = vcmask 523264
      %v243 = vsel %vm241, %v240, %v196
      %vm244 = vcmask 785408
      %v246 = vsel %vm244, %v243, %v201
      %v250 = vsel %vm237, %v175, %v213
      %v252 = vsel %vm241, %v250, %v219
      %v254 = vsel %vm244, %v252, %v225
      %v256 = vld [vmem:[%s1] sm:$0xf]
      %v257 = vld [vmem:[%s1 + $0x4] sm:$0xf]
      %v258 = vld [vmem:[%s1 + $0x8] sm:$0xf]
      %v259 = vld [vmem:[%s1 + $0xc] sm:$0xf]
      %v260 = vld [vmem:[%s1 + $0x10] sm:$0xf]
      %v261 = vld [vmem:[%s1 + $0x14] sm:$0xf]
      %v262 = vld [vmem:[%s1 + $0x18] sm:$0xf]
      %v263 = vld [vmem:[%s1 + $0x1c] sm:$0xf]
      %v264 = vld [vmem:[%s1 + $0x20] sm:$0xf]
      %v265 = vld [vmem:[%s1 + $0x24] sm:$0xf]
      %v266 = vld [vmem:[%s1 + $0x28] sm:$0xf]
      %v267 = vld [vmem:[%s1 + $0x2c] sm:$0xf]
      %v268 = vld [vmem:[%s1 + $0x30] sm:$0xf]
      %v269 = vld [vmem:[%s1 + $0x34] sm:$0xf]
      %v270 = vld [vmem:[%s1 + $0x38] sm:$0xf]
      %v271 = vld [vmem:[%s1 + $0x3c] sm:$0xf]
      %v272 = vld [vmem:[%s1 + $0x40] sm:$0xf]
      %v273 = vld [vmem:[%s1 + $0x44] sm:$0xf]
      %v274 = vld [vmem:[%s1 + $0x48] sm:$0xf]
      %v275 = vld [vmem:[%s1 + $0x4c] sm:$0xf]
      %v276 = vld [vmem:[%s1 + $0x50] sm:$0xf]
      %v277 = vld [vmem:[%s1 + $0x54] sm:$0xf]
      %v278 = vld [vmem:[%s1 + $0x58] sm:$0xf]
      %v279 = vld [vmem:[%s1 + $0x5c] sm:$0xf]
      %v280 = vld [vmem:[%s1 + $0x60] sm:$0xf]
      %v281 = vld [vmem:[%s1 + $0x64] sm:$0xf]
      %v282 = vld [vmem:[%s1 + $0x68] sm:$0xf]
      %v283 = vld [vmem:[%s1 + $0x6c] sm:$0xf]
      %v284 = vld [vmem:[%s1 + $0x70] sm:$0xf]
      %v285 = vld [vmem:[%s1 + $0x74] sm:$0xf]
      %v286 = vld [vmem:[%s1 + $0x78] sm:$0xf]
      %v287 = vld [vmem:[%s1 + $0x7c] sm:$0xf]
      %v288 = vld [vmem:[%s1 + $0x80] sm:$0xf]
      %v289 = vld [vmem:[%s1 + $0x84] sm:$0xf]
      %v290 = vld [vmem:[%s1 + $0x88] sm:$0xf]
      %v291 = vld [vmem:[%s1 + $0x8c] sm:$0xf]
      %v292 = vld [vmem:[%s2] sm:$0x1]
      %v294 = vperm.slane %v292, 0
      %v332 = vunpack.c.l.b16 %v256
      %v333 = vunpack.c.l.b16 %v257
      %v334 = vunpack.c.l.b16 %v258
      %v335 = vunpack.c.l.b16 %v259
      %v336 = vunpack.c.l.b16 %v260
      %v337 = vunpack.c.l.b16 %v261
      %v338 = vunpack.c.l.b16 %v262
      %v339 = vunpack.c.l.b16 %v263
      %v340 = vunpack.c.l.b16 %v264
      %v341 = vunpack.c.l.b16 %v265
      %v342 = vunpack.c.l.b16 %v266
      %v343 = vunpack.c.l.b16 %v267
      %v344 = vunpack.c.l.b16 %v268
      %v345 = vunpack.c.l.b16 %v269
      %v346 = vunpack.c.l.b16 %v270
      %v347 = vunpack.c.l.b16 %v271
      %v348 = vunpack.c.l.b16 %v272
      %v349 = vunpack.c.l.b16 %v273
      %v350 = vunpack.c.l.b16 %v274
      %v351 = vunpack.c.l.b16 %v275
      %v352 = vunpack.c.l.b16 %v276
      %v353 = vunpack.c.l.b16 %v277
      %v354 = vunpack.c.l.b16 %v278
      %v355 = vunpack.c.l.b16 %v279
      %v356 = vunpack.c.l.b16 %v280
      %v357 = vunpack.c.l.b16 %v281
      %v358 = vunpack.c.l.b16 %v282
      %v359 = vunpack.c.l.b16 %v283
      %v360 = vunpack.c.l.b16 %v284
      %v361 = vunpack.c.l.b16 %v285
      %v362 = vunpack.c.l.b16 %v286
      %v363 = vunpack.c.l.b16 %v287
      %v364 = vunpack.c.l.b16 %v288
      %v365 = vunpack.c.l.b16 %v289
      %v366 = vunpack.c.l.b16 %v290
      %v367 = vunpack.c.l.b16 %v291
      %v368 = vpack.c.b16 %v333, %v332
      %v369 = vpack.c.b16 %v335, %v334
      %v370 = vpack.c.b16 %v337, %v336
      %v371 = vpack.c.b16 %v339, %v338
      %v372 = vpack.c.b16 %v341, %v340
      %v373 = vpack.c.b16 %v343, %v342
      %v374 = vpack.c.b16 %v345, %v344
      %v375 = vpack.c.b16 %v347, %v346
      %v376 = vpack.c.b16 %v349, %v348
      %v377 = vpack.c.b16 %v351, %v350
      %v378 = vpack.c.b16 %v353, %v352
      %v379 = vpack.c.b16 %v355, %v354
      %v380 = vpack.c.b16 %v357, %v356
      %v381 = vpack.c.b16 %v359, %v358
      %v382 = vpack.c.b16 %v361, %v360
      %v383 = vpack.c.b16 %v363, %v362
      %v384 = vpack.c.b16 %v365, %v364
      %v385 = vpack.c.b16 %v367, %v366
      %v405 = vsel %vm237, %v236, 0
      %407 = vmatpush.bf16.msra.mxu0 %v375
      %408 = vmatpush.bf16.msra.mxu0 %v374
      %409 = vmatpush.bf16.msra.mxu0 %v373
      %410 = vmatpush.bf16.msra.mxu0 %v372
      %411 = vmatpush.bf16.msra.mxu0 %v371
      %412 = vmatpush.bf16.msra.mxu0 %v370
      %413 = vmatpush.bf16.msra.mxu0 %v369
      %414 = vmatpush.bf16.msra.mxu0 %v368
      %415 = vmatmul.bf16.gmra.mxu0 %v246
      %v416 = vpop.f32.mrf.mxu0
      %v417 = vadd.f32 %v294, %v416
      %v418 = vpop.f32.mrf.mxu0
      %419 = vdwg.mxu0
      %420 = vmatpush.bf16.msra.mxu0 %v383
      %421 = vmatpush.bf16.msra.mxu0 %v382
      %422 = vmatpush.bf16.msra.mxu0 %v381
      %423 = vmatpush.bf16.msra.mxu0 %v380
      %424 = vmatpush.bf16.msra.mxu0 %v379
      %425 = vmatpush.bf16.msra.mxu0 %v378
      %426 = vmatpush.bf16.msra.mxu0 %v377
      %427 = vmatpush.bf16.msra.mxu0 %v376
      %428 = vmatmul.bf16.gmra.mxu0 %v254
      %v429 = vpop.f32.mrf.mxu0
      %v430 = vadd.f32 %v417, %v429
      %v431 = vpop.f32.mrf.mxu0
      %432 = vdwg.mxu0
      %433 = vmatpush.bf16.msra.mxu0 0
      %434 = vmatpush.bf16.msra.mxu0 0
      %435 = vmatpush.bf16.msra.mxu0 0
      %436 = vmatpush.bf16.msra.mxu0 0
      %437 = vmatpush.bf16.msra.mxu0 0
      %438 = vmatpush.bf16.msra.mxu0 0
      %439 = vmatpush.bf16.msra.mxu0 %v385
      %440 = vmatpush.bf16.msra.mxu0 %v384
      %441 = vmatmul.bf16.gmra.mxu0 %v405
      %v442 = vpop.f32.mrf.mxu0
      %v443 = vadd.f32 %v430, %v442
      %v444 = vpop.f32.mrf.mxu0
      %445 = vdwg.mxu0
      %v446 = vmax.f32 %v443, 0.0
      %v447 = vpack.c.bf16 %v446, %v446
      %vm448 = vcmask 516096
      %449 = vst.msk [vmem:[%s166] sm:$0x1] %vm448, %v447
      %p450 = scmp.lt.s32.totalorder %s14, 1
      %s451 = scalar_select %p450, %s14, 1
      %s452 = scalar_lea.vmem %s3, %s451
      // Predicated region
      $region33: #{vae_background_forward.7} parent=31 // pred_check
        %p453 = pneg %p100
      $region34: #{vae_background_forward.7} parent=31 // pred_check_branch
        %455 = sbr.rel (%p453) target = $region36
      $region35: #{vae_background_forward.7} parent=31 // pred_region
        _
      $region36: #{vae_background_forward.7} parent=31 // pred_fallthru
        _
    $region32: #{vae_background_forward.7} parent=5 // pred_fallthru
      _
    %p456 = scmp.le.s32.totalorder 2, %s9
    // Predicated region
    $region37: #{vae_background_forward.7} parent=5 // pred_check
      %p457 = pneg %p456
    $region38: #{vae_background_forward.7} parent=5 // pred_check_branch
      %459 = sbr.rel (%p457) target = $region40
    $region39: #{vae_background_forward.7} parent=5 // pred_region
      %s460 = ssub.s32 %s9, 2
      // Predicated region
      $region41: #{vae_background_forward.7} parent=39 // pred_check
        %p461 = pneg %p106
      $region42: #{vae_background_forward.7} parent=39 // pred_check_branch
        %463 = sbr.rel (%p461) target = $region44
      $region43: #{vae_background_forward.7} parent=39 // pred_region
        %p464 = scmp.lt.s32.totalorder %s15, 1
        %s465 = scalar_select %p464, %s15, 1
        %s466 = scalar_lea.vmem %s3, %s465
      $region44: #{vae_background_forward.7} parent=39 // pred_fallthru
        _
    $region40: #{vae_background_forward.7} parent=5 // pred_fallthru
      _
  $region6: #{vae_background_forward.7} parent=0 // loop_footer
    %s13 = sadd.s32 1, %s9
  $region7: #{vae_background_forward.7} parent=0 // loop_footer_branch
    %8 = sbr.rel target = $region3
  $region8: #{vae_background_forward.7} parent=0 // loop_exit
    _

// kernel: vae_background_forward.8
$region0: #{vae_background_forward.8}
  #allocation0 [shape = 'u32[]', space=smem, size = 0x4, offset = 0x4, fixed_abs, tag = 'smem constant byte address 0x4 - core index']
  #allocation1 [shape = 'u32[72,128]{1,0:T(1,128)}', space=vmem, size = 0x9000, scoped, tag = 'internal scratch']
  #allocation2 [shape = 'f32[2,256]{1,0:T(2,128)}', space=vmem, size = 0x800, scoped, tag = 'scratch operand']
  %s0 = inlined_call_operand.vmem [shape: bf16[2,512], index: 0, kind: input, shape index: {}]
  %s1 = inlined_call_operand.vmem [shape: bf16[512,256], index: 1, kind: input, shape index: {}]
  %s2 = inlined_call_operand.vmem [shape: f32[1,256], index: 2, kind: input, shape index: {}]
  %s3 = inlined_call_operand.vmem [shape: bf16[256,64], index: 3, kind: input, shape index: {}]
  %s4 = inlined_call_operand.vmem [shape: f32[1,64], index: 4, kind: input, shape index: {}]
  %s5 = inlined_call_operand.vmem [shape: bf16[32,32], index: 5, kind: input, shape index: {}]
  %s6 = inlined_call_operand.vmem [shape: f32[2,32], index: 6, kind: input, shape index: {}]
  %s7 = inlined_call_operand.hbm [shape: f32[2,32], index: 7, kind: output, shape index: {0}]
  %s8 = inlined_call_operand.vmem [shape: f32[2,32], index: 8, kind: output, shape index: {1}]
  %s9 = inlined_call_operand.vmem [shape: f32[2,1], index: 9, kind: output, shape index: {2}]
  %10 = xla_tuple %s7, %s8, %s9
  %s11 = sld [smem:[#allocation0]]
  $region62: #{vae_background_forward.8} parent=0
    _
  %s13 = ssub.s32 1, %s11
  %s14 = scalar_select 0, %s13, %s11
  $region1: #{vae_background_forward.8} parent=0
    #allocation3 [shape = 'u8[1024]{0}', space=vmem, size = 0x400, scoped, tag = 'output window, operand 0, single buffered']
    #allocation4 [shape = 's32[1]{0}', space=sflag, size = 0x4, scoped, tag = 'scoped memory for vae_background_forward.8']
    %15 = vsyncpa [#allocation4], 0
    // Predicated region
    $region2: #{vae_background_forward.8} parent=1 // pred_check
      _
    $region3: #{vae_background_forward.8} parent=1 // pred_check_branch
      %17 = sbr.rel (0) target = $region5
    $region4: #{vae_background_forward.8} parent=1 // pred_region
      _
    $region5: #{vae_background_forward.8} parent=1 // pred_fallthru
      _
    // Predicated region
    $region6: #{vae_background_forward.8} parent=1 // pred_check
      _
    $region7: #{vae_background_forward.8} parent=1 // pred_check_branch
      %19 = sbr.rel (0) target = $region9
    $region8: #{vae_background_forward.8} parent=1 // pred_region
      _
    $region9: #{vae_background_forward.8} parent=1 // pred_fallthru
      _
    // Predicated region
    $region10: #{vae_background_forward.8} parent=1 // pred_check
      _
    $region11: #{vae_background_forward.8} parent=1 // pred_check_branch
      %21 = sbr.rel (0) target = $region13
    $region12: #{vae_background_forward.8} parent=1 // pred_region
      _
    $region13: #{vae_background_forward.8} parent=1 // pred_fallthru
      _
    // Predicated region
    $region14: #{vae_background_forward.8} parent=1 // pred_check
      _
    $region15: #{vae_background_forward.8} parent=1 // pred_check_branch
      %23 = sbr.rel (0) target = $region17
    $region16: #{vae_background_forward.8} parent=1 // pred_region
      _
    $region17: #{vae_background_forward.8} parent=1 // pred_fallthru
      _
    // Predicated region
    $region18: #{vae_background_forward.8} parent=1 // pred_check
      _
    $region19: #{vae_background_forward.8} parent=1 // pred_check_branch
      %25 = sbr.rel (0) target = $region21
    $region20: #{vae_background_forward.8} parent=1 // pred_region
      _
    $region21: #{vae_background_forward.8} parent=1 // pred_fallthru
      _
    // Predicated region
    $region22: #{vae_background_forward.8} parent=1 // pred_check
      _
    $region23: #{vae_background_forward.8} parent=1 // pred_check_branch
      %27 = sbr.rel (0) target = $region25
    $region24: #{vae_background_forward.8} parent=1 // pred_region
      _
    $region25: #{vae_background_forward.8} parent=1 // pred_fallthru
      _
    // Predicated region
    $region26: #{vae_background_forward.8} parent=1 // pred_check
      _
    $region27: #{vae_background_forward.8} parent=1 // pred_check_branch
      %29 = sbr.rel (0) target = $region29
    $region28: #{vae_background_forward.8} parent=1 // pred_region
      _
    $region29: #{vae_background_forward.8} parent=1 // pred_fallthru
      _
    %p31 = scmp.eq.s32.totalorder 0, 0
    // Predicated region
    $region30: #{vae_background_forward.8} parent=1 // pred_check
      %p32 = pneg %p31
    $region31: #{vae_background_forward.8} parent=1 // pred_check_branch
      %34 = sbr.rel (%p32) target = $region33
    $region32: #{vae_background_forward.8} parent=1 // pred_region
      %35 = vst [vmem:[#allocation2] sm:$0xf] 0.0
    $region33: #{vae_background_forward.8} parent=1 // pred_fallthru
      _
    %v36 = vld [vmem:[#allocation2] sm:$0xf]
    %v37 = vld [vmem:[%s0] sm:$0xf]
    %v38 = vld [vmem:[%s1] sm:$0xff]
    %v39 = vld [vmem:[%s1 + $0x8] sm:$0xff]
    %v40 = vld [vmem:[%s1 + $0x10] sm:$0xff]
    %v41 = vld [vmem:[%s1 + $0x18] sm:$0xff]
    %v42 = vld [vmem:[%s1 + $0x20] sm:$0xff]
    %v43 = vld [vmem:[%s1 + $0x28] sm:$0xff]
    %v44 = vld [vmem:[%s1 + $0x30] sm:$0xff]
    %v45 = vld [vmem:[%s1 + $0x38] sm:$0xff]
    %v46 = vld [vmem:[%s1 + $0x40] sm:$0xff]
    %v47 = vld [vmem:[%s1 + $0x48] sm:$0xff]
    %v48 = vld [vmem:[%s1 + $0x50] sm:$0xff]
    %v49 = vld [vmem:[%s1 + $0x58] sm:$0xff]
    %v50 = vld [vmem:[%s1 + $0x60] sm:$0xff]
    %v51 = vld [vmem:[%s1 + $0x68] sm:$0xff]
    %v52 = vld [vmem:[%s1 + $0x70] sm:$0xff]
    %v53 = vld [vmem:[%s1 + $0x78] sm:$0xff]
    %v54 = vld [vmem:[%s1 + $0x80] sm:$0xff]
    %v55 = vld [vmem:[%s1 + $0x88] sm:$0xff]
    %v56 = vld [vmem:[%s1 + $0x90] sm:$0xff]
    %v57 = vld [vmem:[%s1 + $0x98] sm:$0xff]
    %v58 = vld [vmem:[%s1 + $0xa0] sm:$0xff]
    %v59 = vld [vmem:[%s1 + $0xa8] sm:$0xff]
    %v60 = vld [vmem:[%s1 + $0xb0] sm:$0xff]
    %v61 = vld [vmem:[%s1 + $0xb8] sm:$0xff]
    %v62 = vld [vmem:[%s1 + $0xc0] sm:$0xff]
    %v63 = vld [vmem:[%s1 + $0xc8] sm:$0xff]
    %v64 = vld [vmem:[%s1 + $0xd0] sm:$0xff]
    %v65 = vld [vmem:[%s1 + $0xd8] sm:$0xff]
    %v66 = vld [vmem:[%s1 + $0xe0] sm:$0xff]
    %v67 = vld [vmem:[%s1 + $0xe8] sm:$0xff]
    %v68 = vld [vmem:[%s1 + $0xf0] sm:$0xff]
    %v69 = vld [vmem:[%s1 + $0xf8] sm:$0xff]
    %v70 = vld [vmem:[%s1 + $0x100] sm:$0xff]
    %v71 = vld [vmem:[%s1 + $0x108] sm:$0xff]
    %v72 = vld [vmem:[%s1 + $0x110] sm:$0xff]
    %v73 = vld [vmem:[%s1 + $0x118] sm:$0xff]
    %v74 = vld [vmem:[%s1 + $0x120] sm:$0xff]
    %v75 = vld [vmem:[%s1 + $0x128] sm:$0xff]
    %v76 = vld [vmem:[%s1 + $0x130] sm:$0xff]
    %v77 = vld [vmem:[%s1 + $0x138] sm:$0xff]
    %v78 = vld [vmem:[%s1 + $0x140] sm:$0xff]
    %v79 = vld [vmem:[%s1 + $0x148] sm:$0xff]
    %v80 = vld [vmem:[%s1 + $0x150] sm:$0xff]
    %v81 = vld [vmem:[%s1 + $0x158] sm:$0xff]
    %v82 = vld [vmem:[%s1 + $0x160] sm:$0xff]
    %v83 = vld [vmem:[%s1 + $0x168] sm:$0xff]
    %v84 = vld [vmem:[%s1 + $0x170] sm:$0xff]
    %v85 = vld [vmem:[%s1 + $0x178] sm:$0xff]
    %v86 = vld [vmem:[%s1 + $0x180] sm:$0xff]
    %v87 = vld [vmem:[%s1 + $0x188] sm:$0xff]
    %v88 = vld [vmem:[%s1 + $0x190] sm:$0xff]
    %v89 = vld [vmem:[%s1 + $0x198] sm:$0xff]
    %v90 = vld [vmem:[%s1 + $0x1a0] sm:$0xff]
    %v91 = vld [vmem:[%s1 + $0x1a8] sm:$0xff]
    %v92 = vld [vmem:[%s1 + $0x1b0] sm:$0xff]
    %v93 = vld [vmem:[%s1 + $0x1b8] sm:$0xff]
    %v94 = vld [vmem:[%s1 + $0x1c0] sm:$0xff]
    %v95 = vld [vmem:[%s1 + $0x1c8] sm:$0xff]
    %v96 = vld [vmem:[%s1 + $0x1d0] sm:$0xff]
    %v97 = vld [vmem:[%s1 + $0x1d8] sm:$0xff]
    %v98 = vld [vmem:[%s1 + $0x1e0] sm:$0xff]
    %v99 = vld [vmem:[%s1 + $0x1e8] sm:$0xff]
    %v100 = vld [vmem:[%s1 + $0x1f0] sm:$0xff]
    %v101 = vld [vmem:[%s1 + $0x1f8] sm:$0xff]
    %103 = vst [vmem:[#allocation1] ss:$9 sm:$0xff] %v37
    %v104 = vld [vmem:[#allocation1] sm:$0xff]
    %v105 = vld [vmem:[#allocation1 + $0x9] sm:$0xff]
    %v106 = vld [vmem:[#allocation1 + $0x12] sm:$0xff]
    %v107 = vld [vmem:[#allocation1 + $0x1b] sm:$0xff]
    %v176 = vunpack.c.l.b16 %v38
    %v177 = vunpack.c.h.b16 %v38
    %v178 = vunpack.c.l.b16 %v39
    %v179 = vunpack.c.h.b16 %v39
    %v180 = vunpack.c.l.b16 %v40
    %v181 = vunpack.c.h.b16 %v40
    %v182 = vunpack.c.l.b16 %v41
    %v183 = vunpack.c.h.b16 %v41
    %v184 = vunpack.c.l.b16 %v42
    %v185 = vunpack.c.h.b16 %v42
    %v186 = vunpack.c.l.b16 %v43
    %v187 = vunpack.c.h.b16 %v43
    %v188 = vunpack.c.l.b16 %v44
    %v189 = vunpack.c.h.b16 %v44
    %v190 = vunpack.c.l.b16 %v45
    %v191 = vunpack.c.h.b16 %v45
    %v192 = vunpack.c.l.b16 %v46
    %v193 = vunpack.c.h.b16 %v46
    %v194 = vunpack.c.l.b16 %v47
    %v195 = vunpack.c.h.b16 %v47
    %v196 = vunpack.c.l.b16 %v48
    %v197 = vunpack.c.h.b16 %v48
    %v198 = vunpack.c.l.b16 %v49
    %v199 = vunpack.c.h.b16 %v49
    %v200 = vunpack.c.l.b16 %v50
    %v201 = vunpack.c.h.b16 %v50
    %v202 = vunpack.c.l.b16 %v51
    %v203 = vunpack.c.h.b16 %v51
    %v204 = vunpack.c.l.b16 %v52
    %v205 = vunpack.c.h.b16 %v52
    %v206 = vunpack.c.l.b16 %v53
    %v207 = vunpack.c.h.b16 %v53
    %v208 = vunpack.c.l.b16 %v54
    %v209 = vunpack.c.h.b16 %v54
    %v210 = vunpack.c.l.b16 %v55
    %v211 = vunpack.c.h.b16 %v55
    %v212 = vunpack.c.l.b16 %v56
    %v213 = vunpack.c.h.b16 %v56
    %v214 = vunpack.c.l.b16 %v57
    %v215 = vunpack.c.h.b16 %v57
    %v216 = vunpack.c.l.b16 %v58
    %v217 = vunpack.c.h.b16 %v58
    %v218 = vunpack.c.l.b16 %v59
    %v219 = vunpack.c.h.b16 %v59
    %v220 = vunpack.c.l.b16 %v60
    %v221 = vunpack.c.h.b16 %v60
    %v222 = vunpack.c.l.b16 %v61
    %v223 = vunpack.c.h.b16 %v61
    %v224 = vunpack.c.l.b16 %v62
    %v225 = vunpack.c.h.b16 %v62
    %v226 = vunpack.c.l.b16 %v63
    %v227 = vunpack.c.h.b16 %v63
    %v228 = vunpack.c.l.b16 %v64
    %v229 = vunpack.c.h.b16 %v64
    %v230 = vunpack.c.l.b16 %v65
    %v231 = vunpack.c.h.b16 %v65
    %v232 = vunpack.c.l.b16 %v66
    %v233 = vunpack.c.h.b16 %v66
    %v234 = vunpack.c.l.b16 %v67
    %v235 = vunpack.c.h.b16 %v67
    %v236 = vunpack.c.l.b16 %v68
    %v237 = vunpack.c.h.b16 %v68
    %v238 = vunpack.c.l.b16 %v69
    %v239 = vunpack.c.h.b16 %v69
    %v240 = vunpack.c.l.b16 %v70
    %v241 = vunpack.c.h.b16 %v70
    %v242 = vunpack.c.l.b16 %v71
    %v243 = vunpack.c.h.b16 %v71
    %v244 = vunpack.c.l.b16 %v72
    %v245 = vunpack.c.h.b16 %v72
    %v246 = vunpack.c.l.b16 %v73
    %v247 = vunpack.c.h.b16 %v73
    %v248 = vunpack.c.l.b16 %v74
    %v249 = vunpack.c.h.b16 %v74
    %v250 = vunpack.c.l.b16 %v75
    %v251 = vunpack.c.h.b16 %v75
    %v252 = vunpack.c.l.b16 %v76
    %v253 = vunpack.c.h.b16 %v76
    %v254 = vunpack.c.l.b16 %v77
    %v255 = vunpack.c.h.b16 %v77
    %v256 = vunpack.c.l.b16 %v78
    %v257 = vunpack.c.h.b16 %v78
    %v258 = vunpack.c.l.b16 %v79
    %v259 = vunpack.c.h.b16 %v79
    %v260 = vunpack.c.l.b16 %v80
    %v261 = vunpack.c.h.b16 %v80
    %v262 = vunpack.c.l.b16 %v81
    %v263 = vunpack.c.h.b16 %v81
    %v264 = vunpack.c.l.b16 %v82
    %v265 = vunpack.c.h.b16 %v82
    %v266 = vunpack.c.l.b16 %v83
    %v267 = vunpack.c.h.b16 %v83
    %v268 = vunpack.c.l.b16 %v84
    %v269 = vunpack.c.h.b16 %v84
    %v270 = vunpack.c.l.b16 %v85
    %v271 = vunpack.c.h.b16 %v85
    %v272 = vunpack.c.l.b16 %v86
    %v273 = vunpack.c.h.b16 %v86
    %v274 = vunpack.c.l.b16 %v87
    %v275 = vunpack.c.h.b16 %v87
    %v276 = vunpack.c.l.b16 %v88
    %v277 = vunpack.c.h.b16 %v88
    %v278 = vunpack.c.l.b16 %v89
    %v279 = vunpack.c.h.b16 %v89
    %v280 = vunpack.c.l.b16 %v90
    %v281 = vunpack.c.h.b16 %v90
    %v282 = vunpack.c.l.b16 %v91
    %v283 = vunpack.c.h.b16 %v91
    %v284 = vunpack.c.l.b16 %v92
    %v285 = vunpack.c.h.b16 %v92
    %v286 = vunpack.c.l.b16 %v93
    %v287 = vunpack.c.h.b16 %v93
    %v288 = vunpack.c.l.b16 %v94
    %v289 = vunpack.c.h.b16 %v94
    %v290 = vunpack.c.l.b16 %v95
    %v291 = vunpack.c.h.b16 %v95
    %v292 = vunpack.c.l.b16 %v96
    %v293 = vunpack.c.h.b16 %v96
    %v294 = vunpack.c.l.b16 %v97
    %v295 = vunpack.c.h.b16 %v97
    %v296 = vunpack.c.l.b16 %v98
    %v297 = vunpack.c.h.b16 %v98
    %v298 = vunpack.c.l.b16 %v99
    %v299 = vunpack.c.h.b16 %v99
    %v300 = vunpack.c.l.b16 %v100
    %v301 = vunpack.c.h.b16 %v100
    %v302 = vunpack.c.l.b16 %v101
    %v303 = vunpack.c.h.b16 %v101
    %v304 = vpack.c.b16 %v178, %v176
    %v305 = vpack.c.b16 %v179, %v177
    %v306 = vpack.c.b16 %v182, %v180
    %v307 = vpack.c.b16 %v183, %v181
    %v308 = vpack.c.b16 %v186, %v184
    %v309 = vpack.c.b16 %v187, %v185
    %v310 = vpack.c.b16 %v190, %v188
    %v311 = vpack.c.b16 %v191, %v189
    %v312 = vpack.c.b16 %v194, %v192
    %v313 = vpack.c.b16 %v195, %v193
    %v314 = vpack.c.b16 %v198, %v196
    %v315 = vpack.c.b16 %v199, %v197
    %v316 = vpack.c.b16 %v202, %v200
    %v317 = vpack.c.b16 %v203, %v201
    %v318 = vpack.c.b16 %v206, %v204
    %v319 = vpack.c.b16 %v207, %v205
    %v320 = vpack.c.b16 %v210, %v208
    %v321 = vpack.c.b16 %v211, %v209
    %v322 = vpack.c.b16 %v214, %v212
    %v323 = vpack.c.b16 %v215, %v213
    %v324 = vpack.c.b16 %v218, %v216
    %v325 = vpack.c.b16 %v219, %v217
    %v326 = vpack.c.b16 %v222, %v220
    %v327 = vpack.c.b16 %v223, %v221
    %v328 = vpack.c.b16 %v226, %v224
    %v329 = vpack.c.b16 %v227, %v225
    %v330 = vpack.c.b16 %v230, %v228
    %v331 = vpack.c.b16 %v231, %v229
    %v332 = vpack.c.b16 %v234, %v232
    %v333 = vpack.c.b16 %v235, %v233
    %v334 = vpack.c.b16 %v238, %v236
    %v335 = vpack.c.b16 %v239, %v237
    %v336 = vpack.c.b16 %v242, %v240
    %v337 = vpack.c.b16 %v243, %v241
    %v338 = vpack.c.b16 %v246, %v244
    %v339 = vpack.c.b16 %v247, %v245
    %v340 = vpack.c.b16 %v250, %v248
    %v341 = vpack.c.b16 %v251, %v249
    %v342 = vpack.c.b16 %v254, %v252
    %v343 = vpack.c.b16 %v255, %v253
    %v344 = vpack.c.b16 %v258, %v256
    %v345 = vpack.c.b16 %v259, %v257
    %v346 = vpack.c.b16 %v262, %v260
    %v347 = vpack.c.b16 %v263, %v261
    %v348 = vpack.c.b16 %v266, %v264
    %v349 = vpack.c.b16 %v267, %v265
    %v350 = vpack.c.b16 %v270, %v268
    %v351 = vpack.c.b16 %v271, %v269
    %v352 = vpack.c.b16 %v274, %v272
    %v353 = vpack.c.b16 %v275, %v273
    %v354 = vpack.c.b16 %v278, %v276
    %v355 = vpack.c.b16 %v279, %v277
    %v356 = vpack.c.b16 %v282, %v280
    %v357 = vpack.c.b16 %v283, %v281
    %v358 = vpack.c.b16 %v286, %v284
    %v359 = vpack.c.b16 %v287, %v285
    %v360 = vpack.c.b16 %v290, %v288
    %v361 = vpack.c.b16 %v291, %v289
    %v362 = vpack.c.b16 %v294, %v292
    %v363 = vpack.c.b16 %v295, %v293
    %v364 = vpack.c.b16 %v298, %v296
    %v365 = vpack.c.b16 %v299, %v297
    %v366 = vpack.c.b16 %v302, %v300
    %v367 = vpack.c.b16 %v303, %v301
    %432 = vmatpush.bf16.msra.mxu0 %v318
    %433 = vmatpush.bf16.msra.mxu0 %v316
    %434 = vmatpush.bf16.msra.mxu0 %v314
    %435 = vmatpush.bf16.msra.mxu0 %v312
    %436 = vmatpush.bf16.msra.mxu0 %v310
    %437 = vmatpush.bf16.msra.mxu0 %v308
    %438 = vmatpush.bf16.msra.mxu0 %v306
    %439 = vmatpush.bf16.msra.mxu0 %v304
    %440 = vmatmul.bf16.gmra.mxu0 %v104
    %v441 = vpop.f32.mrf.mxu0
    %v442 = vadd.f32 0.0, %v441
    %v443 = vpop.f32.mrf.mxu0
    %444 = vdwg.mxu0
    %445 = vmatpush.bf16.msra.mxu0 %v334
    %446 = vmatpush.bf16.msra.mxu0 %v332
    %447 = vmatpush.bf16.msra.mxu0 %v330
    %448 = vmatpush.bf16.msra.mxu0 %v328
    %449 = vmatpush.bf16.msra.mxu0 %v326
    %450 = vmatpush.bf16.msra.mxu0 %v324
    %451 = vmatpush.bf16.msra.mxu0 %v322
    %452 = vmatpush.bf16.msra.mxu0 %v320
    %453 = vmatmul.bf16.gmra.mxu0 %v105
    %v454 = vpop.f32.mrf.mxu0
    %v455 = vadd.f32 %v442, %v454
    %v456 = vpop.f32.mrf.mxu0
    %457 = vdwg.mxu0
    %458 = vmatpush.bf16.msra.mxu0 %v350
    %459 = vmatpush.bf16.msra.mxu0 %v348
    %460 = vmatpush.bf16.msra.mxu0 %v346
    %461 = vmatpush.bf16.msra.mxu0 %v344
    %462 = vmatpush.bf16.msra.mxu0 %v342
    %463 = vmatpush.bf16.msra.mxu0 %v340
    %464 = vmatpush.bf16.msra.mxu0 %v338
    %465 = vmatpush.bf16.msra.mxu0 %v336
    %466 = vmatmul.bf16.gmra.mxu0 %v106
    %v467 = vpop.f32.mrf.mxu0
    %v468 = vadd.f32 %v455, %v467
    %v469 = vpop.f32.mrf.mxu0
    %470 = vdwg.mxu0
    %471 = vmatpush.bf16.msra.mxu0 %v366
    %472 = vmatpush.bf16.msra.mxu0 %v364
    %473 = vmatpush.bf16.msra.mxu0 %v362
    %474 = vmatpush.bf16.msra.mxu0 %v360
    %475 = vmatpush.bf16.msra.mxu0 %v358
    %476 = vmatpush.bf16.msra.mxu0 %v356
    %477 = vmatpush.bf16.msra.mxu0 %v354
    %478 = vmatpush.bf16.msra.mxu0 %v352
    %479 = vmatmul.bf16.gmra.mxu0 %v107
    %v480 = vpop.f32.mrf.mxu0
    %v481 = vadd.f32 %v468, %v480
    %v482 = vpop.f32.mrf.mxu0
    %483 = vdwg.mxu0
    %484 = vmatpush.bf16.msra.mxu0 %v319
    %485 = vmatpush.bf16.msra.mxu0 %v317
    %486 = vmatpush.bf16.msra.mxu0 %v315
    %487 = vmatpush.bf16.msra.mxu0 %v313
    %488 = vmatpush.bf16.msra.mxu0 %v311
    %489 = vmatpush.bf16.msra.mxu0 %v309
    %490 = vmatpush.bf16.msra.mxu0 %v307
    %491 = vmatpush.bf16.msra.mxu0 %v305
    %492 = vmatmul.bf16.gmra.mxu0 %v104
    %v493 = vpop.f32.mrf.mxu0
    %v494 = vadd.f32 0.0, %v493
    %v495 = vpop.f32.mrf.mxu0
    %496 = vdwg.mxu0
    %497 = vmatpush.bf16.msra.mxu0 %v335
    %498 = vmatpush.bf16.msra.mxu0 %v333
    %499 = vmatpush.bf16.msra.mxu0 %v331
    %500 = vmatpush.bf16.msra.mxu0 %v329
    %501 = vmatpush.bf16.msra.mxu0 %v327
    %502 = vmatpush.bf16.msra.mxu0 %v325
    %503 = vmatpush.bf16.msra.mxu0 %v323
    %504 = vmatpush.bf16.msra.mxu0 %v321
    %505 = vmatmul.bf16.gmra.mxu0 %v105
    %v506 = vpop.f32.mrf.mxu0
    %v507 = vadd.f32 %v494, %v506
    %v508 = vpop.f32.mrf.mxu0
    %509 = vdwg.mxu0
    %510 = vmatpush.bf16.msra.mxu0 %v351
    %511 = vmatpush.bf16.msra.mxu0 %v349
    %512 = vmatpush.bf16.msra.mxu0 %v347
    %513 = vmatpush.bf16.msra.mxu0 %v345
    %514 = vmatpush.bf16.msra.mxu0 %v343
    %515 = vmatpush.bf16.msra.mxu0 %v341
    %516 = vmatpush.bf16.msra.mxu0 %v339
    %517 = vmatpush.bf16.msra.mxu0 %v337
    %518 = vmatmul.bf16.gmra.mxu0 %v106
    %v519 = vpop.f32.mrf.mxu0
    %v520 = vadd.f32 %v507, %v519
    %v521 = vpop.f32.mrf.mxu0
    %522 = vdwg.mxu0
    %523 = vmatpush.bf16.msra.mxu0 %v367
    %524 = vmatpush.bf16.msra.mxu0 %v365
    %525 = vmatpush.bf16.msra.mxu0 %v363
    %526 = vmatpush.bf16.msra.mxu0 %v361
    %527 = vmatpush.bf16.msra.mxu0 %v359
    %528 = vmatpush.bf16.msra.mxu0 %v357
    %529 = vmatpush.bf16.msra.mxu0 %v355
    %530 = vmatpush.bf16.msra.mxu0 %v353
    %531 = vmatmul.bf16.gmra.mxu0 %v107
    %v532 = vpop.f32.mrf.mxu0
    %v533 = vadd.f32 %v520, %v532
    %v534 = vpop.f32.mrf.mxu0
    %535 = vdwg.mxu0
    %v538 = vrot.slane %v533, 6
    %vm539 = vcmask 1041408
    %v540 = vsel %vm539, %v481, %v538
    %v542 = vadd.f32 %v36, %v540
    %543 = vst [vmem:[#allocation2] sm:$0xf] %v542
    // Predicated region
    $region34: #{vae_background_forward.8} parent=1 // pred_check
      %p544 = pneg %p31
    $region35: #{vae_background_forward.8} parent=1 // pred_check_branch
      %546 = sbr.rel (%p544) target = $region37
    $region36: #{vae_background_forward.8} parent=1 // pred_region
      %v547 = vld [vmem:[#allocation2] sm:$0xf]
      %v548 = vld [vmem:[%s2] sm:$0x3]
      %v550 = vperm.slane %v548, 0
      %v551 = vperm.slane %v548, 1
      %v552 = vrot.slane %v551, 6
      %v553 = vsel %vm539, %v550, %v552
      %v555 = vadd.f32 %v547, %v553
      %v556 = vmax.f32 %v555, 0.0
      %558 = vst [vmem:[#allocation1] ss:$4 sm:$0xff] %v556
      %v559 = vld.sshfl [vmem:[#allocation1] sm:$0xff pattern:$0x73625140]
      %v560 = vld.sshfl [vmem:[#allocation1 + $0x8] sm:$0xff pattern:$0x73625140]
      %v563 = vpack.c.bf16 %v559, %v559
      %v564 = vpack.c.bf16 %v560, %v560
      %v565 = vld [vmem:[%s3] sm:$0xf]
      %v566 = vld [vmem:[%s3 + $0x4] sm:$0xf]
      %v567 = vld [vmem:[%s3 + $0x8] sm:$0xf]
      %v568 = vld [vmem:[%s3 + $0xc] sm:$0xf]
      %v569 = vld [vmem:[%s3 + $0x10] sm:$0xf]
      %v570 = vld [vmem:[%s3 + $0x14] sm:$0xf]
      %v571 = vld [vmem:[%s3 + $0x18] sm:$0xf]
      %v572 = vld [vmem:[%s3 + $0x1c] sm:$0xf]
      %v573 = vld [vmem:[%s3 + $0x20] sm:$0xf]
      %v574 = vld [vmem:[%s3 + $0x24] sm:$0xf]
      %v575 = vld [vmem:[%s3 + $0x28] sm:$0xf]
      %v576 = vld [vmem:[%s3 + $0x2c] sm:$0xf]
      %v577 = vld [vmem:[%s3 + $0x30] sm:$0xf]
      %v578 = vld [vmem:[%s3 + $0x34] sm:$0xf]
      %v579 = vld [vmem:[%s3 + $0x38] sm:$0xf]
      %v580 = vld [vmem:[%s3 + $0x3c] sm:$0xf]
      %v581 = vld [vmem:[%s3 + $0x40] sm:$0xf]
      %v582 = vld [vmem:[%s3 + $0x44] sm:$0xf]
      %v583 = vld [vmem:[%s3 + $0x48] sm:$0xf]
      %v584 = vld [vmem:[%s3 + $0x4c] sm:$0xf]
      %v585 = vld [vmem:[%s3 + $0x50] sm:$0xf]
      %v586 = vld [vmem:[%s3 + $0x54] sm:$0xf]
      %v587 = vld [vmem:[%s3 + $0x58] sm:$0xf]
      %v588 = vld [vmem:[%s3 + $0x5c] sm:$0xf]
      %v589 = vld [vmem:[%s3 + $0x60] sm:$0xf]
      %v590 = vld [vmem:[%s3 + $0x64] sm:$0xf]
      %v591 = vld [vmem:[%s3 + $0x68] sm:$0xf]
      %v592 = vld [vmem:[%s3 + $0x6c] sm:$0xf]
      %v593 = vld [vmem:[%s3 + $0x70] sm:$0xf]
      %v594 = vld [vmem:[%s3 + $0x74] sm:$0xf]
      %v595 = vld [vmem:[%s3 + $0x78] sm:$0xf]
      %v596 = vld [vmem:[%s3 + $0x7c] sm:$0xf]
      %v597 = vld [vmem:[%s4] sm:$0x1]
      %v599 = vperm.slane %v597, 0
      %v633 = vunpack.c.l.b16 %v565
      %v634 = vunpack.c.l.b16 %v566
      %v635 = vunpack.c.l.b16 %v567
      %v636 = vunpack.c.l.b16 %v568
      %v637 = vunpack.c.l.b16 %v569
      %v638 = vunpack.c.l.b16 %v570
      %v639 = vunpack.c.l.b16 %v571
      %v640 = vunpack.c.l.b16 %v572
      %v641 = vunpack.c.l.b16 %v573
      %v642 = vunpack.c.l.b16 %v574
      %v643 = vunpack.c.l.b16 %v575
      %v644 = vunpack.c.l.b16 %v576
      %v645 = vunpack.c.l.b16 %v577
      %v646 = vunpack.c.l.b16 %v578
      %v647 = vunpack.c.l.b16 %v579
      %v648 = vunpack.c.l.b16 %v580
      %v649 = vunpack.c.l.b16 %v581
      %v650 = vunpack.c.l.b16 %v582
      %v651 = vunpack.c.l.b16 %v583
      %v652 = vunpack.c.l.b16 %v584
      %v653 = vunpack.c.l.b16 %v585
      %v654 = vunpack.c.l.b16 %v586
      %v655 = vunpack.c.l.b16 %v587
      %v656 = vunpack.c.l.b16 %v588
      %v657 = vunpack.c.l.b16 %v589
      %v658 = vunpack.c.l.b16 %v590
      %v659 = vunpack.c.l.b16 %v591
      %v660 = vunpack.c.l.b16 %v592
      %v661 = vunpack.c.l.b16 %v593
      %v662 = vunpack.c.l.b16 %v594
      %v663 = vunpack.c.l.b16 %v595
      %v664 = vunpack.c.l.b16 %v596
      %v665 = vpack.c.b16 %v634, %v633
      %v666 = vpack.c.b16 %v636, %v635
      %v667 = vpack.c.b16 %v638, %v637
      %v668 = vpack.c.b16 %v640, %v639
      %v669 = vpack.c.b16 %v642, %v641
      %v670 = vpack.c.b16 %v644, %v643
      %v671 = vpack.c.b16 %v646, %v645
      %v672 = vpack.c.b16 %v648, %v647
      %v673 = vpack.c.b16 %v650, %v649
      %v674 = vpack.c.b16 %v652, %v651
      %v675 = vpack.c.b16 %v654, %v653
      %v676 = vpack.c.b16 %v656, %v655
      %v677 = vpack.c.b16 %v658, %v657
      %v678 = vpack.c.b16 %v660, %v659
      %v679 = vpack.c.b16 %v662, %v661
      %v680 = vpack.c.b16 %v664, %v663
      %697 = vmatpush.bf16.msra.mxu0 %v672
      %698 = vmatpush.bf16.msra.mxu0 %v671
      %699 = vmatpush.bf16.msra.mxu0 %v670
      %700 = vmatpush.bf16.msra.mxu0 %v669
      %701 = vmatpush.bf16.msra.mxu0 %v668
      %702 = vmatpush.bf16.msra.mxu0 %v667
      %703 = vmatpush.bf16.msra.mxu0 %v666
      %704 = vmatpush.bf16.msra.mxu0 %v665
      %705 = vmatmul.bf16.gmra.mxu0 %v563
      %v706 = vpop.f32.mrf.mxu0
      %v707 = vadd.f32 %v599, %v706
      %v708 = vpop.f32.mrf.mxu0
      %709 = vdwg.mxu0
      %710 = vmatpush.bf16.msra.mxu0 %v680
      %711 = vmatpush.bf16.msra.mxu0 %v679
      %712 = vmatpush.bf16.msra.mxu0 %v678
      %713 = vmatpush.bf16.msra.mxu0 %v677
      %714 = vmatpush.bf16.msra.mxu0 %v676
      %715 = vmatpush.bf16.msra.mxu0 %v675
      %716 = vmatpush.bf16.msra.mxu0 %v674
      %717 = vmatpush.bf16.msra.mxu0 %v673
      %718 = vmatmul.bf16.gmra.mxu0 %v564
      %v719 = vpop.f32.mrf.mxu0
      %v720 = vadd.f32 %v707, %v719
      %v721 = vpop.f32.mrf.mxu0
      %722 = vdwg.mxu0
      %v723 = vmax.f32 %v720, 0.0
      %vm724 = vcmp.ne.f32.partialorder %v720, %v720
      %v725 = vadd.f32 %v720, 0.0
      %v726 = vand.u32 2147483647, %v720
      %v727 = vsub.f32 0.0, %v726
      %v728 = vmul.f32 %v727, 1.442695
      %v729 = vpow.pop %v728
      %v730 = vadd.f32 %v729, 1.0
      %v731 = vlog2.pop %v730
      %v732 = vmul.f32 %v731, 0.6931472
      %v733 = vmul.f32 -0.5, %v729
      %v734 = vadd.f32 %v733, 1.0
      %v735 = vmul.f32 %v734, %v729
      %v736 = vand.u32 2147483647, %v729
      %vm737 = vcmp.lt.f32.partialorder %v736, 0.0004427343
      %v738 = vsel %vm737, %v735, %v732
      %v739 = vadd.f32 %v723, %v738
      %v740 = vsel %vm724, %v725, %v739
      %v741 = vadd.f32 %v740, 1e-10
      %v742 = vld [vmem:[%s6] sm:$0x3]
      %744 = vrot.lane.b32.xlu0 %v742, 32
      %v745 = vpop.permute.xlu0 %744
      %v747 = vmul.f32 %v741, %v745
      %749 = vrot.lane.b32.xlu0 %v747, 96
      %v750 = vpop.permute.xlu0 %749
      %v752 = vadd.f32 %v720, %v750
      %vm753 = vcmask 254976
      %754 = vst.msk [vmem:[#allocation3] sm:$0x3] %vm753, %v752
      %v755 = vpack.c.bf16 %v752, %v752
      %v756 = vld [vmem:[%s5] sm:$0xf]
      %v757 = vld [vmem:[%s5 + $0x4] sm:$0xf]
      %v758 = vld [vmem:[%s5 + $0x8] sm:$0xf]
      %v759 = vld [vmem:[%s5 + $0xc] sm:$0xf]
      %v764 = vunpack.c.l.b16 %v756
      %v765 = vunpack.c.l.b16 %v757
      %v766 = vunpack.c.l.b16 %v758
      %v767 = vunpack.c.l.b16 %v759
      %v768 = vpack.c.b16 %v765, %v764
      %v769 = vpack.c.b16 %v767, %v766
      %vm772 = vcmask 261120
      %v774 = vsel %vm772, %v755, 0
      %776 = vmatpush.bf16.msra.mxu0 0
      %777 = vmatpush.bf16.msra.mxu0 0
      %778 = vmatpush.bf16.msra.mxu0 0
      %779 = vmatpush.bf16.msra.mxu0 0
      %780 = vmatpush.bf16.msra.mxu0 0
      %781 = vmatpush.bf16.msra.mxu0 0
      %782 = vmatpush.bf16.msra.mxu0 %v769
      %783 = vmatpush.bf16.msra.mxu0 %v768
      %784 = vmatmul.bf16.gmra.mxu0 %v774
      %v785 = vpop.f32.mrf.mxu0
      %v786 = vadd.f32 0.0, %v785
      %v787 = vpop.f32.mrf.mxu0
      %788 = vdwg.mxu0
      %789 = vst.msk [vmem:[%s8] sm:$0x3] %vm753, %v786
      %v790 = vlog2.pop %v741
      %v791 = vmul.f32 %v790, 0.6931472
      %v792 = vsub.f32 0.0, %v791
      %v793 = vmul.f32 %v741, %v741
      %v794 = vmul.f32 %v720, %v720
      %796 = vrot.lane.b32.xlu0 %v794, 32
      %v797 = vpop.permute.xlu0 %796
      %v799 = vadd.f32 %v793, %v797
      %v800 = vrcp.pop 2.0
      %v801 = vmul.f32 2.0, %v800
      %v802 = vsub.f32 1.0, %v801
      %v803 = vmul.f32 %v800, %v802
      %v804 = vadd.f32 %v800, %v803
      %vm805 = vweird.f32 %v800
      %v806 = vsel %vm805, %v800, %v804
      %v807 = vmul.f32 %v799, %v806
      %v808 = vadd.f32 %v792, %v807
      %v809 = vsub.f32 %v808, 0.5
      %811 = vrot.lane.b32.xlu0 %v809, 96
      %v812 = vpop.permute.xlu0 %811
      %v814 = vsel %vm753, %v812, 0.0
      %815 = vadd.xlane.f32.xlu0 %v814
      %v816 = vpop.xlane.xlu0 %815
      %vm817 = vcmask 1024
      %818 = vst.msk [vmem:[%s9] sm:$0x3] %vm817, %v816
    $region37: #{vae_background_forward.8} parent=1 // pred_fallthru
      _
    // Predicated region
    $region38: #{vae_background_forward.8} parent=1 // pred_check
      _
    $region39: #{vae_background_forward.8} parent=1 // pred_check_branch
      %820 = sbr.rel (0) target = $region41
    $region40: #{vae_background_forward.8} parent=1 // pred_region
      %822 = vsyncadd [#allocation4], 0
      %s824 = sshll.u32 [#allocation3], 4
      %s825 = int_to_ptr.vmem [resolvable:$true] %s824
      %s826 = sshll.u32 %s7, 4
      %s827 = int_to_ptr.hbm [resolvable:$true] %s826
      %829 = dma.vmem_to_hbm [thread:$0]  %s825, 32, %s827, [#allocation4]
    $region41: #{vae_background_forward.8} parent=1 // pred_fallthru
      _
    // Predicated region
    $region42: #{vae_background_forward.8} parent=1 // pred_check
      _
    $region43: #{vae_background_forward.8} parent=1 // pred_check_branch
      %831 = sbr.rel (0) target = $region45
    $region44: #{vae_background_forward.8} parent=1 // pred_region
      _
    $region45: #{vae_background_forward.8} parent=1 // pred_fallthru
      _
    // Predicated region
    $region46: #{vae_background_forward.8} parent=1 // pred_check
      _
    $region47: #{vae_background_forward.8} parent=1 // pred_check_branch
      %833 = sbr.rel (0) target = $region49
    $region48: #{vae_background_forward.8} parent=1 // pred_region
      _
    $region49: #{vae_background_forward.8} parent=1 // pred_fallthru
      _
    // Predicated region
    $region50: #{vae_background_forward.8} parent=1 // pred_check
      _
    $region51: #{vae_background_forward.8} parent=1 // pred_check_branch
      %835 = sbr.rel (0) target = $region53
    $region52: #{vae_background_forward.8} parent=1 // pred_region
      %837 = dma.done [#allocation4], 32
    $region53: #{vae_background_forward.8} parent=1 // pred_fallthru
      _
    // Predicated region
    $region54: #{vae_background_forward.8} parent=1 // pred_check
      _
    $region55: #{vae_background_forward.8} parent=1 // pred_check_branch
      %839 = sbr.rel (0) target = $region57
    $region56: #{vae_background_forward.8} parent=1 // pred_region
      _
    $region57: #{vae_background_forward.8} parent=1 // pred_fallthru
      _
    // Predicated region
    $region58: #{vae_background_forward.8} parent=1 // pred_check
      _
    $region59: #{vae_background_forward.8} parent=1 // pred_check_branch
      %841 = sbr.rel (0) target = $region61
    $region60: #{vae_background_forward.8} parent=1 // pred_region
      _
    $region61: #{vae_background_forward.8} parent=1 // pred_fallthru
      _
    %842 = vsyncpa [#allocation4], 1

// kernel: vae_background_forward.9
$region0: #{vae_background_forward.9}
  #allocation0 [shape = 'u32[]', space=smem, size = 0x4, offset = 0x4, fixed_abs, tag = 'smem constant byte address 0x4 - core index']
  #allocation1 [shape = 'u32[72,128]{1,0:T(1,128)}', space=vmem, size = 0x9000, scoped, tag = 'internal scratch']
  #allocation2 [shape = 'bf16[344,32]{1,0:T(8,128)(2,1)}', space=vmem, size = 0x15800, scoped, tag = 'scratch operand']
  #allocation3 [shape = 'bf16[296,32]{1,0:T(8,128)(2,1)}', space=vmem, size = 0x12800, scoped, tag = 'scratch operand']
  #allocation4 [shape = 'bf16[248,32]{1,0:T(8,128)(2,1)}', space=vmem, size = 0xf800, scoped, tag = 'scratch operand']
  %s0 = inlined_call_operand.vmem [shape: f32[2,32], index: 0, kind: input, shape index: {}]
  %s1 = inlined_call_operand.vmem [shape: bf16[2,344,32], index: 1, kind: input, shape index: {}]
  %s2 = inlined_call_operand.vmem [shape: bf16[288,32], index: 2, kind: input, shape index: {}]
  %s3 = inlined_call_operand.vmem [shape: f32[1,32], index: 3, kind: input, shape index: {}]
  %s4 = inlined_call_operand.vmem [shape: bf16[288,32], index: 4, kind: input, shape index: {}]
  %s5 = inlined_call_operand.vmem [shape: f32[1,32], index: 5, kind: input, shape index: {}]
  %s6 = inlined_call_operand.vmem [shape: bf16[288,32], index: 6, kind: input, shape index: {}]
  %s7 = inlined_call_operand.vmem [shape: f32[1,32], index: 7, kind: input, shape index: {}]
  %s8 = inlined_call_operand.vmem [shape: bf16[32,4], index: 8, kind: input, shape index: {}]
  %s9 = inlined_call_operand.vmem [shape: f32[1,4], index: 9, kind: input, shape index: {}]
  %s10 = inlined_call_operand.vmem [shape: f32[2,2,4,192], index: 10, kind: output, shape index: {}]
  %s11 = sld [smem:[#allocation0]]
  $region73: #{vae_background_forward.9} parent=0
    _
  %s13 = ssub.s32 1, %s11
  %s14 = scalar_select 0, %s13, %s11
  loop: start=0, step=1, limit=6
  $region2: #{vae_background_forward.9} parent=0 // loop_pre_header
    _
  $region3: #{vae_background_forward.9} parent=0 // loop_header
    %s16 = sphi 0, %s20
    %p17 = scmp.ge.s32.totalorder %s16, 6
    %s23 = sphi 0, %s35
    %s24 = sphi 0, %s31
    %s25 = sphi 0, %s23
    %s26 = sphi 0, %s24
    %s27 = sphi 0, %s25
    %s28 = sphi 0, %s26
    %s36 = sphi 0, %s36
    %s38 = sphi 0, %s36
    %s39 = sphi 0, %s38
    %s53 = sphi 0, %s39
    %s59 = sphi 0, %s61
    %s62 = sphi 0, %s59
    %s63 = sphi 0, %s62
    %s79 = sphi 0, %s63
    %s83 = sphi 0, %s83
    %s85 = sphi 0, %s83
    %s86 = sphi 0, %s85
    %s100 = sphi 0, %s86
    %s104 = sphi 0, %s104
    %s106 = sphi 0, %s104
    %s107 = sphi 0, %s106
    %s121 = sphi 0, %s107
    %s125 = sphi 0, %s125
    %s127 = sphi 0, %s125
    %s128 = sphi 0, %s127
    %s142 = sphi 0, %s128
    %s146 = sphi 0, %s146
    %s148 = sphi 0, %s146
    %s149 = sphi 0, %s148
    %s163 = sphi 0, %s149
    %s167 = sphi 0, %s167
    %s169 = sphi 0, %s167
    %s170 = sphi 0, %s169
    %s184 = sphi 0, %s170
    %s188 = sphi 0, %s188
    %s190 = sphi 0, %s188
    %s191 = sphi 0, %s190
    %s205 = sphi 0, %s191
    %s209 = sphi 0, %s209
    %s211 = sphi 0, %s209
    %s212 = sphi 0, %s211
    %s226 = sphi 0, %s212
    %s230 = sphi 0, %s230
    %s232 = sphi 0, %s230
    %s233 = sphi 0, %s232
    %s247 = sphi 0, %s233
    %s255 = sphi 0, %s257
    %s258 = sphi 0, %s255
    %s259 = sphi 0, %s258
    %s275 = sphi 0, %s259
  $region4: #{vae_background_forward.9} parent=0 // loop_header_branch
    %19 = sbr.rel (%p17) target = $region8
  $region5: #{vae_background_forward.9} parent=0 // loop_body
    %s21 = ssub.s32 %s16, 1
    %s22 = ssub.s32 %s16, 2
    %s29 = sadd.s32 1, %s24
    %p30 = scmp.ge.s32.totalorder %s29, 2
    %s31 = scalar_select %p30, 0, %s29
    %s32 = sadd.s32 1, %s23
    %s33 = scalar_select %p30, %s32, %s23
    %p34 = scmp.ge.s32.totalorder %s33, 2
    %s35 = scalar_select %p34, 0, %s33
    %s37 = sadd.s32 %s36, 1
    %p40 = scmp.eq.s32.totalorder %s16, 3
    %p41 = scmp.ne.s32.totalorder %s36, %s38
    %p42 = scmp.eq.s32.totalorder %s16, 0
    %p43 = por %p41, %p42
    %p44 = scmp.ne.s32.totalorder %s36, %s38
    %p45 = scmp.eq.s32.totalorder %s21, 3
    %p46 = por %p44, %p45
    %p47 = scmp.ne.s32.totalorder %s38, %s39
    %p48 = scmp.eq.s32.totalorder %s21, 0
    %p49 = por %p47, %p48
    %p50 = scmp.ne.s32.totalorder %s38, %s39
    %p51 = scmp.eq.s32.totalorder %s22, 3
    %p52 = por %p50, %p51
    %p54 = scmp.ne.s32.totalorder %s39, %s53
    %p55 = scmp.eq.s32.totalorder %s22, 0
    %p56 = por %p54, %p55
    %s57 = ssub.s32 %s24, %s31
    %p58 = scmp.eq.s32.totalorder %s57, 0
    %s60 = sadd.s32 %s59, 1
    %s61 = scalar_select %p58, %s59, %s60
    %p64 = pneg %p58
    %p65 = scmp.eq.s32.totalorder %s16, 3
    %p66 = por %p64, %p65
    %p67 = scmp.ne.s32.totalorder %s59, %s62
    %p68 = scmp.eq.s32.totalorder %s16, 0
    %p69 = por %p67, %p68
    %p70 = scmp.ne.s32.totalorder %s59, %s62
    %p71 = scmp.eq.s32.totalorder %s21, 3
    %p72 = por %p70, %p71
    %p73 = scmp.ne.s32.totalorder %s62, %s63
    %p74 = scmp.eq.s32.totalorder %s21, 0
    %p75 = por %p73, %p74
    %p76 = scmp.ne.s32.totalorder %s62, %s63
    %p77 = scmp.eq.s32.totalorder %s22, 3
    %p78 = por %p76, %p77
    %p80 = scmp.ne.s32.totalorder %s63, %s79
    %p81 = scmp.eq.s32.totalorder %s22, 0
    %p82 = por %p80, %p81
    %s84 = sadd.s32 %s83, 1
    %p87 = scmp.eq.s32.totalorder %s16, 3
    %p88 = scmp.ne.s32.totalorder %s83, %s85
    %p89 = scmp.eq.s32.totalorder %s16, 0
    %p90 = por %p88, %p89
    %p91 = scmp.ne.s32.totalorder %s83, %s85
    %p92 = scmp.eq.s32.totalorder %s21, 3
    %p93 = por %p91, %p92
    %p94 = scmp.ne.s32.totalorder %s85, %s86
    %p95 = scmp.eq.s32.totalorder %s21, 0
    %p96 = por %p94, %p95
    %p97 = scmp.ne.s32.totalorder %s85, %s86
    %p98 = scmp.eq.s32.totalorder %s22, 3
    %p99 = por %p97, %p98
    %p101 = scmp.ne.s32.totalorder %s86, %s100
    %p102 = scmp.eq.s32.totalorder %s22, 0
    %p103 = por %p101, %p102
    %s105 = sadd.s32 %s104, 1
    %p108 = scmp.eq.s32.totalorder %s16, 3
    %p109 = scmp.ne.s32.totalorder %s104, %s106
    %p110 = scmp.eq.s32.totalorder %s16, 0
    %p111 = por %p109, %p110
    %p112 = scmp.ne.s32.totalorder %s104, %s106
    %p113 = scmp.eq.s32.totalorder %s21, 3
    %p114 = por %p112, %p113
    %p115 = scmp.ne.s32.totalorder %s106, %s107
    %p116 = scmp.eq.s32.totalorder %s21, 0
    %p117 = por %p115, %p116
    %p118 = scmp.ne.s32.totalorder %s106, %s107
    %p119 = scmp.eq.s32.totalorder %s22, 3
    %p120 = por %p118, %p119
    %p122 = scmp.ne.s32.totalorder %s107, %s121
    %p123 = scmp.eq.s32.totalorder %s22, 0
    %p124 = por %p122, %p123
    %s126 = sadd.s32 %s125, 1
    %p129 = scmp.eq.s32.totalorder %s16, 3
    %p130 = scmp.ne.s32.totalorder %s125, %s127
    %p131 = scmp.eq.s32.totalorder %s16, 0
    %p132 = por %p130, %p131
    %p133 = scmp.ne.s32.totalorder %s125, %s127
    %p134 = scmp.eq.s32.totalorder %s21, 3
    %p135 = por %p133, %p134
    %p136 = scmp.ne.s32.totalorder %s127, %s128
    %p137 = scmp.eq.s32.totalorder %s21, 0
    %p138 = por %p136, %p137
    %p139 = scmp.ne.s32.totalorder %s127, %s128
    %p140 = scmp.eq.s32.totalorder %s22, 3
    %p141 = por %p139, %p140
    %p143 = scmp.ne.s32.totalorder %s128, %s142
    %p144 = scmp.eq.s32.totalorder %s22, 0
    %p145 = por %p143, %p144
    %s147 = sadd.s32 %s146, 1
    %p150 = scmp.eq.s32.totalorder %s16, 3
    %p151 = scmp.ne.s32.totalorder %s146, %s148
    %p152 = scmp.eq.s32.totalorder %s16, 0
    %p153 = por %p151, %p152
    %p154 = scmp.ne.s32.totalorder %s146, %s148
    %p155 = scmp.eq.s32.totalorder %s21, 3
    %p156 = por %p154, %p155
    %p157 = scmp.ne.s32.totalorder %s148, %s149
    %p158 = scmp.eq.s32.totalorder %s21, 0
    %p159 = por %p157, %p158
    %p160 = scmp.ne.s32.totalorder %s148, %s149
    %p161 = scmp.eq.s32.totalorder %s22, 3
    %p162 = por %p160, %p161
    %p164 = scmp.ne.s32.totalorder %s149, %s163
    %p165 = scmp.eq.s32.totalorder %s22, 0
    %p166 = por %p164, %p165
    %s168 = sadd.s32 %s167, 1
    %p171 = scmp.eq.s32.totalorder %s16, 3
    %p172 = scmp.ne.s32.totalorder %s167, %s169
    %p173 = scmp.eq.s32.totalorder %s16, 0
    %p174 = por %p172, %p173
    %p175 = scmp.ne.s32.totalorder %s167, %s169
    %p176 = scmp.eq.s32.totalorder %s21, 3
    %p177 = por %p175, %p176
    %p178 = scmp.ne.s32.totalorder %s169, %s170
    %p179 = scmp.eq.s32.totalorder %s21, 0
    %p180 = por %p178, %p179
    %p181 = scmp.ne.s32.totalorder %s169, %s170
    %p182 = scmp.eq.s32.totalorder %s22, 3
    %p183 = por %p181, %p182
    %p185 = scmp.ne.s32.totalorder %s170, %s184
    %p186 = scmp.eq.s32.totalorder %s22, 0
    %p187 = por %p185, %p186
    %s189 = sadd.s32 %s188, 1
    %p192 = scmp.eq.s32.totalorder %s16, 3
    %p193 = scmp.ne.s32.totalorder %s188, %s190
    %p194 = scmp.eq.s32.totalorder %s16, 0
    %p195 = por %p193, %p194
    %p196 = scmp.ne.s32.totalorder %s188, %s190
    %p197 = scmp.eq.s32.totalorder %s21, 3
    %p198 = por %p196, %p197
    %p199 = scmp.ne.s32.totalorder %s190, %s191
    %p200 = scmp.eq.s32.totalorder %s21, 0
    %p201 = por %p199, %p200
    %p202 = scmp.ne.s32.totalorder %s190, %s191
    %p203 = scmp.eq.s32.totalorder %s22, 3
    %p204 = por %p202, %p203
    %p206 = scmp.ne.s32.totalorder %s191, %s205
    %p207 = scmp.eq.s32.totalorder %s22, 0
    %p208 = por %p206, %p207
    %s210 = sadd.s32 %s209, 1
    %p213 = scmp.eq.s32.totalorder %s16, 3
    %p214 = scmp.ne.s32.totalorder %s209, %s211
    %p215 = scmp.eq.s32.totalorder %s16, 0
    %p216 = por %p214, %p215
    %p217 = scmp.ne.s32.totalorder %s209, %s211
    %p218 = scmp.eq.s32.totalorder %s21, 3
    %p219 = por %p217, %p218
    %p220 = scmp.ne.s32.totalorder %s211, %s212
    %p221 = scmp.eq.s32.totalorder %s21, 0
    %p222 = por %p220, %p221
    %p223 = scmp.ne.s32.totalorder %s211, %s212
    %p224 = scmp.eq.s32.totalorder %s22, 3
    %p225 = por %p223, %p224
    %p227 = scmp.ne.s32.totalorder %s212, %s226
    %p228 = scmp.eq.s32.totalorder %s22, 0
    %p229 = por %p227, %p228
    %s231 = sadd.s32 %s230, 1
    %p234 = scmp.eq.s32.totalorder %s16, 3
    %p235 = scmp.ne.s32.totalorder %s230, %s232
    %p236 = scmp.eq.s32.totalorder %s16, 0
    %p237 = por %p235, %p236
    %p238 = scmp.ne.s32.totalorder %s230, %s232
    %p239 = scmp.eq.s32.totalorder %s21, 3
    %p240 = por %p238, %p239
    %p241 = scmp.ne.s32.totalorder %s232, %s233
    %p242 = scmp.eq.s32.totalorder %s21, 0
    %p243 = por %p241, %p242
    %p244 = scmp.ne.s32.totalorder %s232, %s233
    %p245 = scmp.eq.s32.totalorder %s22, 3
    %p246 = por %p244, %p245
    %p248 = scmp.ne.s32.totalorder %s233, %s247
    %p249 = scmp.eq.s32.totalorder %s22, 0
    %p250 = por %p248, %p249
    %s251 = ssub.s32 %s23, %s35
    %s252 = ssub.s32 %s24, %s31
    %s253 = sor.u32 %s251, %s252
    %p254 = scmp.eq.s32.totalorder %s253, 0
    %s256 = sadd.s32 %s255, 1
    %s257 = scalar_select %p254, %s255, %s256
    %p260 = pneg %p254
    %p261 = scmp.eq.s32.totalorder %s16, 3
    %p262 = por %p260, %p261
    %p263 = scmp.ne.s32.totalorder %s255, %s258
    %p264 = scmp.eq.s32.totalorder %s16, 0
    %p265 = por %p263, %p264
    %p266 = scmp.ne.s32.totalorder %s255, %s258
    %p267 = scmp.eq.s32.totalorder %s21, 3
    %p268 = por %p266, %p267
    %p269 = scmp.ne.s32.totalorder %s258, %s259
    %p270 = scmp.eq.s32.totalorder %s21, 0
    %p271 = por %p269, %p270
    %p272 = scmp.ne.s32.totalorder %s258, %s259
    %p273 = scmp.eq.s32.totalorder %s22, 3
    %p274 = por %p272, %p273
    %p276 = scmp.ne.s32.totalorder %s259, %s275
    %p277 = scmp.eq.s32.totalorder %s22, 0
    %p278 = por %p276, %p277
    %p279 = scmp.le.s32.totalorder 1, %s16
    %p280 = scmp.lt.s32.totalorder %s16, 5
    %p281 = pnand %p279, %p280
    %p282 = pneg %p281
    // Predicated region
    $region9: #{vae_background_forward.9} parent=5 // pred_check
      _
    $region10: #{vae_background_forward.9} parent=5 // pred_check_branch
      %284 = sbr.rel (%p281) target = $region12
    $region11: #{vae_background_forward.9} parent=5 // pred_region
      %s285 = ssub.s32 %s16, 1
      // Predicated region
      $region13: #{vae_background_forward.9} parent=11 // pred_check
        %p286 = pneg %p49
      $region14: #{vae_background_forward.9} parent=11 // pred_check_branch
        %288 = sbr.rel (%p286) target = $region16
      $region15: #{vae_background_forward.9} parent=11 // pred_region
        _
      $region16: #{vae_background_forward.9} parent=11 // pred_fallthru
        _
      // Predicated region
      $region17: #{vae_background_forward.9} parent=11 // pred_check
        %p289 = pneg %p96
      $region18: #{vae_background_forward.9} parent=11 // pred_check_branch
        %291 = sbr.rel (%p289) target = $region20
      $region19: #{vae_background_forward.9} parent=11 // pred_region
        _
      $region20: #{vae_background_forward.9} parent=11 // pred_fallthru
        _
      // Predicated region
      $region21: #{vae_background_forward.9} parent=11 // pred_check
        %p292 = pneg %p117
      $region22: #{vae_background_forward.9} parent=11 // pred_check_branch
        %294 = sbr.rel (%p292) target = $region24
      $region23: #{vae_background_forward.9} parent=11 // pred_region
        _
      $region24: #{vae_background_forward.9} parent=11 // pred_fallthru
        _
      // Predicated region
      $region25: #{vae_background_forward.9} parent=11 // pred_check
        %p295 = pneg %p138
      $region26: #{vae_background_forward.9} parent=11 // pred_check_branch
        %297 = sbr.rel (%p295) target = $region28
      $region27: #{vae_background_forward.9} parent=11 // pred_region
        _
      $region28: #{vae_background_forward.9} parent=11 // pred_fallthru
        _
      // Predicated region
      $region29: #{vae_background_forward.9} parent=11 // pred_check
        %p298 = pneg %p159
      $region30: #{vae_background_forward.9} parent=11 // pred_check_branch
        %300 = sbr.rel (%p298) target = $region32
      $region31: #{vae_background_forward.9} parent=11 // pred_region
        _
      $region32: #{vae_background_forward.9} parent=11 // pred_fallthru
        _
      // Predicated region
      $region33: #{vae_background_forward.9} parent=11 // pred_check
        %p301 = pneg %p180
      $region34: #{vae_background_forward.9} parent=11 // pred_check_branch
        %303 = sbr.rel (%p301) target = $region36
      $region35: #{vae_background_forward.9} parent=11 // pred_region
        _
      $region36: #{vae_background_forward.9} parent=11 // pred_fallthru
        _
      // Predicated region
      $region37: #{vae_background_forward.9} parent=11 // pred_check
        %p304 = pneg %p201
      $region38: #{vae_background_forward.9} parent=11 // pred_check_branch
        %306 = sbr.rel (%p304) target = $region40
      $region39: #{vae_background_forward.9} parent=11 // pred_region
        _
      $region40: #{vae_background_forward.9} parent=11 // pred_fallthru
        _
      // Predicated region
      $region41: #{vae_background_forward.9} parent=11 // pred_check
        %p307 = pneg %p222
      $region42: #{vae_background_forward.9} parent=11 // pred_check_branch
        %309 = sbr.rel (%p307) target = $region44
      $region43: #{vae_background_forward.9} parent=11 // pred_region
        _
      $region44: #{vae_background_forward.9} parent=11 // pred_fallthru
        _
      // Predicated region
      $region45: #{vae_background_forward.9} parent=11 // pred_check
        %p310 = pneg %p243
      $region46: #{vae_background_forward.9} parent=11 // pred_check_branch
        %312 = sbr.rel (%p310) target = $region48
      $region47: #{vae_background_forward.9} parent=11 // pred_region
        _
      $region48: #{vae_background_forward.9} parent=11 // pred_fallthru
        _
    $region12: #{vae_background_forward.9} parent=5 // pred_fallthru
      _
    %p313 = scmp.lt.s32.totalorder %s16, 4
    // Predicated region
    $region49: #{vae_background_forward.9} parent=5 // pred_check
      %p314 = pneg %p313
    $region50: #{vae_background_forward.9} parent=5 // pred_check_branch
      %316 = sbr.rel (%p314) target = $region52
    $region51: #{vae_background_forward.9} parent=5 // pred_region
      // Predicated region
      $region53: #{vae_background_forward.9} parent=51 // pred_check
        %p317 = pneg %p69
      $region54: #{vae_background_forward.9} parent=51 // pred_check_branch
        %319 = sbr.rel (%p317) target = $region56
      $region55: #{vae_background_forward.9} parent=51 // pred_region
        %p320 = scmp.lt.s32.totalorder %s24, 1
        %s321 = scalar_select %p320, %s24, 1
        %s322 = smul.addr %s321, 43
        %s323 = smul.addr %s322, 4
        %s324 = scalar_lea.vmem %s1, %s323
      $region56: #{vae_background_forward.9} parent=51 // pred_fallthru
        _
    $region52: #{vae_background_forward.9} parent=5 // pred_fallthru
      _
    %p325 = scmp.le.s32.totalorder 1, %s16
    %p326 = scmp.lt.s32.totalorder %s16, 5
    %p327 = pnand %p325, %p326
    %p328 = pneg %p327
    // Predicated region
    $region57: #{vae_background_forward.9} parent=5 // pred_check
      _
    $region58: #{vae_background_forward.9} parent=5 // pred_check_branch
      %330 = sbr.rel (%p327) target = $region60
    $region59: #{vae_background_forward.9} parent=5 // pred_region
      %s331 = ssub.s32 %s16, 1
      %p332 = pneg %p49
      %p333 = pneg %p46
      %p334 = scmp.lt.s32.totalorder %s26, 1
      %s335 = scalar_select %p334, %s26, 1
      %s336 = smul.addr %s335, 43
      %s337 = smul.addr %s336, 4
      %s338 = scalar_lea.vmem %s1, %s337
      %p339 = pneg %p75
      %p340 = pneg %p72
      %p341 = pneg %p96
      %p342 = pneg %p93
      %p343 = pneg %p117
      %p344 = pneg %p114
      %p345 = pneg %p138
      %p346 = pneg %p135
      %p347 = pneg %p159
      %p348 = pneg %p156
      %p349 = pneg %p180
      %p350 = pneg %p177
      %p351 = pneg %p201
      %p352 = pneg %p198
      %p353 = pneg %p222
      %p354 = pneg %p219
      %p355 = pneg %p243
      %p356 = pneg %p240
      %p357 = pneg %p271
      %p358 = pneg %p268
      %p359 = scmp.lt.s32.totalorder %s25, 1
      %s360 = scalar_select %p359, %s25, 1
      %p361 = scmp.lt.s32.totalorder %s26, 1
      %s362 = scalar_select %p361, %s26, 1
      %s363 = smul.addr %s362, 2
      %s364 = smul.addr %s360, 4
      %s365 = sadd.s32 %s363, %s364
      %s366 = smul.addr %s365, 4
      %s367 = scalar_lea.vmem %s10, %s366
      %p368 = scmp.lt.s32.totalorder %s26, 1
      %s369 = scalar_select %p368, %s26, 1
      %s370 = smul.addr %s369, 43
      %s371 = smul.addr %s370, 4
      %s372 = scalar_lea.vmem %s1, %s371
      %p373 = scmp.lt.s32.totalorder %s25, 1
      %s374 = scalar_select %p373, %s25, 1
      %p375 = scmp.lt.s32.totalorder %s26, 1
      %s376 = scalar_select %p375, %s26, 1
      %s377 = smul.addr %s376, 2
      %s378 = smul.addr %s374, 4
      %s379 = sadd.s32 %s377, %s378
      %s380 = smul.addr %s379, 4
      %s381 = scalar_lea.vmem %s10, %s380
      %s383 = scalar_lea.vmem %s0, %s25
      %v384 = vld [vmem:[%s383] sm:$0x1]
      %v385 = vld [vmem:[%s372] sm:$0xf]
      %v386 = vld [vmem:[%s372 + $0x4] sm:$0xf]
      %v387 = vld [vmem:[%s372 + $0x8] sm:$0xf]
      %v388 = vld [vmem:[%s372 + $0xc] sm:$0xf]
      %v389 = vld [vmem:[%s372 + $0x10] sm:$0xf]
      %v390 = vld [vmem:[%s372 + $0x14] sm:$0xf]
      %v391 = vld [vmem:[%s372 + $0x18] sm:$0xf]
      %v392 = vld [vmem:[%s372 + $0x1c] sm:$0xf]
      %v393 = vld [vmem:[%s372 + $0x20] sm:$0xf]
      %v394 = vld [vmem:[%s372 + $0x24] sm:$0xf]
      %v395 = vld [vmem:[%s372 + $0x28] sm:$0xf]
      %v396 = vld [vmem:[%s372 + $0x2c] sm:$0xf]
      %v397 = vld [vmem:[%s372 + $0x30] sm:$0xf]
      %v398 = vld [vmem:[%s372 + $0x34] sm:$0xf]
      %v399 = vld [vmem:[%s372 + $0x38] sm:$0xf]
      %v400 = vld [vmem:[%s372 + $0x3c] sm:$0xf]
      %v401 = vld [vmem:[%s372 + $0x40] sm:$0xf]
      %v402 = vld [vmem:[%s372 + $0x44] sm:$0xf]
      %v403 = vld [vmem:[%s372 + $0x48] sm:$0xf]
      %v404 = vld [vmem:[%s372 + $0x4c] sm:$0xf]
      %v405 = vld [vmem:[%s372 + $0x50] sm:$0xf]
      %v406 = vld [vmem:[%s372 + $0x54] sm:$0xf]
      %v407 = vld [vmem:[%s372 + $0x58] sm:$0xf]
      %v408 = vld [vmem:[%s372 + $0x5c] sm:$0xf]
      %v409 = vld [vmem:[%s372 + $0x60] sm:$0xf]
      %v410 = vld [vmem:[%s372 + $0x64] sm:$0xf]
      %v411 = vld [vmem:[%s372 + $0x68] sm:$0xf]
      %v412 = vld [vmem:[%s372 + $0x6c] sm:$0xf]
      %v413 = vld [vmem:[%s372 + $0x70] sm:$0xf]
      %v414 = vld [vmem:[%s372 + $0x74] sm:$0xf]
      %v415 = vld [vmem:[%s372 + $0x78] sm:$0xf]
      %v416 = vld [vmem:[%s372 + $0x7c] sm:$0xf]
      %v417 = vld [vmem:[%s372 + $0x80] sm:$0xf]
      %v418 = vld [vmem:[%s372 + $0x84] sm:$0xf]
      %v419 = vld [vmem:[%s372 + $0x88] sm:$0xf]
      %v420 = vld [vmem:[%s372 + $0x8c] sm:$0xf]
      %v421 = vld [vmem:[%s372 + $0x90] sm:$0xf]
      %v422 = vld [vmem:[%s372 + $0x94] sm:$0xf]
      %v423 = vld [vmem:[%s372 + $0x98] sm:$0xf]
      %v424 = vld [vmem:[%s372 + $0x9c] sm:$0xf]
      %v425 = vld [vmem:[%s372 + $0xa0] sm:$0xf]
      %v426 = vld [vmem:[%s372 + $0xa4] sm:$0xf]
      %v427 = vld [vmem:[%s372 + $0xa8] sm:$0xf]
      %v428 = vunpack.c.l.bf16 %v385
      %v429 = vunpack.c.l.bf16 %v386
      %v430 = vunpack.c.l.bf16 %v387
      %v431 = vunpack.c.l.bf16 %v388
      %v432 = vunpack.c.l.bf16 %v389
      %v433 = vunpack.c.l.bf16 %v390
      %v434 = vunpack.c.l.bf16 %v391
      %v435 = vunpack.c.l.bf16 %v392
      %v436 = vunpack.c.l.bf16 %v393
      %v437 = vunpack.c.l.bf16 %v394
      %v438 = vunpack.c.l.bf16 %v395
      %v439 = vunpack.c.l.bf16 %v396
      %v440 = vunpack.c.l.bf16 %v397
      %v441 = vunpack.c.l.bf16 %v398
      %v442 = vunpack.c.l.bf16 %v399
      %v443 = vunpack.c.l.bf16 %v400
      %v444 = vunpack.c.l.bf16 %v401
      %v445 = vunpack.c.l.bf16 %v402
      %v446 = vunpack.c.l.bf16 %v403
      %v447 = vunpack.c.l.bf16 %v404
      %v448 = vunpack.c.l.bf16 %v405
      %v449 = vunpack.c.l.bf16 %v406
      %v450 = vunpack.c.l.bf16 %v407
      %v451 = vunpack.c.l.bf16 %v408
      %v452 = vunpack.c.l.bf16 %v409
      %v453 = vunpack.c.l.bf16 %v410
      %v454 = vunpack.c.l.bf16 %v411
      %v455 = vunpack.c.l.bf16 %v412
      %v456 = vunpack.c.l.bf16 %v413
      %v457 = vunpack.c.l.bf16 %v414
      %v458 = vunpack.c.l.bf16 %v415
      %v459 = vunpack.c.l.bf16 %v416
      %v460 = vunpack.c.l.bf16 %v417
      %v461 = vunpack.c.l.bf16 %v418
      %v462 = vunpack.c.l.bf16 %v419
      %v463 = vunpack.c.l.bf16 %v420
      %v464 = vunpack.c.l.bf16 %v421
      %v465 = vunpack.c.l.bf16 %v422
      %v466 = vunpack.c.l.bf16 %v423
      %v467 = vunpack.c.l.bf16 %v424
      %v468 = vunpack.c.l.bf16 %v425
      %v469 = vunpack.c.l.bf16 %v426
      %v470 = vunpack.c.l.bf16 %v427
      %v471 = vperm.slane %v384, 0
      %v472 = vadd.f32 %v428, %v471
      %v473 = vadd.f32 %v429, %v471
      %v474 = vadd.f32 %v430, %v471
      %v475 = vadd.f32 %v431, %v471
      %v476 = vadd.f32 %v432, %v471
      %v477 = vadd.f32 %v433, %v471
      %v478 = vadd.f32 %v434, %v471
      %v479 = vadd.f32 %v435, %v471
      %v480 = vadd.f32 %v436, %v471
      %v481 = vadd.f32 %v437, %v471
      %v482 = vadd.f32 %v438, %v471
      %v483 = vadd.f32 %v439, %v471
      %v484 = vadd.f32 %v440, %v471
      %v485 = vadd.f32 %v441, %v471
      %v486 = vadd.f32 %v442, %v471
      %v487 = vadd.f32 %v443, %v471
      %v488 = vadd.f32 %v444, %v471
      %v489 = vadd.f32 %v445, %v471
      %v490 = vadd.f32 %v446, %v471
      %v491 = vadd.f32 %v447, %v471
      %v492 = vadd.f32 %v448, %v471
      %v493 = vadd.f32 %v449, %v471
      %v494 = vadd.f32 %v450, %v471
      %v495 = vadd.f32 %v451, %v471
      %v496 = vadd.f32 %v452, %v471
      %v497 = vadd.f32 %v453, %v471
      %v498 = vadd.f32 %v454, %v471
      %v499 = vadd.f32 %v455, %v471
      %v500 = vadd.f32 %v456, %v471
      %v501 = vadd.f32 %v457, %v471
      %v502 = vadd.f32 %v458, %v471
      %v503 = vadd.f32 %v459, %v471
      %v504 = vadd.f32 %v460, %v471
      %v505 = vadd.f32 %v461, %v471
      %v506 = vadd.f32 %v462, %v471
      %v507 = vadd.f32 %v463, %v471
      %v508 = vadd.f32 %v464, %v471
      %v509 = vadd.f32 %v465, %v471
      %v510 = vadd.f32 %v466, %v471
      %v511 = vadd.f32 %v467, %v471
      %v512 = vadd.f32 %v468, %v471
      %v513 = vadd.f32 %v469, %v471
      %v514 = vadd.f32 %v470, %v471
      %v515 = vmax.f32 %v472, 0.0
      %v516 = vmax.f32 %v473, 0.0
      %v517 = vmax.f32 %v474, 0.0
      %v518 = vmax.f32 %v475, 0.0
      %v519 = vmax.f32 %v476, 0.0
      %v520 = vmax.f32 %v477, 0.0
      %v521 = vmax.f32 %v478, 0.0
      %v522 = vmax.f32 %v479, 0.0
      %v523 = vmax.f32 %v480, 0.0
      %v524 = vmax.f32 %v481, 0.0
      %v525 = vmax.f32 %v482, 0.0
      %v526 = vmax.f32 %v483, 0.0
      %v527 = vmax.f32 %v484, 0.0
      %v528 = vmax.f32 %v485, 0.0
      %v529 = vmax.f32 %v486, 0.0
      %v530 = vmax.f32 %v487, 0.0
      %v531 = vmax.f32 %v488, 0.0
      %v532 = vmax.f32 %v489, 0.0
      %v533 = vmax.f32 %v490, 0.0
      %v534 = vmax.f32 %v491, 0.0
      %v535 = vmax.f32 %v492, 0.0
      %v536 = vmax.f32 %v493, 0.0
      %v537 = vmax.f32 %v494, 0.0
      %v538 = vmax.f32 %v495, 0.0
      %v539 = vmax.f32 %v496, 0.0
      %v540 = vmax.f32 %v497, 0.0
      %v541 = vmax.f32 %v498, 0.0
      %v542 = vmax.f32 %v499, 0.0
      %v543 = vmax.f32 %v500, 0.0
      %v544 = vmax.f32 %v501, 0.0
      %v545 = vmax.f32 %v502, 0.0
      %v546 = vmax.f32 %v503, 0.0
      %v547 = vmax.f32 %v504, 0.0
      %v548 = vmax.f32 %v505, 0.0
      %v549 = vmax.f32 %v506, 0.0
      %v550 = vmax.f32 %v507, 0.0
      %v551 = vmax.f32 %v508, 0.0
      %v552 = vmax.f32 %v509, 0.0
      %v553 = vmax.f32 %v510, 0.0
      %v554 = vmax.f32 %v511, 0.0
      %v555 = vmax.f32 %v512, 0.0
      %v556 = vmax.f32 %v513, 0.0
      %v557 = vmax.f32 %v514, 0.0
      %v558 = vpack.c.bf16 %v515, %v515
      %v559 = vpack.c.bf16 %v516, %v516
      %v560 = vpack.c.bf16 %v517, %v517
      %v561 = vpack.c.bf16 %v518, %v518
      %v562 = vpack.c.bf16 %v519, %v519
      %v563 = vpack.c.bf16 %v520, %v520
      %v564 = vpack.c.bf16 %v521, %v521
      %v565 = vpack.c.bf16 %v522, %v522
      %v566 = vpack.c.bf16 %v523, %v523
      %v567 = vpack.c.bf16 %v524, %v524
      %v568 = vpack.c.bf16 %v525, %v525
      %v569 = vpack.c.bf16 %v526, %v526
      %v570 = vpack.c.bf16 %v527, %v527
      %v571 = vpack.c.bf16 %v528, %v528
      %v572 = vpack.c.bf16 %v529, %v529
      %v573 = vpack.c.bf16 %v530, %v530
      %v574 = vpack.c.bf16 %v531, %v531
      %v575 = vpack.c.bf16 %v532, %v532
      %v576 = vpack.c.bf16 %v533, %v533
      %v577 = vpack.c.bf16 %v534, %v534
      %v578 = vpack.c.bf16 %v535, %v535
      %v579 = vpack.c.bf16 %v536, %v536
      %v580 = vpack.c.bf16 %v537, %v537
      %v581 = vpack.c.bf16 %v538, %v538
      %v582 = vpack.c.bf16 %v539, %v539
      %v583 = vpack.c.bf16 %v540, %v540
      %v584 = vpack.c.bf16 %v541, %v541
      %v585 = vpack.c.bf16 %v542, %v542
      %v586 = vpack.c.bf16 %v543, %v543
      %v587 = vpack.c.bf16 %v544, %v544
      %v588 = vpack.c.bf16 %v545, %v545
      %v589 = vpack.c.bf16 %v546, %v546
      %v590 = vpack.c.bf16 %v547, %v547
      %v591 = vpack.c.bf16 %v548, %v548
      %v592 = vpack.c.bf16 %v549, %v549
      %v593 = vpack.c.bf16 %v550, %v550
      %v594 = vpack.c.bf16 %v551, %v551
      %v595 = vpack.c.bf16 %v552, %v552
      %v596 = vpack.c.bf16 %v553, %v553
      %v597 = vpack.c.bf16 %v554, %v554
      %v598 = vpack.c.bf16 %v555, %v555
      %v599 = vpack.c.bf16 %v556, %v556
      %v600 = vpack.c.bf16 %v557, %v557
      %vm601 = vcmask 257024
      %602 = vst.msk [vmem:[#allocation2] sm:$0xf] %vm601, %v558
      %603 = vst.msk [vmem:[#allocation2 + $0x4] sm:$0xf] %vm601, %v559
      %604 = vst.msk [vmem:[#allocation2 + $0x8] sm:$0xf] %vm601, %v560
      %605 = vst.msk [vmem:[#allocation2 + $0xc] sm:$0xf] %vm601, %v561
      %606 = vst.msk [vmem:[#allocation2 + $0x10] sm:$0xf] %vm601, %v562
      %607 = vst.msk [vmem:[#allocation2 + $0x14] sm:$0xf] %vm601, %v563
      %608 = vst.msk [vmem:[#allocation2 + $0x18] sm:$0xf] %vm601, %v564
      %609 = vst.msk [vmem:[#allocation2 + $0x1c] sm:$0xf] %vm601, %v565
      %610 = vst.msk [vmem:[#allocation2 + $0x20] sm:$0xf] %vm601, %v566
      %611 = vst.msk [vmem:[#allocation2 + $0x24] sm:$0xf] %vm601, %v567
      %612 = vst.msk [vmem:[#allocation2 + $0x28] sm:$0xf] %vm601, %v568
      %613 = vst.msk [vmem:[#allocation2 + $0x2c] sm:$0xf] %vm601, %v569
      %614 = vst.msk [vmem:[#allocation2 + $0x30] sm:$0xf] %vm601, %v570
      %615 = vst.msk [vmem:[#allocation2 + $0x34] sm:$0xf] %vm601, %v571
      %616 = vst.msk [vmem:[#allocation2 + $0x38] sm:$0xf] %vm601, %v572
      %617 = vst.msk [vmem:[#allocation2 + $0x3c] sm:$0xf] %vm601, %v573
      %618 = vst.msk [vmem:[#allocation2 + $0x40] sm:$0xf] %vm601, %v574
      %619 = vst.msk [vmem:[#allocation2 + $0x44] sm:$0xf] %vm601, %v575
      %620 = vst.msk [vmem:[#allocation2 + $0x48] sm:$0xf] %vm601, %v576
      %621 = vst.msk [vmem:[#allocation2 + $0x4c] sm:$0xf] %vm601, %v577
      %622 = vst.msk [vmem:[#allocation2 + $0x50] sm:$0xf] %vm601, %v578
      %623 = vst.msk [vmem:[#allocation2 + $0x54] sm:$0xf] %vm601, %v579
      %624 = vst.msk [vmem:[#allocation2 + $0x58] sm:$0xf] %vm601, %v580
      %625 = vst.msk [vmem:[#allocation2 + $0x5c] sm:$0xf] %vm601, %v581
      %626 = vst.msk [vmem:[#allocation2 + $0x60] sm:$0xf] %vm601, %v582
      %627 = vst.msk [vmem:[#allocation2 + $0x64] sm:$0xf] %vm601, %v583
      %628 = vst.msk [vmem:[#allocation2 + $0x68] sm:$0xf] %vm601, %v584
      %629 = vst.msk [vmem:[#allocation2 + $0x6c] sm:$0xf] %vm601, %v585
      %630 = vst.msk [vmem:[#allocation2 + $0x70] sm:$0xf] %vm601, %v586
      %631 = vst.msk [vmem:[#allocation2 + $0x74] sm:$0xf] %vm601, %v587
      %632 = vst.msk [vmem:[#allocation2 + $0x78] sm:$0xf] %vm601, %v588
      %633 = vst.msk [vmem:[#allocation2 + $0x7c] sm:$0xf] %vm601, %v589
      %634 = vst.msk [vmem:[#allocation2 + $0x80] sm:$0xf] %vm601, %v590
      %635 = vst.msk [vmem:[#allocation2 + $0x84] sm:$0xf] %vm601, %v591
      %636 = vst.msk [vmem:[#allocation2 + $0x88] sm:$0xf] %vm601, %v592
      %637 = vst.msk [vmem:[#allocation2 + $0x8c] sm:$0xf] %vm601, %v593
      %638 = vst.msk [vmem:[#allocation2 + $0x90] sm:$0xf] %vm601, %v594
      %639 = vst.msk [vmem:[#allocation2 + $0x94] sm:$0xf] %vm601, %v595
      %640 = vst.msk [vmem:[#allocation2 + $0x98] sm:$0xf] %vm601, %v596
      %641 = vst.msk [vmem:[#allocation2 + $0x9c] sm:$0xf] %vm601, %v597
      %642 = vst.msk [vmem:[#allocation2 + $0xa0] sm:$0xf] %vm601, %v598
      %643 = vst.msk [vmem:[#allocation2 + $0xa4] sm:$0xf] %vm601, %v599
      %644 = vst.msk [vmem:[#allocation2 + $0xa8] sm:$0xf] %vm601, %v600
      %v645 = vld [vmem:[#allocation2] sm:$0xf]
      %v646 = vld [vmem:[#allocation2 + $0x4] sm:$0xf]
      %v647 = vld [vmem:[#allocation2 + $0x8] sm:$0xf]
      %v648 = vld [vmem:[#allocation2 + $0xc] sm:$0xf]
      %v649 = vld [vmem:[#allocation2 + $0x10] sm:$0xf]
      %v650 = vld [vmem:[#allocation2 + $0x14] sm:$0xf]
      %v651 = vld [vmem:[#allocation2 + $0x18] sm:$0xf]
      %v652 = vld [vmem:[#allocation2 + $0x1c] sm:$0xf]
      %v653 = vld [vmem:[#allocation2 + $0x20] sm:$0xf]
      %v654 = vld [vmem:[#allocation2 + $0x24] sm:$0xf]
      %v655 = vld [vmem:[#allocation2 + $0x28] sm:$0xf]
      %v656 = vld [vmem:[#allocation2 + $0x2c] sm:$0xf]
      %v657 = vld [vmem:[#allocation2 + $0x30] sm:$0xf]
      %v658 = vld [vmem:[#allocation2 + $0x34] sm:$0xf]
      %v659 = vld [vmem:[#allocation2 + $0x38] sm:$0xf]
      %v660 = vld [vmem:[#allocation2 + $0x3c] sm:$0xf]
      %v661 = vld [vmem:[#allocation2 + $0x40] sm:$0xf]
      %v662 = vld [vmem:[#allocation2 + $0x44] sm:$0xf]
      %v663 = vld [vmem:[#allocation2 + $0x48] sm:$0xf]
      %v664 = vld [vmem:[#allocation2 + $0x4c] sm:$0xf]
      %v665 = vld [vmem:[#allocation2 + $0x50] sm:$0xf]
      %v666 = vld [vmem:[#allocation2 + $0x54] sm:$0xf]
      %v667 = vld [vmem:[#allocation2 + $0x58] sm:$0xf]
      %v668 = vld [vmem:[#allocation2 + $0x5c] sm:$0xf]
      %v669 = vld [vmem:[#allocation2 + $0x60] sm:$0xf]
      %v670 = vld [vmem:[#allocation2 + $0x64] sm:$0xf]
      %v671 = vld [vmem:[#allocation2 + $0x68] sm:$0xf]
      %v672 = vld [vmem:[#allocation2 + $0x6c] sm:$0xf]
      %v673 = vld [vmem:[#allocation2 + $0x70] sm:$0xf]
      %v674 = vld [vmem:[#allocation2 + $0x74] sm:$0xf]
      %v675 = vld [vmem:[#allocation2 + $0x78] sm:$0xf]
      %v676 = vld [vmem:[#allocation2 + $0x7c] sm:$0xf]
      %v677 = vld [vmem:[#allocation2 + $0x80] sm:$0xf]
      %v678 = vld [vmem:[#allocation2 + $0x84] sm:$0xf]
      %v679 = vld [vmem:[#allocation2 + $0x88] sm:$0xf]
      %v680 = vld [vmem:[#allocation2 + $0x8c] sm:$0xf]
      %v681 = vld [vmem:[#allocation2 + $0x90] sm:$0x1]
      %v682 = vld [vmem:[#allocation2] sm:$0xe]
      %v683 = vld [vmem:[#allocation2 + $0x90] sm:$0xf]
      %v684 = vld [vmem:[#allocation2 + $0x94] sm:$0xf]
      %v685 = vld [vmem:[#allocation2 + $0x98] sm:$0xf]
      %v686 = vld [vmem:[#allocation2 + $0x9c] sm:$0x1]
      %v687 = vld [vmem:[#allocation2 + $0xc] sm:$0xe]
      %v688 = vld [vmem:[#allocation2 + $0x9c] sm:$0xf]
      %v689 = vld [vmem:[#allocation2 + $0xa0] sm:$0xf]
      %v690 = vld [vmem:[#allocation2 + $0xa4] sm:$0xf]
      %v691 = vld [vmem:[#allocation2 + $0xa8] sm:$0x1]
      %v692 = vld [vmem:[#allocation2 + $0x18] sm:$0xe]
      %v729 = vunpack.c.l.b16 %v645
      %v730 = vunpack.c.l.b16 %v646
      %v731 = vunpack.c.l.b16 %v647
      %v732 = vunpack.c.l.b16 %v648
      %v733 = vunpack.c.l.b16 %v649
      %v734 = vunpack.c.l.b16 %v650
      %v735 = vunpack.c.l.b16 %v651
      %v736 = vunpack.c.l.b16 %v652
      %v737 = vunpack.c.l.b16 %v653
      %v738 = vunpack.c.l.b16 %v654
      %v739 = vunpack.c.l.b16 %v655
      %v740 = vunpack.c.l.b16 %v656
      %v741 = vunpack.c.l.b16 %v657
      %v742 = vunpack.c.l.b16 %v658
      %v743 = vunpack.c.l.b16 %v659
      %v744 = vunpack.c.l.b16 %v660
      %v745 = vunpack.c.l.b16 %v661
      %v746 = vunpack.c.l.b16 %v662
      %v747 = vunpack.c.l.b16 %v663
      %v748 = vunpack.c.l.b16 %v664
      %v749 = vunpack.c.l.b16 %v665
      %v750 = vunpack.c.l.b16 %v666
      %v751 = vunpack.c.l.b16 %v667
      %v752 = vunpack.c.l.b16 %v668
      %v753 = vunpack.c.l.b16 %v669
      %v754 = vunpack.c.l.b16 %v670
      %v755 = vunpack.c.l.b16 %v671
      %v756 = vunpack.c.l.b16 %v672
      %v757 = vunpack.c.l.b16 %v673
      %v758 = vunpack.c.l.b16 %v674
      %v759 = vunpack.c.l.b16 %v675
      %v760 = vunpack.c.l.b16 %v676
      %v761 = vunpack.c.l.b16 %v677
      %v762 = vunpack.c.l.b16 %v678
      %v763 = vunpack.c.l.b16 %v679
      %v764 = vunpack.c.l.b16 %v680
      %v765 = vpack.c.b16 %v730, %v729
      %v766 = vpack.c.b16 %v732, %v731
      %v767 = vpack.c.b16 %v734, %v733
      %v768 = vpack.c.b16 %v736, %v735
      %v769 = vpack.c.b16 %v738, %v737
      %v770 = vpack.c.b16 %v740, %v739
      %v771 = vpack.c.b16 %v742, %v741
      %v772 = vpack.c.b16 %v744, %v743
      %v773 = vpack.c.b16 %v746, %v745
      %v774 = vpack.c.b16 %v748, %v747
      %v775 = vpack.c.b16 %v750, %v749
      %v776 = vpack.c.b16 %v752, %v751
      %v777 = vpack.c.b16 %v754, %v753
      %v778 = vpack.c.b16 %v756, %v755
      %v779 = vpack.c.b16 %v758, %v757
      %v780 = vpack.c.b16 %v760, %v759
      %v781 = vpack.c.b16 %v762, %v761
      %v782 = vpack.c.b16 %v764, %v763
      %v784 = vunpack.c.l.b16 %v681
      %v785 = vpack.c.b16 %v784, %v784
      %vm786 = vsmask.f32 7424
      %v788 = vshrl.u32 %v765, 16
      %v790 = vshll.u32 %v765, 16
      %v792 = vrot.slane %v790, 1
      %v793 = vor.u32 %v788, %v792
      %v795 = vshll.u32 %v766, 16
      %v797 = vrot.slane %v795, 1
      %v798 = vsel %vm786, %v793, %v797
      %v799 = vshrl.u32 %v766, 16
      %v801 = vor.u32 %v799, %v797
      %v803 = vshll.u32 %v767, 16
      %v805 = vrot.slane %v803, 1
      %v806 = vsel %vm786, %v801, %v805
      %v807 = vshrl.u32 %v767, 16
      %v809 = vor.u32 %v807, %v805
      %v811 = vshll.u32 %v768, 16
      %v813 = vrot.slane %v811, 1
      %v814 = vsel %vm786, %v809, %v813
      %v815 = vshrl.u32 %v768, 16
      %v817 = vor.u32 %v815, %v813
      %v819 = vshll.u32 %v769, 16
      %v821 = vrot.slane %v819, 1
      %v822 = vsel %vm786, %v817, %v821
      %v823 = vshrl.u32 %v769, 16
      %v825 = vor.u32 %v823, %v821
      %v827 = vshll.u32 %v770, 16
      %v829 = vrot.slane %v827, 1
      %v830 = vsel %vm786, %v825, %v829
      %v831 = vshrl.u32 %v770, 16
      %v833 = vor.u32 %v831, %v829
      %v835 = vshll.u32 %v771, 16
      %v837 = vrot.slane %v835, 1
      %v838 = vsel %vm786, %v833, %v837
      %v839 = vshrl.u32 %v771, 16
      %v841 = vor.u32 %v839, %v837
      %v843 = vshll.u32 %v772, 16
      %v845 = vrot.slane %v843, 1
      %v846 = vsel %vm786, %v841, %v845
      %v847 = vshrl.u32 %v772, 16
      %v849 = vor.u32 %v847, %v845
      %v851 = vshll.u32 %v773, 16
      %v853 = vrot.slane %v851, 1
      %v854 = vsel %vm786, %v849, %v853
      %v855 = vshrl.u32 %v773, 16
      %v857 = vor.u32 %v855, %v853
      %v859 = vshll.u32 %v774, 16
      %v861 = vrot.slane %v859, 1
      %v862 = vsel %vm786, %v857, %v861
      %v863 = vshrl.u32 %v774, 16
      %v865 = vor.u32 %v863, %v861
      %v867 = vshll.u32 %v775, 16
      %v869 = vrot.slane %v867, 1
      %v870 = vsel %vm786, %v865, %v869
      %v871 = vshrl.u32 %v775, 16
      %v873 = vor.u32 %v871, %v869
      %v875 = vshll.u32 %v776, 16
      %v877 = vrot.slane %v875, 1
      %v878 = vsel %vm786, %v873, %v877
      %v879 = vshrl.u32 %v776, 16
      %v881 = vor.u32 %v879, %v877
      %v883 = vshll.u32 %v777, 16
      %v885 = vrot.slane %v883, 1
      %v886 = vsel %vm786, %v881, %v885
      %v887 = vshrl.u32 %v777, 16
      %v889 = vor.u32 %v887, %v885
      %v891 = vshll.u32 %v778, 16
      %v893 = vrot.slane %v891, 1
      %v894 = vsel %vm786, %v889, %v893
      %v895 = vshrl.u32 %v778, 16
      %v897 = vor.u32 %v895, %v893
      %v899 = vshll.u32 %v779, 16
      %v901 = vrot.slane %v899, 1
      %v902 = vsel %vm786, %v897, %v901
      %v903 = vshrl.u32 %v779, 16
      %v905 = vor.u32 %v903, %v901
      %v907 = vshll.u32 %v780, 16
      %v909 = vrot.slane %v907, 1
      %v910 = vsel %vm786, %v905, %v909
      %v911 = vshrl.u32 %v780, 16
      %v913 = vor.u32 %v911, %v909
      %v915 = vshll.u32 %v781, 16
      %v917 = vrot.slane %v915, 1
      %v918 = vsel %vm786, %v913, %v917
      %v919 = vshrl.u32 %v781, 16
      %v921 = vor.u32 %v919, %v917
      %v923 = vshll.u32 %v782, 16
      %v925 = vrot.slane %v923, 1
      %v926 = vsel %vm786, %v921, %v925
      %v927 = vshrl.u32 %v782, 16
      %v929 = vor.u32 %v927, %v925
      %v931 = vshll.u32 %v785, 16
      %v933 = vrot.slane %v931, 1
      %v934 = vsel %vm786, %v929, %v933
      %935 = vrot.lane.b32.xlu0 %v798, 32
      %v936 = vpop.permute.xlu0 %935
      %937 = vrot.lane.b32.xlu0 %v806, 32
      %v938 = vpop.permute.xlu0 %937
      %939 = vrot.lane.b32.xlu0 %v814, 32
      %v940 = vpop.permute.xlu0 %939
      %941 = vrot.lane.b32.xlu0 %v822, 32
      %v942 = vpop.permute.xlu0 %941
      %943 = vrot.lane.b32.xlu0 %v830, 32
      %v944 = vpop.permute.xlu0 %943
      %945 = vrot.lane.b32.xlu0 %v838, 32
      %v946 = vpop.permute.xlu0 %945
      %947 = vrot.lane.b32.xlu0 %v846, 32
      %v948 = vpop.permute.xlu0 %947
      %949 = vrot.lane.b32.xlu0 %v854, 32
      %v950 = vpop.permute.xlu0 %949
      %951 = vrot.lane.b32.xlu0 %v862, 32
      %v952 = vpop.permute.xlu0 %951
      %953 = vrot.lane.b32.xlu0 %v870, 32
      %v954 = vpop.permute.xlu0 %953
      %955 = vrot.lane.b32.xlu0 %v878, 32
      %v956 = vpop.permute.xlu0 %955
      %957 = vrot.lane.b32.xlu0 %v886, 32
      %v958 = vpop.permute.xlu0 %957
      %959 = vrot.lane.b32.xlu0 %v894, 32
      %v960 = vpop.permute.xlu0 %959
      %961 = vrot.lane.b32.xlu0 %v902, 32
      %v962 = vpop.permute.xlu0 %961
      %963 = vrot.lane.b32.xlu0 %v910, 32
      %v964 = vpop.permute.xlu0 %963
      %965 = vrot.lane.b32.xlu0 %v918, 32
      %v966 = vpop.permute.xlu0 %965
      %967 = vrot.lane.b32.xlu0 %v926, 32
      %v968 = vpop.permute.xlu0 %967
      %969 = vrot.lane.b32.xlu0 %v934, 32
      %v970 = vpop.permute.xlu0 %969
      %v972 = vunpack.c.l.b16 %v682
      %v973 = vpack.c.b16 %v730, %v972
      %vm974 = vcmask 1046528
      %v975 = vrot.slane %v973, 1
      %v976 = vrot.slane %v766, 1
      %v977 = vsel %vm974, %v975, %v976
      %v978 = vrot.slane %v767, 1
      %v979 = vsel %vm974, %v976, %v978
      %v980 = vrot.slane %v768, 1
      %v981 = vsel %vm974, %v978, %v980
      %v982 = vrot.slane %v769, 1
      %v983 = vsel %vm974, %v980, %v982
      %v984 = vrot.slane %v770, 1
      %v985 = vsel %vm974, %v982, %v984
      %v986 = vrot.slane %v771, 1
      %v987 = vsel %vm974, %v984, %v986
      %v988 = vrot.slane %v772, 1
      %v989 = vsel %vm974, %v986, %v988
      %v990 = vrot.slane %v773, 1
      %v991 = vsel %vm974, %v988, %v990
      %v992 = vrot.slane %v774, 1
      %v993 = vsel %vm974, %v990, %v992
      %v994 = vrot.slane %v775, 1
      %v995 = vsel %vm974, %v992, %v994
      %v996 = vrot.slane %v776, 1
      %v997 = vsel %vm974, %v994, %v996
      %v998 = vrot.slane %v777, 1
      %v999 = vsel %vm974, %v996, %v998
      %v1000 = vrot.slane %v778, 1
      %v1001 = vsel %vm974, %v998, %v1000
      %v1002 = vrot.slane %v779, 1
      %v1003 = vsel %vm974, %v1000, %v1002
      %v1004 = vrot.slane %v780, 1
      %v1005 = vsel %vm974, %v1002, %v1004
      %v1006 = vrot.slane %v781, 1
      %v1007 = vsel %vm974, %v1004, %v1006
      %v1008 = vrot.slane %v782, 1
      %v1009 = vsel %vm974, %v1006, %v1008
      %v1010 = vrot.slane %v785, 1
      %v1011 = vsel %vm974, %v1008, %v1010
      %1012 = vrot.lane.b32.xlu0 %v977, 64
      %v1013 = vpop.permute.xlu0 %1012
      %1014 = vrot.lane.b32.xlu0 %v979, 64
      %v1015 = vpop.permute.xlu0 %1014
      %1016 = vrot.lane.b32.xlu0 %v981, 64
      %v1017 = vpop.permute.xlu0 %1016
      %1018 = vrot.lane.b32.xlu0 %v983, 64
      %v1019 = vpop.permute.xlu0 %1018
      %1020 = vrot.lane.b32.xlu0 %v985, 64
      %v1021 = vpop.permute.xlu0 %1020
      %1022 = vrot.lane.b32.xlu0 %v987, 64
      %v1023 = vpop.permute.xlu0 %1022
      %1024 = vrot.lane.b32.xlu0 %v989, 64
      %v1025 = vpop.permute.xlu0 %1024
      %1026 = vrot.lane.b32.xlu0 %v991, 64
      %v1027 = vpop.permute.xlu0 %1026
      %1028 = vrot.lane.b32.xlu0 %v993, 64
      %v1029 = vpop.permute.xlu0 %1028
      %1030 = vrot.lane.b32.xlu0 %v995, 64
      %v1031 = vpop.permute.xlu0 %1030
      %1032 = vrot.lane.b32.xlu0 %v997, 64
      %v1033 = vpop.permute.xlu0 %1032
      %1034 = vrot.lane.b32.xlu0 %v999, 64
      %v1035 = vpop.permute.xlu0 %1034
      %1036 = vrot.lane.b32.xlu0 %v1001, 64
      %v1037 = vpop.permute.xlu0 %1036
      %1038 = vrot.lane.b32.xlu0 %v1003, 64
      %v1039 = vpop.permute.xlu0 %1038
      %1040 = vrot.lane.b32.xlu0 %v1005, 64
      %v1041 = vpop.permute.xlu0 %1040
      %1042 = vrot.lane.b32.xlu0 %v1007, 64
      %v1043 = vpop.permute.xlu0 %1042
      %1044 = vrot.lane.b32.xlu0 %v1009, 64
      %v1045 = vpop.permute.xlu0 %1044
      %1046 = vrot.lane.b32.xlu0 %v1011, 64
      %v1047 = vpop.permute.xlu0 %1046
      %v1051 = vunpack.c.l.b16 %v683
      %v1052 = vunpack.c.l.b16 %v684
      %v1053 = vunpack.c.l.b16 %v685
      %v1054 = vpack.c.b16 %v733, %v732
      %v1055 = vpack.c.b16 %v735, %v734
      %v1056 = vpack.c.b16 %v737, %v736
      %v1057 = vpack.c.b16 %v739, %v738
      %v1058 = vpack.c.b16 %v741, %v740
      %v1059 = vpack.c.b16 %v743, %v742
      %v1060 = vpack.c.b16 %v745, %v744
      %v1061 = vpack.c.b16 %v747, %v746
      %v1062 = vpack.c.b16 %v749, %v748
      %v1063 = vpack.c.b16 %v751, %v750
      %v1064 = vpack.c.b16 %v753, %v752
      %v1065 = vpack.c.b16 %v755, %v754
      %v1066 = vpack.c.b16 %v757, %v756
      %v1067 = vpack.c.b16 %v759, %v758
      %v1068 = vpack.c.b16 %v761, %v760
      %v1069 = vpack.c.b16 %v763, %v762
      %v1070 = vpack.c.b16 %v1051, %v764
      %v1071 = vpack.c.b16 %v1053, %v1052
      %1072 = vrot.lane.b32.xlu0 %v1054, 96
      %v1073 = vpop.permute.xlu0 %1072
      %1074 = vrot.lane.b32.xlu0 %v1055, 96
      %v1075 = vpop.permute.xlu0 %1074
      %1076 = vrot.lane.b32.xlu0 %v1056, 96
      %v1077 = vpop.permute.xlu0 %1076
      %1078 = vrot.lane.b32.xlu0 %v1057, 96
      %v1079 = vpop.permute.xlu0 %1078
      %1080 = vrot.lane.b32.xlu0 %v1058, 96
      %v1081 = vpop.permute.xlu0 %1080
      %1082 = vrot.lane.b32.xlu0 %v1059, 96
      %v1083 = vpop.permute.xlu0 %1082
      %1084 = vrot.lane.b32.xlu0 %v1060, 96
      %v1085 = vpop.permute.xlu0 %1084
      %1086 = vrot.lane.b32.xlu0 %v1061, 96
      %v1087 = vpop.permute.xlu0 %1086
      %1088 = vrot.lane.b32.xlu0 %v1062, 96
      %v1089 = vpop.permute.xlu0 %1088
      %1090 = vrot.lane.b32.xlu0 %v1063, 96
      %v1091 = vpop.permute.xlu0 %1090
      %1092 = vrot.lane.b32.xlu0 %v1064, 96
      %v1093 = vpop.permute.xlu0 %1092
      %1094 = vrot.lane.b32.xlu0 %v1065, 96
      %v1095 = vpop.permute.xlu0 %1094
      %1096 = vrot.lane.b32.xlu0 %v1066, 96
      %v1097 = vpop.permute.xlu0 %1096
      %1098 = vrot.lane.b32.xlu0 %v1067, 96
      %v1099 = vpop.permute.xlu0 %1098
      %1100 = vrot.lane.b32.xlu0 %v1068, 96
      %v1101 = vpop.permute.xlu0 %1100
      %1102 = vrot.lane.b32.xlu0 %v1069, 96
      %v1103 = vpop.permute.xlu0 %1102
      %1104 = vrot.lane.b32.xlu0 %v1070, 96
      %v1105 = vpop.permute.xlu0 %1104
      %1106 = vrot.lane.b32.xlu0 %v1071, 96
      %v1107 = vpop.permute.xlu0 %1106
      %v1109 = vunpack.c.l.b16 %v686
      %v1110 = vpack.c.b16 %v1109, %v1109
      %v1112 = vshrl.u32 %v1054, 16
      %v1114 = vshll.u32 %v1054, 16
      %v1116 = vrot.slane %v1114, 1
      %v1117 = vor.u32 %v1112, %v1116
      %v1119 = vshll.u32 %v1055, 16
      %v1121 = vrot.slane %v1119, 1
      %v1122 = vsel %vm786, %v1117, %v1121
      %v1123 = vshrl.u32 %v1055, 16
      %v1125 = vor.u32 %v1123, %v1121
      %v1127 = vshll.u32 %v1056, 16
      %v1129 = vrot.slane %v1127, 1
      %v1130 = vsel %vm786, %v1125, %v1129
      %v1131 = vshrl.u32 %v1056, 16
      %v1133 = vor.u32 %v1131, %v1129
      %v1135 = vshll.u32 %v1057, 16
      %v1137 = vrot.slane %v1135, 1
      %v1138 = vsel %vm786, %v1133, %v1137
      %v1139 = vshrl.u32 %v1057, 16
      %v1141 = vor.u32 %v1139, %v1137
      %v1143 = vshll.u32 %v1058, 16
      %v1145 = vrot.slane %v1143, 1
      %v1146 = vsel %vm786, %v1141, %v1145
      %v1147 = vshrl.u32 %v1058, 16
      %v1149 = vor.u32 %v1147, %v1145
      %v1151 = vshll.u32 %v1059, 16
      %v1153 = vrot.slane %v1151, 1
      %v1154 = vsel %vm786, %v1149, %v1153
      %v1155 = vshrl.u32 %v1059, 16
      %v1157 = vor.u32 %v1155, %v1153
      %v1159 = vshll.u32 %v1060, 16
      %v1161 = vrot.slane %v1159, 1
      %v1162 = vsel %vm786, %v1157, %v1161
      %v1163 = vshrl.u32 %v1060, 16
      %v1165 = vor.u32 %v1163, %v1161
      %v1167 = vshll.u32 %v1061, 16
      %v1169 = vrot.slane %v1167, 1
      %v1170 = vsel %vm786, %v1165, %v1169
      %v1171 = vshrl.u32 %v1061, 16
      %v1173 = vor.u32 %v1171, %v1169
      %v1175 = vshll.u32 %v1062, 16
      %v1177 = vrot.slane %v1175, 1
      %v1178 = vsel %vm786, %v1173, %v1177
      %v1179 = vshrl.u32 %v1062, 16
      %v1181 = vor.u32 %v1179, %v1177
      %v1183 = vshll.u32 %v1063, 16
      %v1185 = vrot.slane %v1183, 1
      %v1186 = vsel %vm786, %v1181, %v1185
      %v1187 = vshrl.u32 %v1063, 16
      %v1189 = vor.u32 %v1187, %v1185
      %v1191 = vshll.u32 %v1064, 16
      %v1193 = vrot.slane %v1191, 1
      %v1194 = vsel %vm786, %v1189, %v1193
      %v1195 = vshrl.u32 %v1064, 16
      %v1197 = vor.u32 %v1195, %v1193
      %v1199 = vshll.u32 %v1065, 16
      %v1201 = vrot.slane %v1199, 1
      %v1202 = vsel %vm786, %v1197, %v1201
      %v1203 = vshrl.u32 %v1065, 16
      %v1205 = vor.u32 %v1203, %v1201
      %v1207 = vshll.u32 %v1066, 16
      %v1209 = vrot.slane %v1207, 1
      %v1210 = vsel %vm786, %v1205, %v1209
      %v1211 = vshrl.u32 %v1066, 16
      %v1213 = vor.u32 %v1211, %v1209
      %v1215 = vshll.u32 %v1067, 16
      %v1217 = vrot.slane %v1215, 1
      %v1218 = vsel %vm786, %v1213, %v1217
      %v1219 = vshrl.u32 %v1067, 16
      %v1221 = vor.u32 %v1219, %v1217
      %v1223 = vshll.u32 %v1068, 16
      %v1225 = vrot.slane %v1223, 1
      %v1226 = vsel %vm786, %v1221, %v1225
      %v1227 = vshrl.u32 %v1068, 16
      %v1229 = vor.u32 %v1227, %v1225
      %v1231 = vshll.u32 %v1069, 16
      %v1233 = vrot.slane %v1231, 1
      %v1234 = vsel %vm786, %v1229, %v1233
      %v1235 = vshrl.u32 %v1069, 16
      %v1237 = vor.u32 %v1235, %v1233
      %v1239 = vshll.u32 %v1070, 16
      %v1241 = vrot.slane %v1239, 1
      %v1242 = vsel %vm786, %v1237, %v1241
      %v1243 = vshrl.u32 %v1070, 16
      %v1245 = vor.u32 %v1243, %v1241
      %v1247 = vshll.u32 %v1071, 16
      %v1249 = vrot.slane %v1247, 1
      %v1250 = vsel %vm786, %v1245, %v1249
      %v1251 = vshrl.u32 %v1071, 16
      %v1253 = vor.u32 %v1251, %v1249
      %v1255 = vshll.u32 %v1110, 16
      %v1257 = vrot.slane %v1255, 1
      %v1258 = vsel %vm786, %v1253, %v1257
      %v1260 = vunpack.c.l.b16 %v687
      %v1261 = vpack.c.b16 %v733, %v1260
      %v1262 = vrot.slane %v1261, 1
      %v1263 = vrot.slane %v1055, 1
      %v1264 = vsel %vm974, %v1262, %v1263
      %v1265 = vrot.slane %v1056, 1
      %v1266 = vsel %vm974, %v1263, %v1265
      %v1267 = vrot.slane %v1057, 1
      %v1268 = vsel %vm974, %v1265, %v1267
      %v1269 = vrot.slane %v1058, 1
      %v1270 = vsel %vm974, %v1267, %v1269
      %v1271 = vrot.slane %v1059, 1
      %v1272 = vsel %vm974, %v1269, %v1271
      %v1273 = vrot.slane %v1060, 1
      %v1274 = vsel %vm974, %v1271, %v1273
      %v1275 = vrot.slane %v1061, 1
      %v1276 = vsel %vm974, %v1273, %v1275
      %v1277 = vrot.slane %v1062, 1
      %v1278 = vsel %vm974, %v1275, %v1277
      %v1279 = vrot.slane %v1063, 1
      %v1280 = vsel %vm974, %v1277, %v1279
      %v1281 = vrot.slane %v1064, 1
      %v1282 = vsel %vm974, %v1279, %v1281
      %v1283 = vrot.slane %v1065, 1
      %v1284 = vsel %vm974, %v1281, %v1283
      %v1285 = vrot.slane %v1066, 1
      %v1286 = vsel %vm974, %v1283, %v1285
      %v1287 = vrot.slane %v1067, 1
      %v1288 = vsel %vm974, %v1285, %v1287
      %v1289 = vrot.slane %v1068, 1
      %v1290 = vsel %vm974, %v1287, %v1289
      %v1291 = vrot.slane %v1069, 1
      %v1292 = vsel %vm974, %v1289, %v1291
      %v1293 = vrot.slane %v1070, 1
      %v1294 = vsel %vm974, %v1291, %v1293
      %v1295 = vrot.slane %v1071, 1
      %v1296 = vsel %vm974, %v1293, %v1295
      %v1297 = vrot.slane %v1110, 1
      %v1298 = vsel %vm974, %v1295, %v1297
      %1299 = vrot.lane.b32.xlu0 %v1264, 32
      %v1300 = vpop.permute.xlu0 %1299
      %1301 = vrot.lane.b32.xlu0 %v1266, 32
      %v1302 = vpop.permute.xlu0 %1301
      %1303 = vrot.lane.b32.xlu0 %v1268, 32
      %v1304 = vpop.permute.xlu0 %1303
      %1305 = vrot.lane.b32.xlu0 %v1270, 32
      %v1306 = vpop.permute.xlu0 %1305
      %1307 = vrot.lane.b32.xlu0 %v1272, 32
      %v1308 = vpop.permute.xlu0 %1307
      %1309 = vrot.lane.b32.xlu0 %v1274, 32
      %v1310 = vpop.permute.xlu0 %1309
      %1311 = vrot.lane.b32.xlu0 %v1276, 32
      %v1312 = vpop.permute.xlu0 %1311
      %1313 = vrot.lane.b32.xlu0 %v1278, 32
      %v1314 = vpop.permute.xlu0 %1313
      %1315 = vrot.lane.b32.xlu0 %v1280, 32
      %v1316 = vpop.permute.xlu0 %1315
      %1317 = vrot.lane.b32.xlu0 %v1282, 32
      %v1318 = vpop.permute.xlu0 %1317
      %1319 = vrot.lane.b32.xlu0 %v1284, 32
      %v1320 = vpop.permute.xlu0 %1319
      %1321 = vrot.lane.b32.xlu0 %v1286, 32
      %v1322 = vpop.permute.xlu0 %1321
      %1323 = vrot.lane.b32.xlu0 %v1288, 32
      %v1324 = vpop.permute.xlu0 %1323
      %1325 = vrot.lane.b32.xlu0 %v1290, 32
      %v1326 = vpop.permute.xlu0 %1325
      %1327 = vrot.lane.b32.xlu0 %v1292, 32
      %v1328 = vpop.permute.xlu0 %1327
      %1329 = vrot.lane.b32.xlu0 %v1294, 32
      %v1330 = vpop.permute.xlu0 %1329
      %1331 = vrot.lane.b32.xlu0 %v1296, 32
      %v1332 = vpop.permute.xlu0 %1331
      %1333 = vrot.lane.b32.xlu0 %v1298, 32
      %v1334 = vpop.permute.xlu0 %1333
      %v1338 = vunpack.c.l.b16 %v688
      %v1339 = vunpack.c.l.b16 %v689
      %v1340 = vunpack.c.l.b16 %v690
      %v1341 = vpack.c.b16 %v1052, %v1051
      %v1342 = vpack.c.b16 %v1338, %v1053
      %v1343 = vpack.c.b16 %v1340, %v1339
      %1344 = vrot.lane.b32.xlu0 %v768, 64
      %v1345 = vpop.permute.xlu0 %1344
      %1346 = vrot.lane.b32.xlu0 %v769, 64
      %v1347 = vpop.permute.xlu0 %1346
      %1348 = vrot.lane.b32.xlu0 %v770, 64
      %v1349 = vpop.permute.xlu0 %1348
      %1350 = vrot.lane.b32.xlu0 %v771, 64
      %v1351 = vpop.permute.xlu0 %1350
      %1352 = vrot.lane.b32.xlu0 %v772, 64
      %v1353 = vpop.permute.xlu0 %1352
      %1354 = vrot.lane.b32.xlu0 %v773, 64
      %v1355 = vpop.permute.xlu0 %1354
      %1356 = vrot.lane.b32.xlu0 %v774, 64
      %v1357 = vpop.permute.xlu0 %1356
      %1358 = vrot.lane.b32.xlu0 %v775, 64
      %v1359 = vpop.permute.xlu0 %1358
      %1360 = vrot.lane.b32.xlu0 %v776, 64
      %v1361 = vpop.permute.xlu0 %1360
      %1362 = vrot.lane.b32.xlu0 %v777, 64
      %v1363 = vpop.permute.xlu0 %1362
      %1364 = vrot.lane.b32.xlu0 %v778, 64
      %v1365 = vpop.permute.xlu0 %1364
      %1366 = vrot.lane.b32.xlu0 %v779, 64
      %v1367 = vpop.permute.xlu0 %1366
      %1368 = vrot.lane.b32.xlu0 %v780, 64
      %v1369 = vpop.permute.xlu0 %1368
      %1370 = vrot.lane.b32.xlu0 %v781, 64
      %v1371 = vpop.permute.xlu0 %1370
      %1372 = vrot.lane.b32.xlu0 %v782, 64
      %v1373 = vpop.permute.xlu0 %1372
      %1374 = vrot.lane.b32.xlu0 %v1341, 64
      %v1375 = vpop.permute.xlu0 %1374
      %1376 = vrot.lane.b32.xlu0 %v1342, 64
      %v1377 = vpop.permute.xlu0 %1376
      %1378 = vrot.lane.b32.xlu0 %v1343, 64
      %v1379 = vpop.permute.xlu0 %1378
      %v1381 = vunpack.c.l.b16 %v691
      %v1382 = vpack.c.b16 %v1381, %v1381
      %v1384 = vshll.u32 %v1341, 16
      %v1386 = vrot.slane %v1384, 1
      %v1387 = vsel %vm786, %v929, %v1386
      %v1388 = vshrl.u32 %v1341, 16
      %v1390 = vor.u32 %v1388, %v1386
      %v1392 = vshll.u32 %v1342, 16
      %v1394 = vrot.slane %v1392, 1
      %v1395 = vsel %vm786, %v1390, %v1394
      %v1396 = vshrl.u32 %v1342, 16
      %v1398 = vor.u32 %v1396, %v1394
      %v1400 = vshll.u32 %v1343, 16
      %v1402 = vrot.slane %v1400, 1
      %v1403 = vsel %vm786, %v1398, %v1402
      %v1404 = vshrl.u32 %v1343, 16
      %v1406 = vor.u32 %v1404, %v1402
      %v1408 = vshll.u32 %v1382, 16
      %v1410 = vrot.slane %v1408, 1
      %v1411 = vsel %vm786, %v1406, %v1410
      %1412 = vrot.lane.b32.xlu0 %v822, 96
      %v1413 = vpop.permute.xlu0 %1412
      %1414 = vrot.lane.b32.xlu0 %v830, 96
      %v1415 = vpop.permute.xlu0 %1414
      %1416 = vrot.lane.b32.xlu0 %v838, 96
      %v1417 = vpop.permute.xlu0 %1416
      %1418 = vrot.lane.b32.xlu0 %v846, 96
      %v1419 = vpop.permute.xlu0 %1418
      %1420 = vrot.lane.b32.xlu0 %v854, 96
      %v1421 = vpop.permute.xlu0 %1420
      %1422 = vrot.lane.b32.xlu0 %v862, 96
      %v1423 = vpop.permute.xlu0 %1422
      %1424 = vrot.lane.b32.xlu0 %v870, 96
      %v1425 = vpop.permute.xlu0 %1424
      %1426 = vrot.lane.b32.xlu0 %v878, 96
      %v1427 = vpop.permute.xlu0 %1426
      %1428 = vrot.lane.b32.xlu0 %v886, 96
      %v1429 = vpop.permute.xlu0 %1428
      %1430 = vrot.lane.b32.xlu0 %v894, 96
      %v1431 = vpop.permute.xlu0 %1430
      %1432 = vrot.lane.b32.xlu0 %v902, 96
      %v1433 = vpop.permute.xlu0 %1432
      %1434 = vrot.lane.b32.xlu0 %v910, 96
      %v1435 = vpop.permute.xlu0 %1434
      %1436 = vrot.lane.b32.xlu0 %v918, 96
      %v1437 = vpop.permute.xlu0 %1436
      %1438 = vrot.lane.b32.xlu0 %v926, 96
      %v1439 = vpop.permute.xlu0 %1438
      %1440 = vrot.lane.b32.xlu0 %v1387, 96
      %v1441 = vpop.permute.xlu0 %1440
      %1442 = vrot.lane.b32.xlu0 %v1395, 96
      %v1443 = vpop.permute.xlu0 %1442
      %1444 = vrot.lane.b32.xlu0 %v1403, 96
      %v1445 = vpop.permute.xlu0 %1444
      %1446 = vrot.lane.b32.xlu0 %v1411, 96
      %v1447 = vpop.permute.xlu0 %1446
      %v1449 = vunpack.c.l.b16 %v692
      %v1450 = vpack.c.b16 %v736, %v1449
      %v1451 = vrot.slane %v1450, 1
      %v1452 = vsel %vm974, %v1451, %v982
      %v1453 = vrot.slane %v1341, 1
      %v1454 = vsel %vm974, %v1008, %v1453
      %v1455 = vrot.slane %v1342, 1
      %v1456 = vsel %vm974, %v1453, %v1455
      %v1457 = vrot.slane %v1343, 1
      %v1458 = vsel %vm974, %v1455, %v1457
      %v1459 = vrot.slane %v1382, 1
      %v1460 = vsel %vm974, %v1457, %v1459
      %vm1461 = vcmask 261120
      %v1463 = vsel %vm1461, %v765, %v936
      %v1465 = vsel %vm1461, %v766, %v938
      %v1467 = vsel %vm1461, %v767, %v940
      %v1469 = vsel %vm1461, %v768, %v942
      %v1471 = vsel %vm1461, %v769, %v944
      %v1473 = vsel %vm1461, %v770, %v946
      %v1475 = vsel %vm1461, %v771, %v948
      %v1477 = vsel %vm1461, %v772, %v950
      %v1479 = vsel %vm1461, %v773, %v952
      %v1481 = vsel %vm1461, %v774, %v954
      %v1483 = vsel %vm1461, %v775, %v956
      %v1485 = vsel %vm1461, %v776, %v958
      %v1487 = vsel %vm1461, %v777, %v960
      %v1489 = vsel %vm1461, %v778, %v962
      %v1491 = vsel %vm1461, %v779, %v964
      %v1493 = vsel %vm1461, %v780, %v966
      %v1495 = vsel %vm1461, %v781, %v968
      %v1497 = vsel %vm1461, %v782, %v970
      %vm1498 = vcmask 523264
      %v1500 = vsel %vm1498, %v1463, %v1013
      %v1502 = vsel %vm1498, %v1465, %v1015
      %v1504 = vsel %vm1498, %v1467, %v1017
      %v1506 = vsel %vm1498, %v1469, %v1019
      %v1508 = vsel %vm1498, %v1471, %v1021
      %v1510 = vsel %vm1498, %v1473, %v1023
      %v1512 = vsel %vm1498, %v1475, %v1025
      %v1514 = vsel %vm1498, %v1477, %v1027
      %v1516 = vsel %vm1498, %v1479, %v1029
      %v1518 = vsel %vm1498, %v1481, %v1031
      %v1520 = vsel %vm1498, %v1483, %v1033
      %v1522 = vsel %vm1498, %v1485, %v1035
      %v1524 = vsel %vm1498, %v1487, %v1037
      %v1526 = vsel %vm1498, %v1489, %v1039
      %v1528 = vsel %vm1498, %v1491, %v1041
      %v1530 = vsel %vm1498, %v1493, %v1043
      %v1532 = vsel %vm1498, %v1495, %v1045
      %v1534 = vsel %vm1498, %v1497, %v1047
      %vm1535 = vcmask 785408
      %v1537 = vsel %vm1535, %v1500, %v1073
      %v1540 = vsel %vm1535, %v1502, %v1075
      %v1543 = vsel %vm1535, %v1504, %v1077
      %v1546 = vsel %vm1535, %v1506, %v1079
      %v1549 = vsel %vm1535, %v1508, %v1081
      %v1552 = vsel %vm1535, %v1510, %v1083
      %v1555 = vsel %vm1535, %v1512, %v1085
      %v1558 = vsel %vm1535, %v1514, %v1087
      %v1561 = vsel %vm1535, %v1516, %v1089
      %v1564 = vsel %vm1535, %v1518, %v1091
      %v1567 = vsel %vm1535, %v1520, %v1093
      %v1570 = vsel %vm1535, %v1522, %v1095
      %v1573 = vsel %vm1535, %v1524, %v1097
      %v1576 = vsel %vm1535, %v1526, %v1099
      %v1579 = vsel %vm1535, %v1528, %v1101
      %v1582 = vsel %vm1535, %v1530, %v1103
      %v1585 = vsel %vm1535, %v1532, %v1105
      %v1588 = vsel %vm1535, %v1534, %v1107
      %v1592 = vsel %vm1461, %v1122, %v1300
      %v1595 = vsel %vm1461, %v1130, %v1302
      %v1598 = vsel %vm1461, %v1138, %v1304
      %v1601 = vsel %vm1461, %v1146, %v1306
      %v1604 = vsel %vm1461, %v1154, %v1308
      %v1607 = vsel %vm1461, %v1162, %v1310
      %v1610 = vsel %vm1461, %v1170, %v1312
      %v1613 = vsel %vm1461, %v1178, %v1314
      %v1616 = vsel %vm1461, %v1186, %v1316
      %v1619 = vsel %vm1461, %v1194, %v1318
      %v1622 = vsel %vm1461, %v1202, %v1320
      %v1625 = vsel %vm1461, %v1210, %v1322
      %v1628 = vsel %vm1461, %v1218, %v1324
      %v1631 = vsel %vm1461, %v1226, %v1326
      %v1634 = vsel %vm1461, %v1234, %v1328
      %v1637 = vsel %vm1461, %v1242, %v1330
      %v1640 = vsel %vm1461, %v1250, %v1332
      %v1643 = vsel %vm1461, %v1258, %v1334
      %v1645 = vsel %vm1498, %v1592, %v1345
      %v1647 = vsel %vm1498, %v1595, %v1347
      %v1649 = vsel %vm1498, %v1598, %v1349
      %v1651 = vsel %vm1498, %v1601, %v1351
      %v1653 = vsel %vm1498, %v1604, %v1353
      %v1655 = vsel %vm1498, %v1607, %v1355
      %v1657 = vsel %vm1498, %v1610, %v1357
      %v1659 = vsel %vm1498, %v1613, %v1359
      %v1661 = vsel %vm1498, %v1616, %v1361
      %v1663 = vsel %vm1498, %v1619, %v1363
      %v1665 = vsel %vm1498, %v1622, %v1365
      %v1667 = vsel %vm1498, %v1625, %v1367
      %v1669 = vsel %vm1498, %v1628, %v1369
      %v1671 = vsel %vm1498, %v1631, %v1371
      %v1673 = vsel %vm1498, %v1634, %v1373
      %v1675 = vsel %vm1498, %v1637, %v1375
      %v1677 = vsel %vm1498, %v1640, %v1377
      %v1679 = vsel %vm1498, %v1643, %v1379
      %v1681 = vsel %vm1535, %v1645, %v1413
      %v1684 = vsel %vm1535, %v1647, %v1415
      %v1687 = vsel %vm1535, %v1649, %v1417
      %v1690 = vsel %vm1535, %v1651, %v1419
      %v1693 = vsel %vm1535, %v1653, %v1421
      %v1696 = vsel %vm1535, %v1655, %v1423
      %v1699 = vsel %vm1535, %v1657, %v1425
      %v1702 = vsel %vm1535, %v1659, %v1427
      %v1705 = vsel %vm1535, %v1661, %v1429
      %v1708 = vsel %vm1535, %v1663, %v1431
      %v1711 = vsel %vm1535, %v1665, %v1433
      %v1714 = vsel %vm1535, %v1667, %v1435
      %v1717 = vsel %vm1535, %v1669, %v1437
      %v1720 = vsel %vm1535, %v1671, %v1439
      %v1723 = vsel %vm1535, %v1673, %v1441
      %v1726 = vsel %vm1535, %v1675, %v1443
      %v1729 = vsel %vm1535, %v1677, %v1445
      %v1732 = vsel %vm1535, %v1679, %v1447
      %v1734 = vld [vmem:[%s2] sm:$0xf]
      %v1735 = vld [vmem:[%s2 + $0x4] sm:$0xf]
      %v1736 = vld [vmem:[%s2 + $0x8] sm:$0xf]
      %v1737 = vld [vmem:[%s2 + $0xc] sm:$0xf]
      %v1738 = vld [vmem:[%s2 + $0x10] sm:$0xf]
      %v1739 = vld [vmem:[%s2 + $0x14] sm:$0xf]
      %v1740 = vld [vmem:[%s2 + $0x18] sm:$0xf]
      %v1741 = vld [vmem:[%s2 + $0x1c] sm:$0xf]
      %v1742 = vld [vmem:[%s2 + $0x20] sm:$0xf]
      %v1743 = vld [vmem:[%s2 + $0x24] sm:$0xf]
      %v1744 = vld [vmem:[%s2 + $0x28] sm:$0xf]
      %v1745 = vld [vmem:[%s2 + $0x2c] sm:$0xf]
      %v1746 = vld [vmem:[%s2 + $0x30] sm:$0xf]
      %v1747 = vld [vmem:[%s2 + $0x34] sm:$0xf]
      %v1748 = vld [vmem:[%s2 + $0x38] sm:$0xf]
      %v1749 = vld [vmem:[%s2 + $0x3c] sm:$0xf]
      %v1750 = vld [vmem:[%s2 + $0x40] sm:$0xf]
      %v1751 = vld [vmem:[%s2 + $0x44] sm:$0xf]
      %v1752 = vld [vmem:[%s2 + $0x48] sm:$0xf]
      %v1753 = vld [vmem:[%s2 + $0x4c] sm:$0xf]
      %v1754 = vld [vmem:[%s2 + $0x50] sm:$0xf]
      %v1755 = vld [vmem:[%s2 + $0x54] sm:$0xf]
      %v1756 = vld [vmem:[%s2 + $0x58] sm:$0xf]
      %v1757 = vld [vmem:[%s2 + $0x5c] sm:$0xf]
      %v1758 = vld [vmem:[%s2 + $0x60] sm:$0xf]
      %v1759 = vld [vmem:[%s2 + $0x64] sm:$0xf]
      %v1760 = vld [vmem:[%s2 + $0x68] sm:$0xf]
      %v1761 = vld [vmem:[%s2 + $0x6c] sm:$0xf]
      %v1762 = vld [vmem:[%s2 + $0x70] sm:$0xf]
      %v1763 = vld [vmem:[%s2 + $0x74] sm:$0xf]
      %v1764 = vld [vmem:[%s2 + $0x78] sm:$0xf]
      %v1765 = vld [vmem:[%s2 + $0x7c] sm:$0xf]
      %v1766 = vld [vmem:[%s2 + $0x80] sm:$0xf]
      %v1767 = vld [vmem:[%s2 + $0x84] sm:$0xf]
      %v1768 = vld [vmem:[%s2 + $0x88] sm:$0xf]
      %v1769 = vld [vmem:[%s2 + $0x8c] sm:$0xf]
      %v1770 = vld [vmem:[%s3] sm:$0x1]
      %v1772 = vperm.slane %v1770, 0
      %v1810 = vunpack.c.l.b16 %v1734
      %v1811 = vunpack.c.l.b16 %v1735
      %v1812 = vunpack.c.l.b16 %v1736
      %v1813 = vunpack.c.l.b16 %v1737
      %v1814 = vunpack.c.l.b16 %v1738
      %v1815 = vunpack.c.l.b16 %v1739
      %v1816 = vunpack.c.l.b16 %v1740
      %v1817 = vunpack.c.l.b16 %v1741
      %v1818 = vunpack.c.l.b16 %v1742
      %v1819 = vunpack.c.l.b16 %v1743
      %v1820 = vunpack.c.l.b16 %v1744
      %v1821 = vunpack.c.l.b16 %v1745
      %v1822 = vunpack.c.l.b16 %v1746
      %v1823 = vunpack.c.l.b16 %v1747
      %v1824 = vunpack.c.l.b16 %v1748
      %v1825 = vunpack.c.l.b16 %v1749
      %v1826 = vunpack.c.l.b16 %v1750
      %v1827 = vunpack.c.l.b16 %v1751
      %v1828 = vunpack.c.l.b16 %v1752
      %v1829 = vunpack.c.l.b16 %v1753
      %v1830 = vunpack.c.l.b16 %v1754
      %v1831 = vunpack.c.l.b16 %v1755
      %v1832 = vunpack.c.l.b16 %v1756
      %v1833 = vunpack.c.l.b16 %v1757
      %v1834 = vunpack.c.l.b16 %v1758
      %v1835 = vunpack.c.l.b16 %v1759
      %v1836 = vunpack.c.l.b16 %v1760
      %v1837 = vunpack.c.l.b16 %v1761
      %v1838 = vunpack.c.l.b16 %v1762
      %v1839 = vunpack.c.l.b16 %v1763
      %v1840 = vunpack.c.l.b16 %v1764
      %v1841 = vunpack.c.l.b16 %v1765
      %v1842 = vunpack.c.l.b16 %v1766
      %v1843 = vunpack.c.l.b16 %v1767
      %v1844 = vunpack.c.l.b16 %v1768
      %v1845 = vunpack.c.l.b16 %v1769
      %v1846 = vpack.c.b16 %v1811, %v1810
      %v1847 = vpack.c.b16 %v1813, %v1812
      %v1848 = vpack.c.b16 %v1815, %v1814
      %v1849 = vpack.c.b16 %v1817, %v1816
      %v1850 = vpack.c.b16 %v1819, %v1818
      %v1851 = vpack.c.b16 %v1821, %v1820
      %v1852 = vpack.c.b16 %v1823, %v1822
      %v1853 = vpack.c.b16 %v1825, %v1824
      %v1854 = vpack.c.b16 %v1827, %v1826
      %v1855 = vpack.c.b16 %v1829, %v1828
      %v1856 = vpack.c.b16 %v1831, %v1830
      %v1857 = vpack.c.b16 %v1833, %v1832
      %v1858 = vpack.c.b16 %v1835, %v1834
      %v1859 = vpack.c.b16 %v1837, %v1836
      %v1860 = vpack.c.b16 %v1839, %v1838
      %v1861 = vpack.c.b16 %v1841, %v1840
      %v1862 = vpack.c.b16 %v1843, %v1842
      %v1863 = vpack.c.b16 %v1845, %v1844
      %v1883 = vsel %vm1461, %v1452, 0
      %v1886 = vsel %vm1461, %v985, 0
      %v1889 = vsel %vm1461, %v987, 0
      %v1892 = vsel %vm1461, %v989, 0
      %v1895 = vsel %vm1461, %v991, 0
      %v1898 = vsel %vm1461, %v993, 0
      %v1901 = vsel %vm1461, %v995, 0
      %v1904 = vsel %vm1461, %v997, 0
      %v1907 = vsel %vm1461, %v999, 0
      %v1910 = vsel %vm1461, %v1001, 0
      %v1913 = vsel %vm1461, %v1003, 0
      %v1916 = vsel %vm1461, %v1005, 0
      %v1919 = vsel %vm1461, %v1007, 0
      %v1922 = vsel %vm1461, %v1009, 0
      %v1925 = vsel %vm1461, %v1454, 0
      %v1928 = vsel %vm1461, %v1456, 0
      %v1931 = vsel %vm1461, %v1458, 0
      %v1934 = vsel %vm1461, %v1460, 0
      %1936 = vmatpush.bf16.msra.mxu0 %v1853
      %1937 = vmatpush.bf16.msra.mxu0 %v1852
      %1938 = vmatpush.bf16.msra.mxu0 %v1851
      %1939 = vmatpush.bf16.msra.mxu0 %v1850
      %1940 = vmatpush.bf16.msra.mxu0 %v1849
      %1941 = vmatpush.bf16.msra.mxu0 %v1848
      %1942 = vmatpush.bf16.msra.mxu0 %v1847
      %1943 = vmatpush.bf16.msra.mxu0 %v1846
      %1944 = vmatmul.bf16.gmra.mxu0 %v1537
      %v1945 = vpop.f32.mrf.mxu0
      %v1946 = vadd.f32 %v1772, %v1945
      %v1947 = vpop.f32.mrf.mxu0
      %v1948 = vadd.f32 %v1772, %v1947
      %1949 = vmatmul.bf16.gmra.mxu0 %v1540
      %v1950 = vpop.f32.mrf.mxu0
      %v1951 = vadd.f32 %v1772, %v1950
      %v1952 = vpop.f32.mrf.mxu0
      %v1953 = vadd.f32 %v1772, %v1952
      %1954 = vmatmul.bf16.gmra.mxu0 %v1543
      %v1955 = vpop.f32.mrf.mxu0
      %v1956 = vadd.f32 %v1772, %v1955
      %v1957 = vpop.f32.mrf.mxu0
      %v1958 = vadd.f32 %v1772, %v1957
      %1959 = vmatmul.bf16.gmra.mxu0 %v1546
      %v1960 = vpop.f32.mrf.mxu0
      %v1961 = vadd.f32 %v1772, %v1960
      %v1962 = vpop.f32.mrf.mxu0
      %v1963 = vadd.f32 %v1772, %v1962
      %1964 = vmatmul.bf16.gmra.mxu0 %v1549
      %v1965 = vpop.f32.mrf.mxu0
      %v1966 = vadd.f32 %v1772, %v1965
      %v1967 = vpop.f32.mrf.mxu0
      %v1968 = vadd.f32 %v1772, %v1967
      %1969 = vmatmul.bf16.gmra.mxu0 %v1552
      %v1970 = vpop.f32.mrf.mxu0
      %v1971 = vadd.f32 %v1772, %v1970
      %v1972 = vpop.f32.mrf.mxu0
      %v1973 = vadd.f32 %v1772, %v1972
      %1974 = vmatmul.bf16.gmra.mxu0 %v1555
      %v1975 = vpop.f32.mrf.mxu0
      %v1976 = vadd.f32 %v1772, %v1975
      %v1977 = vpop.f32.mrf.mxu0
      %v1978 = vadd.f32 %v1772, %v1977
      %1979 = vmatmul.bf16.gmra.mxu0 %v1558
      %v1980 = vpop.f32.mrf.mxu0
      %v1981 = vadd.f32 %v1772, %v1980
      %v1982 = vpop.f32.mrf.mxu0
      %v1983 = vadd.f32 %v1772, %v1982
      %1984 = vmatmul.bf16.gmra.mxu0 %v1561
      %v1985 = vpop.f32.mrf.mxu0
      %v1986 = vadd.f32 %v1772, %v1985
      %v1987 = vpop.f32.mrf.mxu0
      %v1988 = vadd.f32 %v1772, %v1987
      %1989 = vmatmul.bf16.gmra.mxu0 %v1564
      %v1990 = vpop.f32.mrf.mxu0
      %v1991 = vadd.f32 %v1772, %v1990
      %v1992 = vpop.f32.mrf.mxu0
      %v1993 = vadd.f32 %v1772, %v1992
      %1994 = vmatmul.bf16.gmra.mxu0 %v1567
      %v1995 = vpop.f32.mrf.mxu0
      %v1996 = vadd.f32 %v1772, %v1995
      %v1997 = vpop.f32.mrf.mxu0
      %v1998 = vadd.f32 %v1772, %v1997
      %1999 = vmatmul.bf16.gmra.mxu0 %v1570
      %v2000 = vpop.f32.mrf.mxu0
      %v2001 = vadd.f32 %v1772, %v2000
      %v2002 = vpop.f32.mrf.mxu0
      %v2003 = vadd.f32 %v1772, %v2002
      %2004 = vmatmul.bf16.gmra.mxu0 %v1573
      %v2005 = vpop.f32.mrf.mxu0
      %v2006 = vadd.f32 %v1772, %v2005
      %v2007 = vpop.f32.mrf.mxu0
      %v2008 = vadd.f32 %v1772, %v2007
      %2009 = vmatmul.bf16.gmra.mxu0 %v1576
      %v2010 = vpop.f32.mrf.mxu0
      %v2011 = vadd.f32 %v1772, %v2010
      %v2012 = vpop.f32.mrf.mxu0
      %v2013 = vadd.f32 %v1772, %v2012
      %2014 = vmatmul.bf16.gmra.mxu0 %v1579
      %v2015 = vpop.f32.mrf.mxu0
      %v2016 = vadd.f32 %v1772, %v2015
      %v2017 = vpop.f32.mrf.mxu0
      %v2018 = vadd.f32 %v1772, %v2017
      %2019 = vmatmul.bf16.gmra.mxu0 %v1582
      %v2020 = vpop.f32.mrf.mxu0
      %v2021 = vadd.f32 %v1772, %v2020
      %v2022 = vpop.f32.mrf.mxu0
      %v2023 = vadd.f32 %v1772, %v2022
      %2024 = vmatmul.bf16.gmra.mxu0 %v1585
      %v2025 = vpop.f32.mrf.mxu0
      %v2026 = vadd.f32 %v1772, %v2025
      %v2027 = vpop.f32.mrf.mxu0
      %v2028 = vadd.f32 %v1772, %v2027
      %2029 = vmatmul.bf16.gmra.mxu0 %v1588
      %v2030 = vpop.f32.mrf.mxu0
      %v2031 = vadd.f32 %v1772, %v2030
      %v2032 = vpop.f32.mrf.mxu0
      %v2033 = vadd.f32 %v1772, %v2032
      %2034 = vdwg.mxu0
      %2035 = vmatpush.bf16.msra.mxu0 %v1861
      %2036 = vmatpush.bf16.msra.mxu0 %v1860
      %2037 = vmatpush.bf16.msra.mxu0 %v1859
      %2038 = vmatpush.bf16.msra.mxu0 %v1858
      %2039 = vmatpush.bf16.msra.mxu0 %v1857
      %2040 = vmatpush.bf16.msra.mxu0 %v1856
      %2041 = vmatpush.bf16.msra.mxu0 %v1855
      %2042 = vmatpush.bf16.msra.mxu0 %v1854
      %2043 = vmatmul.bf16.gmra.mxu0 %v1681
      %v2044 = vpop.f32.mrf.mxu0
      %v2045 = vadd.f32 %v1946, %v2044
      %v2046 = vpop.f32.mrf.mxu0
      %v2047 = vadd.f32 %v1948, %v2046
      %2048 = vmatmul.bf16.gmra.mxu0 %v1684
      %v2049 = vpop.f32.mrf.mxu0
      %v2050 = vadd.f32 %v1951, %v2049
      %v2051 = vpop.f32.mrf.mxu0
      %v2052 = vadd.f32 %v1953, %v2051
      %2053 = vmatmul.bf16.gmra.mxu0 %v1687
      %v2054 = vpop.f32.mrf.mxu0
      %v2055 = vadd.f32 %v1956, %v2054
      %v2056 = vpop.f32.mrf.mxu0
      %v2057 = vadd.f32 %v1958, %v2056
      %2058 = vmatmul.bf16.gmra.mxu0 %v1690
      %v2059 = vpop.f32.mrf.mxu0
      %v2060 = vadd.f32 %v1961, %v2059
      %v2061 = vpop.f32.mrf.mxu0
      %v2062 = vadd.f32 %v1963, %v2061
      %2063 = vmatmul.bf16.gmra.mxu0 %v1693
      %v2064 = vpop.f32.mrf.mxu0
      %v2065 = vadd.f32 %v1966, %v2064
      %v2066 = vpop.f32.mrf.mxu0
      %v2067 = vadd.f32 %v1968, %v2066
      %2068 = vmatmul.bf16.gmra.mxu0 %v1696
      %v2069 = vpop.f32.mrf.mxu0
      %v2070 = vadd.f32 %v1971, %v2069
      %v2071 = vpop.f32.mrf.mxu0
      %v2072 = vadd.f32 %v1973, %v2071
      %2073 = vmatmul.bf16.gmra.mxu0 %v1699
      %v2074 = vpop.f32.mrf.mxu0
      %v2075 = vadd.f32 %v1976, %v2074
      %v2076 = vpop.f32.mrf.mxu0
      %v2077 = vadd.f32 %v1978, %v2076
      %2078 = vmatmul.bf16.gmra.mxu0 %v1702
      %v2079 = vpop.f32.mrf.mxu0
      %v2080 = vadd.f32 %v1981, %v2079
      %v2081 = vpop.f32.mrf.mxu0
      %v2082 = vadd.f32 %v1983, %v2081
      %2083 = vmatmul.bf16.gmra.mxu0 %v1705
      %v2084 = vpop.f32.mrf.mxu0
      %v2085 = vadd.f32 %v1986, %v2084
      %v2086 = vpop.f32.mrf.mxu0
      %v2087 = vadd.f32 %v1988, %v2086
      %2088 = vmatmul.bf16.gmra.mxu0 %v1708
      %v2089 = vpop.f32.mrf.mxu0
      %v2090 = vadd.f32 %v1991, %v2089
      %v2091 = vpop.f32.mrf.mxu0
      %v2092 = vadd.f32 %v1993, %v2091
      %2093 = vmatmul.bf16.gmra.mxu0 %v1711
      %v2094 = vpop.f32.mrf.mxu0
      %v2095 = vadd.f32 %v1996, %v2094
      %v2096 = vpop.f32.mrf.mxu0
      %v2097 = vadd.f32 %v1998, %v2096
      %2098 = vmatmul.bf16.gmra.mxu0 %v1714
      %v2099 = vpop.f32.mrf.mxu0
      %v2100 = vadd.f32 %v2001, %v2099
      %v2101 = vpop.f32.mrf.mxu0
      %v2102 = vadd.f32 %v2003, %v2101
      %2103 = vmatmul.bf16.gmra.mxu0 %v1717
      %v2104 = vpop.f32.mrf.mxu0
      %v2105 = vadd.f32 %v2006, %v2104
      %v2106 = vpop.f32.mrf.mxu0
      %v2107 = vadd.f32 %v2008, %v2106
      %2108 = vmatmul.bf16.gmra.mxu0 %v1720
      %v2109 = vpop.f32.mrf.mxu0
      %v2110 = vadd.f32 %v2011, %v2109
      %v2111 = vpop.f32.mrf.mxu0
      %v2112 = vadd.f32 %v2013, %v2111
      %2113 = vmatmul.bf16.gmra.mxu0 %v1723
      %v2114 = vpop.f32.mrf.mxu0
      %v2115 = vadd.f32 %v2016, %v2114
      %v2116 = vpop.f32.mrf.mxu0
      %v2117 = vadd.f32 %v2018, %v2116
      %2118 = vmatmul.bf16.gmra.mxu0 %v1726
      %v2119 = vpop.f32.mrf.mxu0
      %v2120 = vadd.f32 %v2021, %v2119
      %v2121 = vpop.f32.mrf.mxu0
      %v2122 = vadd.f32 %v2023, %v2121
      %2123 = vmatmul.bf16.gmra.mxu0 %v1729
      %v2124 = vpop.f32.mrf.mxu0
      %v2125 = vadd.f32 %v2026, %v2124
      %v2126 = vpop.f32.mrf.mxu0
      %v2127 = vadd.f32 %v2028, %v2126
      %2128 = vmatmul.bf16.gmra.mxu0 %v1732
      %v2129 = vpop.f32.mrf.mxu0
      %v2130 = vadd.f32 %v2031, %v2129
      %v2131 = vpop.f32.mrf.mxu0
      %v2132 = vadd.f32 %v2033, %v2131
      %2133 = vdwg.mxu0
      %2134 = vmatpush.bf16.msra.mxu0 0
      %2135 = vmatpush.bf16.msra.mxu0 0
      %2136 = vmatpush.bf16.msra.mxu0 0
      %2137 = vmatpush.bf16.msra.mxu0 0
      %2138 = vmatpush.bf16.msra.mxu0 0
      %2139 = vmatpush.bf16.msra.mxu0 0
      %2140 = vmatpush.bf16.msra.mxu0 %v1863
      %2141 = vmatpush.bf16.msra.mxu0 %v1862
      %2142 = vmatmul.bf16.gmra.mxu0 %v1883
      %v2143 = vpop.f32.mrf.mxu0
      %v2144 = vadd.f32 %v2045, %v2143
      %v2145 = vpop.f32.mrf.mxu0
      %v2146 = vadd.f32 %v2047, %v2145
      %2147 = vmatmul.bf16.gmra.mxu0 %v1886
      %v2148 = vpop.f32.mrf.mxu0
      %v2149 = vadd.f32 %v2050, %v2148
      %v2150 = vpop.f32.mrf.mxu0
      %v2151 = vadd.f32 %v2052, %v2150
      %2152 = vmatmul.bf16.gmra.mxu0 %v1889
      %v2153 = vpop.f32.mrf.mxu0
      %v2154 = vadd.f32 %v2055, %v2153
      %v2155 = vpop.f32.mrf.mxu0
      %v2156 = vadd.f32 %v2057, %v2155
      %2157 = vmatmul.bf16.gmra.mxu0 %v1892
      %v2158 = vpop.f32.mrf.mxu0
      %v2159 = vadd.f32 %v2060, %v2158
      %v2160 = vpop.f32.mrf.mxu0
      %v2161 = vadd.f32 %v2062, %v2160
      %2162 = vmatmul.bf16.gmra.mxu0 %v1895
      %v2163 = vpop.f32.mrf.mxu0
      %v2164 = vadd.f32 %v2065, %v2163
      %v2165 = vpop.f32.mrf.mxu0
      %v2166 = vadd.f32 %v2067, %v2165
      %2167 = vmatmul.bf16.gmra.mxu0 %v1898
      %v2168 = vpop.f32.mrf.mxu0
      %v2169 = vadd.f32 %v2070, %v2168
      %v2170 = vpop.f32.mrf.mxu0
      %v2171 = vadd.f32 %v2072, %v2170
      %2172 = vmatmul.bf16.gmra.mxu0 %v1901
      %v2173 = vpop.f32.mrf.mxu0
      %v2174 = vadd.f32 %v2075, %v2173
      %v2175 = vpop.f32.mrf.mxu0
      %v2176 = vadd.f32 %v2077, %v2175
      %2177 = vmatmul.bf16.gmra.mxu0 %v1904
      %v2178 = vpop.f32.mrf.mxu0
      %v2179 = vadd.f32 %v2080, %v2178
      %v2180 = vpop.f32.mrf.mxu0
      %v2181 = vadd.f32 %v2082, %v2180
      %2182 = vmatmul.bf16.gmra.mxu0 %v1907
      %v2183 = vpop.f32.mrf.mxu0
      %v2184 = vadd.f32 %v2085, %v2183
      %v2185 = vpop.f32.mrf.mxu0
      %v2186 = vadd.f32 %v2087, %v2185
      %2187 = vmatmul.bf16.gmra.mxu0 %v1910
      %v2188 = vpop.f32.mrf.mxu0
      %v2189 = vadd.f32 %v2090, %v2188
      %v2190 = vpop.f32.mrf.mxu0
      %v2191 = vadd.f32 %v2092, %v2190
      %2192 = vmatmul.bf16.gmra.mxu0 %v1913
      %v2193 = vpop.f32.mrf.mxu0
      %v2194 = vadd.f32 %v2095, %v2193
      %v2195 = vpop.f32.mrf.mxu0
      %v2196 = vadd.f32 %v2097, %v2195
      %2197 = vmatmul.bf16.gmra.mxu0 %v1916
      %v2198 = vpop.f32.mrf.mxu0
      %v2199 = vadd.f32 %v2100, %v2198
      %v2200 = vpop.f32.mrf.mxu0
      %v2201 = vadd.f32 %v2102, %v2200
      %2202 = vmatmul.bf16.gmra.mxu0 %v1919
      %v2203 = vpop.f32.mrf.mxu0
      %v2204 = vadd.f32 %v2105, %v2203
      %v2205 = vpop.f32.mrf.mxu0
      %v2206 = vadd.f32 %v2107, %v2205
      %2207 = vmatmul.bf16.gmra.mxu0 %v1922
      %v2208 = vpop.f32.mrf.mxu0
      %v2209 = vadd.f32 %v2110, %v2208
      %v2210 = vpop.f32.mrf.mxu0
      %v2211 = vadd.f32 %v2112, %v2210
      %2212 = vmatmul.bf16.gmra.mxu0 %v1925
      %v2213 = vpop.f32.mrf.mxu0
      %v2214 = vadd.f32 %v2115, %v2213
      %v2215 = vpop.f32.mrf.mxu0
      %v2216 = vadd.f32 %v2117, %v2215
      %2217 = vmatmul.bf16.gmra.mxu0 %v1928
      %v2218 = vpop.f32.mrf.mxu0
      %v2219 = vadd.f32 %v2120, %v2218
      %v2220 = vpop.f32.mrf.mxu0
      %v2221 = vadd.f32 %v2122, %v2220
      %2222 = vmatmul.bf16.gmra.mxu0 %v1931
      %v2223 = vpop.f32.mrf.mxu0
      %v2224 = vadd.f32 %v2125, %v2223
      %v2225 = vpop.f32.mrf.mxu0
      %v2226 = vadd.f32 %v2127, %v2225
      %2227 = vmatmul.bf16.gmra.mxu0 %v1934
      %v2228 = vpop.f32.mrf.mxu0
      %v2229 = vadd.f32 %v2130, %v2228
      %v2230 = vpop.f32.mrf.mxu0
      %v2231 = vadd.f32 %v2132, %v2230
      %2232 = vdwg.mxu0
      %v2233 = vmax.f32 %v2144, 0.0
      %v2234 = vmax.f32 %v2146, 0.0
      %v2235 = vmax.f32 %v2149, 0.0
      %v2236 = vmax.f32 %v2151, 0.0
      %v2237 = vmax.f32 %v2154, 0.0
      %v2238 = vmax.f32 %v2156, 0.0
      %v2239 = vmax.f32 %v2159, 0.0
      %v2240 = vmax.f32 %v2161, 0.0
      %v2241 = vmax.f32 %v2164, 0.0
      %v2242 = vmax.f32 %v2166, 0.0
      %v2243 = vmax.f32 %v2169, 0.0
      %v2244 = vmax.f32 %v2171, 0.0
      %v2245 = vmax.f32 %v2174, 0.0
      %v2246 = vmax.f32 %v2176, 0.0
      %v2247 = vmax.f32 %v2179, 0.0
      %v2248 = vmax.f32 %v2181, 0.0
      %v2249 = vmax.f32 %v2184, 0.0
      %v2250 = vmax.f32 %v2186, 0.0
      %v2251 = vmax.f32 %v2189, 0.0
      %v2252 = vmax.f32 %v2191, 0.0
      %v2253 = vmax.f32 %v2194, 0.0
      %v2254 = vmax.f32 %v2196, 0.0
      %v2255 = vmax.f32 %v2199, 0.0
      %v2256 = vmax.f32 %v2201, 0.0
      %v2257 = vmax.f32 %v2204, 0.0
      %v2258 = vmax.f32 %v2206, 0.0
      %v2259 = vmax.f32 %v2209, 0.0
      %v2260 = vmax.f32 %v2211, 0.0
      %v2261 = vmax.f32 %v2214, 0.0
      %v2262 = vmax.f32 %v2216, 0.0
      %v2263 = vmax.f32 %v2219, 0.0
      %v2264 = vmax.f32 %v2221, 0.0
      %v2265 = vmax.f32 %v2224, 0.0
      %v2266 = vmax.f32 %v2226, 0.0
      %v2267 = vmax.f32 %v2229, 0.0
      %v2268 = vmax.f32 %v2231, 0.0
      %v2269 = vpack.c.bf16 %v2233, %v2233
      %v2270 = vpack.c.bf16 %v2234, %v2234
      %v2271 = vpack.c.bf16 %v2235, %v2235
      %v2272 = vpack.c.bf16 %v2236, %v2236
      %v2273 = vpack.c.bf16 %v2237, %v2237
      %v2274 = vpack.c.bf16 %v2238, %v2238
      %v2275 = vpack.c.bf16 %v2239, %v2239
      %v2276 = vpack.c.bf16 %v2240, %v2240
      %v2277 = vpack.c.bf16 %v2241, %v2241
      %v2278 = vpack.c.bf16 %v2242, %v2242
      %v2279 = vpack.c.bf16 %v2243, %v2243
      %v2280 = vpack.c.bf16 %v2244, %v2244
      %v2281 = vpack.c.bf16 %v2245, %v2245
      %v2282 = vpack.c.bf16 %v2246, %v2246
      %v2283 = vpack.c.bf16 %v2247, %v2247
      %v2284 = vpack.c.bf16 %v2248, %v2248
      %v2285 = vpack.c.bf16 %v2249, %v2249
      %v2286 = vpack.c.bf16 %v2250, %v2250
      %v2287 = vpack.c.bf16 %v2251, %v2251
      %v2288 = vpack.c.bf16 %v2252, %v2252
      %v2289 = vpack.c.bf16 %v2253, %v2253
      %v2290 = vpack.c.bf16 %v2254, %v2254
      %v2291 = vpack.c.bf16 %v2255, %v2255
      %v2292 = vpack.c.bf16 %v2256, %v2256
      %v2293 = vpack.c.bf16 %v2257, %v2257
      %v2294 = vpack.c.bf16 %v2258, %v2258
      %v2295 = vpack.c.bf16 %v2259, %v2259
      %v2296 = vpack.c.bf16 %v2260, %v2260
      %v2297 = vpack.c.bf16 %v2261, %v2261
      %v2298 = vpack.c.bf16 %v2262, %v2262
      %v2299 = vpack.c.bf16 %v2263, %v2263
      %v2300 = vpack.c.bf16 %v2264, %v2264
      %v2301 = vpack.c.bf16 %v2265, %v2265
      %v2302 = vpack.c.bf16 %v2266, %v2266
      %v2303 = vpack.c.bf16 %v2267, %v2267
      %v2304 = vpack.c.bf16 %v2268, %v2268
      %2305 = vst.msk [vmem:[#allocation3] sm:$0xf] %vm601, %v2269
      %2306 = vst.msk [vmem:[#allocation3 + $0x4] sm:$0xf] %vm601, %v2270
      %2307 = vst.msk [vmem:[#allocation3 + $0x8] sm:$0xf] %vm601, %v2271
      %2308 = vst.msk [vmem:[#allocation3 + $0xc] sm:$0xf] %vm601, %v2272
      %2309 = vst.msk [vmem:[#allocation3 + $0x10] sm:$0xf] %vm601, %v2273
      %2310 = vst.msk [vmem:[#allocation3 + $0x14] sm:$0xf] %vm601, %v2274
      %2311 = vst.msk [vmem:[#allocation3 + $0x18] sm:$0xf] %vm601, %v2275
      %2312 = vst.msk [vmem:[#allocation3 + $0x1c] sm:$0xf] %vm601, %v2276
      %2313 = vst.msk [vmem:[#allocation3 + $0x20] sm:$0xf] %vm601, %v2277
      %2314 = vst.msk [vmem:[#allocation3 + $0x24] sm:$0xf] %vm601, %v2278
      %2315 = vst.msk [vmem:[#allocation3 + $0x28] sm:$0xf] %vm601, %v2279
      %2316 = vst.msk [vmem:[#allocation3 + $0x2c] sm:$0xf] %vm601, %v2280
      %2317 = vst.msk [vmem:[#allocation3 + $0x30] sm:$0xf] %vm601, %v2281
      %2318 = vst.msk [vmem:[#allocation3 + $0x34] sm:$0xf] %vm601, %v2282
      %2319 = vst.msk [vmem:[#allocation3 + $0x38] sm:$0xf] %vm601, %v2283
      %2320 = vst.msk [vmem:[#allocation3 + $0x3c] sm:$0xf] %vm601, %v2284
      %2321 = vst.msk [vmem:[#allocation3 + $0x40] sm:$0xf] %vm601, %v2285
      %2322 = vst.msk [vmem:[#allocation3 + $0x44] sm:$0xf] %vm601, %v2286
      %2323 = vst.msk [vmem:[#allocation3 + $0x48] sm:$0xf] %vm601, %v2287
      %2324 = vst.msk [vmem:[#allocation3 + $0x4c] sm:$0xf] %vm601, %v2288
      %2325 = vst.msk [vmem:[#allocation3 + $0x50] sm:$0xf] %vm601, %v2289
      %2326 = vst.msk [vmem:[#allocation3 + $0x54] sm:$0xf] %vm601, %v2290
      %2327 = vst.msk [vmem:[#allocation3 + $0x58] sm:$0xf] %vm601, %v2291
      %2328 = vst.msk [vmem:[#allocation3 + $0x5c] sm:$0xf] %vm601, %v2292
      %2329 = vst.msk [vmem:[#allocation3 + $0x60] sm:$0xf] %vm601, %v2293
      %2330 = vst.msk [vmem:[#allocation3 + $0x64] sm:$0xf] %vm601, %v2294
      %2331 = vst.msk [vmem:[#allocation3 + $0x68] sm:$0xf] %vm601, %v2295
      %2332 = vst.msk [vmem:[#allocation3 + $0x6c] sm:$0xf] %vm601, %v2296
      %2333 = vst.msk [vmem:[#allocation3 + $0x70] sm:$0xf] %vm601, %v2297
      %2334 = vst.msk [vmem:[#allocation3 + $0x74] sm:$0xf] %vm601, %v2298
      %2335 = vst.msk [vmem:[#allocation3 + $0x78] sm:$0xf] %vm601, %v2299
      %2336 = vst.msk [vmem:[#allocation3 + $0x7c] sm:$0xf] %vm601, %v2300
      %2337 = vst.msk [vmem:[#allocation3 + $0x80] sm:$0xf] %vm601, %v2301
      %2338 = vst.msk [vmem:[#allocation3 + $0x84] sm:$0xf] %vm601, %v2302
      %2339 = vst.msk [vmem:[#allocation3 + $0x88] sm:$0xf] %vm601, %v2303
      %2340 = vst.msk [vmem:[#allocation3 + $0x8c] sm:$0xf] %vm601, %v2304
      %2341 = vst.msk [vmem:[#allocation3 + $0x90] sm:$0xf] %vm601, 0
      %v2342 = vld [vmem:[#allocation3] sm:$0xf]
      %v2343 = vld [vmem:[#allocation3 + $0x4] sm:$0xf]
      %v2344 = vld [vmem:[#allocation3 + $0x8] sm:$0xf]
      %v2345 = vld [vmem:[#allocation3 + $0xc] sm:$0xf]
      %v2346 = vld [vmem:[#allocation3 + $0x10] sm:$0xf]
      %v2347 = vld [vmem:[#allocation3 + $0x14] sm:$0xf]
      %v2348 = vld [vmem:[#allocation3 + $0x18] sm:$0xf]
      %v2349 = vld [vmem:[#allocation3 + $0x1c] sm:$0xf]
      %v2350 = vld [vmem:[#allocation3 + $0x20] sm:$0xf]
      %v2351 = vld [vmem:[#allocation3 + $0x24] sm:$0xf]
      %v2352 = vld [vmem:[#allocation3 + $0x28] sm:$0xf]
      %v2353 = vld [vmem:[#allocation3 + $0x2c] sm:$0xf]
      %v2354 = vld [vmem:[#allocation3 + $0x30] sm:$0xf]
      %v2355 = vld [vmem:[#allocation3 + $0x34] sm:$0xf]
      %v2356 = vld [vmem:[#allocation3 + $0x38] sm:$0xf]
      %v2357 = vld [vmem:[#allocation3 + $0x3c] sm:$0xf]
      %v2358 = vld [vmem:[#allocation3 + $0x40] sm:$0xf]
      %v2359 = vld [vmem:[#allocation3 + $0x44] sm:$0xf]
      %v2360 = vld [vmem:[#allocation3 + $0x48] sm:$0xf]
      %v2361 = vld [vmem:[#allocation3 + $0x4c] sm:$0xf]
      %v2362 = vld [vmem:[#allocation3 + $0x50] sm:$0xf]
      %v2363 = vld [vmem:[#allocation3 + $0x54] sm:$0xf]
      %v2364 = vld [vmem:[#allocation3 + $0x58] sm:$0xf]
      %v2365 = vld [vmem:[#allocation3 + $0x5c] sm:$0xf]
      %v2366 = vld [vmem:[#allocation3 + $0x60] sm:$0xf]
      %v2367 = vld [vmem:[#allocation3 + $0x64] sm:$0xf]
      %v2368 = vld [vmem:[#allocation3 + $0x68] sm:$0xf]
      %v2369 = vld [vmem:[#allocation3 + $0x6c] sm:$0xf]
      %v2370 = vld [vmem:[#allocation3 + $0x70] sm:$0xf]
      %v2371 = vld [vmem:[#allocation3 + $0x74] sm:$0xf]
      %v2372 = vld [vmem:[#allocation3 + $0x78] sm:$0x1]
      %v2373 = vld [vmem:[#allocation3] sm:$0xe]
      %v2374 = vld [vmem:[#allocation3 + $0x78] sm:$0xf]
      %v2375 = vld [vmem:[#allocation3 + $0x7c] sm:$0xf]
      %v2376 = vld [vmem:[#allocation3 + $0x80] sm:$0xf]
      %v2377 = vld [vmem:[#allocation3 + $0x84] sm:$0x1]
      %v2378 = vld [vmem:[#allocation3 + $0xc] sm:$0xe]
      %v2379 = vld [vmem:[#allocation3 + $0x84] sm:$0xf]
      %v2380 = vld [vmem:[#allocation3 + $0x88] sm:$0xf]
      %v2381 = vld [vmem:[#allocation3 + $0x8c] sm:$0xf]
      %v2382 = vld [vmem:[#allocation3 + $0x90] sm:$0x1]
      %v2383 = vld [vmem:[#allocation3 + $0x18] sm:$0xe]
      %v2414 = vunpack.c.l.b16 %v2342
      %v2415 = vunpack.c.l.b16 %v2343
      %v2416 = vunpack.c.l.b16 %v2344
      %v2417 = vunpack.c.l.b16 %v2345
      %v2418 = vunpack.c.l.b16 %v2346
      %v2419 = vunpack.c.l.b16 %v2347
      %v2420 = vunpack.c.l.b16 %v2348
      %v2421 = vunpack.c.l.b16 %v2349
      %v2422 = vunpack.c.l.b16 %v2350
      %v2423 = vunpack.c.l.b16 %v2351
      %v2424 = vunpack.c.l.b16 %v2352
      %v2425 = vunpack.c.l.b16 %v2353
      %v2426 = vunpack.c.l.b16 %v2354
      %v2427 = vunpack.c.l.b16 %v2355
      %v2428 = vunpack.c.l.b16 %v2356
      %v2429 = vunpack.c.l.b16 %v2357
      %v2430 = vunpack.c.l.b16 %v2358
      %v2431 = vunpack.c.l.b16 %v2359
      %v2432 = vunpack.c.l.b16 %v2360
      %v2433 = vunpack.c.l.b16 %v2361
      %v2434 = vunpack.c.l.b16 %v2362
      %v2435 = vunpack.c.l.b16 %v2363
      %v2436 = vunpack.c.l.b16 %v2364
      %v2437 = vunpack.c.l.b16 %v2365
      %v2438 = vunpack.c.l.b16 %v2366
      %v2439 = vunpack.c.l.b16 %v2367
      %v2440 = vunpack.c.l.b16 %v2368
      %v2441 = vunpack.c.l.b16 %v2369
      %v2442 = vunpack.c.l.b16 %v2370
      %v2443 = vunpack.c.l.b16 %v2371
      %v2444 = vpack.c.b16 %v2415, %v2414
      %v2445 = vpack.c.b16 %v2417, %v2416
      %v2446 = vpack.c.b16 %v2419, %v2418
      %v2447 = vpack.c.b16 %v2421, %v2420
      %v2448 = vpack.c.b16 %v2423, %v2422
      %v2449 = vpack.c.b16 %v2425, %v2424
      %v2450 = vpack.c.b16 %v2427, %v2426
      %v2451 = vpack.c.b16 %v2429, %v2428
      %v2452 = vpack.c.b16 %v2431, %v2430
      %v2453 = vpack.c.b16 %v2433, %v2432
      %v2454 = vpack.c.b16 %v2435, %v2434
      %v2455 = vpack.c.b16 %v2437, %v2436
      %v2456 = vpack.c.b16 %v2439, %v2438
      %v2457 = vpack.c.b16 %v2441, %v2440
      %v2458 = vpack.c.b16 %v2443, %v2442
      %v2460 = vunpack.c.l.b16 %v2372
      %v2461 = vpack.c.b16 %v2460, %v2460
      %v2463 = vshrl.u32 %v2444, 16
      %v2465 = vshll.u32 %v2444, 16
      %v2467 = vrot.slane %v2465, 1
      %v2468 = vor.u32 %v2463, %v2467
      %v2470 = vshll.u32 %v2445, 16
      %v2472 = vrot.slane %v2470, 1
      %v2473 = vsel %vm786, %v2468, %v2472
      %v2474 = vshrl.u32 %v2445, 16
      %v2476 = vor.u32 %v2474, %v2472
      %v2478 = vshll.u32 %v2446, 16
      %v2480 = vrot.slane %v2478, 1
      %v2481 = vsel %vm786, %v2476, %v2480
      %v2482 = vshrl.u32 %v2446, 16
      %v2484 = vor.u32 %v2482, %v2480
      %v2486 = vshll.u32 %v2447, 16
      %v2488 = vrot.slane %v2486, 1
      %v2489 = vsel %vm786, %v2484, %v2488
      %v2490 = vshrl.u32 %v2447, 16
      %v2492 = vor.u32 %v2490, %v2488
      %v2494 = vshll.u32 %v2448, 16
      %v2496 = vrot.slane %v2494, 1
      %v2497 = vsel %vm786, %v2492, %v2496
      %v2498 = vshrl.u32 %v2448, 16
      %v2500 = vor.u32 %v2498, %v2496
      %v2502 = vshll.u32 %v2449, 16
      %v2504 = vrot.slane %v2502, 1
      %v2505 = vsel %vm786, %v2500, %v2504
      %v2506 = vshrl.u32 %v2449, 16
      %v2508 = vor.u32 %v2506, %v2504
      %v2510 = vshll.u32 %v2450, 16
      %v2512 = vrot.slane %v2510, 1
      %v2513 = vsel %vm786, %v2508, %v2512
      %v2514 = vshrl.u32 %v2450, 16
      %v2516 = vor.u32 %v2514, %v2512
      %v2518 = vshll.u32 %v2451, 16
      %v2520 = vrot.slane %v2518, 1
      %v2521 = vsel %vm786, %v2516, %v2520
      %v2522 = vshrl.u32 %v2451, 16
      %v2524 = vor.u32 %v2522, %v2520
      %v2526 = vshll.u32 %v2452, 16
      %v2528 = vrot.slane %v2526, 1
      %v2529 = vsel %vm786, %v2524, %v2528
      %v2530 = vshrl.u32 %v2452, 16
      %v2532 = vor.u32 %v2530, %v2528
      %v2534 = vshll.u32 %v2453, 16
      %v2536 = vrot.slane %v2534, 1
      %v2537 = vsel %vm786, %v2532, %v2536
      %v2538 = vshrl.u32 %v2453, 16
      %v2540 = vor.u32 %v2538, %v2536
      %v2542 = vshll.u32 %v2454, 16
      %v2544 = vrot.slane %v2542, 1
      %v2545 = vsel %vm786, %v2540, %v2544
      %v2546 = vshrl.u32 %v2454, 16
      %v2548 = vor.u32 %v2546, %v2544
      %v2550 = vshll.u32 %v2455, 16
      %v2552 = vrot.slane %v2550, 1
      %v2553 = vsel %vm786, %v2548, %v2552
      %v2554 = vshrl.u32 %v2455, 16
      %v2556 = vor.u32 %v2554, %v2552
      %v2558 = vshll.u32 %v2456, 16
      %v2560 = vrot.slane %v2558, 1
      %v2561 = vsel %vm786, %v2556, %v2560
      %v2562 = vshrl.u32 %v2456, 16
      %v2564 = vor.u32 %v2562, %v2560
      %v2566 = vshll.u32 %v2457, 16
      %v2568 = vrot.slane %v2566, 1
      %v2569 = vsel %vm786, %v2564, %v2568
      %v2570 = vshrl.u32 %v2457, 16
      %v2572 = vor.u32 %v2570, %v2568
      %v2574 = vshll.u32 %v2458, 16
      %v2576 = vrot.slane %v2574, 1
      %v2577 = vsel %vm786, %v2572, %v2576
      %v2578 = vshrl.u32 %v2458, 16
      %v2580 = vor.u32 %v2578, %v2576
      %v2582 = vshll.u32 %v2461, 16
      %v2584 = vrot.slane %v2582, 1
      %v2585 = vsel %vm786, %v2580, %v2584
      %2586 = vrot.lane.b32.xlu0 %v2473, 32
      %v2587 = vpop.permute.xlu0 %2586
      %2588 = vrot.lane.b32.xlu0 %v2481, 32
      %v2589 = vpop.permute.xlu0 %2588
      %2590 = vrot.lane.b32.xlu0 %v2489, 32
      %v2591 = vpop.permute.xlu0 %2590
      %2592 = vrot.lane.b32.xlu0 %v2497, 32
      %v2593 = vpop.permute.xlu0 %2592
      %2594 = vrot.lane.b32.xlu0 %v2505, 32
      %v2595 = vpop.permute.xlu0 %2594
      %2596 = vrot.lane.b32.xlu0 %v2513, 32
      %v2597 = vpop.permute.xlu0 %2596
      %2598 = vrot.lane.b32.xlu0 %v2521, 32
      %v2599 = vpop.permute.xlu0 %2598
      %2600 = vrot.lane.b32.xlu0 %v2529, 32
      %v2601 = vpop.permute.xlu0 %2600
      %2602 = vrot.lane.b32.xlu0 %v2537, 32
      %v2603 = vpop.permute.xlu0 %2602
      %2604 = vrot.lane.b32.xlu0 %v2545, 32
      %v2605 = vpop.permute.xlu0 %2604
      %2606 = vrot.lane.b32.xlu0 %v2553, 32
      %v2607 = vpop.permute.xlu0 %2606
      %2608 = vrot.lane.b32.xlu0 %v2561, 32
      %v2609 = vpop.permute.xlu0 %2608
      %2610 = vrot.lane.b32.xlu0 %v2569, 32
      %v2611 = vpop.permute.xlu0 %2610
      %2612 = vrot.lane.b32.xlu0 %v2577, 32
      %v2613 = vpop.permute.xlu0 %2612
      %2614 = vrot.lane.b32.xlu0 %v2585, 32
      %v2615 = vpop.permute.xlu0 %2614
      %v2617 = vunpack.c.l.b16 %v2373
      %v2618 = vpack.c.b16 %v2415, %v2617
      %v2619 = vrot.slane %v2618, 1
      %v2620 = vrot.slane %v2445, 1
      %v2621 = vsel %vm974, %v2619, %v2620
      %v2622 = vrot.slane %v2446, 1
      %v2623 = vsel %vm974, %v2620, %v2622
      %v2624 = vrot.slane %v2447, 1
      %v2625 = vsel %vm974, %v2622, %v2624
      %v2626 = vrot.slane %v2448, 1
      %v2627 = vsel %vm974, %v2624, %v2626
      %v2628 = vrot.slane %v2449, 1
      %v2629 = vsel %vm974, %v2626, %v2628
      %v2630 = vrot.slane %v2450, 1
      %v2631 = vsel %vm974, %v2628, %v2630
      %v2632 = vrot.slane %v2451, 1
      %v2633 = vsel %vm974, %v2630, %v2632
      %v2634 = vrot.slane %v2452, 1
      %v2635 = vsel %vm974, %v2632, %v2634
      %v2636 = vrot.slane %v2453, 1
      %v2637 = vsel %vm974, %v2634, %v2636
      %v2638 = vrot.slane %v2454, 1
      %v2639 = vsel %vm974, %v2636, %v2638
      %v2640 = vrot.slane %v2455, 1
      %v2641 = vsel %vm974, %v2638, %v2640
      %v2642 = vrot.slane %v2456, 1
      %v2643 = vsel %vm974, %v2640, %v2642
      %v2644 = vrot.slane %v2457, 1
      %v2645 = vsel %vm974, %v2642, %v2644
      %v2646 = vrot.slane %v2458, 1
      %v2647 = vsel %vm974, %v2644, %v2646
      %v2648 = vrot.slane %v2461, 1
      %v2649 = vsel %vm974, %v2646, %v2648
      %2650 = vrot.lane.b32.xlu0 %v2621, 64
      %v2651 = vpop.permute.xlu0 %2650
      %2652 = vrot.lane.b32.xlu0 %v2623, 64
      %v2653 = vpop.permute.xlu0 %2652
      %2654 = vrot.lane.b32.xlu0 %v2625, 64
      %v2655 = vpop.permute.xlu0 %2654
      %2656 = vrot.lane.b32.xlu0 %v2627, 64
      %v2657 = vpop.permute.xlu0 %2656
      %2658 = vrot.lane.b32.xlu0 %v2629, 64
      %v2659 = vpop.permute.xlu0 %2658
      %2660 = vrot.lane.b32.xlu0 %v2631, 64
      %v2661 = vpop.permute.xlu0 %2660
      %2662 = vrot.lane.b32.xlu0 %v2633, 64
      %v2663 = vpop.permute.xlu0 %2662
      %2664 = vrot.lane.b32.xlu0 %v2635, 64
      %v2665 = vpop.permute.xlu0 %2664
      %2666 = vrot.lane.b32.xlu0 %v2637, 64
      %v2667 = vpop.permute.xlu0 %2666
      %2668 = vrot.lane.b32.xlu0 %v2639, 64
      %v2669 = vpop.permute.xlu0 %2668
      %2670 = vrot.lane.b32.xlu0 %v2641, 64
      %v2671 = vpop.permute.xlu0 %2670
      %2672 = vrot.lane.b32.xlu0 %v2643, 64
      %v2673 = vpop.permute.xlu0 %2672
      %2674 = vrot.lane.b32.xlu0 %v2645, 64
      %v2675 = vpop.permute.xlu0 %2674
      %2676 = vrot.lane.b32.xlu0 %v2647, 64
      %v2677 = vpop.permute.xlu0 %2676
      %2678 = vrot.lane.b32.xlu0 %v2649, 64
      %v2679 = vpop.permute.xlu0 %2678
      %v2683 = vunpack.c.l.b16 %v2374
      %v2684 = vunpack.c.l.b16 %v2375
      %v2685 = vunpack.c.l.b16 %v2376
      %v2686 = vpack.c.b16 %v2418, %v2417
      %v2687 = vpack.c.b16 %v2420, %v2419
      %v2688 = vpack.c.b16 %v2422, %v2421
      %v2689 = vpack.c.b16 %v2424, %v2423
      %v2690 = vpack.c.b16 %v2426, %v2425
      %v2691 = vpack.c.b16 %v2428, %v2427
      %v2692 = vpack.c.b16 %v2430, %v2429
      %v2693 = vpack.c.b16 %v2432, %v2431
      %v2694 = vpack.c.b16 %v2434, %v2433
      %v2695 = vpack.c.b16 %v2436, %v2435
      %v2696 = vpack.c.b16 %v2438, %v2437
      %v2697 = vpack.c.b16 %v2440, %v2439
      %v2698 = vpack.c.b16 %v2442, %v2441
      %v2699 = vpack.c.b16 %v2683, %v2443
      %v2700 = vpack.c.b16 %v2685, %v2684
      %2701 = vrot.lane.b32.xlu0 %v2686, 96
      %v2702 = vpop.permute.xlu0 %2701
      %2703 = vrot.lane.b32.xlu0 %v2687, 96
      %v2704 = vpop.permute.xlu0 %2703
      %2705 = vrot.lane.b32.xlu0 %v2688, 96
      %v2706 = vpop.permute.xlu0 %2705
      %2707 = vrot.lane.b32.xlu0 %v2689, 96
      %v2708 = vpop.permute.xlu0 %2707
      %2709 = vrot.lane.b32.xlu0 %v2690, 96
      %v2710 = vpop.permute.xlu0 %2709
      %2711 = vrot.lane.b32.xlu0 %v2691, 96
      %v2712 = vpop.permute.xlu0 %2711
      %2713 = vrot.lane.b32.xlu0 %v2692, 96
      %v2714 = vpop.permute.xlu0 %2713
      %2715 = vrot.lane.b32.xlu0 %v2693, 96
      %v2716 = vpop.permute.xlu0 %2715
      %2717 = vrot.lane.b32.xlu0 %v2694, 96
      %v2718 = vpop.permute.xlu0 %2717
      %2719 = vrot.lane.b32.xlu0 %v2695, 96
      %v2720 = vpop.permute.xlu0 %2719
      %2721 = vrot.lane.b32.xlu0 %v2696, 96
      %v2722 = vpop.permute.xlu0 %2721
      %2723 = vrot.lane.b32.xlu0 %v2697, 96
      %v2724 = vpop.permute.xlu0 %2723
      %2725 = vrot.lane.b32.xlu0 %v2698, 96
      %v2726 = vpop.permute.xlu0 %2725
      %2727 = vrot.lane.b32.xlu0 %v2699, 96
      %v2728 = vpop.permute.xlu0 %2727
      %2729 = vrot.lane.b32.xlu0 %v2700, 96
      %v2730 = vpop.permute.xlu0 %2729
      %v2732 = vunpack.c.l.b16 %v2377
      %v2733 = vpack.c.b16 %v2732, %v2732
      %v2735 = vshrl.u32 %v2686, 16
      %v2737 = vshll.u32 %v2686, 16
      %v2739 = vrot.slane %v2737, 1
      %v2740 = vor.u32 %v2735, %v2739
      %v2742 = vshll.u32 %v2687, 16
      %v2744 = vrot.slane %v2742, 1
      %v2745 = vsel %vm786, %v2740, %v2744
      %v2746 = vshrl.u32 %v2687, 16
      %v2748 = vor.u32 %v2746, %v2744
      %v2750 = vshll.u32 %v2688, 16
      %v2752 = vrot.slane %v2750, 1
      %v2753 = vsel %vm786, %v2748, %v2752
      %v2754 = vshrl.u32 %v2688, 16
      %v2756 = vor.u32 %v2754, %v2752
      %v2758 = vshll.u32 %v2689, 16
      %v2760 = vrot.slane %v2758, 1
      %v2761 = vsel %vm786, %v2756, %v2760
      %v2762 = vshrl.u32 %v2689, 16
      %v2764 = vor.u32 %v2762, %v2760
      %v2766 = vshll.u32 %v2690, 16
      %v2768 = vrot.slane %v2766, 1
      %v2769 = vsel %vm786, %v2764, %v2768
      %v2770 = vshrl.u32 %v2690, 16
      %v2772 = vor.u32 %v2770, %v2768
      %v2774 = vshll.u32 %v2691, 16
      %v2776 = vrot.slane %v2774, 1
      %v2777 = vsel %vm786, %v2772, %v2776
      %v2778 = vshrl.u32 %v2691, 16
      %v2780 = vor.u32 %v2778, %v2776
      %v2782 = vshll.u32 %v2692, 16
      %v2784 = vrot.slane %v2782, 1
      %v2785 = vsel %vm786, %v2780, %v2784
      %v2786 = vshrl.u32 %v2692, 16
      %v2788 = vor.u32 %v2786, %v2784
      %v2790 = vshll.u32 %v2693, 16
      %v2792 = vrot.slane %v2790, 1
      %v2793 = vsel %vm786, %v2788, %v2792
      %v2794 = vshrl.u32 %v2693, 16
      %v2796 = vor.u32 %v2794, %v2792
      %v2798 = vshll.u32 %v2694, 16
      %v2800 = vrot.slane %v2798, 1
      %v2801 = vsel %vm786, %v2796, %v2800
      %v2802 = vshrl.u32 %v2694, 16
      %v2804 = vor.u32 %v2802, %v2800
      %v2806 = vshll.u32 %v2695, 16
      %v2808 = vrot.slane %v2806, 1
      %v2809 = vsel %vm786, %v2804, %v2808
      %v2810 = vshrl.u32 %v2695, 16
      %v2812 = vor.u32 %v2810, %v2808
      %v2814 = vshll.u32 %v2696, 16
      %v2816 = vrot.slane %v2814, 1
      %v2817 = vsel %vm786, %v2812, %v2816
      %v2818 = vshrl.u32 %v2696, 16
      %v2820 = vor.u32 %v2818, %v2816
      %v2822 = vshll.u32 %v2697, 16
      %v2824 = vrot.slane %v2822, 1
      %v2825 = vsel %vm786, %v2820, %v2824
      %v2826 = vshrl.u32 %v2697, 16
      %v2828 = vor.u32 %v2826, %v2824
      %v2830 = vshll.u32 %v2698, 16
      %v2832 = vrot.slane %v2830, 1
      %v2833 = vsel %vm786, %v2828, %v2832
      %v2834 = vshrl.u32 %v2698, 16
      %v2836 = vor.u32 %v2834, %v2832
      %v2838 = vshll.u32 %v2699, 16
      %v2840 = vrot.slane %v2838, 1
      %v2841 = vsel %vm786, %v2836, %v2840
      %v2842 = vshrl.u32 %v2699, 16
      %v2844 = vor.u32 %v2842, %v2840
      %v2846 = vshll.u32 %v2700, 16
      %v2848 = vrot.slane %v2846, 1
      %v2849 = vsel %vm786, %v2844, %v2848
      %v2850 = vshrl.u32 %v2700, 16
      %v2852 = vor.u32 %v2850, %v2848
      %v2854 = vshll.u32 %v2733, 16
      %v2856 = vrot.slane %v2854, 1
      %v2857 = vsel %vm786, %v2852, %v2856
      %v2859 = vunpack.c.l.b16 %v2378
      %v2860 = vpack.c.b16 %v2418, %v2859
      %v2861 = vrot.slane %v2860, 1
      %v2862 = vrot.slane %v2687, 1
      %v2863 = vsel %vm974, %v2861, %v2862
      %v2864 = vrot.slane %v2688, 1
      %v2865 = vsel %vm974, %v2862, %v2864
      %v2866 = vrot.slane %v2689, 1
      %v2867 = vsel %vm974, %v2864, %v2866
      %v2868 = vrot.slane %v2690, 1
      %v2869 = vsel %vm974, %v2866, %v2868
      %v2870 = vrot.slane %v2691, 1
      %v2871 = vsel %vm974, %v2868, %v2870
      %v2872 = vrot.slane %v2692, 1
      %v2873 = vsel %vm974, %v2870, %v2872
      %v2874 = vrot.slane %v2693, 1
      %v2875 = vsel %vm974, %v2872, %v2874
      %v2876 = vrot.slane %v2694, 1
      %v2877 = vsel %vm974, %v2874, %v2876
      %v2878 = vrot.slane %v2695, 1
      %v2879 = vsel %vm974, %v2876, %v2878
      %v2880 = vrot.slane %v2696, 1
      %v2881 = vsel %vm974, %v2878, %v2880
      %v2882 = vrot.slane %v2697, 1
      %v2883 = vsel %vm974, %v2880, %v2882
      %v2884 = vrot.slane %v2698, 1
      %v2885 = vsel %vm974, %v2882, %v2884
      %v2886 = vrot.slane %v2699, 1
      %v2887 = vsel %vm974, %v2884, %v2886
      %v2888 = vrot.slane %v2700, 1
      %v2889 = vsel %vm974, %v2886, %v2888
      %v2890 = vrot.slane %v2733, 1
      %v2891 = vsel %vm974, %v2888, %v2890
      %2892 = vrot.lane.b32.xlu0 %v2863, 32
      %v2893 = vpop.permute.xlu0 %2892
      %2894 = vrot.lane.b32.xlu0 %v2865, 32
      %v2895 = vpop.permute.xlu0 %2894
      %2896 = vrot.lane.b32.xlu0 %v2867, 32
      %v2897 = vpop.permute.xlu0 %2896
      %2898 = vrot.lane.b32.xlu0 %v2869, 32
      %v2899 = vpop.permute.xlu0 %2898
      %2900 = vrot.lane.b32.xlu0 %v2871, 32
      %v2901 = vpop.permute.xlu0 %2900
      %2902 = vrot.lane.b32.xlu0 %v2873, 32
      %v2903 = vpop.permute.xlu0 %2902
      %2904 = vrot.lane.b32.xlu0 %v2875, 32
      %v2905 = vpop.permute.xlu0 %2904
      %2906 = vrot.lane.b32.xlu0 %v2877, 32
      %v2907 = vpop.permute.xlu0 %2906
      %2908 = vrot.lane.b32.xlu0 %v2879, 32
      %v2909 = vpop.permute.xlu0 %2908
      %2910 = vrot.lane.b32.xlu0 %v2881, 32
      %v2911 = vpop.permute.xlu0 %2910
      %2912 = vrot.lane.b32.xlu0 %v2883, 32
      %v2913 = vpop.permute.xlu0 %2912
      %2914 = vrot.lane.b32.xlu0 %v2885, 32
      %v2915 = vpop.permute.xlu0 %2914
      %2916 = vrot.lane.b32.xlu0 %v2887, 32
      %v2917 = vpop.permute.xlu0 %2916
      %2918 = vrot.lane.b32.xlu0 %v2889, 32
      %v2919 = vpop.permute.xlu0 %2918
      %2920 = vrot.lane.b32.xlu0 %v2891, 32
      %v2921 = vpop.permute.xlu0 %2920
      %v2925 = vunpack.c.l.b16 %v2379
      %v2926 = vunpack.c.l.b16 %v2380
      %v2927 = vunpack.c.l.b16 %v2381
      %v2928 = vpack.c.b16 %v2684, %v2683
      %v2929 = vpack.c.b16 %v2925, %v2685
      %v2930 = vpack.c.b16 %v2927, %v2926
      %2931 = vrot.lane.b32.xlu0 %v2447, 64
      %v2932 = vpop.permute.xlu0 %2931
      %2933 = vrot.lane.b32.xlu0 %v2448, 64
      %v2934 = vpop.permute.xlu0 %2933
      %2935 = vrot.lane.b32.xlu0 %v2449, 64
      %v2936 = vpop.permute.xlu0 %2935
      %2937 = vrot.lane.b32.xlu0 %v2450, 64
      %v2938 = vpop.permute.xlu0 %2937
      %2939 = vrot.lane.b32.xlu0 %v2451, 64
      %v2940 = vpop.permute.xlu0 %2939
      %2941 = vrot.lane.b32.xlu0 %v2452, 64
      %v2942 = vpop.permute.xlu0 %2941
      %2943 = vrot.lane.b32.xlu0 %v2453, 64
      %v2944 = vpop.permute.xlu0 %2943
      %2945 = vrot.lane.b32.xlu0 %v2454, 64
      %v2946 = vpop.permute.xlu0 %2945
      %2947 = vrot.lane.b32.xlu0 %v2455, 64
      %v2948 = vpop.permute.xlu0 %2947
      %2949 = vrot.lane.b32.xlu0 %v2456, 64
      %v2950 = vpop.permute.xlu0 %2949
      %2951 = vrot.lane.b32.xlu0 %v2457, 64
      %v2952 = vpop.permute.xlu0 %2951
      %2953 = vrot.lane.b32.xlu0 %v2458, 64
      %v2954 = vpop.permute.xlu0 %2953
      %2955 = vrot.lane.b32.xlu0 %v2928, 64
      %v2956 = vpop.permute.xlu0 %2955
      %2957 = vrot.lane.b32.xlu0 %v2929, 64
      %v2958 = vpop.permute.xlu0 %2957
      %2959 = vrot.lane.b32.xlu0 %v2930, 64
      %v2960 = vpop.permute.xlu0 %2959
      %v2962 = vunpack.c.l.b16 %v2382
      %v2963 = vpack.c.b16 %v2962, %v2962
      %v2965 = vshll.u32 %v2928, 16
      %v2967 = vrot.slane %v2965, 1
      %v2968 = vsel %vm786, %v2580, %v2967
      %v2969 = vshrl.u32 %v2928, 16
      %v2971 = vor.u32 %v2969, %v2967
      %v2973 = vshll.u32 %v2929, 16
      %v2975 = vrot.slane %v2973, 1
      %v2976 = vsel %vm786, %v2971, %v2975
      %v2977 = vshrl.u32 %v2929, 16
      %v2979 = vor.u32 %v2977, %v2975
      %v2981 = vshll.u32 %v2930, 16
      %v2983 = vrot.slane %v2981, 1
      %v2984 = vsel %vm786, %v2979, %v2983
      %v2985 = vshrl.u32 %v2930, 16
      %v2987 = vor.u32 %v2985, %v2983
      %v2989 = vshll.u32 %v2963, 16
      %v2991 = vrot.slane %v2989, 1
      %v2992 = vsel %vm786, %v2987, %v2991
      %2993 = vrot.lane.b32.xlu0 %v2497, 96
      %v2994 = vpop.permute.xlu0 %2993
      %2995 = vrot.lane.b32.xlu0 %v2505, 96
      %v2996 = vpop.permute.xlu0 %2995
      %2997 = vrot.lane.b32.xlu0 %v2513, 96
      %v2998 = vpop.permute.xlu0 %2997
      %2999 = vrot.lane.b32.xlu0 %v2521, 96
      %v3000 = vpop.permute.xlu0 %2999
      %3001 = vrot.lane.b32.xlu0 %v2529, 96
      %v3002 = vpop.permute.xlu0 %3001
      %3003 = vrot.lane.b32.xlu0 %v2537, 96
      %v3004 = vpop.permute.xlu0 %3003
      %3005 = vrot.lane.b32.xlu0 %v2545, 96
      %v3006 = vpop.permute.xlu0 %3005
      %3007 = vrot.lane.b32.xlu0 %v2553, 96
      %v3008 = vpop.permute.xlu0 %3007
      %3009 = vrot.lane.b32.xlu0 %v2561, 96
      %v3010 = vpop.permute.xlu0 %3009
      %3011 = vrot.lane.b32.xlu0 %v2569, 96
      %v3012 = vpop.permute.xlu0 %3011
      %3013 = vrot.lane.b32.xlu0 %v2577, 96
      %v3014 = vpop.permute.xlu0 %3013
      %3015 = vrot.lane.b32.xlu0 %v2968, 96
      %v3016 = vpop.permute.xlu0 %3015
      %3017 = vrot.lane.b32.xlu0 %v2976, 96
      %v3018 = vpop.permute.xlu0 %3017
      %3019 = vrot.lane.b32.xlu0 %v2984, 96
      %v3020 = vpop.permute.xlu0 %3019
      %3021 = vrot.lane.b32.xlu0 %v2992, 96
      %v3022 = vpop.permute.xlu0 %3021
      %v3024 = vunpack.c.l.b16 %v2383
      %v3025 = vpack.c.b16 %v2421, %v3024
      %v3026 = vrot.slane %v3025, 1
      %v3027 = vsel %vm974, %v3026, %v2626
      %v3028 = vrot.slane %v2928, 1
      %v3029 = vsel %vm974, %v2646, %v3028
      %v3030 = vrot.slane %v2929, 1
      %v3031 = vsel %vm974, %v3028, %v3030
      %v3032 = vrot.slane %v2930, 1
      %v3033 = vsel %vm974, %v3030, %v3032
      %v3034 = vrot.slane %v2963, 1
      %v3035 = vsel %vm974, %v3032, %v3034
      %v3037 = vsel %vm1461, %v2444, %v2587
      %v3039 = vsel %vm1461, %v2445, %v2589
      %v3041 = vsel %vm1461, %v2446, %v2591
      %v3043 = vsel %vm1461, %v2447, %v2593
      %v3045 = vsel %vm1461, %v2448, %v2595
      %v3047 = vsel %vm1461, %v2449, %v2597
      %v3049 = vsel %vm1461, %v2450, %v2599
      %v3051 = vsel %vm1461, %v2451, %v2601
      %v3053 = vsel %vm1461, %v2452, %v2603
      %v3055 = vsel %vm1461, %v2453, %v2605
      %v3057 = vsel %vm1461, %v2454, %v2607
      %v3059 = vsel %vm1461, %v2455, %v2609
      %v3061 = vsel %vm1461, %v2456, %v2611
      %v3063 = vsel %vm1461, %v2457, %v2613
      %v3065 = vsel %vm1461, %v2458, %v2615
      %v3067 = vsel %vm1498, %v3037, %v2651
      %v3069 = vsel %vm1498, %v3039, %v2653
      %v3071 = vsel %vm1498, %v3041, %v2655
      %v3073 = vsel %vm1498, %v3043, %v2657
      %v3075 = vsel %vm1498, %v3045, %v2659
      %v3077 = vsel %vm1498, %v3047, %v2661
      %v3079 = vsel %vm1498, %v3049, %v2663
      %v3081 = vsel %vm1498, %v3051, %v2665
      %v3083 = vsel %vm1498, %v3053, %v2667
      %v3085 = vsel %vm1498, %v3055, %v2669
      %v3087 = vsel %vm1498, %v3057, %v2671
      %v3089 = vsel %vm1498, %v3059, %v2673
      %v3091 = vsel %vm1498, %v3061, %v2675
      %v3093 = vsel %vm1498, %v3063, %v2677
      %v3095 = vsel %vm1498, %v3065, %v2679
      %v3097 = vsel %vm1535, %v3067, %v2702
      %v3100 = vsel %vm1535, %v3069, %v2704
      %v3103 = vsel %vm1535, %v3071, %v2706
      %v3106 = vsel %vm1535, %v3073, %v2708
      %v3109 = vsel %vm1535, %v3075, %v2710
      %v3112 = vsel %vm1535, %v3077, %v2712
      %v3115 = vsel %vm1535, %v3079, %v2714
      %v3118 = vsel %vm1535, %v3081, %v2716
      %v3121 = vsel %vm1535, %v3083, %v2718
      %v3124 = vsel %vm1535, %v3085, %v2720
      %v3127 = vsel %vm1535, %v3087, %v2722
      %v3130 = vsel %vm1535, %v3089, %v2724
      %v3133 = vsel %vm1535, %v3091, %v2726
      %v3136 = vsel %vm1535, %v3093, %v2728
      %v3139 = vsel %vm1535, %v3095, %v2730
      %v3143 = vsel %vm1461, %v2745, %v2893
      %v3146 = vsel %vm1461, %v2753, %v2895
      %v3149 = vsel %vm1461, %v2761, %v2897
      %v3152 = vsel %vm1461, %v2769, %v2899
      %v3155 = vsel %vm1461, %v2777, %v2901
      %v3158 = vsel %vm1461, %v2785, %v2903
      %v3161 = vsel %vm1461, %v2793, %v2905
      %v3164 = vsel %vm1461, %v2801, %v2907
      %v3167 = vsel %vm1461, %v2809, %v2909
      %v3170 = vsel %vm1461, %v2817, %v2911
      %v3173 = vsel %vm1461, %v2825, %v2913
      %v3176 = vsel %vm1461, %v2833, %v2915
      %v3179 = vsel %vm1461, %v2841, %v2917
      %v3182 = vsel %vm1461, %v2849, %v2919
      %v3185 = vsel %vm1461, %v2857, %v2921
      %v3187 = vsel %vm1498, %v3143, %v2932
      %v3189 = vsel %vm1498, %v3146, %v2934
      %v3191 = vsel %vm1498, %v3149, %v2936
      %v3193 = vsel %vm1498, %v3152, %v2938
      %v3195 = vsel %vm1498, %v3155, %v2940
      %v3197 = vsel %vm1498, %v3158, %v2942
      %v3199 = vsel %vm1498, %v3161, %v2944
      %v3201 = vsel %vm1498, %v3164, %v2946
      %v3203 = vsel %vm1498, %v3167, %v2948
      %v3205 = vsel %vm1498, %v3170, %v2950
      %v3207 = vsel %vm1498, %v3173, %v2952
      %v3209 = vsel %vm1498, %v3176, %v2954
      %v3211 = vsel %vm1498, %v3179, %v2956
      %v3213 = vsel %vm1498, %v3182, %v2958
      %v3215 = vsel %vm1498, %v3185, %v2960
      %v3217 = vsel %vm1535, %v3187, %v2994
      %v3220 = vsel %vm1535, %v3189, %v2996
      %v3223 = vsel %vm1535, %v3191, %v2998
      %v3226 = vsel %vm1535, %v3193, %v3000
      %v3229 = vsel %vm1535, %v3195, %v3002
      %v3232 = vsel %vm1535, %v3197, %v3004
      %v3235 = vsel %vm1535, %v3199, %v3006
      %v3238 = vsel %vm1535, %v3201, %v3008
      %v3241 = vsel %vm1535, %v3203, %v3010
      %v3244 = vsel %vm1535, %v3205, %v3012
      %v3247 = vsel %vm1535, %v3207, %v3014
      %v3250 = vsel %vm1535, %v3209, %v3016
      %v3253 = vsel %vm1535, %v3211, %v3018
      %v3256 = vsel %vm1535, %v3213, %v3020
      %v3259 = vsel %vm1535, %v3215, %v3022
      %v3261 = vld [vmem:[%s4] sm:$0xf]
      %v3262 = vld [vmem:[%s4 + $0x4] sm:$0xf]
      %v3263 = vld [vmem:[%s4 + $0x8] sm:$0xf]
      %v3264 = vld [vmem:[%s4 + $0xc] sm:$0xf]
      %v3265 = vld [vmem:[%s4 + $0x10] sm:$0xf]
      %v3266 = vld [vmem:[%s4 + $0x14] sm:$0xf]
      %v3267 = vld [vmem:[%s4 + $0x18] sm:$0xf]
      %v3268 = vld [vmem:[%s4 + $0x1c] sm:$0xf]
      %v3269 = vld [vmem:[%s4 + $0x20] sm:$0xf]
      %v3270 = vld [vmem:[%s4 + $0x24] sm:$0xf]
      %v3271 = vld [vmem:[%s4 + $0x28] sm:$0xf]
      %v3272 = vld [vmem:[%s4 + $0x2c] sm:$0xf]
      %v3273 = vld [vmem:[%s4 + $0x30] sm:$0xf]
      %v3274 = vld [vmem:[%s4 + $0x34] sm:$0xf]
      %v3275 = vld [vmem:[%s4 + $0x38] sm:$0xf]
      %v3276 = vld [vmem:[%s4 + $0x3c] sm:$0xf]
      %v3277 = vld [vmem:[%s4 + $0x40] sm:$0xf]
      %v3278 = vld [vmem:[%s4 + $0x44] sm:$0xf]
      %v3279 = vld [vmem:[%s4 + $0x48] sm:$0xf]
      %v3280 = vld [vmem:[%s4 + $0x4c] sm:$0xf]
      %v3281 = vld [vmem:[%s4 + $0x50] sm:$0xf]
      %v3282 = vld [vmem:[%s4 + $0x54] sm:$0xf]
      %v3283 = vld [vmem:[%s4 + $0x58] sm:$0xf]
      %v3284 = vld [vmem:[%s4 + $0x5c] sm:$0xf]
      %v3285 = vld [vmem:[%s4 + $0x60] sm:$0xf]
      %v3286 = vld [vmem:[%s4 + $0x64] sm:$0xf]
      %v3287 = vld [vmem:[%s4 + $0x68] sm:$0xf]
      %v3288 = vld [vmem:[%s4 + $0x6c] sm:$0xf]
      %v3289 = vld [vmem:[%s4 + $0x70] sm:$0xf]
      %v3290 = vld [vmem:[%s4 + $0x74] sm:$0xf]
      %v3291 = vld [vmem:[%s4 + $0x78] sm:$0xf]
      %v3292 = vld [vmem:[%s4 + $0x7c] sm:$0xf]
      %v3293 = vld [vmem:[%s4 + $0x80] sm:$0xf]
      %v3294 = vld [vmem:[%s4 + $0x84] sm:$0xf]
      %v3295 = vld [vmem:[%s4 + $0x88] sm:$0xf]
      %v3296 = vld [vmem:[%s4 + $0x8c] sm:$0xf]
      %v3297 = vld [vmem:[%s5] sm:$0x1]
      %v3299 = vperm.slane %v3297, 0
      %v3337 = vunpack.c.l.b16 %v3261
      %v3338 = vunpack.c.l.b16 %v3262
      %v3339 = vunpack.c.l.b16 %v3263
      %v3340 = vunpack.c.l.b16 %v3264
      %v3341 = vunpack.c.l.b16 %v3265
      %v3342 = vunpack.c.l.b16 %v3266
      %v3343 = vunpack.c.l.b16 %v3267
      %v3344 = vunpack.c.l.b16 %v3268
      %v3345 = vunpack.c.l.b16 %v3269
      %v3346 = vunpack.c.l.b16 %v3270
      %v3347 = vunpack.c.l.b16 %v3271
      %v3348 = vunpack.c.l.b16 %v3272
      %v3349 = vunpack.c.l.b16 %v3273
      %v3350 = vunpack.c.l.b16 %v3274
      %v3351 = vunpack.c.l.b16 %v3275
      %v3352 = vunpack.c.l.b16 %v3276
      %v3353 = vunpack.c.l.b16 %v3277
      %v3354 = vunpack.c.l.b16 %v3278
      %v3355 = vunpack.c.l.b16 %v3279
      %v3356 = vunpack.c.l.b16 %v3280
      %v3357 = vunpack.c.l.b16 %v3281
      %v3358 = vunpack.c.l.b16 %v3282
      %v3359 = vunpack.c.l.b16 %v3283
      %v3360 = vunpack.c.l.b16 %v3284
      %v3361 = vunpack.c.l.b16 %v3285
      %v3362 = vunpack.c.l.b16 %v3286
      %v3363 = vunpack.c.l.b16 %v3287
      %v3364 = vunpack.c.l.b16 %v3288
      %v3365 = vunpack.c.l.b16 %v3289
      %v3366 = vunpack.c.l.b16 %v3290
      %v3367 = vunpack.c.l.b16 %v3291
      %v3368 = vunpack.c.l.b16 %v3292
      %v3369 = vunpack.c.l.b16 %v3293
      %v3370 = vunpack.c.l.b16 %v3294
      %v3371 = vunpack.c.l.b16 %v3295
      %v3372 = vunpack.c.l.b16 %v3296
      %v3373 = vpack.c.b16 %v3338, %v3337
      %v3374 = vpack.c.b16 %v3340, %v3339
      %v3375 = vpack.c.b16 %v3342, %v3341
      %v3376 = vpack.c.b16 %v3344, %v3343
      %v3377 = vpack.c.b16 %v3346, %v3345
      %v3378 = vpack.c.b16 %v3348, %v3347
      %v3379 = vpack.c.b16 %v3350, %v3349
      %v3380 = vpack.c.b16 %v3352, %v3351
      %v3381 = vpack.c.b16 %v3354, %v3353
      %v3382 = vpack.c.b16 %v3356, %v3355
      %v3383 = vpack.c.b16 %v3358, %v3357
      %v3384 = vpack.c.b16 %v3360, %v3359
      %v3385 = vpack.c.b16 %v3362, %v3361
      %v3386 = vpack.c.b16 %v3364, %v3363
      %v3387 = vpack.c.b16 %v3366, %v3365
      %v3388 = vpack.c.b16 %v3368, %v3367
      %v3389 = vpack.c.b16 %v3370, %v3369
      %v3390 = vpack.c.b16 %v3372, %v3371
      %v3410 = vsel %vm1461, %v3027, 0
      %v3413 = vsel %vm1461, %v2629, 0
      %v3416 = vsel %vm1461, %v2631, 0
      %v3419 = vsel %vm1461, %v2633, 0
      %v3422 = vsel %vm1461, %v2635, 0
      %v3425 = vsel %vm1461, %v2637, 0
      %v3428 = vsel %vm1461, %v2639, 0
      %v3431 = vsel %vm1461, %v2641, 0
      %v3434 = vsel %vm1461, %v2643, 0
      %v3437 = vsel %vm1461, %v2645, 0
      %v3440 = vsel %vm1461, %v2647, 0
      %v3443 = vsel %vm1461, %v3029, 0
      %v3446 = vsel %vm1461, %v3031, 0
      %v3449 = vsel %vm1461, %v3033, 0
      %v3452 = vsel %vm1461, %v3035, 0
      %3454 = vmatpush.bf16.msra.mxu0 %v3380
      %3455 = vmatpush.bf16.msra.mxu0 %v3379
      %3456 = vmatpush.bf16.msra.mxu0 %v3378
      %3457 = vmatpush.bf16.msra.mxu0 %v3377
      %3458 = vmatpush.bf16.msra.mxu0 %v3376
      %3459 = vmatpush.bf16.msra.mxu0 %v3375
      %3460 = vmatpush.bf16.msra.mxu0 %v3374
      %3461 = vmatpush.bf16.msra.mxu0 %v3373
      %3462 = vmatmul.bf16.gmra.mxu0 %v3097
      %v3463 = vpop.f32.mrf.mxu0
      %v3464 = vadd.f32 %v3299, %v3463
      %v3465 = vpop.f32.mrf.mxu0
      %v3466 = vadd.f32 %v3299, %v3465
      %3467 = vmatmul.bf16.gmra.mxu0 %v3100
      %v3468 = vpop.f32.mrf.mxu0
      %v3469 = vadd.f32 %v3299, %v3468
      %v3470 = vpop.f32.mrf.mxu0
      %v3471 = vadd.f32 %v3299, %v3470
      %3472 = vmatmul.bf16.gmra.mxu0 %v3103
      %v3473 = vpop.f32.mrf.mxu0
      %v3474 = vadd.f32 %v3299, %v3473
      %v3475 = vpop.f32.mrf.mxu0
      %v3476 = vadd.f32 %v3299, %v3475
      %3477 = vmatmul.bf16.gmra.mxu0 %v3106
      %v3478 = vpop.f32.mrf.mxu0
      %v3479 = vadd.f32 %v3299, %v3478
      %v3480 = vpop.f32.mrf.mxu0
      %v3481 = vadd.f32 %v3299, %v3480
      %3482 = vmatmul.bf16.gmra.mxu0 %v3109
      %v3483 = vpop.f32.mrf.mxu0
      %v3484 = vadd.f32 %v3299, %v3483
      %v3485 = vpop.f32.mrf.mxu0
      %v3486 = vadd.f32 %v3299, %v3485
      %3487 = vmatmul.bf16.gmra.mxu0 %v3112
      %v3488 = vpop.f32.mrf.mxu0
      %v3489 = vadd.f32 %v3299, %v3488
      %v3490 = vpop.f32.mrf.mxu0
      %v3491 = vadd.f32 %v3299, %v3490
      %3492 = vmatmul.bf16.gmra.mxu0 %v3115
      %v3493 = vpop.f32.mrf.mxu0
      %v3494 = vadd.f32 %v3299, %v3493
      %v3495 = vpop.f32.mrf.mxu0
      %v3496 = vadd.f32 %v3299, %v3495
      %3497 = vmatmul.bf16.gmra.mxu0 %v3118
      %v3498 = vpop.f32.mrf.mxu0
      %v3499 = vadd.f32 %v3299, %v3498
      %v3500 = vpop.f32.mrf.mxu0
      %v3501 = vadd.f32 %v3299, %v3500
      %3502 = vmatmul.bf16.gmra.mxu0 %v3121
      %v3503 = vpop.f32.mrf.mxu0
      %v3504 = vadd.f32 %v3299, %v3503
      %v3505 = vpop.f32.mrf.mxu0
      %v3506 = vadd.f32 %v3299, %v3505
      %3507 = vmatmul.bf16.gmra.mxu0 %v3124
      %v3508 = vpop.f32.mrf.mxu0
      %v3509 = vadd.f32 %v3299, %v3508
      %v3510 = vpop.f32.mrf.mxu0
      %v3511 = vadd.f32 %v3299, %v3510
      %3512 = vmatmul.bf16.gmra.mxu0 %v3127
      %v3513 = vpop.f32.mrf.mxu0
      %v3514 = vadd.f32 %v3299, %v3513
      %v3515 = vpop.f32.mrf.mxu0
      %v3516 = vadd.f32 %v3299, %v3515
      %3517 = vmatmul.bf16.gmra.mxu0 %v3130
      %v3518 = vpop.f32.mrf.mxu0
      %v3519 = vadd.f32 %v3299, %v3518
      %v3520 = vpop.f32.mrf.mxu0
      %v3521 = vadd.f32 %v3299, %v3520
      %3522 = vmatmul.bf16.gmra.mxu0 %v3133
      %v3523 = vpop.f32.mrf.mxu0
      %v3524 = vadd.f32 %v3299, %v3523
      %v3525 = vpop.f32.mrf.mxu0
      %v3526 = vadd.f32 %v3299, %v3525
      %3527 = vmatmul.bf16.gmra.mxu0 %v3136
      %v3528 = vpop.f32.mrf.mxu0
      %v3529 = vadd.f32 %v3299, %v3528
      %v3530 = vpop.f32.mrf.mxu0
      %v3531 = vadd.f32 %v3299, %v3530
      %3532 = vmatmul.bf16.gmra.mxu0 %v3139
      %v3533 = vpop.f32.mrf.mxu0
      %v3534 = vadd.f32 %v3299, %v3533
      %v3535 = vpop.f32.mrf.mxu0
      %v3536 = vadd.f32 %v3299, %v3535
      %3537 = vdwg.mxu0
      %3538 = vmatpush.bf16.msra.mxu0 %v3388
      %3539 = vmatpush.bf16.msra.mxu0 %v3387
      %3540 = vmatpush.bf16.msra.mxu0 %v3386
      %3541 = vmatpush.bf16.msra.mxu0 %v3385
      %3542 = vmatpush.bf16.msra.mxu0 %v3384
      %3543 = vmatpush.bf16.msra.mxu0 %v3383
      %3544 = vmatpush.bf16.msra.mxu0 %v3382
      %3545 = vmatpush.bf16.msra.mxu0 %v3381
      %3546 = vmatmul.bf16.gmra.mxu0 %v3217
      %v3547 = vpop.f32.mrf.mxu0
      %v3548 = vadd.f32 %v3464, %v3547
      %v3549 = vpop.f32.mrf.mxu0
      %v3550 = vadd.f32 %v3466, %v3549
      %3551 = vmatmul.bf16.gmra.mxu0 %v3220
      %v3552 = vpop.f32.mrf.mxu0
      %v3553 = vadd.f32 %v3469, %v3552
      %v3554 = vpop.f32.mrf.mxu0
      %v3555 = vadd.f32 %v3471, %v3554
      %3556 = vmatmul.bf16.gmra.mxu0 %v3223
      %v3557 = vpop.f32.mrf.mxu0
      %v3558 = vadd.f32 %v3474, %v3557
      %v3559 = vpop.f32.mrf.mxu0
      %v3560 = vadd.f32 %v3476, %v3559
      %3561 = vmatmul.bf16.gmra.mxu0 %v3226
      %v3562 = vpop.f32.mrf.mxu0
      %v3563 = vadd.f32 %v3479, %v3562
      %v3564 = vpop.f32.mrf.mxu0
      %v3565 = vadd.f32 %v3481, %v3564
      %3566 = vmatmul.bf16.gmra.mxu0 %v3229
      %v3567 = vpop.f32.mrf.mxu0
      %v3568 = vadd.f32 %v3484, %v3567
      %v3569 = vpop.f32.mrf.mxu0
      %v3570 = vadd.f32 %v3486, %v3569
      %3571 = vmatmul.bf16.gmra.mxu0 %v3232
      %v3572 = vpop.f32.mrf.mxu0
      %v3573 = vadd.f32 %v3489, %v3572
      %v3574 = vpop.f32.mrf.mxu0
      %v3575 = vadd.f32 %v3491, %v3574
      %3576 = vmatmul.bf16.gmra.mxu0 %v3235
      %v3577 = vpop.f32.mrf.mxu0
      %v3578 = vadd.f32 %v3494, %v3577
      %v3579 = vpop.f32.mrf.mxu0
      %v3580 = vadd.f32 %v3496, %v3579
      %3581 = vmatmul.bf16.gmra.mxu0 %v3238
      %v3582 = vpop.f32.mrf.mxu0
      %v3583 = vadd.f32 %v3499, %v3582
      %v3584 = vpop.f32.mrf.mxu0
      %v3585 = vadd.f32 %v3501, %v3584
      %3586 = vmatmul.bf16.gmra.mxu0 %v3241
      %v3587 = vpop.f32.mrf.mxu0
      %v3588 = vadd.f32 %v3504, %v3587
      %v3589 = vpop.f32.mrf.mxu0
      %v3590 = vadd.f32 %v3506, %v3589
      %3591 = vmatmul.bf16.gmra.mxu0 %v3244
      %v3592 = vpop.f32.mrf.mxu0
      %v3593 = vadd.f32 %v3509, %v3592
      %v3594 = vpop.f32.mrf.mxu0
      %v3595 = vadd.f32 %v3511, %v3594
      %3596 = vmatmul.bf16.gmra.mxu0 %v3247
      %v3597 = vpop.f32.mrf.mxu0
      %v3598 = vadd.f32 %v3514, %v3597
      %v3599 = vpop.f32.mrf.mxu0
      %v3600 = vadd.f32 %v3516, %v3599
      %3601 = vmatmul.bf16.gmra.mxu0 %v3250
      %v3602 = vpop.f32.mrf.mxu0
      %v3603 = vadd.f32 %v3519, %v3602
      %v3604 = vpop.f32.mrf.mxu0
      %v3605 = vadd.f32 %v3521, %v3604
      %3606 = vmatmul.bf16.gmra.mxu0 %v3253
      %v3607 = vpop.f32.mrf.mxu0
      %v3608 = vadd.f32 %v3524, %v3607
      %v3609 = vpop.f32.mrf.mxu0
      %v3610 = vadd.f32 %v3526, %v3609
      %3611 = vmatmul.bf16.gmra.mxu0 %v3256
      %v3612 = vpop.f32.mrf.mxu0
      %v3613 = vadd.f32 %v3529, %v3612
      %v3614 = vpop.f32.mrf.mxu0
      %v3615 = vadd.f32 %v3531, %v3614
      %3616 = vmatmul.bf16.gmra.mxu0 %v3259
      %v3617 = vpop.f32.mrf.mxu0
      %v3618 = vadd.f32 %v3534, %v3617
      %v3619 = vpop.f32.mrf.mxu0
      %v3620 = vadd.f32 %v3536, %v3619
      %3621 = vdwg.mxu0
      %3622 = vmatpush.bf16.msra.mxu0 0
      %3623 = vmatpush.bf16.msra.mxu0 0
      %3624 = vmatpush.bf16.msra.mxu0 0
      %3625 = vmatpush.bf16.msra.mxu0 0
      %3626 = vmatpush.bf16.msra.mxu0 0
      %3627 = vmatpush.bf16.msra.mxu0 0
      %3628 = vmatpush.bf16.msra.mxu0 %v3390
      %3629 = vmatpush.bf16.msra.mxu0 %v3389
      %3630 = vmatmul.bf16.gmra.mxu0 %v3410
      %v3631 = vpop.f32.mrf.mxu0
      %v3632 = vadd.f32 %v3548, %v3631
      %v3633 = vpop.f32.mrf.mxu0
      %v3634 = vadd.f32 %v3550, %v3633
      %3635 = vmatmul.bf16.gmra.mxu0 %v3413
      %v3636 = vpop.f32.mrf.mxu0
      %v3637 = vadd.f32 %v3553, %v3636
      %v3638 = vpop.f32.mrf.mxu0
      %v3639 = vadd.f32 %v3555, %v3638
      %3640 = vmatmul.bf16.gmra.mxu0 %v3416
      %v3641 = vpop.f32.mrf.mxu0
      %v3642 = vadd.f32 %v3558, %v3641
      %v3643 = vpop.f32.mrf.mxu0
      %v3644 = vadd.f32 %v3560, %v3643
      %3645 = vmatmul.bf16.gmra.mxu0 %v3419
      %v3646 = vpop.f32.mrf.mxu0
      %v3647 = vadd.f32 %v3563, %v3646
      %v3648 = vpop.f32.mrf.mxu0
      %v3649 = vadd.f32 %v3565, %v3648
      %3650 = vmatmul.bf16.gmra.mxu0 %v3422
      %v3651 = vpop.f32.mrf.mxu0
      %v3652 = vadd.f32 %v3568, %v3651
      %v3653 = vpop.f32.mrf.mxu0
      %v3654 = vadd.f32 %v3570, %v3653
      %3655 = vmatmul.bf16.gmra.mxu0 %v3425
      %v3656 = vpop.f32.mrf.mxu0
      %v3657 = vadd.f32 %v3573, %v3656
      %v3658 = vpop.f32.mrf.mxu0
      %v3659 = vadd.f32 %v3575, %v3658
      %3660 = vmatmul.bf16.gmra.mxu0 %v3428
      %v3661 = vpop.f32.mrf.mxu0
      %v3662 = vadd.f32 %v3578, %v3661
      %v3663 = vpop.f32.mrf.mxu0
      %v3664 = vadd.f32 %v3580, %v3663
      %3665 = vmatmul.bf16.gmra.mxu0 %v3431
      %v3666 = vpop.f32.mrf.mxu0
      %v3667 = vadd.f32 %v3583, %v3666
      %v3668 = vpop.f32.mrf.mxu0
      %v3669 = vadd.f32 %v3585, %v3668
      %3670 = vmatmul.bf16.gmra.mxu0 %v3434
      %v3671 = vpop.f32.mrf.mxu0
      %v3672 = vadd.f32 %v3588, %v3671
      %v3673 = vpop.f32.mrf.mxu0
      %v3674 = vadd.f32 %v3590, %v3673
      %3675 = vmatmul.bf16.gmra.mxu0 %v3437
      %v3676 = vpop.f32.mrf.mxu0
      %v3677 = vadd.f32 %v3593, %v3676
      %v3678 = vpop.f32.mrf.mxu0
      %v3679 = vadd.f32 %v3595, %v3678
      %3680 = vmatmul.bf16.gmra.mxu0 %v3440
      %v3681 = vpop.f32.mrf.mxu0
      %v3682 = vadd.f32 %v3598, %v3681
      %v3683 = vpop.f32.mrf.mxu0
      %v3684 = vadd.f32 %v3600, %v3683
      %3685 = vmatmul.bf16.gmra.mxu0 %v3443
      %v3686 = vpop.f32.mrf.mxu0
      %v3687 = vadd.f32 %v3603, %v3686
      %v3688 = vpop.f32.mrf.mxu0
      %v3689 = vadd.f32 %v3605, %v3688
      %3690 = vmatmul.bf16.gmra.mxu0 %v3446
      %v3691 = vpop.f32.mrf.mxu0
      %v3692 = vadd.f32 %v3608, %v3691
      %v3693 = vpop.f32.mrf.mxu0
      %v3694 = vadd.f32 %v3610, %v3693
      %3695 = vmatmul.bf16.gmra.mxu0 %v3449
      %v3696 = vpop.f32.mrf.mxu0
      %v3697 = vadd.f32 %v3613, %v3696
      %v3698 = vpop.f32.mrf.mxu0
      %v3699 = vadd.f32 %v3615, %v3698
      %3700 = vmatmul.bf16.gmra.mxu0 %v3452
      %v3701 = vpop.f32.mrf.mxu0
      %v3702 = vadd.f32 %v3618, %v3701
      %v3703 = vpop.f32.mrf.mxu0
      %v3704 = vadd.f32 %v3620, %v3703
      %3705 = vdwg.mxu0
      %v3706 = vmax.f32 %v3632, 0.0
      %v3707 = vmax.f32 %v3634, 0.0
      %v3708 = vmax.f32 %v3637, 0.0
      %v3709 = vmax.f32 %v3639, 0.0
      %v3710 = vmax.f32 %v3642, 0.0
      %v3711 = vmax.f32 %v3644, 0.0
      %v3712 = vmax.f32 %v3647, 0.0
      %v3713 = vmax.f32 %v3649, 0.0
      %v3714 = vmax.f32 %v3652, 0.0
      %v3715 = vmax.f32 %v3654, 0.0
      %v3716 = vmax.f32 %v3657, 0.0
      %v3717 = vmax.f32 %v3659, 0.0
      %v3718 = vmax.f32 %v3662, 0.0
      %v3719 = vmax.f32 %v3664, 0.0
      %v3720 = vmax.f32 %v3667, 0.0
      %v3721 = vmax.f32 %v3669, 0.0
      %v3722 = vmax.f32 %v3672, 0.0
      %v3723 = vmax.f32 %v3674, 0.0
      %v3724 = vmax.f32 %v3677, 0.0
      %v3725 = vmax.f32 %v3679, 0.0
      %v3726 = vmax.f32 %v3682, 0.0
      %v3727 = vmax.f32 %v3684, 0.0
      %v3728 = vmax.f32 %v3687, 0.0
      %v3729 = vmax.f32 %v3689, 0.0
      %v3730 = vmax.f32 %v3692, 0.0
      %v3731 = vmax.f32 %v3694, 0.0
      %v3732 = vmax.f32 %v3697, 0.0
      %v3733 = vmax.f32 %v3699, 0.0
      %v3734 = vmax.f32 %v3702, 0.0
      %v3735 = vmax.f32 %v3704, 0.0
      %v3736 = vpack.c.bf16 %v3706, %v3706
      %v3737 = vpack.c.bf16 %v3707, %v3707
      %v3738 = vpack.c.bf16 %v3708, %v3708
      %v3739 = vpack.c.bf16 %v3709, %v3709
      %v3740 = vpack.c.bf16 %v3710, %v3710
      %v3741 = vpack.c.bf16 %v3711, %v3711
      %v3742 = vpack.c.bf16 %v3712, %v3712
      %v3743 = vpack.c.bf16 %v3713, %v3713
      %v3744 = vpack.c.bf16 %v3714, %v3714
      %v3745 = vpack.c.bf16 %v3715, %v3715
      %v3746 = vpack.c.bf16 %v3716, %v3716
      %v3747 = vpack.c.bf16 %v3717, %v3717
      %v3748 = vpack.c.bf16 %v3718, %v3718
      %v3749 = vpack.c.bf16 %v3719, %v3719
      %v3750 = vpack.c.bf16 %v3720, %v3720
      %v3751 = vpack.c.bf16 %v3721, %v3721
      %v3752 = vpack.c.bf16 %v3722, %v3722
      %v3753 = vpack.c.bf16 %v3723, %v3723
      %v3754 = vpack.c.bf16 %v3724, %v3724
      %v3755 = vpack.c.bf16 %v3725, %v3725
      %v3756 = vpack.c.bf16 %v3726, %v3726
      %v3757 = vpack.c.bf16 %v3727, %v3727
      %v3758 = vpack.c.bf16 %v3728, %v3728
      %v3759 = vpack.c.bf16 %v3729, %v3729
      %v3760 = vpack.c.bf16 %v3730, %v3730
      %v3761 = vpack.c.bf16 %v3731, %v3731
      %v3762 = vpack.c.bf16 %v3732, %v3732
      %v3763 = vpack.c.bf16 %v3733, %v3733
      %v3764 = vpack.c.bf16 %v3734, %v3734
      %v3765 = vpack.c.bf16 %v3735, %v3735
      %3766 = vst.msk [vmem:[#allocation4] sm:$0xf] %vm601, %v3736
      %3767 = vst.msk [vmem:[#allocation4 + $0x4] sm:$0xf] %vm601, %v3737
      %3768 = vst.msk [vmem:[#allocation4 + $0x8] sm:$0xf] %vm601, %v3738
      %3769 = vst.msk [vmem:[#allocation4 + $0xc] sm:$0xf] %vm601, %v3739
      %3770 = vst.msk [vmem:[#allocation4 + $0x10] sm:$0xf] %vm601, %v3740
      %3771 = vst.msk [vmem:[#allocation4 + $0x14] sm:$0xf] %vm601, %v3741
      %3772 = vst.msk [vmem:[#allocation4 + $0x18] sm:$0xf] %vm601, %v3742
      %3773 = vst.msk [vmem:[#allocation4 + $0x1c] sm:$0xf] %vm601, %v3743
      %3774 = vst.msk [vmem:[#allocation4 + $0x20] sm:$0xf] %vm601, %v3744
      %3775 = vst.msk [vmem:[#allocation4 + $0x24] sm:$0xf] %vm601, %v3745
      %3776 = vst.msk [vmem:[#allocation4 + $0x28] sm:$0xf] %vm601, %v3746
      %3777 = vst.msk [vmem:[#allocation4 + $0x2c] sm:$0xf] %vm601, %v3747
      %3778 = vst.msk [vmem:[#allocation4 + $0x30] sm:$0xf] %vm601, %v3748
      %3779 = vst.msk [vmem:[#allocation4 + $0x34] sm:$0xf] %vm601, %v3749
      %3780 = vst.msk [vmem:[#allocation4 + $0x38] sm:$0xf] %vm601, %v3750
      %3781 = vst.msk [vmem:[#allocation4 + $0x3c] sm:$0xf] %vm601, %v3751
      %3782 = vst.msk [vmem:[#allocation4 + $0x40] sm:$0xf] %vm601, %v3752
      %3783 = vst.msk [vmem:[#allocation4 + $0x44] sm:$0xf] %vm601, %v3753
      %3784 = vst.msk [vmem:[#allocation4 + $0x48] sm:$0xf] %vm601, %v3754
      %3785 = vst.msk [vmem:[#allocation4 + $0x4c] sm:$0xf] %vm601, %v3755
      %3786 = vst.msk [vmem:[#allocation4 + $0x50] sm:$0xf] %vm601, %v3756
      %3787 = vst.msk [vmem:[#allocation4 + $0x54] sm:$0xf] %vm601, %v3757
      %3788 = vst.msk [vmem:[#allocation4 + $0x58] sm:$0xf] %vm601, %v3758
      %3789 = vst.msk [vmem:[#allocation4 + $0x5c] sm:$0xf] %vm601, %v3759
      %3790 = vst.msk [vmem:[#allocation4 + $0x60] sm:$0xf] %vm601, %v3760
      %3791 = vst.msk [vmem:[#allocation4 + $0x64] sm:$0xf] %vm601, %v3761
      %3792 = vst.msk [vmem:[#allocation4 + $0x68] sm:$0xf] %vm601, %v3762
      %3793 = vst.msk [vmem:[#allocation4 + $0x6c] sm:$0xf] %vm601, %v3763
      %3794 = vst.msk [vmem:[#allocation4 + $0x70] sm:$0xf] %vm601, %v3764
      %3795 = vst.msk [vmem:[#allocation4 + $0x74] sm:$0xf] %vm601, %v3765
      %3796 = vst.msk [vmem:[#allocation4 + $0x78] sm:$0xf] %vm601, 0
      %v3797 = vld [vmem:[#allocation4] sm:$0xf]
      %v3798 = vld [vmem:[#allocation4 + $0x4] sm:$0xf]
      %v3799 = vld [vmem:[#allocation4 + $0x8] sm:$0xf]
      %v3800 = vld [vmem:[#allocation4 + $0xc] sm:$0xf]
      %v3801 = vld [vmem:[#allocation4 + $0x10] sm:$0xf]
      %v3802 = vld [vmem:[#allocation4 + $0x14] sm:$0xf]
      %v3803 = vld [vmem:[#allocation4 + $0x18] sm:$0xf]
      %v3804 = vld [vmem:[#allocation4 + $0x1c] sm:$0xf]
      %v3805 = vld [vmem:[#allocation4 + $0x20] sm:$0xf]
      %v3806 = vld [vmem:[#allocation4 + $0x24] sm:$0xf]
      %v3807 = vld [vmem:[#allocation4 + $0x28] sm:$0xf]
      %v3808 = vld [vmem:[#allocation4 + $0x2c] sm:$0xf]
      %v3809 = vld [vmem:[#allocation4 + $0x30] sm:$0xf]
      %v3810 = vld [vmem:[#allocation4 + $0x34] sm:$0xf]
      %v3811 = vld [vmem:[#allocation4 + $0x38] sm:$0xf]
      %v3812 = vld [vmem:[#allocation4 + $0x3c] sm:$0xf]
      %v3813 = vld [vmem:[#allocation4 + $0x40] sm:$0xf]
      %v3814 = vld [vmem:[#allocation4 + $0x44] sm:$0xf]
      %v3815 = vld [vmem:[#allocation4 + $0x48] sm:$0xf]
      %v3816 = vld [vmem:[#allocation4 + $0x4c] sm:$0xf]
      %v3817 = vld [vmem:[#allocation4 + $0x50] sm:$0xf]
      %v3818 = vld [vmem:[#allocation4 + $0x54] sm:$0xf]
      %v3819 = vld [vmem:[#allocation4 + $0x58] sm:$0xf]
      %v3820 = vld [vmem:[#allocation4 + $0x5c] sm:$0xf]
      %v3821 = vld [vmem:[#allocation4 + $0x60] sm:$0x1]
      %v3822 = vld [vmem:[#allocation4] sm:$0xe]
      %v3823 = vld [vmem:[#allocation4 + $0x60] sm:$0xf]
      %v3824 = vld [vmem:[#allocation4 + $0x64] sm:$0xf]
      %v3825 = vld [vmem:[#allocation4 + $0x68] sm:$0xf]
      %v3826 = vld [vmem:[#allocation4 + $0x6c] sm:$0x1]
      %v3827 = vld [vmem:[#allocation4 + $0xc] sm:$0xe]
      %v3828 = vld [vmem:[#allocation4 + $0x6c] sm:$0xf]
      %v3829 = vld [vmem:[#allocation4 + $0x70] sm:$0xf]
      %v3830 = vld [vmem:[#allocation4 + $0x74] sm:$0xf]
      %v3831 = vld [vmem:[#allocation4 + $0x78] sm:$0x1]
      %v3832 = vld [vmem:[#allocation4 + $0x18] sm:$0xe]
      %v3857 = vunpack.c.l.b16 %v3797
      %v3858 = vunpack.c.l.b16 %v3798
      %v3859 = vunpack.c.l.b16 %v3799
      %v3860 = vunpack.c.l.b16 %v3800
      %v3861 = vunpack.c.l.b16 %v3801
      %v3862 = vunpack.c.l.b16 %v3802
      %v3863 = vunpack.c.l.b16 %v3803
      %v3864 = vunpack.c.l.b16 %v3804
      %v3865 = vunpack.c.l.b16 %v3805
      %v3866 = vunpack.c.l.b16 %v3806
      %v3867 = vunpack.c.l.b16 %v3807
      %v3868 = vunpack.c.l.b16 %v3808
      %v3869 = vunpack.c.l.b16 %v3809
      %v3870 = vunpack.c.l.b16 %v3810
      %v3871 = vunpack.c.l.b16 %v3811
      %v3872 = vunpack.c.l.b16 %v3812
      %v3873 = vunpack.c.l.b16 %v3813
      %v3874 = vunpack.c.l.b16 %v3814
      %v3875 = vunpack.c.l.b16 %v3815
      %v3876 = vunpack.c.l.b16 %v3816
      %v3877 = vunpack.c.l.b16 %v3817
      %v3878 = vunpack.c.l.b16 %v3818
      %v3879 = vunpack.c.l.b16 %v3819
      %v3880 = vunpack.c.l.b16 %v3820
      %v3881 = vpack.c.b16 %v3858, %v3857
      %v3882 = vpack.c.b16 %v3860, %v3859
      %v3883 = vpack.c.b16 %v3862, %v3861
      %v3884 = vpack.c.b16 %v3864, %v3863
      %v3885 = vpack.c.b16 %v3866, %v3865
      %v3886 = vpack.c.b16 %v3868, %v3867
      %v3887 = vpack.c.b16 %v3870, %v3869
      %v3888 = vpack.c.b16 %v3872, %v3871
      %v3889 = vpack.c.b16 %v3874, %v3873
      %v3890 = vpack.c.b16 %v3876, %v3875
      %v3891 = vpack.c.b16 %v3878, %v3877
      %v3892 = vpack.c.b16 %v3880, %v3879
      %v3894 = vunpack.c.l.b16 %v3821
      %v3895 = vpack.c.b16 %v3894, %v3894
      %v3897 = vshrl.u32 %v3881, 16
      %v3899 = vshll.u32 %v3881, 16
      %v3901 = vrot.slane %v3899, 1
      %v3902 = vor.u32 %v3897, %v3901
      %v3904 = vshll.u32 %v3882, 16
      %v3906 = vrot.slane %v3904, 1
      %v3907 = vsel %vm786, %v3902, %v3906
      %v3908 = vshrl.u32 %v3882, 16
      %v3910 = vor.u32 %v3908, %v3906
      %v3912 = vshll.u32 %v3883, 16
      %v3914 = vrot.slane %v3912, 1
      %v3915 = vsel %vm786, %v3910, %v3914
      %v3916 = vshrl.u32 %v3883, 16
      %v3918 = vor.u32 %v3916, %v3914
      %v3920 = vshll.u32 %v3884, 16
      %v3922 = vrot.slane %v3920, 1
      %v3923 = vsel %vm786, %v3918, %v3922
      %v3924 = vshrl.u32 %v3884, 16
      %v3926 = vor.u32 %v3924, %v3922
      %v3928 = vshll.u32 %v3885, 16
      %v3930 = vrot.slane %v3928, 1
      %v3931 = vsel %vm786, %v3926, %v3930
      %v3932 = vshrl.u32 %v3885, 16
      %v3934 = vor.u32 %v3932, %v3930
      %v3936 = vshll.u32 %v3886, 16
      %v3938 = vrot.slane %v3936, 1
      %v3939 = vsel %vm786, %v3934, %v3938
      %v3940 = vshrl.u32 %v3886, 16
      %v3942 = vor.u32 %v3940, %v3938
      %v3944 = vshll.u32 %v3887, 16
      %v3946 = vrot.slane %v3944, 1
      %v3947 = vsel %vm786, %v3942, %v3946
      %v3948 = vshrl.u32 %v3887, 16
      %v3950 = vor.u32 %v3948, %v3946
      %v3952 = vshll.u32 %v3888, 16
      %v3954 = vrot.slane %v3952, 1
      %v3955 = vsel %vm786, %v3950, %v3954
      %v3956 = vshrl.u32 %v3888, 16
      %v3958 = vor.u32 %v3956, %v3954
      %v3960 = vshll.u32 %v3889, 16
      %v3962 = vrot.slane %v3960, 1
      %v3963 = vsel %vm786, %v3958, %v3962
      %v3964 = vshrl.u32 %v3889, 16
      %v3966 = vor.u32 %v3964, %v3962
      %v3968 = vshll.u32 %v3890, 16
      %v3970 = vrot.slane %v3968, 1
      %v3971 = vsel %vm786, %v3966, %v3970
      %v3972 = vshrl.u32 %v3890, 16
      %v3974 = vor.u32 %v3972, %v3970
      %v3976 = vshll.u32 %v3891, 16
      %v3978 = vrot.slane %v3976, 1
      %v3979 = vsel %vm786, %v3974, %v3978
      %v3980 = vshrl.u32 %v3891, 16
      %v3982 = vor.u32 %v3980, %v3978
      %v3984 = vshll.u32 %v3892, 16
      %v3986 = vrot.slane %v3984, 1
      %v3987 = vsel %vm786, %v3982, %v3986
      %v3988 = vshrl.u32 %v3892, 16
      %v3990 = vor.u32 %v3988, %v3986
      %v3992 = vshll.u32 %v3895, 16
      %v3994 = vrot.slane %v3992, 1
      %v3995 = vsel %vm786, %v3990, %v3994
      %3996 = vrot.lane.b32.xlu0 %v3907, 32
      %v3997 = vpop.permute.xlu0 %3996
      %3998 = vrot.lane.b32.xlu0 %v3915, 32
      %v3999 = vpop.permute.xlu0 %3998
      %4000 = vrot.lane.b32.xlu0 %v3923, 32
      %v4001 = vpop.permute.xlu0 %4000
      %4002 = vrot.lane.b32.xlu0 %v3931, 32
      %v4003 = vpop.permute.xlu0 %4002
      %4004 = vrot.lane.b32.xlu0 %v3939, 32
      %v4005 = vpop.permute.xlu0 %4004
      %4006 = vrot.lane.b32.xlu0 %v3947, 32
      %v4007 = vpop.permute.xlu0 %4006
      %4008 = vrot.lane.b32.xlu0 %v3955, 32
      %v4009 = vpop.permute.xlu0 %4008
      %4010 = vrot.lane.b32.xlu0 %v3963, 32
      %v4011 = vpop.permute.xlu0 %4010
      %4012 = vrot.lane.b32.xlu0 %v3971, 32
      %v4013 = vpop.permute.xlu0 %4012
      %4014 = vrot.lane.b32.xlu0 %v3979, 32
      %v4015 = vpop.permute.xlu0 %4014
      %4016 = vrot.lane.b32.xlu0 %v3987, 32
      %v4017 = vpop.permute.xlu0 %4016
      %4018 = vrot.lane.b32.xlu0 %v3995, 32
      %v4019 = vpop.permute.xlu0 %4018
      %v4021 = vunpack.c.l.b16 %v3822
      %v4022 = vpack.c.b16 %v3858, %v4021
      %v4023 = vrot.slane %v4022, 1
      %v4024 = vrot.slane %v3882, 1
      %v4025 = vsel %vm974, %v4023, %v4024
      %v4026 = vrot.slane %v3883, 1
      %v4027 = vsel %vm974, %v4024, %v4026
      %v4028 = vrot.slane %v3884, 1
      %v4029 = vsel %vm974, %v4026, %v4028
      %v4030 = vrot.slane %v3885, 1
      %v4031 = vsel %vm974, %v4028, %v4030
      %v4032 = vrot.slane %v3886, 1
      %v4033 = vsel %vm974, %v4030, %v4032
      %v4034 = vrot.slane %v3887, 1
      %v4035 = vsel %vm974, %v4032, %v4034
      %v4036 = vrot.slane %v3888, 1
      %v4037 = vsel %vm974, %v4034, %v4036
      %v4038 = vrot.slane %v3889, 1
      %v4039 = vsel %vm974, %v4036, %v4038
      %v4040 = vrot.slane %v3890, 1
      %v4041 = vsel %vm974, %v4038, %v4040
      %v4042 = vrot.slane %v3891, 1
      %v4043 = vsel %vm974, %v4040, %v4042
      %v4044 = vrot.slane %v3892, 1
      %v4045 = vsel %vm974, %v4042, %v4044
      %v4046 = vrot.slane %v3895, 1
      %v4047 = vsel %vm974, %v4044, %v4046
      %4048 = vrot.lane.b32.xlu0 %v4025, 64
      %v4049 = vpop.permute.xlu0 %4048
      %4050 = vrot.lane.b32.xlu0 %v4027, 64
      %v4051 = vpop.permute.xlu0 %4050
      %4052 = vrot.lane.b32.xlu0 %v4029, 64
      %v4053 = vpop.permute.xlu0 %4052
      %4054 = vrot.lane.b32.xlu0 %v4031, 64
      %v4055 = vpop.permute.xlu0 %4054
      %4056 = vrot.lane.b32.xlu0 %v4033, 64
      %v4057 = vpop.permute.xlu0 %4056
      %4058 = vrot.lane.b32.xlu0 %v4035, 64
      %v4059 = vpop.permute.xlu0 %4058
      %4060 = vrot.lane.b32.xlu0 %v4037, 64
      %v4061 = vpop.permute.xlu0 %4060
      %4062 = vrot.lane.b32.xlu0 %v4039, 64
      %v4063 = vpop.permute.xlu0 %4062
      %4064 = vrot.lane.b32.xlu0 %v4041, 64
      %v4065 = vpop.permute.xlu0 %4064
      %4066 = vrot.lane.b32.xlu0 %v4043, 64
      %v4067 = vpop.permute.xlu0 %4066
      %4068 = vrot.lane.b32.xlu0 %v4045, 64
      %v4069 = vpop.permute.xlu0 %4068
      %4070 = vrot.lane.b32.xlu0 %v4047, 64
      %v4071 = vpop.permute.xlu0 %4070
      %v4075 = vunpack.c.l.b16 %v3823
      %v4076 = vunpack.c.l.b16 %v3824
      %v4077 = vunpack.c.l.b16 %v3825
      %v4078 = vpack.c.b16 %v3861, %v3860
      %v4079 = vpack.c.b16 %v3863, %v3862
      %v4080 = vpack.c.b16 %v3865, %v3864
      %v4081 = vpack.c.b16 %v3867, %v3866
      %v4082 = vpack.c.b16 %v3869, %v3868
      %v4083 = vpack.c.b16 %v3871, %v3870
      %v4084 = vpack.c.b16 %v3873, %v3872
      %v4085 = vpack.c.b16 %v3875, %v3874
      %v4086 = vpack.c.b16 %v3877, %v3876
      %v4087 = vpack.c.b16 %v3879, %v3878
      %v4088 = vpack.c.b16 %v4075, %v3880
      %v4089 = vpack.c.b16 %v4077, %v4076
      %4090 = vrot.lane.b32.xlu0 %v4078, 96
      %v4091 = vpop.permute.xlu0 %4090
      %4092 = vrot.lane.b32.xlu0 %v4079, 96
      %v4093 = vpop.permute.xlu0 %4092
      %4094 = vrot.lane.b32.xlu0 %v4080, 96
      %v4095 = vpop.permute.xlu0 %4094
      %4096 = vrot.lane.b32.xlu0 %v4081, 96
      %v4097 = vpop.permute.xlu0 %4096
      %4098 = vrot.lane.b32.xlu0 %v4082, 96
      %v4099 = vpop.permute.xlu0 %4098
      %4100 = vrot.lane.b32.xlu0 %v4083, 96
      %v4101 = vpop.permute.xlu0 %4100
      %4102 = vrot.lane.b32.xlu0 %v4084, 96
      %v4103 = vpop.permute.xlu0 %4102
      %4104 = vrot.lane.b32.xlu0 %v4085, 96
      %v4105 = vpop.permute.xlu0 %4104
      %4106 = vrot.lane.b32.xlu0 %v4086, 96
      %v4107 = vpop.permute.xlu0 %4106
      %4108 = vrot.lane.b32.xlu0 %v4087, 96
      %v4109 = vpop.permute.xlu0 %4108
      %4110 = vrot.lane.b32.xlu0 %v4088, 96
      %v4111 = vpop.permute.xlu0 %4110
      %4112 = vrot.lane.b32.xlu0 %v4089, 96
      %v4113 = vpop.permute.xlu0 %4112
      %v4115 = vunpack.c.l.b16 %v3826
      %v4116 = vpack.c.b16 %v4115, %v4115
      %v4118 = vshrl.u32 %v4078, 16
      %v4120 = vshll.u32 %v4078, 16
      %v4122 = vrot.slane %v4120, 1
      %v4123 = vor.u32 %v4118, %v4122
      %v4125 = vshll.u32 %v4079, 16
      %v4127 = vrot.slane %v4125, 1
      %v4128 = vsel %vm786, %v4123, %v4127
      %v4129 = vshrl.u32 %v4079, 16
      %v4131 = vor.u32 %v4129, %v4127
      %v4133 = vshll.u32 %v4080, 16
      %v4135 = vrot.slane %v4133, 1
      %v4136 = vsel %vm786, %v4131, %v4135
      %v4137 = vshrl.u32 %v4080, 16
      %v4139 = vor.u32 %v4137, %v4135
      %v4141 = vshll.u32 %v4081, 16
      %v4143 = vrot.slane %v4141, 1
      %v4144 = vsel %vm786, %v4139, %v4143
      %v4145 = vshrl.u32 %v4081, 16
      %v4147 = vor.u32 %v4145, %v4143
      %v4149 = vshll.u32 %v4082, 16
      %v4151 = vrot.slane %v4149, 1
      %v4152 = vsel %vm786, %v4147, %v4151
      %v4153 = vshrl.u32 %v4082, 16
      %v4155 = vor.u32 %v4153, %v4151
      %v4157 = vshll.u32 %v4083, 16
      %v4159 = vrot.slane %v4157, 1
      %v4160 = vsel %vm786, %v4155, %v4159
      %v4161 = vshrl.u32 %v4083, 16
      %v4163 = vor.u32 %v4161, %v4159
      %v4165 = vshll.u32 %v4084, 16
      %v4167 = vrot.slane %v4165, 1
      %v4168 = vsel %vm786, %v4163, %v4167
      %v4169 = vshrl.u32 %v4084, 16
      %v4171 = vor.u32 %v4169, %v4167
      %v4173 = vshll.u32 %v4085, 16
      %v4175 = vrot.slane %v4173, 1
      %v4176 = vsel %vm786, %v4171, %v4175
      %v4177 = vshrl.u32 %v4085, 16
      %v4179 = vor.u32 %v4177, %v4175
      %v4181 = vshll.u32 %v4086, 16
      %v4183 = vrot.slane %v4181, 1
      %v4184 = vsel %vm786, %v4179, %v4183
      %v4185 = vshrl.u32 %v4086, 16
      %v4187 = vor.u32 %v4185, %v4183
      %v4189 = vshll.u32 %v4087, 16
      %v4191 = vrot.slane %v4189, 1
      %v4192 = vsel %vm786, %v4187, %v4191
      %v4193 = vshrl.u32 %v4087, 16
      %v4195 = vor.u32 %v4193, %v4191
      %v4197 = vshll.u32 %v4088, 16
      %v4199 = vrot.slane %v4197, 1
      %v4200 = vsel %vm786, %v4195, %v4199
      %v4201 = vshrl.u32 %v4088, 16
      %v4203 = vor.u32 %v4201, %v4199
      %v4205 = vshll.u32 %v4089, 16
      %v4207 = vrot.slane %v4205, 1
      %v4208 = vsel %vm786, %v4203, %v4207
      %v4209 = vshrl.u32 %v4089, 16
      %v4211 = vor.u32 %v4209, %v4207
      %v4213 = vshll.u32 %v4116, 16
      %v4215 = vrot.slane %v4213, 1
      %v4216 = vsel %vm786, %v4211, %v4215
      %v4218 = vunpack.c.l.b16 %v3827
      %v4219 = vpack.c.b16 %v3861, %v4218
      %v4220 = vrot.slane %v4219, 1
      %v4221 = vrot.slane %v4079, 1
      %v4222 = vsel %vm974, %v4220, %v4221
      %v4223 = vrot.slane %v4080, 1
      %v4224 = vsel %vm974, %v4221, %v4223
      %v4225 = vrot.slane %v4081, 1
      %v4226 = vsel %vm974, %v4223, %v4225
      %v4227 = vrot.slane %v4082, 1
      %v4228 = vsel %vm974, %v4225, %v4227
      %v4229 = vrot.slane %v4083, 1
      %v4230 = vsel %vm974, %v4227, %v4229
      %v4231 = vrot.slane %v4084, 1
      %v4232 = vsel %vm974, %v4229, %v4231
      %v4233 = vrot.slane %v4085, 1
      %v4234 = vsel %vm974, %v4231, %v4233
      %v4235 = vrot.slane %v4086, 1
      %v4236 = vsel %vm974, %v4233, %v4235
      %v4237 = vrot.slane %v4087, 1
      %v4238 = vsel %vm974, %v4235, %v4237
      %v4239 = vrot.slane %v4088, 1
      %v4240 = vsel %vm974, %v4237, %v4239
      %v4241 = vrot.slane %v4089, 1
      %v4242 = vsel %vm974, %v4239, %v4241
      %v4243 = vrot.slane %v4116, 1
      %v4244 = vsel %vm974, %v4241, %v4243
      %4245 = vrot.lane.b32.xlu0 %v4222, 32
      %v4246 = vpop.permute.xlu0 %4245
      %4247 = vrot.lane.b32.xlu0 %v4224, 32
      %v4248 = vpop.permute.xlu0 %4247
      %4249 = vrot.lane.b32.xlu0 %v4226, 32
      %v4250 = vpop.permute.xlu0 %4249
      %4251 = vrot.lane.b32.xlu0 %v4228, 32
      %v4252 = vpop.permute.xlu0 %4251
      %4253 = vrot.lane.b32.xlu0 %v4230, 32
      %v4254 = vpop.permute.xlu0 %4253
      %4255 = vrot.lane.b32.xlu0 %v4232, 32
      %v4256 = vpop.permute.xlu0 %4255
      %4257 = vrot.lane.b32.xlu0 %v4234, 32
      %v4258 = vpop.permute.xlu0 %4257
      %4259 = vrot.lane.b32.xlu0 %v4236, 32
      %v4260 = vpop.permute.xlu0 %4259
      %4261 = vrot.lane.b32.xlu0 %v4238, 32
      %v4262 = vpop.permute.xlu0 %4261
      %4263 = vrot.lane.b32.xlu0 %v4240, 32
      %v4264 = vpop.permute.xlu0 %4263
      %4265 = vrot.lane.b32.xlu0 %v4242, 32
      %v4266 = vpop.permute.xlu0 %4265
      %4267 = vrot.lane.b32.xlu0 %v4244, 32
      %v4268 = vpop.permute.xlu0 %4267
      %v4272 = vunpack.c.l.b16 %v3828
      %v4273 = vunpack.c.l.b16 %v3829
      %v4274 = vunpack.c.l.b16 %v3830
      %v4275 = vpack.c.b16 %v4076, %v4075
      %v4276 = vpack.c.b16 %v4272, %v4077
      %v4277 = vpack.c.b16 %v4274, %v4273
      %4278 = vrot.lane.b32.xlu0 %v3884, 64
      %v4279 = vpop.permute.xlu0 %4278
      %4280 = vrot.lane.b32.xlu0 %v3885, 64
      %v4281 = vpop.permute.xlu0 %4280
      %4282 = vrot.lane.b32.xlu0 %v3886, 64
      %v4283 = vpop.permute.xlu0 %4282
      %4284 = vrot.lane.b32.xlu0 %v3887, 64
      %v4285 = vpop.permute.xlu0 %4284
      %4286 = vrot.lane.b32.xlu0 %v3888, 64
      %v4287 = vpop.permute.xlu0 %4286
      %4288 = vrot.lane.b32.xlu0 %v3889, 64
      %v4289 = vpop.permute.xlu0 %4288
      %4290 = vrot.lane.b32.xlu0 %v3890, 64
      %v4291 = vpop.permute.xlu0 %4290
      %4292 = vrot.lane.b32.xlu0 %v3891, 64
      %v4293 = vpop.permute.xlu0 %4292
      %4294 = vrot.lane.b32.xlu0 %v3892, 64
      %v4295 = vpop.permute.xlu0 %4294
      %4296 = vrot.lane.b32.xlu0 %v4275, 64
      %v4297 = vpop.permute.xlu0 %4296
      %4298 = vrot.lane.b32.xlu0 %v4276, 64
      %v4299 = vpop.permute.xlu0 %4298
      %4300 = vrot.lane.b32.xlu0 %v4277, 64
      %v4301 = vpop.permute.xlu0 %4300
      %v4303 = vunpack.c.l.b16 %v3831
      %v4304 = vpack.c.b16 %v4303, %v4303
      %v4306 = vshll.u32 %v4275, 16
      %v4308 = vrot.slane %v4306, 1
      %v4309 = vsel %vm786, %v3990, %v4308
      %v4310 = vshrl.u32 %v4275, 16
      %v4312 = vor.u32 %v4310, %v4308
      %v4314 = vshll.u32 %v4276, 16
      %v4316 = vrot.slane %v4314, 1
      %v4317 = vsel %vm786, %v4312, %v4316
      %v4318 = vshrl.u32 %v4276, 16
      %v4320 = vor.u32 %v4318, %v4316
      %v4322 = vshll.u32 %v4277, 16
      %v4324 = vrot.slane %v4322, 1
      %v4325 = vsel %vm786, %v4320, %v4324
      %v4326 = vshrl.u32 %v4277, 16
      %v4328 = vor.u32 %v4326, %v4324
      %v4330 = vshll.u32 %v4304, 16
      %v4332 = vrot.slane %v4330, 1
      %v4333 = vsel %vm786, %v4328, %v4332
      %4334 = vrot.lane.b32.xlu0 %v3931, 96
      %v4335 = vpop.permute.xlu0 %4334
      %4336 = vrot.lane.b32.xlu0 %v3939, 96
      %v4337 = vpop.permute.xlu0 %4336
      %4338 = vrot.lane.b32.xlu0 %v3947, 96
      %v4339 = vpop.permute.xlu0 %4338
      %4340 = vrot.lane.b32.xlu0 %v3955, 96
      %v4341 = vpop.permute.xlu0 %4340
      %4342 = vrot.lane.b32.xlu0 %v3963, 96
      %v4343 = vpop.permute.xlu0 %4342
      %4344 = vrot.lane.b32.xlu0 %v3971, 96
      %v4345 = vpop.permute.xlu0 %4344
      %4346 = vrot.lane.b32.xlu0 %v3979, 96
      %v4347 = vpop.permute.xlu0 %4346
      %4348 = vrot.lane.b32.xlu0 %v3987, 96
      %v4349 = vpop.permute.xlu0 %4348
      %4350 = vrot.lane.b32.xlu0 %v4309, 96
      %v4351 = vpop.permute.xlu0 %4350
      %4352 = vrot.lane.b32.xlu0 %v4317, 96
      %v4353 = vpop.permute.xlu0 %4352
      %4354 = vrot.lane.b32.xlu0 %v4325, 96
      %v4355 = vpop.permute.xlu0 %4354
      %4356 = vrot.lane.b32.xlu0 %v4333, 96
      %v4357 = vpop.permute.xlu0 %4356
      %v4359 = vunpack.c.l.b16 %v3832
      %v4360 = vpack.c.b16 %v3864, %v4359
      %v4361 = vrot.slane %v4360, 1
      %v4362 = vsel %vm974, %v4361, %v4030
      %v4363 = vrot.slane %v4275, 1
      %v4364 = vsel %vm974, %v4044, %v4363
      %v4365 = vrot.slane %v4276, 1
      %v4366 = vsel %vm974, %v4363, %v4365
      %v4367 = vrot.slane %v4277, 1
      %v4368 = vsel %vm974, %v4365, %v4367
      %v4369 = vrot.slane %v4304, 1
      %v4370 = vsel %vm974, %v4367, %v4369
      %v4372 = vsel %vm1461, %v3881, %v3997
      %v4374 = vsel %vm1461, %v3882, %v3999
      %v4376 = vsel %vm1461, %v3883, %v4001
      %v4378 = vsel %vm1461, %v3884, %v4003
      %v4380 = vsel %vm1461, %v3885, %v4005
      %v4382 = vsel %vm1461, %v3886, %v4007
      %v4384 = vsel %vm1461, %v3887, %v4009
      %v4386 = vsel %vm1461, %v3888, %v4011
      %v4388 = vsel %vm1461, %v3889, %v4013
      %v4390 = vsel %vm1461, %v3890, %v4015
      %v4392 = vsel %vm1461, %v3891, %v4017
      %v4394 = vsel %vm1461, %v3892, %v4019
      %v4396 = vsel %vm1498, %v4372, %v4049
      %v4398 = vsel %vm1498, %v4374, %v4051
      %v4400 = vsel %vm1498, %v4376, %v4053
      %v4402 = vsel %vm1498, %v4378, %v4055
      %v4404 = vsel %vm1498, %v4380, %v4057
      %v4406 = vsel %vm1498, %v4382, %v4059
      %v4408 = vsel %vm1498, %v4384, %v4061
      %v4410 = vsel %vm1498, %v4386, %v4063
      %v4412 = vsel %vm1498, %v4388, %v4065
      %v4414 = vsel %vm1498, %v4390, %v4067
      %v4416 = vsel %vm1498, %v4392, %v4069
      %v4418 = vsel %vm1498, %v4394, %v4071
      %v4420 = vsel %vm1535, %v4396, %v4091
      %v4423 = vsel %vm1535, %v4398, %v4093
      %v4426 = vsel %vm1535, %v4400, %v4095
      %v4429 = vsel %vm1535, %v4402, %v4097
      %v4432 = vsel %vm1535, %v4404, %v4099
      %v4435 = vsel %vm1535, %v4406, %v4101
      %v4438 = vsel %vm1535, %v4408, %v4103
      %v4441 = vsel %vm1535, %v4410, %v4105
      %v4444 = vsel %vm1535, %v4412, %v4107
      %v4447 = vsel %vm1535, %v4414, %v4109
      %v4450 = vsel %vm1535, %v4416, %v4111
      %v4453 = vsel %vm1535, %v4418, %v4113
      %v4457 = vsel %vm1461, %v4128, %v4246
      %v4460 = vsel %vm1461, %v4136, %v4248
      %v4463 = vsel %vm1461, %v4144, %v4250
      %v4466 = vsel %vm1461, %v4152, %v4252
      %v4469 = vsel %vm1461, %v4160, %v4254
      %v4472 = vsel %vm1461, %v4168, %v4256
      %v4475 = vsel %vm1461, %v4176, %v4258
      %v4478 = vsel %vm1461, %v4184, %v4260
      %v4481 = vsel %vm1461, %v4192, %v4262
      %v4484 = vsel %vm1461, %v4200, %v4264
      %v4487 = vsel %vm1461, %v4208, %v4266
      %v4490 = vsel %vm1461, %v4216, %v4268
      %v4492 = vsel %vm1498, %v4457, %v4279
      %v4494 = vsel %vm1498, %v4460, %v4281
      %v4496 = vsel %vm1498, %v4463, %v4283
      %v4498 = vsel %vm1498, %v4466, %v4285
      %v4500 = vsel %vm1498, %v4469, %v4287
      %v4502 = vsel %vm1498, %v4472, %v4289
      %v4504 = vsel %vm1498, %v4475, %v4291
      %v4506 = vsel %vm1498, %v4478, %v4293
      %v4508 = vsel %vm1498, %v4481, %v4295
      %v4510 = vsel %vm1498, %v4484, %v4297
      %v4512 = vsel %vm1498, %v4487, %v4299
      %v4514 = vsel %vm1498, %v4490, %v4301
      %v4516 = vsel %vm1535, %v4492, %v4335
      %v4519 = vsel %vm1535, %v4494, %v4337
      %v4522 = vsel %vm1535, %v4496, %v4339
      %v4525 = vsel %vm1535, %v4498, %v4341
      %v4528 = vsel %vm1535, %v4500, %v4343
      %v4531 = vsel %vm1535, %v4502, %v4345
      %v4534 = vsel %vm1535, %v4504, %v4347
      %v4537 = vsel %vm1535, %v4506, %v4349
      %v4540 = vsel %vm1535, %v4508, %v4351
      %v4543 = vsel %vm1535, %v4510, %v4353
      %v4546 = vsel %vm1535, %v4512, %v4355
      %v4549 = vsel %vm1535, %v4514, %v4357
      %v4551 = vld [vmem:[%s6] sm:$0xf]
      %v4552 = vld [vmem:[%s6 + $0x4] sm:$0xf]
      %v4553 = vld [vmem:[%s6 + $0x8] sm:$0xf]
      %v4554 = vld [vmem:[%s6 + $0xc] sm:$0xf]
      %v4555 = vld [vmem:[%s6 + $0x10] sm:$0xf]
      %v4556 = vld [vmem:[%s6 + $0x14] sm:$0xf]
      %v4557 = vld [vmem:[%s6 + $0x18] sm:$0xf]
      %v4558 = vld [vmem:[%s6 + $0x1c] sm:$0xf]
      %v4559 = vld [vmem:[%s6 + $0x20] sm:$0xf]
      %v4560 = vld [vmem:[%s6 + $0x24] sm:$0xf]
      %v4561 = vld [vmem:[%s6 + $0x28] sm:$0xf]
      %v4562 = vld [vmem:[%s6 + $0x2c] sm:$0xf]
      %v4563 = vld [vmem:[%s6 + $0x30] sm:$0xf]
      %v4564 = vld [vmem:[%s6 + $0x34] sm:$0xf]
      %v4565 = vld [vmem:[%s6 + $0x38] sm:$0xf]
      %v4566 = vld [vmem:[%s6 + $0x3c] sm:$0xf]
      %v4567 = vld [vmem:[%s6 + $0x40] sm:$0xf]
      %v4568 = vld [vmem:[%s6 + $0x44] sm:$0xf]
      %v4569 = vld [vmem:[%s6 + $0x48] sm:$0xf]
      %v4570 = vld [vmem:[%s6 + $0x4c] sm:$0xf]
      %v4571 = vld [vmem:[%s6 + $0x50] sm:$0xf]
      %v4572 = vld [vmem:[%s6 + $0x54] sm:$0xf]
      %v4573 = vld [vmem:[%s6 + $0x58] sm:$0xf]
      %v4574 = vld [vmem:[%s6 + $0x5c] sm:$0xf]
      %v4575 = vld [vmem:[%s6 + $0x60] sm:$0xf]
      %v4576 = vld [vmem:[%s6 + $0x64] sm:$0xf]
      %v4577 = vld [vmem:[%s6 + $0x68] sm:$0xf]
      %v4578 = vld [vmem:[%s6 + $0x6c] sm:$0xf]
      %v4579 = vld [vmem:[%s6 + $0x70] sm:$0xf]
      %v4580 = vld [vmem:[%s6 + $0x74] sm:$0xf]
      %v4581 = vld [vmem:[%s6 + $0x78] sm:$0xf]
      %v4582 = vld [vmem:[%s6 + $0x7c] sm:$0xf]
      %v4583 = vld [vmem:[%s6 + $0x80] sm:$0xf]
      %v4584 = vld [vmem:[%s6 + $0x84] sm:$0xf]
      %v4585 = vld [vmem:[%s6 + $0x88] sm:$0xf]
      %v4586 = vld [vmem:[%s6 + $0x8c] sm:$0xf]
      %v4587 = vld [vmem:[%s7] sm:$0x1]
      %v4589 = vperm.slane %v4587, 0
      %v4627 = vunpack.c.l.b16 %v4551
      %v4628 = vunpack.c.l.b16 %v4552
      %v4629 = vunpack.c.l.b16 %v4553
      %v4630 = vunpack.c.l.b16 %v4554
      %v4631 = vunpack.c.l.b16 %v4555
      %v4632 = vunpack.c.l.b16 %v4556
      %v4633 = vunpack.c.l.b16 %v4557
      %v4634 = vunpack.c.l.b16 %v4558
      %v4635 = vunpack.c.l.b16 %v4559
      %v4636 = vunpack.c.l.b16 %v4560
      %v4637 = vunpack.c.l.b16 %v4561
      %v4638 = vunpack.c.l.b16 %v4562
      %v4639 = vunpack.c.l.b16 %v4563
      %v4640 = vunpack.c.l.b16 %v4564
      %v4641 = vunpack.c.l.b16 %v4565
      %v4642 = vunpack.c.l.b16 %v4566
      %v4643 = vunpack.c.l.b16 %v4567
      %v4644 = vunpack.c.l.b16 %v4568
      %v4645 = vunpack.c.l.b16 %v4569
      %v4646 = vunpack.c.l.b16 %v4570
      %v4647 = vunpack.c.l.b16 %v4571
      %v4648 = vunpack.c.l.b16 %v4572
      %v4649 = vunpack.c.l.b16 %v4573
      %v4650 = vunpack.c.l.b16 %v4574
      %v4651 = vunpack.c.l.b16 %v4575
      %v4652 = vunpack.c.l.b16 %v4576
      %v4653 = vunpack.c.l.b16 %v4577
      %v4654 = vunpack.c.l.b16 %v4578
      %v4655 = vunpack.c.l.b16 %v4579
      %v4656 = vunpack.c.l.b16 %v4580
      %v4657 = vunpack.c.l.b16 %v4581
      %v4658 = vunpack.c.l.b16 %v4582
      %v4659 = vunpack.c.l.b16 %v4583
      %v4660 = vunpack.c.l.b16 %v4584
      %v4661 = vunpack.c.l.b16 %v4585
      %v4662 = vunpack.c.l.b16 %v4586
      %v4663 = vpack.c.b16 %v4628, %v4627
      %v4664 = vpack.c.b16 %v4630, %v4629
      %v4665 = vpack.c.b16 %v4632, %v4631
      %v4666 = vpack.c.b16 %v4634, %v4633
      %v4667 = vpack.c.b16 %v4636, %v4635
      %v4668 = vpack.c.b16 %v4638, %v4637
      %v4669 = vpack.c.b16 %v4640, %v4639
      %v4670 = vpack.c.b16 %v4642, %v4641
      %v4671 = vpack.c.b16 %v4644, %v4643
      %v4672 = vpack.c.b16 %v4646, %v4645
      %v4673 = vpack.c.b16 %v4648, %v4647
      %v4674 = vpack.c.b16 %v4650, %v4649
      %v4675 = vpack.c.b16 %v4652, %v4651
      %v4676 = vpack.c.b16 %v4654, %v4653
      %v4677 = vpack.c.b16 %v4656, %v4655
      %v4678 = vpack.c.b16 %v4658, %v4657
      %v4679 = vpack.c.b16 %v4660, %v4659
      %v4680 = vpack.c.b16 %v4662, %v4661
      %v4700 = vsel %vm1461, %v4362, 0
      %v4703 = vsel %vm1461, %v4033, 0
      %v4706 = vsel %vm1461, %v4035, 0
      %v4709 = vsel %vm1461, %v4037, 0
      %v4712 = vsel %vm1461, %v4039, 0
      %v4715 = vsel %vm1461, %v4041, 0
      %v4718 = vsel %vm1461, %v4043, 0
      %v4721 = vsel %vm1461, %v4045, 0
      %v4724 = vsel %vm1461, %v4364, 0
      %v4727 = vsel %vm1461, %v4366, 0
      %v4730 = vsel %vm1461, %v4368, 0
      %v4733 = vsel %vm1461, %v4370, 0
      %4735 = vmatpush.bf16.msra.mxu0 %v4670
      %4736 = vmatpush.bf16.msra.mxu0 %v4669
      %4737 = vmatpush.bf16.msra.mxu0 %v4668
      %4738 = vmatpush.bf16.msra.mxu0 %v4667
      %4739 = vmatpush.bf16.msra.mxu0 %v4666
      %4740 = vmatpush.bf16.msra.mxu0 %v4665
      %4741 = vmatpush.bf16.msra.mxu0 %v4664
      %4742 = vmatpush.bf16.msra.mxu0 %v4663
      %4743 = vmatmul.bf16.gmra.mxu0 %v4420
      %v4744 = vpop.f32.mrf.mxu0
      %v4745 = vadd.f32 %v4589, %v4744
      %v4746 = vpop.f32.mrf.mxu0
      %v4747 = vadd.f32 %v4589, %v4746
      %4748 = vmatmul.bf16.gmra.mxu0 %v4423
      %v4749 = vpop.f32.mrf.mxu0
      %v4750 = vadd.f32 %v4589, %v4749
      %v4751 = vpop.f32.mrf.mxu0
      %v4752 = vadd.f32 %v4589, %v4751
      %4753 = vmatmul.bf16.gmra.mxu0 %v4426
      %v4754 = vpop.f32.mrf.mxu0
      %v4755 = vadd.f32 %v4589, %v4754
      %v4756 = vpop.f32.mrf.mxu0
      %v4757 = vadd.f32 %v4589, %v4756
      %4758 = vmatmul.bf16.gmra.mxu0 %v4429
      %v4759 = vpop.f32.mrf.mxu0
      %v4760 = vadd.f32 %v4589, %v4759
      %v4761 = vpop.f32.mrf.mxu0
      %v4762 = vadd.f32 %v4589, %v4761
      %4763 = vmatmul.bf16.gmra.mxu0 %v4432
      %v4764 = vpop.f32.mrf.mxu0
      %v4765 = vadd.f32 %v4589, %v4764
      %v4766 = vpop.f32.mrf.mxu0
      %v4767 = vadd.f32 %v4589, %v4766
      %4768 = vmatmul.bf16.gmra.mxu0 %v4435
      %v4769 = vpop.f32.mrf.mxu0
      %v4770 = vadd.f32 %v4589, %v4769
      %v4771 = vpop.f32.mrf.mxu0
      %v4772 = vadd.f32 %v4589, %v4771
      %4773 = vmatmul.bf16.gmra.mxu0 %v4438
      %v4774 = vpop.f32.mrf.mxu0
      %v4775 = vadd.f32 %v4589, %v4774
      %v4776 = vpop.f32.mrf.mxu0
      %v4777 = vadd.f32 %v4589, %v4776
      %4778 = vmatmul.bf16.gmra.mxu0 %v4441
      %v4779 = vpop.f32.mrf.mxu0
      %v4780 = vadd.f32 %v4589, %v4779
      %v4781 = vpop.f32.mrf.mxu0
      %v4782 = vadd.f32 %v4589, %v4781
      %4783 = vmatmul.bf16.gmra.mxu0 %v4444
      %v4784 = vpop.f32.mrf.mxu0
      %v4785 = vadd.f32 %v4589, %v4784
      %v4786 = vpop.f32.mrf.mxu0
      %v4787 = vadd.f32 %v4589, %v4786
      %4788 = vmatmul.bf16.gmra.mxu0 %v4447
      %v4789 = vpop.f32.mrf.mxu0
      %v4790 = vadd.f32 %v4589, %v4789
      %v4791 = vpop.f32.mrf.mxu0
      %v4792 = vadd.f32 %v4589, %v4791
      %4793 = vmatmul.bf16.gmra.mxu0 %v4450
      %v4794 = vpop.f32.mrf.mxu0
      %v4795 = vadd.f32 %v4589, %v4794
      %v4796 = vpop.f32.mrf.mxu0
      %v4797 = vadd.f32 %v4589, %v4796
      %4798 = vmatmul.bf16.gmra.mxu0 %v4453
      %v4799 = vpop.f32.mrf.mxu0
      %v4800 = vadd.f32 %v4589, %v4799
      %v4801 = vpop.f32.mrf.mxu0
      %v4802 = vadd.f32 %v4589, %v4801
      %4803 = vdwg.mxu0
      %4804 = vmatpush.bf16.msra.mxu0 %v4678
      %4805 = vmatpush.bf16.msra.mxu0 %v4677
      %4806 = vmatpush.bf16.msra.mxu0 %v4676
      %4807 = vmatpush.bf16.msra.mxu0 %v4675
      %4808 = vmatpush.bf16.msra.mxu0 %v4674
      %4809 = vmatpush.bf16.msra.mxu0 %v4673
      %4810 = vmatpush.bf16.msra.mxu0 %v4672
      %4811 = vmatpush.bf16.msra.mxu0 %v4671
      %4812 = vmatmul.bf16.gmra.mxu0 %v4516
      %v4813 = vpop.f32.mrf.mxu0
      %v4814 = vadd.f32 %v4745, %v4813
      %v4815 = vpop.f32.mrf.mxu0
      %v4816 = vadd.f32 %v4747, %v4815
      %4817 = vmatmul.bf16.gmra.mxu0 %v4519
      %v4818 = vpop.f32.mrf.mxu0
      %v4819 = vadd.f32 %v4750, %v4818
      %v4820 = vpop.f32.mrf.mxu0
      %v4821 = vadd.f32 %v4752, %v4820
      %4822 = vmatmul.bf16.gmra.mxu0 %v4522
      %v4823 = vpop.f32.mrf.mxu0
      %v4824 = vadd.f32 %v4755, %v4823
      %v4825 = vpop.f32.mrf.mxu0
      %v4826 = vadd.f32 %v4757, %v4825
      %4827 = vmatmul.bf16.gmra.mxu0 %v4525
      %v4828 = vpop.f32.mrf.mxu0
      %v4829 = vadd.f32 %v4760, %v4828
      %v4830 = vpop.f32.mrf.mxu0
      %v4831 = vadd.f32 %v4762, %v4830
      %4832 = vmatmul.bf16.gmra.mxu0 %v4528
      %v4833 = vpop.f32.mrf.mxu0
      %v4834 = vadd.f32 %v4765, %v4833
      %v4835 = vpop.f32.mrf.mxu0
      %v4836 = vadd.f32 %v4767, %v4835
      %4837 = vmatmul.bf16.gmra.mxu0 %v4531
      %v4838 = vpop.f32.mrf.mxu0
      %v4839 = vadd.f32 %v4770, %v4838
      %v4840 = vpop.f32.mrf.mxu0
      %v4841 = vadd.f32 %v4772, %v4840
      %4842 = vmatmul.bf16.gmra.mxu0 %v4534
      %v4843 = vpop.f32.mrf.mxu0
      %v4844 = vadd.f32 %v4775, %v4843
      %v4845 = vpop.f32.mrf.mxu0
      %v4846 = vadd.f32 %v4777, %v4845
      %4847 = vmatmul.bf16.gmra.mxu0 %v4537
      %v4848 = vpop.f32.mrf.mxu0
      %v4849 = vadd.f32 %v4780, %v4848
      %v4850 = vpop.f32.mrf.mxu0
      %v4851 = vadd.f32 %v4782, %v4850
      %4852 = vmatmul.bf16.gmra.mxu0 %v4540
      %v4853 = vpop.f32.mrf.mxu0
      %v4854 = vadd.f32 %v4785, %v4853
      %v4855 = vpop.f32.mrf.mxu0
      %v4856 = vadd.f32 %v4787, %v4855
      %4857 = vmatmul.bf16.gmra.mxu0 %v4543
      %v4858 = vpop.f32.mrf.mxu0
      %v4859 = vadd.f32 %v4790, %v4858
      %v4860 = vpop.f32.mrf.mxu0
      %v4861 = vadd.f32 %v4792, %v4860
      %4862 = vmatmul.bf16.gmra.mxu0 %v4546
      %v4863 = vpop.f32.mrf.mxu0
      %v4864 = vadd.f32 %v4795, %v4863
      %v4865 = vpop.f32.mrf.mxu0
      %v4866 = vadd.f32 %v4797, %v4865
      %4867 = vmatmul.bf16.gmra.mxu0 %v4549
      %v4868 = vpop.f32.mrf.mxu0
      %v4869 = vadd.f32 %v4800, %v4868
      %v4870 = vpop.f32.mrf.mxu0
      %v4871 = vadd.f32 %v4802, %v4870
      %4872 = vdwg.mxu0
      %4873 = vmatpush.bf16.msra.mxu0 0
      %4874 = vmatpush.bf16.msra.mxu0 0
      %4875 = vmatpush.bf16.msra.mxu0 0
      %4876 = vmatpush.bf16.msra.mxu0 0
      %4877 = vmatpush.bf16.msra.mxu0 0
      %4878 = vmatpush.bf16.msra.mxu0 0
      %4879 = vmatpush.bf16.msra.mxu0 %v4680
      %4880 = vmatpush.bf16.msra.mxu0 %v4679
      %4881 = vmatmul.bf16.gmra.mxu0 %v4700
      %v4882 = vpop.f32.mrf.mxu0
      %v4883 = vadd.f32 %v4814, %v4882
      %v4884 = vpop.f32.mrf.mxu0
      %v4885 = vadd.f32 %v4816, %v4884
      %4886 = vmatmul.bf16.gmra.mxu0 %v4703
      %v4887 = vpop.f32.mrf.mxu0
      %v4888 = vadd.f32 %v4819, %v4887
      %v4889 = vpop.f32.mrf.mxu0
      %v4890 = vadd.f32 %v4821, %v4889
      %4891 = vmatmul.bf16.gmra.mxu0 %v4706
      %v4892 = vpop.f32.mrf.mxu0
      %v4893 = vadd.f32 %v4824, %v4892
      %v4894 = vpop.f32.mrf.mxu0
      %v4895 = vadd.f32 %v4826, %v4894
      %4896 = vmatmul.bf16.gmra.mxu0 %v4709
      %v4897 = vpop.f32.mrf.mxu0
      %v4898 = vadd.f32 %v4829, %v4897
      %v4899 = vpop.f32.mrf.mxu0
      %v4900 = vadd.f32 %v4831, %v4899
      %4901 = vmatmul.bf16.gmra.mxu0 %v4712
      %v4902 = vpop.f32.mrf.mxu0
      %v4903 = vadd.f32 %v4834, %v4902
      %v4904 = vpop.f32.mrf.mxu0
      %v4905 = vadd.f32 %v4836, %v4904
      %4906 = vmatmul.bf16.gmra.mxu0 %v4715
      %v4907 = vpop.f32.mrf.mxu0
      %v4908 = vadd.f32 %v4839, %v4907
      %v4909 = vpop.f32.mrf.mxu0
      %v4910 = vadd.f32 %v4841, %v4909
      %4911 = vmatmul.bf16.gmra.mxu0 %v4718
      %v4912 = vpop.f32.mrf.mxu0
      %v4913 = vadd.f32 %v4844, %v4912
      %v4914 = vpop.f32.mrf.mxu0
      %v4915 = vadd.f32 %v4846, %v4914
      %4916 = vmatmul.bf16.gmra.mxu0 %v4721
      %v4917 = vpop.f32.mrf.mxu0
      %v4918 = vadd.f32 %v4849, %v4917
      %v4919 = vpop.f32.mrf.mxu0
      %v4920 = vadd.f32 %v4851, %v4919
      %4921 = vmatmul.bf16.gmra.mxu0 %v4724
      %v4922 = vpop.f32.mrf.mxu0
      %v4923 = vadd.f32 %v4854, %v4922
      %v4924 = vpop.f32.mrf.mxu0
      %v4925 = vadd.f32 %v4856, %v4924
      %4926 = vmatmul.bf16.gmra.mxu0 %v4727
      %v4927 = vpop.f32.mrf.mxu0
      %v4928 = vadd.f32 %v4859, %v4927
      %v4929 = vpop.f32.mrf.mxu0
      %v4930 = vadd.f32 %v4861, %v4929
      %4931 = vmatmul.bf16.gmra.mxu0 %v4730
      %v4932 = vpop.f32.mrf.mxu0
      %v4933 = vadd.f32 %v4864, %v4932
      %v4934 = vpop.f32.mrf.mxu0
      %v4935 = vadd.f32 %v4866, %v4934
      %4936 = vmatmul.bf16.gmra.mxu0 %v4733
      %v4937 = vpop.f32.mrf.mxu0
      %v4938 = vadd.f32 %v4869, %v4937
      %v4939 = vpop.f32.mrf.mxu0
      %v4940 = vadd.f32 %v4871, %v4939
      %4941 = vdwg.mxu0
      %v4942 = vmax.f32 %v4883, 0.0
      %v4943 = vmax.f32 %v4885, 0.0
      %v4944 = vmax.f32 %v4888, 0.0
      %v4945 = vmax.f32 %v4890, 0.0
      %v4946 = vmax.f32 %v4893, 0.0
      %v4947 = vmax.f32 %v4895, 0.0
      %v4948 = vmax.f32 %v4898, 0.0
      %v4949 = vmax.f32 %v4900, 0.0
      %v4950 = vmax.f32 %v4903, 0.0
      %v4951 = vmax.f32 %v4905, 0.0
      %v4952 = vmax.f32 %v4908, 0.0
      %v4953 = vmax.f32 %v4910, 0.0
      %v4954 = vmax.f32 %v4913, 0.0
      %v4955 = vmax.f32 %v4915, 0.0
      %v4956 = vmax.f32 %v4918, 0.0
      %v4957 = vmax.f32 %v4920, 0.0
      %v4958 = vmax.f32 %v4923, 0.0
      %v4959 = vmax.f32 %v4925, 0.0
      %v4960 = vmax.f32 %v4928, 0.0
      %v4961 = vmax.f32 %v4930, 0.0
      %v4962 = vmax.f32 %v4933, 0.0
      %v4963 = vmax.f32 %v4935, 0.0
      %v4964 = vmax.f32 %v4938, 0.0
      %v4965 = vmax.f32 %v4940, 0.0
      %v4966 = vpack.c.bf16 %v4943, %v4942
      %v4967 = vpack.c.bf16 %v4945, %v4944
      %v4968 = vpack.c.bf16 %v4947, %v4946
      %v4969 = vpack.c.bf16 %v4949, %v4948
      %v4970 = vpack.c.bf16 %v4951, %v4950
      %v4971 = vpack.c.bf16 %v4953, %v4952
      %v4972 = vpack.c.bf16 %v4955, %v4954
      %v4973 = vpack.c.bf16 %v4957, %v4956
      %v4974 = vpack.c.bf16 %v4959, %v4958
      %v4975 = vpack.c.bf16 %v4961, %v4960
      %v4976 = vpack.c.bf16 %v4963, %v4962
      %v4977 = vpack.c.bf16 %v4965, %v4964
      %v4978 = vld [vmem:[%s8] sm:$0xf]
      %v4979 = vld [vmem:[%s8 + $0x4] sm:$0xf]
      %v4980 = vld [vmem:[%s8 + $0x8] sm:$0xf]
      %v4981 = vld [vmem:[%s8 + $0xc] sm:$0xf]
      %v4982 = vld [vmem:[%s9] sm:$0x1]
      %v4984 = vperm.slane %v4982, 0
      %v4990 = vunpack.c.l.b16 %v4978
      %v4991 = vunpack.c.l.b16 %v4979
      %v4992 = vunpack.c.l.b16 %v4980
      %v4993 = vunpack.c.l.b16 %v4981
      %v4994 = vpack.c.b16 %v4991, %v4990
      %v4995 = vpack.c.b16 %v4993, %v4992
      %v4999 = vsel %vm1461, %v4966, 0
      %v5002 = vsel %vm1461, %v4967, 0
      %v5005 = vsel %vm1461, %v4968, 0
      %v5008 = vsel %vm1461, %v4969, 0
      %v5011 = vsel %vm1461, %v4970, 0
      %v5014 = vsel %vm1461, %v4971, 0
      %v5017 = vsel %vm1461, %v4972, 0
      %v5020 = vsel %vm1461, %v4973, 0
      %v5023 = vsel %vm1461, %v4974, 0
      %v5026 = vsel %vm1461, %v4975, 0
      %v5029 = vsel %vm1461, %v4976, 0
      %v5032 = vsel %vm1461, %v4977, 0
      %5034 = vmatpush.bf16.msra.mxu0 0
      %5035 = vmatpush.bf16.msra.mxu0 0
      %5036 = vmatpush.bf16.msra.mxu0 0
      %5037 = vmatpush.bf16.msra.mxu0 0
      %5038 = vmatpush.bf16.msra.mxu0 0
      %5039 = vmatpush.bf16.msra.mxu0 0
      %5040 = vmatpush.bf16.msra.mxu0 %v4995
      %5041 = vmatpush.bf16.msra.mxu0 %v4994
      %5042 = vmatmul.bf16.gmra.mxu0 %v4999
      %v5043 = vpop.f32.mrf.mxu0
      %v5044 = vadd.f32 %v4984, %v5043
      %v5045 = vpop.f32.mrf.mxu0
      %v5046 = vadd.f32 %v4984, %v5045
      %5047 = vmatmul.bf16.gmra.mxu0 %v5002
      %v5048 = vpop.f32.mrf.mxu0
      %v5049 = vadd.f32 %v4984, %v5048
      %v5050 = vpop.f32.mrf.mxu0
      %v5051 = vadd.f32 %v4984, %v5050
      %5052 = vmatmul.bf16.gmra.mxu0 %v5005
      %v5053 = vpop.f32.mrf.mxu0
      %v5054 = vadd.f32 %v4984, %v5053
      %v5055 = vpop.f32.mrf.mxu0
      %v5056 = vadd.f32 %v4984, %v5055
      %5057 = vmatmul.bf16.gmra.mxu0 %v5008
      %v5058 = vpop.f32.mrf.mxu0
      %v5059 = vadd.f32 %v4984, %v5058
      %v5060 = vpop.f32.mrf.mxu0
      %v5061 = vadd.f32 %v4984, %v5060
      %5062 = vmatmul.bf16.gmra.mxu0 %v5011
      %v5063 = vpop.f32.mrf.mxu0
      %v5064 = vadd.f32 %v4984, %v5063
      %v5065 = vpop.f32.mrf.mxu0
      %v5066 = vadd.f32 %v4984, %v5065
      %5067 = vmatmul.bf16.gmra.mxu0 %v5014
      %v5068 = vpop.f32.mrf.mxu0
      %v5069 = vadd.f32 %v4984, %v5068
      %v5070 = vpop.f32.mrf.mxu0
      %v5071 = vadd.f32 %v4984, %v5070
      %5072 = vmatmul.bf16.gmra.mxu0 %v5017
      %v5073 = vpop.f32.mrf.mxu0
      %v5074 = vadd.f32 %v4984, %v5073
      %v5075 = vpop.f32.mrf.mxu0
      %v5076 = vadd.f32 %v4984, %v5075
      %5077 = vmatmul.bf16.gmra.mxu0 %v5020
      %v5078 = vpop.f32.mrf.mxu0
      %v5079 = vadd.f32 %v4984, %v5078
      %v5080 = vpop.f32.mrf.mxu0
      %v5081 = vadd.f32 %v4984, %v5080
      %5082 = vmatmul.bf16.gmra.mxu0 %v5023
      %v5083 = vpop.f32.mrf.mxu0
      %v5084 = vadd.f32 %v4984, %v5083
      %v5085 = vpop.f32.mrf.mxu0
      %v5086 = vadd.f32 %v4984, %v5085
      %5087 = vmatmul.bf16.gmra.mxu0 %v5026
      %v5088 = vpop.f32.mrf.mxu0
      %v5089 = vadd.f32 %v4984, %v5088
      %v5090 = vpop.f32.mrf.mxu0
      %v5091 = vadd.f32 %v4984, %v5090
      %5092 = vmatmul.bf16.gmra.mxu0 %v5029
      %v5093 = vpop.f32.mrf.mxu0
      %v5094 = vadd.f32 %v4984, %v5093
      %v5095 = vpop.f32.mrf.mxu0
      %v5096 = vadd.f32 %v4984, %v5095
      %5097 = vmatmul.bf16.gmra.mxu0 %v5032
      %v5098 = vpop.f32.mrf.mxu0
      %v5099 = vadd.f32 %v4984, %v5098
      %v5100 = vpop.f32.mrf.mxu0
      %v5101 = vadd.f32 %v4984, %v5100
      %5102 = vdwg.mxu0
      %5103 = vxpose.xlu0.b32.start [1/16] %v5044, 128
      %5104 = vxpose.xlu0.b32.cont [2/16] %v5046, 128
      %5105 = vxpose.xlu0.b32.cont [3/16] %v5049, 128
      %5106 = vxpose.xlu0.b32.cont [4/16] %v5051, 128
      %5107 = vxpose.xlu0.b32.cont [5/16] %v5054, 128
      %5108 = vxpose.xlu0.b32.cont [6/16] %v5056, 128
      %5109 = vxpose.xlu0.b32.cont [7/16] %v5059, 128
      %5110 = vxpose.xlu0.b32.cont [8/16] %v5061, 128
      %5111 = vxpose.xlu0.b32.cont [9/16] %v5064, 128
      %5112 = vxpose.xlu0.b32.cont [10/16] %v5066, 128
      %5113 = vxpose.xlu0.b32.cont [11/16] %v5069, 128
      %5114 = vxpose.xlu0.b32.cont [12/16] %v5071, 128
      %5115 = vxpose.xlu0.b32.cont [13/16] %v5074, 128
      %5116 = vxpose.xlu0.b32.cont [14/16] %v5076, 128
      %5117 = vxpose.xlu0.b32.cont [15/16] %v5079, 128
      %5118 = vxpose.xlu0.b32.end [16/16] %v5081, 128
      %v5119 = vpop.trf.xlu0
      %v5120 = vpop.trf.xlu0
      %v5121 = vpop.trf.xlu0
      %v5122 = vpop.trf.xlu0
      %v5123 = vpop.trf.xlu0
      %v5124 = vpop.trf.xlu0
      %v5125 = vpop.trf.xlu0
      %v5126 = vpop.trf.xlu0
      %v5127 = vpop.trf.xlu0
      %v5128 = vpop.trf.xlu0
      %v5129 = vpop.trf.xlu0
      %v5130 = vpop.trf.xlu0
      %v5131 = vpop.trf.xlu0
      %v5132 = vpop.trf.xlu0
      %v5133 = vpop.trf.xlu0
      %v5134 = vpop.trf.xlu0
      %5135 = vxpose.xlu0.b32.start [1/16] %v5084, 128
      %5136 = vxpose.xlu0.b32.cont [2/16] %v5086, 128
      %5137 = vxpose.xlu0.b32.cont [3/16] %v5089, 128
      %5138 = vxpose.xlu0.b32.cont [4/16] %v5091, 128
      %5139 = vxpose.xlu0.b32.cont [5/16] %v5094, 128
      %5140 = vxpose.xlu0.b32.cont [6/16] %v5096, 128
      %5141 = vxpose.xlu0.b32.cont [7/16] %v5099, 128
      %5142 = vxpose.xlu0.b32.cont [8/16] %v5101, 128
      %5143 = vxpose.xlu0.b32.cont [9/16] 0.0, 128
      %5144 = vxpose.xlu0.b32.cont [10/16] 0.0, 128
      %5145 = vxpose.xlu0.b32.cont [11/16] 0.0, 128
      %5146 = vxpose.xlu0.b32.cont [12/16] 0.0, 128
      %5147 = vxpose.xlu0.b32.cont [13/16] 0.0, 128
      %5148 = vxpose.xlu0.b32.cont [14/16] 0.0, 128
      %5149 = vxpose.xlu0.b32.cont [15/16] 0.0, 128
      %5150 = vxpose.xlu0.b32.end [16/16] 0.0, 128
      %v5151 = vpop.trf.xlu0
      %v5152 = vpop.trf.xlu0
      %v5153 = vpop.trf.xlu0
      %v5154 = vpop.trf.xlu0
      %v5155 = vpop.trf.xlu0
      %v5156 = vpop.trf.xlu0
      %v5157 = vpop.trf.xlu0
      %v5158 = vpop.trf.xlu0
      %v5159 = vpop.trf.xlu0
      %v5160 = vpop.trf.xlu0
      %v5161 = vpop.trf.xlu0
      %v5162 = vpop.trf.xlu0
      %v5163 = vpop.trf.xlu0
      %v5164 = vpop.trf.xlu0
      %v5165 = vpop.trf.xlu0
      %v5166 = vpop.trf.xlu0
      %v5169 = vrot.slane %v5151, 4
      %vm5170 = vcmask 1043456
      %v5171 = vsel %vm5170, %v5119, %v5169
      %vm5173 = vcmask 523268
      %vm5174 = vmor %vm5173, %vm5170
      %5175 = vst.msk [vmem:[%s381] sm:$0xff] %vm5174, %v5171
      %p5176 = scmp.lt.s32.totalorder %s25, 1
      %s5177 = scalar_select %p5176, %s25, 1
      %p5178 = scmp.lt.s32.totalorder %s26, 1
      %s5179 = scalar_select %p5178, %s26, 1
      %s5180 = smul.addr %s5179, 2
      %s5181 = smul.addr %s5177, 4
      %s5182 = sadd.s32 %s5180, %s5181
      %s5183 = smul.addr %s5182, 4
      %s5184 = scalar_lea.vmem %s10, %s5183
      // Predicated region
      $region61: #{vae_background_forward.9} parent=59 // pred_check
        %p5185 = pneg %p268
      $region62: #{vae_background_forward.9} parent=59 // pred_check_branch
        %5187 = sbr.rel (%p5185) target = $region64
      $region63: #{vae_background_forward.9} parent=59 // pred_region
        _
      $region64: #{vae_background_forward.9} parent=59 // pred_fallthru
        _
    $region60: #{vae_background_forward.9} parent=5 // pred_fallthru
      _
    %p5188 = scmp.le.s32.totalorder 2, %s16
    // Predicated region
    $region65: #{vae_background_forward.9} parent=5 // pred_check
      %p5189 = pneg %p5188
    $region66: #{vae_background_forward.9} parent=5 // pred_check_branch
      %5191 = sbr.rel (%p5189) target = $region68
    $region67: #{vae_background_forward.9} parent=5 // pred_region
      %s5192 = ssub.s32 %s16, 2
      // Predicated region
      $region69: #{vae_background_forward.9} parent=67 // pred_check
        %p5193 = pneg %p274
      $region70: #{vae_background_forward.9} parent=67 // pred_check_branch
        %5195 = sbr.rel (%p5193) target = $region72
      $region71: #{vae_background_forward.9} parent=67 // pred_region
        %p5196 = scmp.lt.s32.totalorder %s27, 1
        %s5197 = scalar_select %p5196, %s27, 1
        %p5198 = scmp.lt.s32.totalorder %s28, 1
        %s5199 = scalar_select %p5198, %s28, 1
        %s5200 = smul.addr %s5199, 2
        %s5201 = smul.addr %s5197, 4
        %s5202 = sadd.s32 %s5200, %s5201
        %s5203 = smul.addr %s5202, 4
        %s5204 = scalar_lea.vmem %s10, %s5203
      $region72: #{vae_background_forward.9} parent=67 // pred_fallthru
        _
    $region68: #{vae_background_forward.9} parent=5 // pred_fallthru
      _
  $region6: #{vae_background_forward.9} parent=0 // loop_footer
    %s20 = sadd.s32 1, %s16
  $region7: #{vae_background_forward.9} parent=0 // loop_footer_branch
    %15 = sbr.rel target = $region3
  $region8: #{vae_background_forward.9} parent=0 // loop_exit
    _

</llo_original>
